<compile_context>
chip_gen: v7x
topology: tpu7x:2x2x1
jax: 0.10.0
libtpu: 0.0.40
codegen_flags: <defaults>
</compile_context>

<pallas_src>
import functools

import jax
import jax.numpy as jnp
from jax import lax
from jax.experimental import pallas as pl
from jax.experimental.pallas import tpu as pltpu

F32 = jnp.float32
_PARALLEL = pltpu.CompilerParams(dimension_semantics=("parallel",))
_BN_SCALE = float(1.0 / (1.0 + 1e-5) ** 0.5)   # eval-mode BN, running_mean=0 / var=1
_LN_EPS = 1e-5
_GLN_EPS = 1e-8


# ----------------------------------------------------------------------------
# Spec helpers
# ----------------------------------------------------------------------------
def _row(v):
    return jnp.asarray(v, F32).reshape(1, -1)


def _act_spec(shape):
    """Per-batch-element block (leading batch dim squeezed) of a (B, ...) array."""
    dims = tuple(shape)
    return pl.BlockSpec((None,) + dims, lambda b: (b,) + (0,) * len(dims))


def _const_spec(shape):
    zeros = (0,) * len(shape)
    return pl.BlockSpec(tuple(shape), lambda b: zeros)


def _smem_spec():
    return pl.BlockSpec(memory_space=pltpu.MemorySpace.SMEM)


def _frame(wave, K):
    """(B, L) waveform -> (B, T+1, hop) framed view (free metadata reshape)."""
    hop = K // 2
    init_len = wave.shape[-1]
    rem = (init_len - K) % hop
    if rem != 0:
        wave = jnp.pad(wave, ((0, 0), (0, hop - rem)))
    B, L = wave.shape
    T = (L - K) // hop + 1
    return wave.astype(F32).reshape(B, T + 1, hop), T, init_len


# ----------------------------------------------------------------------------
# Kernel 1: reference path = speech encoder + speaker encoder (one batch element)
# ----------------------------------------------------------------------------
def _ref_path_kernel(*refs, Tr, res_meta):
    xr, wlo, whi, rowsC, conv1_w = refs[:5]
    idx = 5
    blocks = []
    for _cin, cout, has_down in res_meta:
        w1, w2, rows = refs[idx], refs[idx + 1], refs[idx + 2]
        idx += 3
        dwn = None
        if has_down:
            dwn = refs[idx]
            idx += 1
        blocks.append((w1, w2, rows, dwn, cout))
    conv2_w, conv2_b, lin_w, lin_b = refs[idx:idx + 4]
    rv_ref, lg_ref = refs[idx + 4], refs[idx + 5]
    scratches = refs[idx + 6:]

    # -- SpeechEncoderShort: Conv1d(1, C, K, stride=hop) + ReLU  (two tap matmuls)
    y = jnp.dot(xr[0:Tr, :], wlo[...], preferred_element_type=F32)
    y = y + jnp.dot(xr[1:Tr + 1, :], whi[...], preferred_element_type=F32)
    y = jnp.maximum(y + rowsC[0:1, :], 0.0)

    # -- LayerNorm over channels (single-pass stats) + conv1 (1x1)
    mu = jnp.mean(y, axis=-1, keepdims=True)
    var = jnp.maximum(jnp.mean(y * y, axis=-1, keepdims=True) - mu * mu, 0.0)
    y = (y - mu) * lax.rsqrt(var + _LN_EPS) * rowsC[1:2, :] + rowsC[2:3, :]
    y = jnp.dot(y, conv1_w[...], preferred_element_type=F32) + rowsC[3:4, :]

    # -- ResNet blocks (BN folded wrapper-side), unrolled at trace time
    t = Tr
    for i, (w1, w2, rows, dwn, cout) in enumerate(blocks):
        h = jnp.dot(y, w1[...], preferred_element_type=F32) + rows[0:1, :]
        h = jnp.where(h >= 0, h, rows[1:2, :] * h)                 # PReLU1
        h = jnp.dot(h, w2[...], preferred_element_type=F32) + rows[2:3, :]
        if dwn is not None:
            yd = jnp.dot(y, dwn[...], preferred_element_type=F32) + rows[4:5, :]
        else:
            yd = y
        h = h + yd
        h = jnp.where(h >= 0, h, rows[3:4, :] * h)                 # PReLU2
        # MaxPool1d(kernel=3, stride=3) via strided VMEM reads (per-block scratch)
        scr = scratches[i]
        scr[...] = h
        n3 = t // 3
        m = jnp.maximum(scr[pl.ds(0, n3, stride=3), :],
                        scr[pl.ds(1, n3, stride=3), :])
        y = jnp.maximum(m, scr[pl.ds(2, n3, stride=3), :])
        t = n3

    # -- conv2 (1x1) -> mean over time -> Linear(out_channels, n_speakers)
    y = jnp.dot(y, conv2_w[...], preferred_element_type=F32) + conv2_b[...]
    rv = jnp.mean(y, axis=0, keepdims=True)
    rv_ref[...] = rv
    lg_ref[...] = jnp.dot(rv, lin_w[...], preferred_element_type=F32) + lin_b[...]


# ----------------------------------------------------------------------------
# Kernel 2: mixture path = speech encoder + speaker extractor + decoder
# ----------------------------------------------------------------------------
def _extract_kernel(xr, rv, wlo, whi, rowsC, conv1_w, inwx, inwr, rowsH, outw,
                    mask_w, dec_w, dec_b, o_ref, *, T, hop, n_stack, n_tcn):
    H = rowsH.shape[-1]

    # -- SpeechEncoderShort on the mixture
    mix = jnp.dot(xr[0:T, :], wlo[...], preferred_element_type=F32)
    mix = mix + jnp.dot(xr[1:T + 1, :], whi[...], preferred_element_type=F32)
    mix = jnp.maximum(mix + rowsC[0:1, :], 0.0)                    # mix_encs (T, C)

    # -- extractor LayerNorm (channels) + conv1 (1x1)
    mu = jnp.mean(mix, axis=-1, keepdims=True)
    var = jnp.maximum(jnp.mean(mix * mix, axis=-1, keepdims=True) - mu * mu, 0.0)
    y = (mix - mu) * lax.rsqrt(var + _LN_EPS) * rowsC[1:2, :] + rowsC[2:3, :]
    y = jnp.dot(y, conv1_w[...], preferred_element_type=F32) + rowsC[3:4, :]

    rvec = rv[...]                                                 # (1, O)

    # -- stacked TCN blocks (unrolled at trace time)
    j = 0
    for s in range(n_stack):
        for i in range(n_tcn):
            d = 2 ** i
            rH = rowsH[j]                                          # (11, H)
            h = jnp.dot(y, inwx[j], preferred_element_type=F32)
            if i == 0:                                             # TCNBlockRef: [y, ref]
                h = h + jnp.dot(rvec, inwr[s], preferred_element_type=F32)
            h = h + rH[0:1, :]
            h = jnp.where(h >= 0, h, rH[1:2, :] * h)               # PReLU1
            m1 = jnp.mean(h)                                       # gLN1 (single pass)
            v1 = jnp.maximum(jnp.mean(h * h) - m1 * m1, 0.0)
            h = (h - m1) * lax.rsqrt(v1 + _GLN_EPS) * rH[2:3, :] + rH[3:4, :]
            # depthwise dilated conv (kernel 3, same length) via shifted operands
            zd = jnp.zeros((d, H), F32)
            h_lag = jnp.concatenate([zd, h[:T - d, :]], axis=0)    # h[t-d]
            h_lead = jnp.concatenate([h[d:, :], zd], axis=0)       # h[t+d]
            z = h_lag * rH[4:5, :] + h * rH[5:6, :] + h_lead * rH[6:7, :] + rH[7:8, :]
            z = jnp.where(z >= 0, z, rH[8:9, :] * z)               # PReLU2
            m2 = jnp.mean(z)                                       # gLN2
            v2 = jnp.maximum(jnp.mean(z * z) - m2 * m2, 0.0)
            z = (z - m2) * lax.rsqrt(v2 + _GLN_EPS) * rH[9:10, :] + rH[10:11, :]
            y = y + jnp.dot(z, outw[j], preferred_element_type=F32) + rowsC[5 + j:6 + j, :]
            j += 1

    # -- mask conv1x1 + ReLU + mask multiply
    m = jnp.dot(y, mask_w[...], preferred_element_type=F32) + rowsC[4:5, :]
    e = mix * jnp.maximum(m, 0.0)                                  # encs1 (T, C)

    # -- ConvTranspose1d(C, 1, K, stride=hop): one (C, K) matmul + overlap-add
    f = jnp.dot(e, dec_w[...], preferred_element_type=F32)         # (T, K)
    zrow = jnp.zeros((1, hop), F32)
    o_ref[...] = (jnp.concatenate([f[:, :hop], zrow], axis=0)
                  + jnp.concatenate([zrow, f[:, hop:]], axis=0)) + dec_b[0]


# ----------------------------------------------------------------------------
# Module forwards (one fused pallas_call per path)
# ----------------------------------------------------------------------------
def ref_path(ref_wave, p, K):
    xr, Tr, _ = _frame(ref_wave, K)
    B = xr.shape[0]
    hop = K // 2
    C = p["enc_w"].shape[1]
    O = p["se_conv2_w"].shape[0]
    n_spk = p["se_lin_w"].shape[1]

    enc_w = p["enc_w"].astype(F32)
    rowsC = jnp.stack([p["enc_b"], p["se_ln_g"], p["se_ln_b"],
                       p["se_conv1_b"]]).astype(F32)               # (4, C)

    args = [xr, enc_w[:hop], enc_w[hop:], rowsC, p["se_conv1_w"].astype(F32)]
    specs = [_act_spec((Tr + 1, hop)),
             _const_spec((hop, C)), _const_spec((hop, C)),
             _const_spec((4, C)), _const_spec((C, C))]

    res_meta, scratches, t = [], [], Tr
    for bp in p["se_resnet"]:
        cin, cout = bp["conv1_w"].shape
        s1 = bp["bn1_g"] * _BN_SCALE                               # fold eval-mode BN
        s2 = bp["bn2_g"] * _BN_SCALE
        w1 = (bp["conv1_w"] * s1[None, :]).astype(F32)
        w2 = (bp["conv2_w"] * s2[None, :]).astype(F32)
        b1 = (bp["conv1_b"] * s1 + bp["bn1_b"]).astype(F32)
        b2 = (bp["conv2_b"] * s2 + bp["bn2_b"]).astype(F32)
        a1 = jnp.broadcast_to(bp["prelu1"], (cout,)).astype(F32)
        a2 = jnp.broadcast_to(bp["prelu2"], (cout,)).astype(F32)
        has_down = "down_w" in bp
        bd = bp["down_b"].astype(F32) if has_down else jnp.zeros((cout,), F32)
        rows = jnp.stack([b1, a1, b2, a2, bd])                     # (5, cout)
        args += [w1, w2, rows]
        specs += [_const_spec((cin, cout)), _const_spec((cout, cout)),
                  _const_spec((5, cout))]
        if has_down:
            args.append(bp["down_w"].astype(F32))
            specs.append(_const_spec((cin, cout)))
        res_meta.append((cin, cout, has_down))
        scratches.append(pltpu.VMEM((t, cout), F32))               # maxpool scratch
        t = t // 3

    args += [p["se_conv2_w"].astype(F32), _row(p["se_conv2_b"]),
             p["se_lin_w"].astype(F32), _row(p["se_lin_b"])]
    specs += [_const_spec((O, O)), _const_spec((1, O)),
              _const_spec((O, n_spk)), _const_spec((1, n_spk))]

    rv, lg = pl.pallas_call(
        functools.partial(_ref_path_kernel, Tr=Tr, res_meta=tuple(res_meta)),
        out_shape=(jax.ShapeDtypeStruct((B, 1, O), F32),
                   jax.ShapeDtypeStruct((B, 1, n_spk), F32)),
        grid=(B,),
        in_specs=specs,
        out_specs=(_act_spec((1, O)), _act_spec((1, n_spk))),
        scratch_shapes=scratches,
        compiler_params=_PARALLEL,
    )(*args)
    return rv[:, 0, :], lg[:, 0, :]


def extract_path(mix_wave, ref_vec, p, K):
    xr, T, init_len = _frame(mix_wave, K)
    B = xr.shape[0]
    hop = K // 2
    C = p["enc_w"].shape[1]
    O = ref_vec.shape[-1]
    H = p["ex_stacks"][0][0]["in_w"].shape[1]
    n_stack = len(p["ex_stacks"])
    n_tcn = len(p["ex_stacks"][0])
    n_blocks = n_stack * n_tcn

    enc_w = p["enc_w"].astype(F32)
    rowC = [p["enc_b"], p["ex_ln_g"], p["ex_ln_b"], p["ex_conv1_b"], p["ex_mask_b"]]
    inwx, inwr, rowsH_l, outw = [], [], [], []
    for stack in p["ex_stacks"]:
        for i, bp in enumerate(stack):
            inw = bp["in_w"].astype(F32)
            if i == 0:
                inwx.append(inw[:C])
                inwr.append(inw[C:])
            else:
                inwx.append(inw)
            a1 = jnp.broadcast_to(bp["prelu1"], (H,)).astype(F32)
            a2 = jnp.broadcast_to(bp["prelu2"], (H,)).astype(F32)
            dw = bp["dw_w"].astype(F32)
            rowsH_l.append(jnp.stack([bp["in_b"], a1, bp["gln1_g"], bp["gln1_b"],
                                      dw[0], dw[1], dw[2], bp["dw_b"], a2,
                                      bp["gln2_g"], bp["gln2_b"]]))
            outw.append(bp["out_w"].astype(F32))
            rowC.append(bp["out_b"])
    rowsC = jnp.stack(rowC).astype(F32)                            # (5+n_blocks, C)
    inwx = jnp.stack(inwx)                                         # (n_blocks, C, H)
    inwr = jnp.stack(inwr)                                         # (n_stack, O, H)
    rowsH = jnp.stack(rowsH_l).astype(F32)                         # (n_blocks, 11, H)
    outw = jnp.stack(outw)                                         # (n_blocks, H, C)
    rv3 = ref_vec.astype(F32)[:, None, :]                          # (B, 1, O)
    nC = 5 + n_blocks

    frames = pl.pallas_call(
        functools.partial(_extract_kernel, T=T, hop=hop,
                          n_stack=n_stack, n_tcn=n_tcn),
        out_shape=jax.ShapeDtypeStruct((B, T + 1, hop), F32),
        grid=(B,),
        in_specs=[_act_spec((T + 1, hop)), _act_spec((1, O)),
                  _const_spec((hop, C)), _const_spec((hop, C)),
                  _const_spec((nC, C)), _const_spec((C, C)),
                  _const_spec((n_blocks, C, H)), _const_spec((n_stack, O, H)),
                  _const_spec((n_blocks, 11, H)), _const_spec((n_blocks, H, C)),
                  _const_spec((C, C)), _const_spec((C, K)),
                  _smem_spec()],
        out_specs=_act_spec((T + 1, hop)),
        compiler_params=_PARALLEL,
    )(xr, rv3, enc_w[:hop], enc_w[hop:], rowsC, p["ex_conv1_w"].astype(F32),
      inwx, inwr, rowsH, outw, p["ex_mask_w"].astype(F32),
      p["dec_w"].astype(F32), jnp.reshape(p["dec_b"], (1,)).astype(F32))
    # TODO(synk): writing a lane-dense (1, (T+1)*hop) row in-kernel would replace the
    #             (T+1, hop=4) masked stores; the wrapper reshape below is metadata-only.
    s1 = frames.reshape(B, (T + 1) * hop)[:, :init_len]
    return s1


def spex_plus_short_forward(p, x, ref, cfg):
    """Default path: one_chunk=False, have_relevant_speakers=True -> (s1, logits)."""
    K = cfg["short_kernel"]
    ref_vec, speaker_logits = ref_path(ref, p, K)
    ref_vec = jnp.tile(ref_vec, (x.shape[0] // ref_vec.shape[0], 1))
    s1 = extract_path(x, ref_vec, p, K)
    return s1, speaker_logits


# ----------------------------------------------------------------------------
# Deterministic parameter init (same layout as the reference implementation)
# ----------------------------------------------------------------------------
class _KeyGen:
    def __init__(self, seed):
        self.key = jax.random.PRNGKey(seed)

    def __call__(self):
        self.key, sub = jax.random.split(self.key)
        return sub


def _w(kg, shape, scale=0.1):
    return jax.random.normal(kg(), shape, jnp.float32) * scale


def init_params(cfg, seed=0):
    C, H, O = cfg["n_channels"], cfg["hidden_channels"], cfg["out_channels"]
    K, n_res = cfg["short_kernel"], cfg["n_resnetblocks"]
    n_spk = cfg["n_speakers"]
    n_stack, n_tcn = cfg["n_stacked_tcnblocks"], cfg["n_tcnblocks"]
    kg = _KeyGen(seed)
    p = {}
    # SpeechEncoderShort / SpeechDecoderShort
    p["enc_w"], p["enc_b"] = _w(kg, (K, C)), jnp.zeros((C,), jnp.float32)
    p["dec_w"], p["dec_b"] = _w(kg, (C, K)), jnp.float32(0.0)
    # SpeakerEncoderShort
    p["se_ln_g"], p["se_ln_b"] = jnp.ones((C,), jnp.float32), jnp.zeros((C,), jnp.float32)
    p["se_conv1_w"], p["se_conv1_b"] = _w(kg, (C, C)), jnp.zeros((C,), jnp.float32)
    res_dims = ([(C, C)] * (n_res // 2) + [(C, O)]
                + [(O, O)] * (n_res - n_res // 2 - 1))
    blocks = []
    for cin, cout in res_dims:
        bp = {
            "conv1_w": _w(kg, (cin, cout)), "conv1_b": jnp.zeros((cout,), jnp.float32),
            "bn1_g": jnp.ones((cout,), jnp.float32), "bn1_b": jnp.zeros((cout,), jnp.float32),
            "prelu1": jnp.float32(0.25),
            "conv2_w": _w(kg, (cout, cout)), "conv2_b": jnp.zeros((cout,), jnp.float32),
            "bn2_g": jnp.ones((cout,), jnp.float32), "bn2_b": jnp.zeros((cout,), jnp.float32),
            "prelu2": jnp.float32(0.25),
        }
        if cin != cout:
            bp["down_w"] = _w(kg, (cin, cout))
            bp["down_b"] = jnp.zeros((cout,), jnp.float32)
        blocks.append(bp)
    p["se_resnet"] = blocks
    p["se_conv2_w"], p["se_conv2_b"] = _w(kg, (O, O)), jnp.zeros((O,), jnp.float32)
    p["se_lin_w"], p["se_lin_b"] = _w(kg, (O, n_spk)), jnp.zeros((n_spk,), jnp.float32)
    # SpeakerExtractorShort
    p["ex_ln_g"], p["ex_ln_b"] = jnp.ones((C,), jnp.float32), jnp.zeros((C,), jnp.float32)
    p["ex_conv1_w"], p["ex_conv1_b"] = _w(kg, (C, C)), jnp.zeros((C,), jnp.float32)
    stacks = []
    for _ in range(n_stack):
        stack = []
        for i in range(n_tcn):
            cin = C + O if i == 0 else C
            stack.append({
                "in_w": _w(kg, (cin, H)), "in_b": jnp.zeros((H,), jnp.float32),
                "prelu1": jnp.float32(0.25),
                "gln1_g": jnp.ones((H,), jnp.float32), "gln1_b": jnp.zeros((H,), jnp.float32),
                "dw_w": _w(kg, (3, H)), "dw_b": jnp.zeros((H,), jnp.float32),
                "prelu2": jnp.float32(0.25),
                "gln2_g": jnp.ones((H,), jnp.float32), "gln2_b": jnp.zeros((H,), jnp.float32),
                "out_w": _w(kg, (H, C)), "out_b": jnp.zeros((C,), jnp.float32),
            })
        stacks.append(stack)
    p["ex_stacks"] = stacks
    p["ex_mask_w"], p["ex_mask_b"] = _w(kg, (C, C)), jnp.zeros((C,), jnp.float32)
    return p


# ----------------------------------------------------------------------------
if __name__ == "__main__":
    cfg = dict(
        n_channels=32,
        hidden_channels=48,
        out_channels=40,
        short_kernel=8,
        n_resnetblocks=2,
        n_speakers=10,
        n_stacked_tcnblocks=1,
        n_tcnblocks=2,
        causal=False,
    )
    params = init_params(cfg, seed=0)

    key = jax.random.PRNGKey(0)
    kx, kr = jax.random.split(key)
    x = jax.random.normal(kx, (2, 800), jnp.float32)    # mixture waveform (B, L)
    ref = jax.random.normal(kr, (2, 400), jnp.float32)  # reference waveform (B, L_ref)

    fwd = jax.jit(functools.partial(spex_plus_short_forward, cfg=cfg))
    s1, logits = fwd(params, x, ref)
    s1 = jax.block_until_ready(s1)
    logits = jax.block_until_ready(logits)

    assert s1.shape == (2, 800), s1.shape
    assert logits.shape == (2, cfg["n_speakers"]), logits.shape
    assert bool(jnp.all(jnp.isfinite(s1))) and bool(jnp.all(jnp.isfinite(logits)))
    print("KERNEL_OK")
</pallas_src>

<mosaic_0001>
module attributes {stable_mosaic.version = 11 : i64} {
  func.func @_ref_path_kernel(%arg0: i32, %arg1: memref<1x100x4xf32, #tpu.memory_space<vmem>>, %arg2: memref<4x32xf32, #tpu.memory_space<vmem>>, %arg3: memref<4x32xf32, #tpu.memory_space<vmem>>, %arg4: memref<4x32xf32, #tpu.memory_space<vmem>>, %arg5: memref<32x32xf32, #tpu.memory_space<vmem>>, %arg6: memref<32x32xf32, #tpu.memory_space<vmem>>, %arg7: memref<32x32xf32, #tpu.memory_space<vmem>>, %arg8: memref<5x32xf32, #tpu.memory_space<vmem>>, %arg9: memref<32x40xf32, #tpu.memory_space<vmem>>, %arg10: memref<40x40xf32, #tpu.memory_space<vmem>>, %arg11: memref<5x40xf32, #tpu.memory_space<vmem>>, %arg12: memref<32x40xf32, #tpu.memory_space<vmem>>, %arg13: memref<40x40xf32, #tpu.memory_space<vmem>>, %arg14: memref<1x40xf32, #tpu.memory_space<vmem>>, %arg15: memref<40x10xf32, #tpu.memory_space<vmem>>, %arg16: memref<1x10xf32, #tpu.memory_space<vmem>>, %arg17: memref<1x1x40xf32, #tpu.memory_space<vmem>>, %arg18: memref<1x1x10xf32, #tpu.memory_space<vmem>>, %arg19: memref<99x32xf32, #tpu.memory_space<vmem>>, %arg20: memref<33x40xf32, #tpu.memory_space<vmem>>) attributes {dimension_semantics = [#tpu.dimension_semantics<parallel>], iteration_bounds = array<i64: 2>, scalar_prefetch = 0 : i64, scratch_operands = 2 : i64, tpu.core_type = #tpu.core_type<tc>, window_params = [{transform_indices = @transform_0, window_bounds = array<i64: 1, 100, 4>}, {pipeline_mode = #tpu.pipeline_mode<synchronous>, transform_indices = @transform_1, window_bounds = array<i64: 4, 32>}, {pipeline_mode = #tpu.pipeline_mode<synchronous>, transform_indices = @transform_2, window_bounds = array<i64: 4, 32>}, {pipeline_mode = #tpu.pipeline_mode<synchronous>, transform_indices = @transform_3, window_bounds = array<i64: 4, 32>}, {pipeline_mode = #tpu.pipeline_mode<synchronous>, transform_indices = @transform_4, window_bounds = array<i64: 32, 32>}, {pipeline_mode = #tpu.pipeline_mode<synchronous>, transform_indices = @transform_5, window_bounds = array<i64: 32, 32>}, {pipeline_mode = #tpu.pipeline_mode<synchronous>, transform_indices = @transform_6, window_bounds = array<i64: 32, 32>}, {pipeline_mode = #tpu.pipeline_mode<synchronous>, transform_indices = @transform_7, window_bounds = array<i64: 5, 32>}, {pipeline_mode = #tpu.pipeline_mode<synchronous>, transform_indices = @transform_8, window_bounds = array<i64: 32, 40>}, {pipeline_mode = #tpu.pipeline_mode<synchronous>, transform_indices = @transform_9, window_bounds = array<i64: 40, 40>}, {pipeline_mode = #tpu.pipeline_mode<synchronous>, transform_indices = @transform_10, window_bounds = array<i64: 5, 40>}, {pipeline_mode = #tpu.pipeline_mode<synchronous>, transform_indices = @transform_11, window_bounds = array<i64: 32, 40>}, {pipeline_mode = #tpu.pipeline_mode<synchronous>, transform_indices = @transform_12, window_bounds = array<i64: 40, 40>}, {pipeline_mode = #tpu.pipeline_mode<synchronous>, transform_indices = @transform_13, window_bounds = array<i64: 1, 40>}, {pipeline_mode = #tpu.pipeline_mode<synchronous>, transform_indices = @transform_14, window_bounds = array<i64: 40, 10>}, {pipeline_mode = #tpu.pipeline_mode<synchronous>, transform_indices = @transform_15, window_bounds = array<i64: 1, 10>}, {transform_indices = @transform_16, window_bounds = array<i64: 1, 1, 40>}, {transform_indices = @transform_17, window_bounds = array<i64: 1, 1, 10>}]} {
    %c0 = arith.constant 0 : index
    %c0_0 = arith.constant 0 : index
    %c0_1 = arith.constant 0 : index
    %0 = vector.load %arg1[%c0, %c0_0, %c0_1] : memref<1x100x4xf32, #tpu.memory_space<vmem>>, vector<1x99x4xf32>
    %1 = vector.shape_cast %0 : vector<1x99x4xf32> to vector<99x4xf32>
    %c0_2 = arith.constant 0 : index
    %c0_3 = arith.constant 0 : index
    %2 = vector.load %arg2[%c0_2, %c0_3] : memref<4x32xf32, #tpu.memory_space<vmem>>, vector<4x32xf32>
    %cst = arith.constant dense<0.000000e+00> : vector<99x32xf32>
    %3 = tpu.matmul %1, %2, %cst {dimension_numbers = #tpu.dot_dimension_numbers<[1], [0], [0], [1], [0, 0, 1, 1], [], []>} : vector<99x4xf32>, vector<4x32xf32>, vector<99x32xf32> -> vector<99x32xf32>
    %c0_4 = arith.constant 0 : index
    %c1 = arith.constant 1 : index
    %c0_5 = arith.constant 0 : index
    %4 = vector.load %arg1[%c0_4, %c1, %c0_5] : memref<1x100x4xf32, #tpu.memory_space<vmem>>, vector<1x99x4xf32>
    %5 = vector.shape_cast %4 : vector<1x99x4xf32> to vector<99x4xf32>
    %c0_6 = arith.constant 0 : index
    %c0_7 = arith.constant 0 : index
    %6 = vector.load %arg3[%c0_6, %c0_7] : memref<4x32xf32, #tpu.memory_space<vmem>>, vector<4x32xf32>
    %cst_8 = arith.constant dense<0.000000e+00> : vector<99x32xf32>
    %7 = tpu.matmul %5, %6, %cst_8 {dimension_numbers = #tpu.dot_dimension_numbers<[1], [0], [0], [1], [0, 0, 1, 1], [], []>} : vector<99x4xf32>, vector<4x32xf32>, vector<99x32xf32> -> vector<99x32xf32>
    %8 = arith.addf %3, %7 : vector<99x32xf32>
    %c0_9 = arith.constant 0 : index
    %c0_10 = arith.constant 0 : index
    %9 = vector.load %arg4[%c0_9, %c0_10] : memref<4x32xf32, #tpu.memory_space<vmem>>, vector<1x32xf32>
    %10 = vector.broadcast %9 : vector<1x32xf32> to vector<99x32xf32>
    %11 = arith.addf %8, %10 : vector<99x32xf32>
    %cst_11 = arith.constant 0.000000e+00 : f32
    %12 = vector.broadcast %cst_11 : f32 to vector<99x32xf32>
    %13 = arith.maximumf %11, %12 : vector<99x32xf32>
    %cst_12 = arith.constant dense<0.000000e+00> : vector<99xf32>
    %14 = vector.multi_reduction <add>, %13, %cst_12 [1] : vector<99x32xf32> to vector<99xf32>
    %15 = vector.shape_cast %14 : vector<99xf32> to vector<99x1xf32>
    %cst_13 = arith.constant 3.200000e+01 : f32
    %16 = vector.broadcast %cst_13 : f32 to vector<99x1xf32>
    %17 = arith.divf %15, %16 : vector<99x1xf32>
    %18 = arith.mulf %13, %13 : vector<99x32xf32>
    %cst_14 = arith.constant dense<0.000000e+00> : vector<99xf32>
    %19 = vector.multi_reduction <add>, %18, %cst_14 [1] : vector<99x32xf32> to vector<99xf32>
    %20 = vector.shape_cast %19 : vector<99xf32> to vector<99x1xf32>
    %cst_15 = arith.constant 3.200000e+01 : f32
    %21 = vector.broadcast %cst_15 : f32 to vector<99x1xf32>
    %22 = arith.divf %20, %21 : vector<99x1xf32>
    %23 = arith.mulf %17, %17 : vector<99x1xf32>
    %24 = arith.subf %22, %23 : vector<99x1xf32>
    %cst_16 = arith.constant 0.000000e+00 : f32
    %25 = vector.broadcast %cst_16 : f32 to vector<99x1xf32>
    %26 = arith.maximumf %24, %25 : vector<99x1xf32>
    %27 = vector.broadcast %17 : vector<99x1xf32> to vector<99x32xf32>
    %28 = arith.subf %13, %27 : vector<99x32xf32>
    %cst_17 = arith.constant 9.99999974E-6 : f32
    %29 = vector.broadcast %cst_17 : f32 to vector<99x1xf32>
    %30 = arith.addf %26, %29 : vector<99x1xf32>
    %31 = math.rsqrt %30 : vector<99x1xf32>
    %32 = vector.broadcast %31 : vector<99x1xf32> to vector<99x32xf32>
    %33 = arith.mulf %28, %32 : vector<99x32xf32>
    %c1_18 = arith.constant 1 : index
    %c0_19 = arith.constant 0 : index
    %34 = vector.load %arg4[%c1_18, %c0_19] : memref<4x32xf32, #tpu.memory_space<vmem>>, vector<1x32xf32>
    %35 = vector.broadcast %34 : vector<1x32xf32> to vector<99x32xf32>
    %36 = arith.mulf %33, %35 : vector<99x32xf32>
    %c2 = arith.constant 2 : index
    %c0_20 = arith.constant 0 : index
    %37 = vector.load %arg4[%c2, %c0_20] : memref<4x32xf32, #tpu.memory_space<vmem>>, vector<1x32xf32>
    %38 = vector.broadcast %37 : vector<1x32xf32> to vector<99x32xf32>
    %39 = arith.addf %36, %38 : vector<99x32xf32>
    %c0_21 = arith.constant 0 : index
    %c0_22 = arith.constant 0 : index
    %40 = vector.load %arg5[%c0_21, %c0_22] : memref<32x32xf32, #tpu.memory_space<vmem>>, vector<32x32xf32>
    %cst_23 = arith.constant dense<0.000000e+00> : vector<99x32xf32>
    %41 = tpu.matmul %39, %40, %cst_23 {dimension_numbers = #tpu.dot_dimension_numbers<[1], [0], [0], [1], [0, 0, 1, 1], [], []>} : vector<99x32xf32>, vector<32x32xf32>, vector<99x32xf32> -> vector<99x32xf32>
    %c3 = arith.constant 3 : index
    %c0_24 = arith.constant 0 : index
    %42 = vector.load %arg4[%c3, %c0_24] : memref<4x32xf32, #tpu.memory_space<vmem>>, vector<1x32xf32>
    %43 = vector.broadcast %42 : vector<1x32xf32> to vector<99x32xf32>
    %44 = arith.addf %41, %43 : vector<99x32xf32>
    %c0_25 = arith.constant 0 : index
    %c0_26 = arith.constant 0 : index
    %45 = vector.load %arg6[%c0_25, %c0_26] : memref<32x32xf32, #tpu.memory_space<vmem>>, vector<32x32xf32>
    %cst_27 = arith.constant dense<0.000000e+00> : vector<99x32xf32>
    %46 = tpu.matmul %44, %45, %cst_27 {dimension_numbers = #tpu.dot_dimension_numbers<[1], [0], [0], [1], [0, 0, 1, 1], [], []>} : vector<99x32xf32>, vector<32x32xf32>, vector<99x32xf32> -> vector<99x32xf32>
    %c0_28 = arith.constant 0 : index
    %c0_29 = arith.constant 0 : index
    %47 = vector.load %arg8[%c0_28, %c0_29] : memref<5x32xf32, #tpu.memory_space<vmem>>, vector<1x32xf32>
    %48 = vector.broadcast %47 : vector<1x32xf32> to vector<99x32xf32>
    %49 = arith.addf %46, %48 : vector<99x32xf32>
    %cst_30 = arith.constant 0.000000e+00 : f32
    %50 = vector.broadcast %cst_30 : f32 to vector<99x32xf32>
    %51 = arith.cmpf oge, %49, %50 : vector<99x32xf32>
    %c1_31 = arith.constant 1 : index
    %c0_32 = arith.constant 0 : index
    %52 = vector.load %arg8[%c1_31, %c0_32] : memref<5x32xf32, #tpu.memory_space<vmem>>, vector<1x32xf32>
    %53 = vector.broadcast %52 : vector<1x32xf32> to vector<99x32xf32>
    %54 = arith.mulf %53, %49 : vector<99x32xf32>
    %55 = arith.select %51, %49, %54 : vector<99x32xi1>, vector<99x32xf32>
    %c0_33 = arith.constant 0 : index
    %c0_34 = arith.constant 0 : index
    %56 = vector.load %arg7[%c0_33, %c0_34] : memref<32x32xf32, #tpu.memory_space<vmem>>, vector<32x32xf32>
    %cst_35 = arith.constant dense<0.000000e+00> : vector<99x32xf32>
    %57 = tpu.matmul %55, %56, %cst_35 {dimension_numbers = #tpu.dot_dimension_numbers<[1], [0], [0], [1], [0, 0, 1, 1], [], []>} : vector<99x32xf32>, vector<32x32xf32>, vector<99x32xf32> -> vector<99x32xf32>
    %c2_36 = arith.constant 2 : index
    %c0_37 = arith.constant 0 : index
    %58 = vector.load %arg8[%c2_36, %c0_37] : memref<5x32xf32, #tpu.memory_space<vmem>>, vector<1x32xf32>
    %59 = vector.broadcast %58 : vector<1x32xf32> to vector<99x32xf32>
    %60 = arith.addf %57, %59 : vector<99x32xf32>
    %61 = arith.addf %60, %44 : vector<99x32xf32>
    %cst_38 = arith.constant 0.000000e+00 : f32
    %62 = vector.broadcast %cst_38 : f32 to vector<99x32xf32>
    %63 = arith.cmpf oge, %61, %62 : vector<99x32xf32>
    %c3_39 = arith.constant 3 : index
    %c0_40 = arith.constant 0 : index
    %64 = vector.load %arg8[%c3_39, %c0_40] : memref<5x32xf32, #tpu.memory_space<vmem>>, vector<1x32xf32>
    %65 = vector.broadcast %64 : vector<1x32xf32> to vector<99x32xf32>
    %66 = arith.mulf %65, %61 : vector<99x32xf32>
    %67 = arith.select %63, %61, %66 : vector<99x32xi1>, vector<99x32xf32>
    %c0_41 = arith.constant 0 : index
    %c0_42 = arith.constant 0 : index
    %68 = vector.load %arg19[%c0_41, %c0_42] : memref<99x32xf32, #tpu.memory_space<vmem>>, vector<99x32xf32>
    tpu.vector_store %arg19[%c0_41, %c0_42], %67 {strides = array<i32>} : memref<99x32xf32, #tpu.memory_space<vmem>>, vector<99x32xf32>,
    %c0_43 = arith.constant 0 : index
    %c0_44 = arith.constant 0 : index
    %69 = tpu.strided_load %arg19[%c0_43, %c0_44] {strides = array<i32: 3, 1>} : memref<99x32xf32, #tpu.memory_space<vmem>>, vector<33x32xf32>
    %c1_45 = arith.constant 1 : index
    %c0_46 = arith.constant 0 : index
    %70 = tpu.strided_load %arg19[%c1_45, %c0_46] {strides = array<i32: 3, 1>} : memref<99x32xf32, #tpu.memory_space<vmem>>, vector<33x32xf32>
    %71 = arith.maximumf %69, %70 : vector<33x32xf32>
    %c2_47 = arith.constant 2 : index
    %c0_48 = arith.constant 0 : index
    %72 = tpu.strided_load %arg19[%c2_47, %c0_48] {strides = array<i32: 3, 1>} : memref<99x32xf32, #tpu.memory_space<vmem>>, vector<33x32xf32>
    %73 = arith.maximumf %71, %72 : vector<33x32xf32>
    %c0_49 = arith.constant 0 : index
    %c0_50 = arith.constant 0 : index
    %74 = vector.load %arg9[%c0_49, %c0_50] : memref<32x40xf32, #tpu.memory_space<vmem>>, vector<32x40xf32>
    %cst_51 = arith.constant dense<0.000000e+00> : vector<33x40xf32>
    %75 = tpu.matmul %73, %74, %cst_51 {dimension_numbers = #tpu.dot_dimension_numbers<[1], [0], [0], [1], [0, 0, 1, 1], [], []>} : vector<33x32xf32>, vector<32x40xf32>, vector<33x40xf32> -> vector<33x40xf32>
    %c0_52 = arith.constant 0 : index
    %c0_53 = arith.constant 0 : index
    %76 = vector.load %arg11[%c0_52, %c0_53] : memref<5x40xf32, #tpu.memory_space<vmem>>, vector<1x40xf32>
    %77 = vector.broadcast %76 : vector<1x40xf32> to vector<33x40xf32>
    %78 = arith.addf %75, %77 : vector<33x40xf32>
    %cst_54 = arith.constant 0.000000e+00 : f32
    %79 = vector.broadcast %cst_54 : f32 to vector<33x40xf32>
    %80 = arith.cmpf oge, %78, %79 : vector<33x40xf32>
    %c1_55 = arith.constant 1 : index
    %c0_56 = arith.constant 0 : index
    %81 = vector.load %arg11[%c1_55, %c0_56] : memref<5x40xf32, #tpu.memory_space<vmem>>, vector<1x40xf32>
    %82 = vector.broadcast %81 : vector<1x40xf32> to vector<33x40xf32>
    %83 = arith.mulf %82, %78 : vector<33x40xf32>
    %84 = arith.select %80, %78, %83 : vector<33x40xi1>, vector<33x40xf32>
    %c0_57 = arith.constant 0 : index
    %c0_58 = arith.constant 0 : index
    %85 = vector.load %arg10[%c0_57, %c0_58] : memref<40x40xf32, #tpu.memory_space<vmem>>, vector<40x40xf32>
    %cst_59 = arith.constant dense<0.000000e+00> : vector<33x40xf32>
    %86 = tpu.matmul %84, %85, %cst_59 {dimension_numbers = #tpu.dot_dimension_numbers<[1], [0], [0], [1], [0, 0, 1, 1], [], []>} : vector<33x40xf32>, vector<40x40xf32>, vector<33x40xf32> -> vector<33x40xf32>
    %c2_60 = arith.constant 2 : index
    %c0_61 = arith.constant 0 : index
    %87 = vector.load %arg11[%c2_60, %c0_61] : memref<5x40xf32, #tpu.memory_space<vmem>>, vector<1x40xf32>
    %88 = vector.broadcast %87 : vector<1x40xf32> to vector<33x40xf32>
    %89 = arith.addf %86, %88 : vector<33x40xf32>
    %c0_62 = arith.constant 0 : index
    %c0_63 = arith.constant 0 : index
    %90 = vector.load %arg12[%c0_62, %c0_63] : memref<32x40xf32, #tpu.memory_space<vmem>>, vector<32x40xf32>
    %cst_64 = arith.constant dense<0.000000e+00> : vector<33x40xf32>
    %91 = tpu.matmul %73, %90, %cst_64 {dimension_numbers = #tpu.dot_dimension_numbers<[1], [0], [0], [1], [0, 0, 1, 1], [], []>} : vector<33x32xf32>, vector<32x40xf32>, vector<33x40xf32> -> vector<33x40xf32>
    %c4 = arith.constant 4 : index
    %c0_65 = arith.constant 0 : index
    %92 = vector.load %arg11[%c4, %c0_65] : memref<5x40xf32, #tpu.memory_space<vmem>>, vector<1x40xf32>
    %93 = vector.broadcast %92 : vector<1x40xf32> to vector<33x40xf32>
    %94 = arith.addf %91, %93 : vector<33x40xf32>
    %95 = arith.addf %89, %94 : vector<33x40xf32>
    %cst_66 = arith.constant 0.000000e+00 : f32
    %96 = vector.broadcast %cst_66 : f32 to vector<33x40xf32>
    %97 = arith.cmpf oge, %95, %96 : vector<33x40xf32>
    %c3_67 = arith.constant 3 : index
    %c0_68 = arith.constant 0 : index
    %98 = vector.load %arg11[%c3_67, %c0_68] : memref<5x40xf32, #tpu.memory_space<vmem>>, vector<1x40xf32>
    %99 = vector.broadcast %98 : vector<1x40xf32> to vector<33x40xf32>
    %100 = arith.mulf %99, %95 : vector<33x40xf32>
    %101 = arith.select %97, %95, %100 : vector<33x40xi1>, vector<33x40xf32>
    %c0_69 = arith.constant 0 : index
    %c0_70 = arith.constant 0 : index
    %102 = vector.load %arg20[%c0_69, %c0_70] : memref<33x40xf32, #tpu.memory_space<vmem>>, vector<33x40xf32>
    tpu.vector_store %arg20[%c0_69, %c0_70], %101 {strides = array<i32>} : memref<33x40xf32, #tpu.memory_space<vmem>>, vector<33x40xf32>,
    %c0_71 = arith.constant 0 : index
    %c0_72 = arith.constant 0 : index
    %103 = tpu.strided_load %arg20[%c0_71, %c0_72] {strides = array<i32: 3, 1>} : memref<33x40xf32, #tpu.memory_space<vmem>>, vector<11x40xf32>
    %c1_73 = arith.constant 1 : index
    %c0_74 = arith.constant 0 : index
    %104 = tpu.strided_load %arg20[%c1_73, %c0_74] {strides = array<i32: 3, 1>} : memref<33x40xf32, #tpu.memory_space<vmem>>, vector<11x40xf32>
    %105 = arith.maximumf %103, %104 : vector<11x40xf32>
    %c2_75 = arith.constant 2 : index
    %c0_76 = arith.constant 0 : index
    %106 = tpu.strided_load %arg20[%c2_75, %c0_76] {strides = array<i32: 3, 1>} : memref<33x40xf32, #tpu.memory_space<vmem>>, vector<11x40xf32>
    %107 = arith.maximumf %105, %106 : vector<11x40xf32>
    %c0_77 = arith.constant 0 : index
    %c0_78 = arith.constant 0 : index
    %108 = vector.load %arg13[%c0_77, %c0_78] : memref<40x40xf32, #tpu.memory_space<vmem>>, vector<40x40xf32>
    %cst_79 = arith.constant dense<0.000000e+00> : vector<11x40xf32>
    %109 = tpu.matmul %107, %108, %cst_79 {dimension_numbers = #tpu.dot_dimension_numbers<[1], [0], [0], [1], [0, 0, 1, 1], [], []>} : vector<11x40xf32>, vector<40x40xf32>, vector<11x40xf32> -> vector<11x40xf32>
    %c0_80 = arith.constant 0 : index
    %c0_81 = arith.constant 0 : index
    %110 = vector.load %arg14[%c0_80, %c0_81] : memref<1x40xf32, #tpu.memory_space<vmem>>, vector<1x40xf32>
    %111 = vector.broadcast %110 : vector<1x40xf32> to vector<11x40xf32>
    %112 = arith.addf %109, %111 : vector<11x40xf32>
    %cst_82 = arith.constant dense<0.000000e+00> : vector<40xf32>
    %113 = vector.multi_reduction <add>, %112, %cst_82 [0] : vector<11x40xf32> to vector<40xf32>
    %114 = vector.shape_cast %113 : vector<40xf32> to vector<1x40xf32>
    %cst_83 = arith.constant 1.100000e+01 : f32
    %115 = vector.broadcast %cst_83 : f32 to vector<1x40xf32>
    %116 = arith.divf %114, %115 : vector<1x40xf32>
    %c0_84 = arith.constant 0 : index
    %c0_85 = arith.constant 0 : index
    %c0_86 = arith.constant 0 : index
    %117 = vector.load %arg17[%c0_84, %c0_85, %c0_86] : memref<1x1x40xf32, #tpu.memory_space<vmem>>, vector<1x1x40xf32>
    %118 = vector.shape_cast %117 : vector<1x1x40xf32> to vector<1x40xf32>
    %119 = vector.shape_cast %116 : vector<1x40xf32> to vector<1x1x40xf32>
    tpu.vector_store %arg17[%c0_84, %c0_85, %c0_86], %119 {strides = array<i32>} : memref<1x1x40xf32, #tpu.memory_space<vmem>>, vector<1x1x40xf32>,
    %c0_87 = arith.constant 0 : index
    %c0_88 = arith.constant 0 : index
    %120 = vector.load %arg15[%c0_87, %c0_88] : memref<40x10xf32, #tpu.memory_space<vmem>>, vector<40x10xf32>
    %cst_89 = arith.constant dense<0.000000e+00> : vector<1x10xf32>
    %121 = tpu.matmul %116, %120, %cst_89 {dimension_numbers = #tpu.dot_dimension_numbers<[1], [0], [0], [1], [0, 0, 1, 1], [], []>} : vector<1x40xf32>, vector<40x10xf32>, vector<1x10xf32> -> vector<1x10xf32>
    %c0_90 = arith.constant 0 : index
    %c0_91 = arith.constant 0 : index
    %122 = vector.load %arg16[%c0_90, %c0_91] : memref<1x10xf32, #tpu.memory_space<vmem>>, vector<1x10xf32>
    %123 = arith.addf %121, %122 : vector<1x10xf32>
    %c0_92 = arith.constant 0 : index
    %c0_93 = arith.constant 0 : index
    %c0_94 = arith.constant 0 : index
    %124 = vector.load %arg18[%c0_92, %c0_93, %c0_94] : memref<1x1x10xf32, #tpu.memory_space<vmem>>, vector<1x1x10xf32>
    %125 = vector.shape_cast %124 : vector<1x1x10xf32> to vector<1x10xf32>
    %126 = vector.shape_cast %123 : vector<1x10xf32> to vector<1x1x10xf32>
    tpu.vector_store %arg18[%c0_92, %c0_93, %c0_94], %126 {strides = array<i32>} : memref<1x1x10xf32, #tpu.memory_space<vmem>>, vector<1x1x10xf32>,
    return
  }
  func.func @transform_0(%arg0: i32) -> (i32, i32, i32) {
    %c0_i32 = arith.constant 0 : i32
    %c0_i32_0 = arith.constant 0 : i32
    %c0_i32_1 = arith.constant 0 : i32
    return %arg0, %c0_i32, %c0_i32_0 : i32, i32, i32
  }
  func.func @transform_1(%arg0: i32) -> (i32, i32) {
    %c0_i32 = arith.constant 0 : i32
    %c0_i32_0 = arith.constant 0 : i32
    %c0_i32_1 = arith.constant 0 : i32
    return %c0_i32, %c0_i32_0 : i32, i32
  }
  func.func @transform_2(%arg0: i32) -> (i32, i32) {
    %c0_i32 = arith.constant 0 : i32
    %c0_i32_0 = arith.constant 0 : i32
    %c0_i32_1 = arith.constant 0 : i32
    return %c0_i32, %c0_i32_0 : i32, i32
  }
  func.func @transform_3(%arg0: i32) -> (i32, i32) {
    %c0_i32 = arith.constant 0 : i32
    %c0_i32_0 = arith.constant 0 : i32
    %c0_i32_1 = arith.constant 0 : i32
    return %c0_i32, %c0_i32_0 : i32, i32
  }
  func.func @transform_4(%arg0: i32) -> (i32, i32) {
    %c0_i32 = arith.constant 0 : i32
    %c0_i32_0 = arith.constant 0 : i32
    %c0_i32_1 = arith.constant 0 : i32
    return %c0_i32, %c0_i32_0 : i32, i32
  }
  func.func @transform_5(%arg0: i32) -> (i32, i32) {
    %c0_i32 = arith.constant 0 : i32
    %c0_i32_0 = arith.constant 0 : i32
    %c0_i32_1 = arith.constant 0 : i32
    return %c0_i32, %c0_i32_0 : i32, i32
  }
  func.func @transform_6(%arg0: i32) -> (i32, i32) {
    %c0_i32 = arith.constant 0 : i32
    %c0_i32_0 = arith.constant 0 : i32
    %c0_i32_1 = arith.constant 0 : i32
    return %c0_i32, %c0_i32_0 : i32, i32
  }
  func.func @transform_7(%arg0: i32) -> (i32, i32) {
    %c0_i32 = arith.constant 0 : i32
    %c0_i32_0 = arith.constant 0 : i32
    %c0_i32_1 = arith.constant 0 : i32
    return %c0_i32, %c0_i32_0 : i32, i32
  }
  func.func @transform_8(%arg0: i32) -> (i32, i32) {
    %c0_i32 = arith.constant 0 : i32
    %c0_i32_0 = arith.constant 0 : i32
    %c0_i32_1 = arith.constant 0 : i32
    return %c0_i32, %c0_i32_0 : i32, i32
  }
  func.func @transform_9(%arg0: i32) -> (i32, i32) {
    %c0_i32 = arith.constant 0 : i32
    %c0_i32_0 = arith.constant 0 : i32
    %c0_i32_1 = arith.constant 0 : i32
    return %c0_i32, %c0_i32_0 : i32, i32
  }
  func.func @transform_10(%arg0: i32) -> (i32, i32) {
    %c0_i32 = arith.constant 0 : i32
    %c0_i32_0 = arith.constant 0 : i32
    %c0_i32_1 = arith.constant 0 : i32
    return %c0_i32, %c0_i32_0 : i32, i32
  }
  func.func @transform_11(%arg0: i32) -> (i32, i32) {
    %c0_i32 = arith.constant 0 : i32
    %c0_i32_0 = arith.constant 0 : i32
    %c0_i32_1 = arith.constant 0 : i32
    return %c0_i32, %c0_i32_0 : i32, i32
  }
  func.func @transform_12(%arg0: i32) -> (i32, i32) {
    %c0_i32 = arith.constant 0 : i32
    %c0_i32_0 = arith.constant 0 : i32
    %c0_i32_1 = arith.constant 0 : i32
    return %c0_i32, %c0_i32_0 : i32, i32
  }
  func.func @transform_13(%arg0: i32) -> (i32, i32) {
    %c0_i32 = arith.constant 0 : i32
    %c0_i32_0 = arith.constant 0 : i32
    %c0_i32_1 = arith.constant 0 : i32
    return %c0_i32, %c0_i32_0 : i32, i32
  }
  func.func @transform_14(%arg0: i32) -> (i32, i32) {
    %c0_i32 = arith.constant 0 : i32
    %c0_i32_0 = arith.constant 0 : i32
    %c0_i32_1 = arith.constant 0 : i32
    return %c0_i32, %c0_i32_0 : i32, i32
  }
  func.func @transform_15(%arg0: i32) -> (i32, i32) {
    %c0_i32 = arith.constant 0 : i32
    %c0_i32_0 = arith.constant 0 : i32
    %c0_i32_1 = arith.constant 0 : i32
    return %c0_i32, %c0_i32_0 : i32, i32
  }
  func.func @transform_16(%arg0: i32) -> (i32, i32, i32) {
    %c0_i32 = arith.constant 0 : i32
    %c0_i32_0 = arith.constant 0 : i32
    %c0_i32_1 = arith.constant 0 : i32
    return %arg0, %c0_i32, %c0_i32_0 : i32, i32, i32
  }
  func.func @transform_17(%arg0: i32) -> (i32, i32, i32) {
    %c0_i32 = arith.constant 0 : i32
    %c0_i32_0 = arith.constant 0 : i32
    %c0_i32_1 = arith.constant 0 : i32
    return %arg0, %c0_i32, %c0_i32_0 : i32, i32, i32
  }
}

module attributes {stable_mosaic.version = 11 : i64} {
  func.func @_extract_kernel(%arg0: i32, %arg1: memref<1x200x4xf32, #tpu.memory_space<vmem>>, %arg2: memref<1x1x40xf32, #tpu.memory_space<vmem>>, %arg3: memref<4x32xf32, #tpu.memory_space<vmem>>, %arg4: memref<4x32xf32, #tpu.memory_space<vmem>>, %arg5: memref<7x32xf32, #tpu.memory_space<vmem>>, %arg6: memref<32x32xf32, #tpu.memory_space<vmem>>, %arg7: memref<2x32x48xf32, #tpu.memory_space<vmem>>, %arg8: memref<1x40x48xf32, #tpu.memory_space<vmem>>, %arg9: memref<2x11x48xf32, #tpu.memory_space<vmem>>, %arg10: memref<2x48x32xf32, #tpu.memory_space<vmem>>, %arg11: memref<32x32xf32, #tpu.memory_space<vmem>>, %arg12: memref<32x8xf32, #tpu.memory_space<vmem>>, %arg13: memref<1xf32, #tpu.memory_space<smem>>, %arg14: memref<1x200x4xf32, #tpu.memory_space<vmem>>) attributes {dimension_semantics = [#tpu.dimension_semantics<parallel>], iteration_bounds = array<i64: 2>, scalar_prefetch = 0 : i64, scratch_operands = 0 : i64, tpu.core_type = #tpu.core_type<tc>, window_params = [{transform_indices = @transform_0, window_bounds = array<i64: 1, 200, 4>}, {transform_indices = @transform_1, window_bounds = array<i64: 1, 1, 40>}, {pipeline_mode = #tpu.pipeline_mode<synchronous>, transform_indices = @transform_2, window_bounds = array<i64: 4, 32>}, {pipeline_mode = #tpu.pipeline_mode<synchronous>, transform_indices = @transform_3, window_bounds = array<i64: 4, 32>}, {pipeline_mode = #tpu.pipeline_mode<synchronous>, transform_indices = @transform_4, window_bounds = array<i64: 7, 32>}, {pipeline_mode = #tpu.pipeline_mode<synchronous>, transform_indices = @transform_5, window_bounds = array<i64: 32, 32>}, {pipeline_mode = #tpu.pipeline_mode<synchronous>, transform_indices = @transform_6, window_bounds = array<i64: 2, 32, 48>}, {pipeline_mode = #tpu.pipeline_mode<synchronous>, transform_indices = @transform_7, window_bounds = array<i64: 1, 40, 48>}, {pipeline_mode = #tpu.pipeline_mode<synchronous>, transform_indices = @transform_8, window_bounds = array<i64: 2, 11, 48>}, {pipeline_mode = #tpu.pipeline_mode<synchronous>, transform_indices = @transform_9, window_bounds = array<i64: 2, 48, 32>}, {pipeline_mode = #tpu.pipeline_mode<synchronous>, transform_indices = @transform_10, window_bounds = array<i64: 32, 32>}, {pipeline_mode = #tpu.pipeline_mode<synchronous>, transform_indices = @transform_11, window_bounds = array<i64: 32, 8>}, {transform_indices = @transform_12, window_bounds = array<i64: 1>}, {transform_indices = @transform_13, window_bounds = array<i64: 1, 200, 4>}]} {
    %c0 = arith.constant 0 : index
    %c0_0 = arith.constant 0 : index
    %c0_1 = arith.constant 0 : index
    %0 = vector.load %arg1[%c0, %c0_0, %c0_1] : memref<1x200x4xf32, #tpu.memory_space<vmem>>, vector<1x199x4xf32>
    %1 = vector.shape_cast %0 : vector<1x199x4xf32> to vector<199x4xf32>
    %c0_2 = arith.constant 0 : index
    %c0_3 = arith.constant 0 : index
    %2 = vector.load %arg3[%c0_2, %c0_3] : memref<4x32xf32, #tpu.memory_space<vmem>>, vector<4x32xf32>
    %cst = arith.constant dense<0.000000e+00> : vector<199x32xf32>
    %3 = tpu.matmul %1, %2, %cst {dimension_numbers = #tpu.dot_dimension_numbers<[1], [0], [0], [1], [0, 0, 1, 1], [], []>} : vector<199x4xf32>, vector<4x32xf32>, vector<199x32xf32> -> vector<199x32xf32>
    %c0_4 = arith.constant 0 : index
    %c1 = arith.constant 1 : index
    %c0_5 = arith.constant 0 : index
    %4 = vector.load %arg1[%c0_4, %c1, %c0_5] : memref<1x200x4xf32, #tpu.memory_space<vmem>>, vector<1x199x4xf32>
    %5 = vector.shape_cast %4 : vector<1x199x4xf32> to vector<199x4xf32>
    %c0_6 = arith.constant 0 : index
    %c0_7 = arith.constant 0 : index
    %6 = vector.load %arg4[%c0_6, %c0_7] : memref<4x32xf32, #tpu.memory_space<vmem>>, vector<4x32xf32>
    %cst_8 = arith.constant dense<0.000000e+00> : vector<199x32xf32>
    %7 = tpu.matmul %5, %6, %cst_8 {dimension_numbers = #tpu.dot_dimension_numbers<[1], [0], [0], [1], [0, 0, 1, 1], [], []>} : vector<199x4xf32>, vector<4x32xf32>, vector<199x32xf32> -> vector<199x32xf32>
    %8 = arith.addf %3, %7 : vector<199x32xf32>
    %c0_9 = arith.constant 0 : index
    %c0_10 = arith.constant 0 : index
    %9 = vector.load %arg5[%c0_9, %c0_10] : memref<7x32xf32, #tpu.memory_space<vmem>>, vector<1x32xf32>
    %10 = vector.broadcast %9 : vector<1x32xf32> to vector<199x32xf32>
    %11 = arith.addf %8, %10 : vector<199x32xf32>
    %cst_11 = arith.constant 0.000000e+00 : f32
    %12 = vector.broadcast %cst_11 : f32 to vector<199x32xf32>
    %13 = arith.maximumf %11, %12 : vector<199x32xf32>
    %cst_12 = arith.constant dense<0.000000e+00> : vector<199xf32>
    %14 = vector.multi_reduction <add>, %13, %cst_12 [1] : vector<199x32xf32> to vector<199xf32>
    %15 = vector.shape_cast %14 : vector<199xf32> to vector<199x1xf32>
    %cst_13 = arith.constant 3.200000e+01 : f32
    %16 = vector.broadcast %cst_13 : f32 to vector<199x1xf32>
    %17 = arith.divf %15, %16 : vector<199x1xf32>
    %18 = arith.mulf %13, %13 : vector<199x32xf32>
    %cst_14 = arith.constant dense<0.000000e+00> : vector<199xf32>
    %19 = vector.multi_reduction <add>, %18, %cst_14 [1] : vector<199x32xf32> to vector<199xf32>
    %20 = vector.shape_cast %19 : vector<199xf32> to vector<199x1xf32>
    %cst_15 = arith.constant 3.200000e+01 : f32
    %21 = vector.broadcast %cst_15 : f32 to vector<199x1xf32>
    %22 = arith.divf %20, %21 : vector<199x1xf32>
    %23 = arith.mulf %17, %17 : vector<199x1xf32>
    %24 = arith.subf %22, %23 : vector<199x1xf32>
    %cst_16 = arith.constant 0.000000e+00 : f32
    %25 = vector.broadcast %cst_16 : f32 to vector<199x1xf32>
    %26 = arith.maximumf %24, %25 : vector<199x1xf32>
    %27 = vector.broadcast %17 : vector<199x1xf32> to vector<199x32xf32>
    %28 = arith.subf %13, %27 : vector<199x32xf32>
    %cst_17 = arith.constant 9.99999974E-6 : f32
    %29 = vector.broadcast %cst_17 : f32 to vector<199x1xf32>
    %30 = arith.addf %26, %29 : vector<199x1xf32>
    %31 = math.rsqrt %30 : vector<199x1xf32>
    %32 = vector.broadcast %31 : vector<199x1xf32> to vector<199x32xf32>
    %33 = arith.mulf %28, %32 : vector<199x32xf32>
    %c1_18 = arith.constant 1 : index
    %c0_19 = arith.constant 0 : index
    %34 = vector.load %arg5[%c1_18, %c0_19] : memref<7x32xf32, #tpu.memory_space<vmem>>, vector<1x32xf32>
    %35 = vector.broadcast %34 : vector<1x32xf32> to vector<199x32xf32>
    %36 = arith.mulf %33, %35 : vector<199x32xf32>
    %c2 = arith.constant 2 : index
    %c0_20 = arith.constant 0 : index
    %37 = vector.load %arg5[%c2, %c0_20] : memref<7x32xf32, #tpu.memory_space<vmem>>, vector<1x32xf32>
    %38 = vector.broadcast %37 : vector<1x32xf32> to vector<199x32xf32>
    %39 = arith.addf %36, %38 : vector<199x32xf32>
    %c0_21 = arith.constant 0 : index
    %c0_22 = arith.constant 0 : index
    %40 = vector.load %arg6[%c0_21, %c0_22] : memref<32x32xf32, #tpu.memory_space<vmem>>, vector<32x32xf32>
    %cst_23 = arith.constant dense<0.000000e+00> : vector<199x32xf32>
    %41 = tpu.matmul %39, %40, %cst_23 {dimension_numbers = #tpu.dot_dimension_numbers<[1], [0], [0], [1], [0, 0, 1, 1], [], []>} : vector<199x32xf32>, vector<32x32xf32>, vector<199x32xf32> -> vector<199x32xf32>
    %c3 = arith.constant 3 : index
    %c0_24 = arith.constant 0 : index
    %42 = vector.load %arg5[%c3, %c0_24] : memref<7x32xf32, #tpu.memory_space<vmem>>, vector<1x32xf32>
    %43 = vector.broadcast %42 : vector<1x32xf32> to vector<199x32xf32>
    %44 = arith.addf %41, %43 : vector<199x32xf32>
    %c0_25 = arith.constant 0 : index
    %c0_26 = arith.constant 0 : index
    %c0_27 = arith.constant 0 : index
    %45 = vector.load %arg2[%c0_25, %c0_26, %c0_27] : memref<1x1x40xf32, #tpu.memory_space<vmem>>, vector<1x1x40xf32>
    %46 = vector.shape_cast %45 : vector<1x1x40xf32> to vector<1x40xf32>
    %c0_28 = arith.constant 0 : index
    %c0_29 = arith.constant 0 : index
    %c0_30 = arith.constant 0 : index
    %47 = vector.load %arg9[%c0_28, %c0_29, %c0_30] : memref<2x11x48xf32, #tpu.memory_space<vmem>>, vector<1x11x48xf32>
    %48 = vector.shape_cast %47 : vector<1x11x48xf32> to vector<11x48xf32>
    %c0_31 = arith.constant 0 : index
    %c0_32 = arith.constant 0 : index
    %c0_33 = arith.constant 0 : index
    %49 = vector.load %arg7[%c0_31, %c0_32, %c0_33] : memref<2x32x48xf32, #tpu.memory_space<vmem>>, vector<1x32x48xf32>
    %50 = vector.shape_cast %49 : vector<1x32x48xf32> to vector<32x48xf32>
    %cst_34 = arith.constant dense<0.000000e+00> : vector<199x48xf32>
    %51 = tpu.matmul %44, %50, %cst_34 {dimension_numbers = #tpu.dot_dimension_numbers<[1], [0], [0], [1], [0, 0, 1, 1], [], []>} : vector<199x32xf32>, vector<32x48xf32>, vector<199x48xf32> -> vector<199x48xf32>
    %c0_35 = arith.constant 0 : index
    %c0_36 = arith.constant 0 : index
    %c0_37 = arith.constant 0 : index
    %52 = vector.load %arg8[%c0_35, %c0_36, %c0_37] : memref<1x40x48xf32, #tpu.memory_space<vmem>>, vector<1x40x48xf32>
    %53 = vector.shape_cast %52 : vector<1x40x48xf32> to vector<40x48xf32>
    %cst_38 = arith.constant dense<0.000000e+00> : vector<1x48xf32>
    %54 = tpu.matmul %46, %53, %cst_38 {dimension_numbers = #tpu.dot_dimension_numbers<[1], [0], [0], [1], [0, 0, 1, 1], [], []>} : vector<1x40xf32>, vector<40x48xf32>, vector<1x48xf32> -> vector<1x48xf32>
    %55 = vector.broadcast %54 : vector<1x48xf32> to vector<199x48xf32>
    %56 = arith.addf %51, %55 : vector<199x48xf32>
    %57 = vector.extract_strided_slice %48 {offsets = [0, 0], sizes = [1, 48], strides = [1, 1]} : vector<11x48xf32> to vector<1x48xf32>
    %58 = vector.broadcast %57 : vector<1x48xf32> to vector<199x48xf32>
    %59 = arith.addf %56, %58 : vector<199x48xf32>
    %cst_39 = arith.constant 0.000000e+00 : f32
    %60 = vector.broadcast %cst_39 : f32 to vector<199x48xf32>
    %61 = arith.cmpf oge, %59, %60 : vector<199x48xf32>
    %62 = vector.extract_strided_slice %48 {offsets = [1, 0], sizes = [1, 48], strides = [1, 1]} : vector<11x48xf32> to vector<1x48xf32>
    %63 = vector.broadcast %62 : vector<1x48xf32> to vector<199x48xf32>
    %64 = arith.mulf %63, %59 : vector<199x48xf32>
    %65 = arith.select %61, %59, %64 : vector<199x48xi1>, vector<199x48xf32>
    %66 = vector.shape_cast %65 : vector<199x48xf32> to vector<1x199x48xf32>
    %cst_40 = arith.constant dense<0.000000e+00> : vector<1xf32>
    %67 = vector.multi_reduction <add>, %66, %cst_40 [1, 2] : vector<1x199x48xf32> to vector<1xf32>
    %68 = vector.shape_cast %67 : vector<1xf32> to vector<1x1x1xf32>
    %69 = vector.extract %68[0, 0, 0] : f32 from vector<1x1x1xf32>
    %cst_41 = arith.constant 9.552000e+03 : f32
    %70 = arith.divf %69, %cst_41 : f32
    %71 = arith.mulf %65, %65 : vector<199x48xf32>
    %72 = vector.shape_cast %71 : vector<199x48xf32> to vector<1x199x48xf32>
    %cst_42 = arith.constant dense<0.000000e+00> : vector<1xf32>
    %73 = vector.multi_reduction <add>, %72, %cst_42 [1, 2] : vector<1x199x48xf32> to vector<1xf32>
    %74 = vector.shape_cast %73 : vector<1xf32> to vector<1x1x1xf32>
    %75 = vector.extract %74[0, 0, 0] : f32 from vector<1x1x1xf32>
    %cst_43 = arith.constant 9.552000e+03 : f32
    %76 = arith.divf %75, %cst_43 : f32
    %77 = arith.mulf %70, %70 : f32
    %78 = arith.subf %76, %77 : f32
    %cst_44 = arith.constant 0.000000e+00 : f32
    %79 = arith.maximumf %78, %cst_44 : f32
    %80 = vector.broadcast %70 : f32 to vector<199x48xf32>
    %81 = arith.subf %65, %80 : vector<199x48xf32>
    %cst_45 = arith.constant 9.99999993E-9 : f32
    %82 = arith.addf %79, %cst_45 : f32
    %83 = math.rsqrt %82 : f32
    %84 = vector.broadcast %83 : f32 to vector<199x48xf32>
    %85 = arith.mulf %81, %84 : vector<199x48xf32>
    %86 = vector.extract_strided_slice %48 {offsets = [2, 0], sizes = [1, 48], strides = [1, 1]} : vector<11x48xf32> to vector<1x48xf32>
    %87 = vector.broadcast %86 : vector<1x48xf32> to vector<199x48xf32>
    %88 = arith.mulf %85, %87 : vector<199x48xf32>
    %89 = vector.extract_strided_slice %48 {offsets = [3, 0], sizes = [1, 48], strides = [1, 1]} : vector<11x48xf32> to vector<1x48xf32>
    %90 = vector.broadcast %89 : vector<1x48xf32> to vector<199x48xf32>
    %91 = arith.addf %88, %90 : vector<199x48xf32>
    %cst_46 = arith.constant 0.000000e+00 : f32
    %92 = vector.broadcast %cst_46 : f32 to vector<1x48xf32>
    %93 = vector.extract_strided_slice %91 {offsets = [0, 0], sizes = [198, 48], strides = [1, 1]} : vector<199x48xf32> to vector<198x48xf32>
    %94 = tpu.concatenate %92, %93 in 0 : vector<1x48xf32>, vector<198x48xf32> -> vector<199x48xf32>
    %95 = vector.extract_strided_slice %91 {offsets = [1, 0], sizes = [198, 48], strides = [1, 1]} : vector<199x48xf32> to vector<198x48xf32>
    %96 = tpu.concatenate %95, %92 in 0 : vector<198x48xf32>, vector<1x48xf32> -> vector<199x48xf32>
    %97 = vector.extract_strided_slice %48 {offsets = [4, 0], sizes = [1, 48], strides = [1, 1]} : vector<11x48xf32> to vector<1x48xf32>
    %98 = vector.broadcast %97 : vector<1x48xf32> to vector<199x48xf32>
    %99 = arith.mulf %94, %98 : vector<199x48xf32>
    %100 = vector.extract_strided_slice %48 {offsets = [5, 0], sizes = [1, 48], strides = [1, 1]} : vector<11x48xf32> to vector<1x48xf32>
    %101 = vector.broadcast %100 : vector<1x48xf32> to vector<199x48xf32>
    %102 = arith.mulf %91, %101 : vector<199x48xf32>
    %103 = arith.addf %99, %102 : vector<199x48xf32>
    %104 = vector.extract_strided_slice %48 {offsets = [6, 0], sizes = [1, 48], strides = [1, 1]} : vector<11x48xf32> to vector<1x48xf32>
    %105 = vector.broadcast %104 : vector<1x48xf32> to vector<199x48xf32>
    %106 = arith.mulf %96, %105 : vector<199x48xf32>
    %107 = arith.addf %103, %106 : vector<199x48xf32>
    %108 = vector.extract_strided_slice %48 {offsets = [7, 0], sizes = [1, 48], strides = [1, 1]} : vector<11x48xf32> to vector<1x48xf32>
    %109 = vector.broadcast %108 : vector<1x48xf32> to vector<199x48xf32>
    %110 = arith.addf %107, %109 : vector<199x48xf32>
    %cst_47 = arith.constant 0.000000e+00 : f32
    %111 = vector.broadcast %cst_47 : f32 to vector<199x48xf32>
    %112 = arith.cmpf oge, %110, %111 : vector<199x48xf32>
    %113 = vector.extract_strided_slice %48 {offsets = [8, 0], sizes = [1, 48], strides = [1, 1]} : vector<11x48xf32> to vector<1x48xf32>
    %114 = vector.broadcast %113 : vector<1x48xf32> to vector<199x48xf32>
    %115 = arith.mulf %114, %110 : vector<199x48xf32>
    %116 = arith.select %112, %110, %115 : vector<199x48xi1>, vector<199x48xf32>
    %117 = vector.shape_cast %116 : vector<199x48xf32> to vector<1x199x48xf32>
    %cst_48 = arith.constant dense<0.000000e+00> : vector<1xf32>
    %118 = vector.multi_reduction <add>, %117, %cst_48 [1, 2] : vector<1x199x48xf32> to vector<1xf32>
    %119 = vector.shape_cast %118 : vector<1xf32> to vector<1x1x1xf32>
    %120 = vector.extract %119[0, 0, 0] : f32 from vector<1x1x1xf32>
    %cst_49 = arith.constant 9.552000e+03 : f32
    %121 = arith.divf %120, %cst_49 : f32
    %122 = arith.mulf %116, %116 : vector<199x48xf32>
    %123 = vector.shape_cast %122 : vector<199x48xf32> to vector<1x199x48xf32>
    %cst_50 = arith.constant dense<0.000000e+00> : vector<1xf32>
    %124 = vector.multi_reduction <add>, %123, %cst_50 [1, 2] : vector<1x199x48xf32> to vector<1xf32>
    %125 = vector.shape_cast %124 : vector<1xf32> to vector<1x1x1xf32>
    %126 = vector.extract %125[0, 0, 0] : f32 from vector<1x1x1xf32>
    %cst_51 = arith.constant 9.552000e+03 : f32
    %127 = arith.divf %126, %cst_51 : f32
    %128 = arith.mulf %121, %121 : f32
    %129 = arith.subf %127, %128 : f32
    %cst_52 = arith.constant 0.000000e+00 : f32
    %130 = arith.maximumf %129, %cst_52 : f32
    %131 = vector.broadcast %121 : f32 to vector<199x48xf32>
    %132 = arith.subf %116, %131 : vector<199x48xf32>
    %cst_53 = arith.constant 9.99999993E-9 : f32
    %133 = arith.addf %130, %cst_53 : f32
    %134 = math.rsqrt %133 : f32
    %135 = vector.broadcast %134 : f32 to vector<199x48xf32>
    %136 = arith.mulf %132, %135 : vector<199x48xf32>
    %137 = vector.extract_strided_slice %48 {offsets = [9, 0], sizes = [1, 48], strides = [1, 1]} : vector<11x48xf32> to vector<1x48xf32>
    %138 = vector.broadcast %137 : vector<1x48xf32> to vector<199x48xf32>
    %139 = arith.mulf %136, %138 : vector<199x48xf32>
    %140 = vector.extract_strided_slice %48 {offsets = [10, 0], sizes = [1, 48], strides = [1, 1]} : vector<11x48xf32> to vector<1x48xf32>
    %141 = vector.broadcast %140 : vector<1x48xf32> to vector<199x48xf32>
    %142 = arith.addf %139, %141 : vector<199x48xf32>
    %c0_54 = arith.constant 0 : index
    %c0_55 = arith.constant 0 : index
    %c0_56 = arith.constant 0 : index
    %143 = vector.load %arg10[%c0_54, %c0_55, %c0_56] : memref<2x48x32xf32, #tpu.memory_space<vmem>>, vector<1x48x32xf32>
    %144 = vector.shape_cast %143 : vector<1x48x32xf32> to vector<48x32xf32>
    %cst_57 = arith.constant dense<0.000000e+00> : vector<199x32xf32>
    %145 = tpu.matmul %142, %144, %cst_57 {dimension_numbers = #tpu.dot_dimension_numbers<[1], [0], [0], [1], [0, 0, 1, 1], [], []>} : vector<199x48xf32>, vector<48x32xf32>, vector<199x32xf32> -> vector<199x32xf32>
    %146 = arith.addf %44, %145 : vector<199x32xf32>
    %c5 = arith.constant 5 : index
    %c0_58 = arith.constant 0 : index
    %147 = vector.load %arg5[%c5, %c0_58] : memref<7x32xf32, #tpu.memory_space<vmem>>, vector<1x32xf32>
    %148 = vector.broadcast %147 : vector<1x32xf32> to vector<199x32xf32>
    %149 = arith.addf %146, %148 : vector<199x32xf32>
    %c1_59 = arith.constant 1 : index
    %c0_60 = arith.constant 0 : index
    %c0_61 = arith.constant 0 : index
    %150 = vector.load %arg9[%c1_59, %c0_60, %c0_61] : memref<2x11x48xf32, #tpu.memory_space<vmem>>, vector<1x11x48xf32>
    %151 = vector.shape_cast %150 : vector<1x11x48xf32> to vector<11x48xf32>
    %c1_62 = arith.constant 1 : index
    %c0_63 = arith.constant 0 : index
    %c0_64 = arith.constant 0 : index
    %152 = vector.load %arg7[%c1_62, %c0_63, %c0_64] : memref<2x32x48xf32, #tpu.memory_space<vmem>>, vector<1x32x48xf32>
    %153 = vector.shape_cast %152 : vector<1x32x48xf32> to vector<32x48xf32>
    %cst_65 = arith.constant dense<0.000000e+00> : vector<199x48xf32>
    %154 = tpu.matmul %149, %153, %cst_65 {dimension_numbers = #tpu.dot_dimension_numbers<[1], [0], [0], [1], [0, 0, 1, 1], [], []>} : vector<199x32xf32>, vector<32x48xf32>, vector<199x48xf32> -> vector<199x48xf32>
    %155 = vector.extract_strided_slice %151 {offsets = [0, 0], sizes = [1, 48], strides = [1, 1]} : vector<11x48xf32> to vector<1x48xf32>
    %156 = vector.broadcast %155 : vector<1x48xf32> to vector<199x48xf32>
    %157 = arith.addf %154, %156 : vector<199x48xf32>
    %cst_66 = arith.constant 0.000000e+00 : f32
    %158 = vector.broadcast %cst_66 : f32 to vector<199x48xf32>
    %159 = arith.cmpf oge, %157, %158 : vector<199x48xf32>
    %160 = vector.extract_strided_slice %151 {offsets = [1, 0], sizes = [1, 48], strides = [1, 1]} : vector<11x48xf32> to vector<1x48xf32>
    %161 = vector.broadcast %160 : vector<1x48xf32> to vector<199x48xf32>
    %162 = arith.mulf %161, %157 : vector<199x48xf32>
    %163 = arith.select %159, %157, %162 : vector<199x48xi1>, vector<199x48xf32>
    %164 = vector.shape_cast %163 : vector<199x48xf32> to vector<1x199x48xf32>
    %cst_67 = arith.constant dense<0.000000e+00> : vector<1xf32>
    %165 = vector.multi_reduction <add>, %164, %cst_67 [1, 2] : vector<1x199x48xf32> to vector<1xf32>
    %166 = vector.shape_cast %165 : vector<1xf32> to vector<1x1x1xf32>
    %167 = vector.extract %166[0, 0, 0] : f32 from vector<1x1x1xf32>
    %cst_68 = arith.constant 9.552000e+03 : f32
    %168 = arith.divf %167, %cst_68 : f32
    %169 = arith.mulf %163, %163 : vector<199x48xf32>
    %170 = vector.shape_cast %169 : vector<199x48xf32> to vector<1x199x48xf32>
    %cst_69 = arith.constant dense<0.000000e+00> : vector<1xf32>
    %171 = vector.multi_reduction <add>, %170, %cst_69 [1, 2] : vector<1x199x48xf32> to vector<1xf32>
    %172 = vector.shape_cast %171 : vector<1xf32> to vector<1x1x1xf32>
    %173 = vector.extract %172[0, 0, 0] : f32 from vector<1x1x1xf32>
    %cst_70 = arith.constant 9.552000e+03 : f32
    %174 = arith.divf %173, %cst_70 : f32
    %175 = arith.mulf %168, %168 : f32
    %176 = arith.subf %174, %175 : f32
    %cst_71 = arith.constant 0.000000e+00 : f32
    %177 = arith.maximumf %176, %cst_71 : f32
    %178 = vector.broadcast %168 : f32 to vector<199x48xf32>
    %179 = arith.subf %163, %178 : vector<199x48xf32>
    %cst_72 = arith.constant 9.99999993E-9 : f32
    %180 = arith.addf %177, %cst_72 : f32
    %181 = math.rsqrt %180 : f32
    %182 = vector.broadcast %181 : f32 to vector<199x48xf32>
    %183 = arith.mulf %179, %182 : vector<199x48xf32>
    %184 = vector.extract_strided_slice %151 {offsets = [2, 0], sizes = [1, 48], strides = [1, 1]} : vector<11x48xf32> to vector<1x48xf32>
    %185 = vector.broadcast %184 : vector<1x48xf32> to vector<199x48xf32>
    %186 = arith.mulf %183, %185 : vector<199x48xf32>
    %187 = vector.extract_strided_slice %151 {offsets = [3, 0], sizes = [1, 48], strides = [1, 1]} : vector<11x48xf32> to vector<1x48xf32>
    %188 = vector.broadcast %187 : vector<1x48xf32> to vector<199x48xf32>
    %189 = arith.addf %186, %188 : vector<199x48xf32>
    %cst_73 = arith.constant 0.000000e+00 : f32
    %190 = vector.broadcast %cst_73 : f32 to vector<2x48xf32>
    %191 = vector.extract_strided_slice %189 {offsets = [0, 0], sizes = [197, 48], strides = [1, 1]} : vector<199x48xf32> to vector<197x48xf32>
    %192 = tpu.concatenate %190, %191 in 0 : vector<2x48xf32>, vector<197x48xf32> -> vector<199x48xf32>
    %193 = vector.extract_strided_slice %189 {offsets = [2, 0], sizes = [197, 48], strides = [1, 1]} : vector<199x48xf32> to vector<197x48xf32>
    %194 = tpu.concatenate %193, %190 in 0 : vector<197x48xf32>, vector<2x48xf32> -> vector<199x48xf32>
    %195 = vector.extract_strided_slice %151 {offsets = [4, 0], sizes = [1, 48], strides = [1, 1]} : vector<11x48xf32> to vector<1x48xf32>
    %196 = vector.broadcast %195 : vector<1x48xf32> to vector<199x48xf32>
    %197 = arith.mulf %192, %196 : vector<199x48xf32>
    %198 = vector.extract_strided_slice %151 {offsets = [5, 0], sizes = [1, 48], strides = [1, 1]} : vector<11x48xf32> to vector<1x48xf32>
    %199 = vector.broadcast %198 : vector<1x48xf32> to vector<199x48xf32>
    %200 = arith.mulf %189, %199 : vector<199x48xf32>
    %201 = arith.addf %197, %200 : vector<199x48xf32>
    %202 = vector.extract_strided_slice %151 {offsets = [6, 0], sizes = [1, 48], strides = [1, 1]} : vector<11x48xf32> to vector<1x48xf32>
    %203 = vector.broadcast %202 : vector<1x48xf32> to vector<199x48xf32>
    %204 = arith.mulf %194, %203 : vector<199x48xf32>
    %205 = arith.addf %201, %204 : vector<199x48xf32>
    %206 = vector.extract_strided_slice %151 {offsets = [7, 0], sizes = [1, 48], strides = [1, 1]} : vector<11x48xf32> to vector<1x48xf32>
    %207 = vector.broadcast %206 : vector<1x48xf32> to vector<199x48xf32>
    %208 = arith.addf %205, %207 : vector<199x48xf32>
    %cst_74 = arith.constant 0.000000e+00 : f32
    %209 = vector.broadcast %cst_74 : f32 to vector<199x48xf32>
    %210 = arith.cmpf oge, %208, %209 : vector<199x48xf32>
    %211 = vector.extract_strided_slice %151 {offsets = [8, 0], sizes = [1, 48], strides = [1, 1]} : vector<11x48xf32> to vector<1x48xf32>
    %212 = vector.broadcast %211 : vector<1x48xf32> to vector<199x48xf32>
    %213 = arith.mulf %212, %208 : vector<199x48xf32>
    %214 = arith.select %210, %208, %213 : vector<199x48xi1>, vector<199x48xf32>
    %215 = vector.shape_cast %214 : vector<199x48xf32> to vector<1x199x48xf32>
    %cst_75 = arith.constant dense<0.000000e+00> : vector<1xf32>
    %216 = vector.multi_reduction <add>, %215, %cst_75 [1, 2] : vector<1x199x48xf32> to vector<1xf32>
    %217 = vector.shape_cast %216 : vector<1xf32> to vector<1x1x1xf32>
    %218 = vector.extract %217[0, 0, 0] : f32 from vector<1x1x1xf32>
    %cst_76 = arith.constant 9.552000e+03 : f32
    %219 = arith.divf %218, %cst_76 : f32
    %220 = arith.mulf %214, %214 : vector<199x48xf32>
    %221 = vector.shape_cast %220 : vector<199x48xf32> to vector<1x199x48xf32>
    %cst_77 = arith.constant dense<0.000000e+00> : vector<1xf32>
    %222 = vector.multi_reduction <add>, %221, %cst_77 [1, 2] : vector<1x199x48xf32> to vector<1xf32>
    %223 = vector.shape_cast %222 : vector<1xf32> to vector<1x1x1xf32>
    %224 = vector.extract %223[0, 0, 0] : f32 from vector<1x1x1xf32>
    %cst_78 = arith.constant 9.552000e+03 : f32
    %225 = arith.divf %224, %cst_78 : f32
    %226 = arith.mulf %219, %219 : f32
    %227 = arith.subf %225, %226 : f32
    %cst_79 = arith.constant 0.000000e+00 : f32
    %228 = arith.maximumf %227, %cst_79 : f32
    %229 = vector.broadcast %219 : f32 to vector<199x48xf32>
    %230 = arith.subf %214, %229 : vector<199x48xf32>
    %cst_80 = arith.constant 9.99999993E-9 : f32
    %231 = arith.addf %228, %cst_80 : f32
    %232 = math.rsqrt %231 : f32
    %233 = vector.broadcast %232 : f32 to vector<199x48xf32>
    %234 = arith.mulf %230, %233 : vector<199x48xf32>
    %235 = vector.extract_strided_slice %151 {offsets = [9, 0], sizes = [1, 48], strides = [1, 1]} : vector<11x48xf32> to vector<1x48xf32>
    %236 = vector.broadcast %235 : vector<1x48xf32> to vector<199x48xf32>
    %237 = arith.mulf %234, %236 : vector<199x48xf32>
    %238 = vector.extract_strided_slice %151 {offsets = [10, 0], sizes = [1, 48], strides = [1, 1]} : vector<11x48xf32> to vector<1x48xf32>
    %239 = vector.broadcast %238 : vector<1x48xf32> to vector<199x48xf32>
    %240 = arith.addf %237, %239 : vector<199x48xf32>
    %c1_81 = arith.constant 1 : index
    %c0_82 = arith.constant 0 : index
    %c0_83 = arith.constant 0 : index
    %241 = vector.load %arg10[%c1_81, %c0_82, %c0_83] : memref<2x48x32xf32, #tpu.memory_space<vmem>>, vector<1x48x32xf32>
    %242 = vector.shape_cast %241 : vector<1x48x32xf32> to vector<48x32xf32>
    %cst_84 = arith.constant dense<0.000000e+00> : vector<199x32xf32>
    %243 = tpu.matmul %240, %242, %cst_84 {dimension_numbers = #tpu.dot_dimension_numbers<[1], [0], [0], [1], [0, 0, 1, 1], [], []>} : vector<199x48xf32>, vector<48x32xf32>, vector<199x32xf32> -> vector<199x32xf32>
    %244 = arith.addf %149, %243 : vector<199x32xf32>
    %c6 = arith.constant 6 : index
    %c0_85 = arith.constant 0 : index
    %245 = vector.load %arg5[%c6, %c0_85] : memref<7x32xf32, #tpu.memory_space<vmem>>, vector<1x32xf32>
    %246 = vector.broadcast %245 : vector<1x32xf32> to vector<199x32xf32>
    %247 = arith.addf %244, %246 : vector<199x32xf32>
    %c0_86 = arith.constant 0 : index
    %c0_87 = arith.constant 0 : index
    %248 = vector.load %arg11[%c0_86, %c0_87] : memref<32x32xf32, #tpu.memory_space<vmem>>, vector<32x32xf32>
    %cst_88 = arith.constant dense<0.000000e+00> : vector<199x32xf32>
    %249 = tpu.matmul %247, %248, %cst_88 {dimension_numbers = #tpu.dot_dimension_numbers<[1], [0], [0], [1], [0, 0, 1, 1], [], []>} : vector<199x32xf32>, vector<32x32xf32>, vector<199x32xf32> -> vector<199x32xf32>
    %c4 = arith.constant 4 : index
    %c0_89 = arith.constant 0 : index
    %250 = vector.load %arg5[%c4, %c0_89] : memref<7x32xf32, #tpu.memory_space<vmem>>, vector<1x32xf32>
    %251 = vector.broadcast %250 : vector<1x32xf32> to vector<199x32xf32>
    %252 = arith.addf %249, %251 : vector<199x32xf32>
    %cst_90 = arith.constant 0.000000e+00 : f32
    %253 = vector.broadcast %cst_90 : f32 to vector<199x32xf32>
    %254 = arith.maximumf %252, %253 : vector<199x32xf32>
    %255 = arith.mulf %13, %254 : vector<199x32xf32>
    %c0_91 = arith.constant 0 : index
    %c0_92 = arith.constant 0 : index
    %256 = vector.load %arg12[%c0_91, %c0_92] : memref<32x8xf32, #tpu.memory_space<vmem>>, vector<32x8xf32>
    %cst_93 = arith.constant dense<0.000000e+00> : vector<199x8xf32>
    %257 = tpu.matmul %255, %256, %cst_93 {dimension_numbers = #tpu.dot_dimension_numbers<[1], [0], [0], [1], [0, 0, 1, 1], [], []>} : vector<199x32xf32>, vector<32x8xf32>, vector<199x8xf32> -> vector<199x8xf32>
    %cst_94 = arith.constant 0.000000e+00 : f32
    %258 = vector.broadcast %cst_94 : f32 to vector<1x4xf32>
    %259 = vector.extract_strided_slice %257 {offsets = [0, 0], sizes = [199, 4], strides = [1, 1]} : vector<199x8xf32> to vector<199x4xf32>
    %260 = tpu.concatenate %259, %258 in 0 : vector<199x4xf32>, vector<1x4xf32> -> vector<200x4xf32>
    %261 = vector.extract_strided_slice %257 {offsets = [0, 4], sizes = [199, 4], strides = [1, 1]} : vector<199x8xf32> to vector<199x4xf32>
    %262 = tpu.concatenate %258, %261 in 0 : vector<1x4xf32>, vector<199x4xf32> -> vector<200x4xf32>
    %263 = arith.addf %260, %262 : vector<200x4xf32>
    %c0_95 = arith.constant 0 : index
    %264 = memref.load %arg13[%c0_95] : memref<1xf32, #tpu.memory_space<smem>>
    %265 = vector.broadcast %264 : f32 to vector<200x4xf32>
    %266 = arith.addf %263, %265 : vector<200x4xf32>
    %c0_96 = arith.constant 0 : index
    %c0_97 = arith.constant 0 : index
    %c0_98 = arith.constant 0 : index
    %267 = vector.load %arg14[%c0_96, %c0_97, %c0_98] : memref<1x200x4xf32, #tpu.memory_space<vmem>>, vector<1x200x4xf32>
    %268 = vector.shape_cast %267 : vector<1x200x4xf32> to vector<200x4xf32>
    %269 = vector.shape_cast %266 : vector<200x4xf32> to vector<1x200x4xf32>
    tpu.vector_store %arg14[%c0_96, %c0_97, %c0_98], %269 {strides = array<i32>} : memref<1x200x4xf32, #tpu.memory_space<vmem>>, vector<1x200x4xf32>,
    return
  }
  func.func @transform_0(%arg0: i32) -> (i32, i32, i32) {
    %c0_i32 = arith.constant 0 : i32
    %c0_i32_0 = arith.constant 0 : i32
    %c0_i32_1 = arith.constant 0 : i32
    return %arg0, %c0_i32, %c0_i32_0 : i32, i32, i32
  }
  func.func @transform_1(%arg0: i32) -> (i32, i32, i32) {
    %c0_i32 = arith.constant 0 : i32
    %c0_i32_0 = arith.constant 0 : i32
    %c0_i32_1 = arith.constant 0 : i32
    return %arg0, %c0_i32, %c0_i32_0 : i32, i32, i32
  }
  func.func @transform_2(%arg0: i32) -> (i32, i32) {
    %c0_i32 = arith.constant 0 : i32
    %c0_i32_0 = arith.constant 0 : i32
    %c0_i32_1 = arith.constant 0 : i32
    return %c0_i32, %c0_i32_0 : i32, i32
  }
  func.func @transform_3(%arg0: i32) -> (i32, i32) {
    %c0_i32 = arith.constant 0 : i32
    %c0_i32_0 = arith.constant 0 : i32
    %c0_i32_1 = arith.constant 0 : i32
    return %c0_i32, %c0_i32_0 : i32, i32
  }
  func.func @transform_4(%arg0: i32) -> (i32, i32) {
    %c0_i32 = arith.constant 0 : i32
    %c0_i32_0 = arith.constant 0 : i32
    %c0_i32_1 = arith.constant 0 : i32
    return %c0_i32, %c0_i32_0 : i32, i32
  }
  func.func @transform_5(%arg0: i32) -> (i32, i32) {
    %c0_i32 = arith.constant 0 : i32
    %c0_i32_0 = arith.constant 0 : i32
    %c0_i32_1 = arith.constant 0 : i32
    return %c0_i32, %c0_i32_0 : i32, i32
  }
  func.func @transform_6(%arg0: i32) -> (i32, i32, i32) {
    %c0_i32 = arith.constant 0 : i32
    %c0_i32_0 = arith.constant 0 : i32
    %c0_i32_1 = arith.constant 0 : i32
    %c0_i32_2 = arith.constant 0 : i32
    return %c0_i32, %c0_i32_0, %c0_i32_1 : i32, i32, i32
  }
  func.func @transform_7(%arg0: i32) -> (i32, i32, i32) {
    %c0_i32 = arith.constant 0 : i32
    %c0_i32_0 = arith.constant 0 : i32
    %c0_i32_1 = arith.constant 0 : i32
    %c0_i32_2 = arith.constant 0 : i32
    return %c0_i32, %c0_i32_0, %c0_i32_1 : i32, i32, i32
  }
  func.func @transform_8(%arg0: i32) -> (i32, i32, i32) {
    %c0_i32 = arith.constant 0 : i32
    %c0_i32_0 = arith.constant 0 : i32
    %c0_i32_1 = arith.constant 0 : i32
    %c0_i32_2 = arith.constant 0 : i32
    return %c0_i32, %c0_i32_0, %c0_i32_1 : i32, i32, i32
  }
  func.func @transform_9(%arg0: i32) -> (i32, i32, i32) {
    %c0_i32 = arith.constant 0 : i32
    %c0_i32_0 = arith.constant 0 : i32
    %c0_i32_1 = arith.constant 0 : i32
    %c0_i32_2 = arith.constant 0 : i32
    return %c0_i32, %c0_i32_0, %c0_i32_1 : i32, i32, i32
  }
  func.func @transform_10(%arg0: i32) -> (i32, i32) {
    %c0_i32 = arith.constant 0 : i32
    %c0_i32_0 = arith.constant 0 : i32
    %c0_i32_1 = arith.constant 0 : i32
    return %c0_i32, %c0_i32_0 : i32, i32
  }
  func.func @transform_11(%arg0: i32) -> (i32, i32) {
    %c0_i32 = arith.constant 0 : i32
    %c0_i32_0 = arith.constant 0 : i32
    %c0_i32_1 = arith.constant 0 : i32
    return %c0_i32, %c0_i32_0 : i32, i32
  }
  func.func @transform_12(%arg0: i32) -> i32 {
    %c0_i32 = arith.constant 0 : i32
    %c0_i32_0 = arith.constant 0 : i32
    return %c0_i32 : i32
  }
  func.func @transform_13(%arg0: i32) -> (i32, i32, i32) {
    %c0_i32 = arith.constant 0 : i32
    %c0_i32_0 = arith.constant 0 : i32
    %c0_i32_1 = arith.constant 0 : i32
    return %arg0, %c0_i32, %c0_i32_0 : i32, i32, i32
  }
}

</mosaic_0001>

<llo_original>
// kernel: spex_plus_short_forward.2
$region0: #{spex_plus_short_forward.2}
  #allocation0 [shape = 'u32[]', space=smem, size = 0x4, offset = 0x4, fixed_abs, tag = 'smem constant byte address 0x4 - core index']
  #allocation1 [shape = 'u32[144,128]{1,0:T(1,128)}', space=vmem, size = 0x12000, scoped, tag = 'internal scratch']
  #allocation2 [shape = 'f32[99,32]{1,0:T(8,128)}', space=vmem, size = 0xd000, scoped, tag = 'scratch operand']
  #allocation3 [shape = 'f32[33,40]{1,0:T(8,128)}', space=vmem, size = 0x5000, scoped, tag = 'scratch operand']
  %s0 = inlined_call_operand.vmem [shape: f32[2,100,4], index: 0, kind: input, shape index: {}]
  %s1 = inlined_call_operand.vmem [shape: f32[4,32], index: 1, kind: input, shape index: {}]
  %s2 = inlined_call_operand.vmem [shape: f32[4,32], index: 2, kind: input, shape index: {}]
  %s3 = inlined_call_operand.vmem [shape: f32[4,32], index: 3, kind: input, shape index: {}]
  %s4 = inlined_call_operand.vmem [shape: f32[32,32], index: 4, kind: input, shape index: {}]
  %s5 = inlined_call_operand.vmem [shape: f32[32,32], index: 5, kind: input, shape index: {}]
  %s6 = inlined_call_operand.vmem [shape: f32[32,32], index: 6, kind: input, shape index: {}]
  %s7 = inlined_call_operand.vmem [shape: f32[5,32], index: 7, kind: input, shape index: {}]
  %s8 = inlined_call_operand.vmem [shape: f32[32,40], index: 8, kind: input, shape index: {}]
  %s9 = inlined_call_operand.vmem [shape: f32[40,40], index: 9, kind: input, shape index: {}]
  %s10 = inlined_call_operand.vmem [shape: f32[5,40], index: 10, kind: input, shape index: {}]
  %s11 = inlined_call_operand.vmem [shape: f32[32,40], index: 11, kind: input, shape index: {}]
  %s12 = inlined_call_operand.vmem [shape: f32[40,40], index: 12, kind: input, shape index: {}]
  %s13 = inlined_call_operand.vmem [shape: f32[1,40], index: 13, kind: input, shape index: {}]
  %s14 = inlined_call_operand.vmem [shape: f32[40,10], index: 14, kind: input, shape index: {}]
  %s15 = inlined_call_operand.vmem [shape: f32[1,10], index: 15, kind: input, shape index: {}]
  %s16 = inlined_call_operand.vmem [shape: f32[2,1,40], index: 16, kind: output, shape index: {0}]
  %s17 = inlined_call_operand.hbm [shape: f32[2,1,10], index: 17, kind: output, shape index: {1}]
  %18 = xla_tuple %s16, %s17
  %s19 = sld [smem:[#allocation0]]
  $region105: #{spex_plus_short_forward.2} parent=0
    _
  %s21 = ssub.s32 1, %s19
  %s22 = scalar_select 0, %s21, %s19
  $region1: #{spex_plus_short_forward.2} parent=0
    #allocation4 [shape = 'u8[1024]{0}', space=vmem, size = 0x400, scoped, tag = 'output window, operand 1']
    #allocation5 [shape = 's32[2]{0}', space=sflag, size = 0x8, scoped, tag = 'scoped memory for spex_plus_short_forward.2']
    %23 = vsyncpa [#allocation5], 0
    %s24 = scalar_lea.sflag [#allocation5], 1
    %25 = vsyncpa %s24, 0
    loop: start=0, step=1, limit=4
    $region2: #{spex_plus_short_forward.2} parent=1 // loop_pre_header
      _
    $region3: #{spex_plus_short_forward.2} parent=1 // loop_header
      %s27 = sphi 0, %s31
      %p28 = scmp.ge.s32.totalorder %s27, 4
      %s37 = sphi 0, %s39
      %s40 = sphi 0, %s37
      %s41 = sphi 0, %s40
      %s57 = sphi 0, %s41
      %s61 = sphi 0, %s61
      %s63 = sphi 0, %s61
      %s64 = sphi 0, %s63
      %s78 = sphi 0, %s64
      %s82 = sphi 0, %s82
      %s84 = sphi 0, %s82
      %s85 = sphi 0, %s84
      %s99 = sphi 0, %s85
      %s103 = sphi 0, %s103
      %s105 = sphi 0, %s103
      %s106 = sphi 0, %s105
      %s120 = sphi 0, %s106
      %s124 = sphi 0, %s124
      %s126 = sphi 0, %s124
      %s127 = sphi 0, %s126
      %s141 = sphi 0, %s127
      %s145 = sphi 0, %s145
      %s147 = sphi 0, %s145
      %s148 = sphi 0, %s147
      %s162 = sphi 0, %s148
      %s166 = sphi 0, %s166
      %s168 = sphi 0, %s166
      %s169 = sphi 0, %s168
      %s183 = sphi 0, %s169
      %s187 = sphi 0, %s187
      %s189 = sphi 0, %s187
      %s190 = sphi 0, %s189
      %s204 = sphi 0, %s190
      %s208 = sphi 0, %s208
      %s210 = sphi 0, %s208
      %s211 = sphi 0, %s210
      %s225 = sphi 0, %s211
      %s229 = sphi 0, %s229
      %s231 = sphi 0, %s229
      %s232 = sphi 0, %s231
      %s246 = sphi 0, %s232
      %s250 = sphi 0, %s250
      %s252 = sphi 0, %s250
      %s253 = sphi 0, %s252
      %s267 = sphi 0, %s253
      %s271 = sphi 0, %s271
      %s273 = sphi 0, %s271
      %s274 = sphi 0, %s273
      %s288 = sphi 0, %s274
      %s292 = sphi 0, %s292
      %s294 = sphi 0, %s292
      %s295 = sphi 0, %s294
      %s309 = sphi 0, %s295
      %s313 = sphi 0, %s313
      %s315 = sphi 0, %s313
      %s316 = sphi 0, %s315
      %s330 = sphi 0, %s316
      %s334 = sphi 0, %s334
      %s336 = sphi 0, %s334
      %s337 = sphi 0, %s336
      %s351 = sphi 0, %s337
      %s355 = sphi 0, %s355
      %s357 = sphi 0, %s355
      %s358 = sphi 0, %s357
      %s372 = sphi 0, %s358
      %s378 = sphi 0, %s380
      %s381 = sphi 0, %s378
      %s382 = sphi 0, %s381
      %s398 = sphi 0, %s382
      %s404 = sphi 0, %s406
      %s407 = sphi 0, %s404
      %s408 = sphi 0, %s407
      %s424 = sphi 0, %s408
    $region4: #{spex_plus_short_forward.2} parent=1 // loop_header_branch
      %30 = sbr.rel (%p28) target = $region8
    $region5: #{spex_plus_short_forward.2} parent=1 // loop_body
      %s32 = ssub.s32 %s27, 1
      %s33 = ssub.s32 %s27, 2
      %s34 = sadd.s32 %s27, 1
      %s35 = ssub.s32 %s27, %s34
      %p36 = scmp.eq.s32.totalorder %s35, 0
      %s38 = sadd.s32 %s37, 1
      %s39 = scalar_select %p36, %s37, %s38
      %p42 = pneg %p36
      %p43 = scmp.eq.s32.totalorder %s27, 1
      %p44 = por %p42, %p43
      %p45 = scmp.ne.s32.totalorder %s37, %s40
      %p46 = scmp.eq.s32.totalorder %s27, 0
      %p47 = por %p45, %p46
      %p48 = scmp.ne.s32.totalorder %s37, %s40
      %p49 = scmp.eq.s32.totalorder %s32, 1
      %p50 = por %p48, %p49
      %p51 = scmp.ne.s32.totalorder %s40, %s41
      %p52 = scmp.eq.s32.totalorder %s32, 0
      %p53 = por %p51, %p52
      %p54 = scmp.ne.s32.totalorder %s40, %s41
      %p55 = scmp.eq.s32.totalorder %s33, 1
      %p56 = por %p54, %p55
      %p58 = scmp.ne.s32.totalorder %s41, %s57
      %p59 = scmp.eq.s32.totalorder %s33, 0
      %p60 = por %p58, %p59
      %s62 = sadd.s32 %s61, 1
      %p65 = scmp.eq.s32.totalorder %s27, 1
      %p66 = scmp.ne.s32.totalorder %s61, %s63
      %p67 = scmp.eq.s32.totalorder %s27, 0
      %p68 = por %p66, %p67
      %p69 = scmp.ne.s32.totalorder %s61, %s63
      %p70 = scmp.eq.s32.totalorder %s32, 1
      %p71 = por %p69, %p70
      %p72 = scmp.ne.s32.totalorder %s63, %s64
      %p73 = scmp.eq.s32.totalorder %s32, 0
      %p74 = por %p72, %p73
      %p75 = scmp.ne.s32.totalorder %s63, %s64
      %p76 = scmp.eq.s32.totalorder %s33, 1
      %p77 = por %p75, %p76
      %p79 = scmp.ne.s32.totalorder %s64, %s78
      %p80 = scmp.eq.s32.totalorder %s33, 0
      %p81 = por %p79, %p80
      %s83 = sadd.s32 %s82, 1
      %p86 = scmp.eq.s32.totalorder %s27, 1
      %p87 = scmp.ne.s32.totalorder %s82, %s84
      %p88 = scmp.eq.s32.totalorder %s27, 0
      %p89 = por %p87, %p88
      %p90 = scmp.ne.s32.totalorder %s82, %s84
      %p91 = scmp.eq.s32.totalorder %s32, 1
      %p92 = por %p90, %p91
      %p93 = scmp.ne.s32.totalorder %s84, %s85
      %p94 = scmp.eq.s32.totalorder %s32, 0
      %p95 = por %p93, %p94
      %p96 = scmp.ne.s32.totalorder %s84, %s85
      %p97 = scmp.eq.s32.totalorder %s33, 1
      %p98 = por %p96, %p97
      %p100 = scmp.ne.s32.totalorder %s85, %s99
      %p101 = scmp.eq.s32.totalorder %s33, 0
      %p102 = por %p100, %p101
      %s104 = sadd.s32 %s103, 1
      %p107 = scmp.eq.s32.totalorder %s27, 1
      %p108 = scmp.ne.s32.totalorder %s103, %s105
      %p109 = scmp.eq.s32.totalorder %s27, 0
      %p110 = por %p108, %p109
      %p111 = scmp.ne.s32.totalorder %s103, %s105
      %p112 = scmp.eq.s32.totalorder %s32, 1
      %p113 = por %p111, %p112
      %p114 = scmp.ne.s32.totalorder %s105, %s106
      %p115 = scmp.eq.s32.totalorder %s32, 0
      %p116 = por %p114, %p115
      %p117 = scmp.ne.s32.totalorder %s105, %s106
      %p118 = scmp.eq.s32.totalorder %s33, 1
      %p119 = por %p117, %p118
      %p121 = scmp.ne.s32.totalorder %s106, %s120
      %p122 = scmp.eq.s32.totalorder %s33, 0
      %p123 = por %p121, %p122
      %s125 = sadd.s32 %s124, 1
      %p128 = scmp.eq.s32.totalorder %s27, 1
      %p129 = scmp.ne.s32.totalorder %s124, %s126
      %p130 = scmp.eq.s32.totalorder %s27, 0
      %p131 = por %p129, %p130
      %p132 = scmp.ne.s32.totalorder %s124, %s126
      %p133 = scmp.eq.s32.totalorder %s32, 1
      %p134 = por %p132, %p133
      %p135 = scmp.ne.s32.totalorder %s126, %s127
      %p136 = scmp.eq.s32.totalorder %s32, 0
      %p137 = por %p135, %p136
      %p138 = scmp.ne.s32.totalorder %s126, %s127
      %p139 = scmp.eq.s32.totalorder %s33, 1
      %p140 = por %p138, %p139
      %p142 = scmp.ne.s32.totalorder %s127, %s141
      %p143 = scmp.eq.s32.totalorder %s33, 0
      %p144 = por %p142, %p143
      %s146 = sadd.s32 %s145, 1
      %p149 = scmp.eq.s32.totalorder %s27, 1
      %p150 = scmp.ne.s32.totalorder %s145, %s147
      %p151 = scmp.eq.s32.totalorder %s27, 0
      %p152 = por %p150, %p151
      %p153 = scmp.ne.s32.totalorder %s145, %s147
      %p154 = scmp.eq.s32.totalorder %s32, 1
      %p155 = por %p153, %p154
      %p156 = scmp.ne.s32.totalorder %s147, %s148
      %p157 = scmp.eq.s32.totalorder %s32, 0
      %p158 = por %p156, %p157
      %p159 = scmp.ne.s32.totalorder %s147, %s148
      %p160 = scmp.eq.s32.totalorder %s33, 1
      %p161 = por %p159, %p160
      %p163 = scmp.ne.s32.totalorder %s148, %s162
      %p164 = scmp.eq.s32.totalorder %s33, 0
      %p165 = por %p163, %p164
      %s167 = sadd.s32 %s166, 1
      %p170 = scmp.eq.s32.totalorder %s27, 1
      %p171 = scmp.ne.s32.totalorder %s166, %s168
      %p172 = scmp.eq.s32.totalorder %s27, 0
      %p173 = por %p171, %p172
      %p174 = scmp.ne.s32.totalorder %s166, %s168
      %p175 = scmp.eq.s32.totalorder %s32, 1
      %p176 = por %p174, %p175
      %p177 = scmp.ne.s32.totalorder %s168, %s169
      %p178 = scmp.eq.s32.totalorder %s32, 0
      %p179 = por %p177, %p178
      %p180 = scmp.ne.s32.totalorder %s168, %s169
      %p181 = scmp.eq.s32.totalorder %s33, 1
      %p182 = por %p180, %p181
      %p184 = scmp.ne.s32.totalorder %s169, %s183
      %p185 = scmp.eq.s32.totalorder %s33, 0
      %p186 = por %p184, %p185
      %s188 = sadd.s32 %s187, 1
      %p191 = scmp.eq.s32.totalorder %s27, 1
      %p192 = scmp.ne.s32.totalorder %s187, %s189
      %p193 = scmp.eq.s32.totalorder %s27, 0
      %p194 = por %p192, %p193
      %p195 = scmp.ne.s32.totalorder %s187, %s189
      %p196 = scmp.eq.s32.totalorder %s32, 1
      %p197 = por %p195, %p196
      %p198 = scmp.ne.s32.totalorder %s189, %s190
      %p199 = scmp.eq.s32.totalorder %s32, 0
      %p200 = por %p198, %p199
      %p201 = scmp.ne.s32.totalorder %s189, %s190
      %p202 = scmp.eq.s32.totalorder %s33, 1
      %p203 = por %p201, %p202
      %p205 = scmp.ne.s32.totalorder %s190, %s204
      %p206 = scmp.eq.s32.totalorder %s33, 0
      %p207 = por %p205, %p206
      %s209 = sadd.s32 %s208, 1
      %p212 = scmp.eq.s32.totalorder %s27, 1
      %p213 = scmp.ne.s32.totalorder %s208, %s210
      %p214 = scmp.eq.s32.totalorder %s27, 0
      %p215 = por %p213, %p214
      %p216 = scmp.ne.s32.totalorder %s208, %s210
      %p217 = scmp.eq.s32.totalorder %s32, 1
      %p218 = por %p216, %p217
      %p219 = scmp.ne.s32.totalorder %s210, %s211
      %p220 = scmp.eq.s32.totalorder %s32, 0
      %p221 = por %p219, %p220
      %p222 = scmp.ne.s32.totalorder %s210, %s211
      %p223 = scmp.eq.s32.totalorder %s33, 1
      %p224 = por %p222, %p223
      %p226 = scmp.ne.s32.totalorder %s211, %s225
      %p227 = scmp.eq.s32.totalorder %s33, 0
      %p228 = por %p226, %p227
      %s230 = sadd.s32 %s229, 1
      %p233 = scmp.eq.s32.totalorder %s27, 1
      %p234 = scmp.ne.s32.totalorder %s229, %s231
      %p235 = scmp.eq.s32.totalorder %s27, 0
      %p236 = por %p234, %p235
      %p237 = scmp.ne.s32.totalorder %s229, %s231
      %p238 = scmp.eq.s32.totalorder %s32, 1
      %p239 = por %p237, %p238
      %p240 = scmp.ne.s32.totalorder %s231, %s232
      %p241 = scmp.eq.s32.totalorder %s32, 0
      %p242 = por %p240, %p241
      %p243 = scmp.ne.s32.totalorder %s231, %s232
      %p244 = scmp.eq.s32.totalorder %s33, 1
      %p245 = por %p243, %p244
      %p247 = scmp.ne.s32.totalorder %s232, %s246
      %p248 = scmp.eq.s32.totalorder %s33, 0
      %p249 = por %p247, %p248
      %s251 = sadd.s32 %s250, 1
      %p254 = scmp.eq.s32.totalorder %s27, 1
      %p255 = scmp.ne.s32.totalorder %s250, %s252
      %p256 = scmp.eq.s32.totalorder %s27, 0
      %p257 = por %p255, %p256
      %p258 = scmp.ne.s32.totalorder %s250, %s252
      %p259 = scmp.eq.s32.totalorder %s32, 1
      %p260 = por %p258, %p259
      %p261 = scmp.ne.s32.totalorder %s252, %s253
      %p262 = scmp.eq.s32.totalorder %s32, 0
      %p263 = por %p261, %p262
      %p264 = scmp.ne.s32.totalorder %s252, %s253
      %p265 = scmp.eq.s32.totalorder %s33, 1
      %p266 = por %p264, %p265
      %p268 = scmp.ne.s32.totalorder %s253, %s267
      %p269 = scmp.eq.s32.totalorder %s33, 0
      %p270 = por %p268, %p269
      %s272 = sadd.s32 %s271, 1
      %p275 = scmp.eq.s32.totalorder %s27, 1
      %p276 = scmp.ne.s32.totalorder %s271, %s273
      %p277 = scmp.eq.s32.totalorder %s27, 0
      %p278 = por %p276, %p277
      %p279 = scmp.ne.s32.totalorder %s271, %s273
      %p280 = scmp.eq.s32.totalorder %s32, 1
      %p281 = por %p279, %p280
      %p282 = scmp.ne.s32.totalorder %s273, %s274
      %p283 = scmp.eq.s32.totalorder %s32, 0
      %p284 = por %p282, %p283
      %p285 = scmp.ne.s32.totalorder %s273, %s274
      %p286 = scmp.eq.s32.totalorder %s33, 1
      %p287 = por %p285, %p286
      %p289 = scmp.ne.s32.totalorder %s274, %s288
      %p290 = scmp.eq.s32.totalorder %s33, 0
      %p291 = por %p289, %p290
      %s293 = sadd.s32 %s292, 1
      %p296 = scmp.eq.s32.totalorder %s27, 1
      %p297 = scmp.ne.s32.totalorder %s292, %s294
      %p298 = scmp.eq.s32.totalorder %s27, 0
      %p299 = por %p297, %p298
      %p300 = scmp.ne.s32.totalorder %s292, %s294
      %p301 = scmp.eq.s32.totalorder %s32, 1
      %p302 = por %p300, %p301
      %p303 = scmp.ne.s32.totalorder %s294, %s295
      %p304 = scmp.eq.s32.totalorder %s32, 0
      %p305 = por %p303, %p304
      %p306 = scmp.ne.s32.totalorder %s294, %s295
      %p307 = scmp.eq.s32.totalorder %s33, 1
      %p308 = por %p306, %p307
      %p310 = scmp.ne.s32.totalorder %s295, %s309
      %p311 = scmp.eq.s32.totalorder %s33, 0
      %p312 = por %p310, %p311
      %s314 = sadd.s32 %s313, 1
      %p317 = scmp.eq.s32.totalorder %s27, 1
      %p318 = scmp.ne.s32.totalorder %s313, %s315
      %p319 = scmp.eq.s32.totalorder %s27, 0
      %p320 = por %p318, %p319
      %p321 = scmp.ne.s32.totalorder %s313, %s315
      %p322 = scmp.eq.s32.totalorder %s32, 1
      %p323 = por %p321, %p322
      %p324 = scmp.ne.s32.totalorder %s315, %s316
      %p325 = scmp.eq.s32.totalorder %s32, 0
      %p326 = por %p324, %p325
      %p327 = scmp.ne.s32.totalorder %s315, %s316
      %p328 = scmp.eq.s32.totalorder %s33, 1
      %p329 = por %p327, %p328
      %p331 = scmp.ne.s32.totalorder %s316, %s330
      %p332 = scmp.eq.s32.totalorder %s33, 0
      %p333 = por %p331, %p332
      %s335 = sadd.s32 %s334, 1
      %p338 = scmp.eq.s32.totalorder %s27, 1
      %p339 = scmp.ne.s32.totalorder %s334, %s336
      %p340 = scmp.eq.s32.totalorder %s27, 0
      %p341 = por %p339, %p340
      %p342 = scmp.ne.s32.totalorder %s334, %s336
      %p343 = scmp.eq.s32.totalorder %s32, 1
      %p344 = por %p342, %p343
      %p345 = scmp.ne.s32.totalorder %s336, %s337
      %p346 = scmp.eq.s32.totalorder %s32, 0
      %p347 = por %p345, %p346
      %p348 = scmp.ne.s32.totalorder %s336, %s337
      %p349 = scmp.eq.s32.totalorder %s33, 1
      %p350 = por %p348, %p349
      %p352 = scmp.ne.s32.totalorder %s337, %s351
      %p353 = scmp.eq.s32.totalorder %s33, 0
      %p354 = por %p352, %p353
      %s356 = sadd.s32 %s355, 1
      %p359 = scmp.eq.s32.totalorder %s27, 1
      %p360 = scmp.ne.s32.totalorder %s355, %s357
      %p361 = scmp.eq.s32.totalorder %s27, 0
      %p362 = por %p360, %p361
      %p363 = scmp.ne.s32.totalorder %s355, %s357
      %p364 = scmp.eq.s32.totalorder %s32, 1
      %p365 = por %p363, %p364
      %p366 = scmp.ne.s32.totalorder %s357, %s358
      %p367 = scmp.eq.s32.totalorder %s32, 0
      %p368 = por %p366, %p367
      %p369 = scmp.ne.s32.totalorder %s357, %s358
      %p370 = scmp.eq.s32.totalorder %s33, 1
      %p371 = por %p369, %p370
      %p373 = scmp.ne.s32.totalorder %s358, %s372
      %p374 = scmp.eq.s32.totalorder %s33, 0
      %p375 = por %p373, %p374
      %s376 = ssub.s32 %s27, %s34
      %p377 = scmp.eq.s32.totalorder %s376, 0
      %s379 = sadd.s32 %s378, 1
      %s380 = scalar_select %p377, %s378, %s379
      %p383 = pneg %p377
      %p384 = scmp.eq.s32.totalorder %s27, 1
      %p385 = por %p383, %p384
      %p386 = scmp.ne.s32.totalorder %s378, %s381
      %p387 = scmp.eq.s32.totalorder %s27, 0
      %p388 = por %p386, %p387
      %p389 = scmp.ne.s32.totalorder %s378, %s381
      %p390 = scmp.eq.s32.totalorder %s32, 1
      %p391 = por %p389, %p390
      %p392 = scmp.ne.s32.totalorder %s381, %s382
      %p393 = scmp.eq.s32.totalorder %s32, 0
      %p394 = por %p392, %p393
      %p395 = scmp.ne.s32.totalorder %s381, %s382
      %p396 = scmp.eq.s32.totalorder %s33, 1
      %p397 = por %p395, %p396
      %p399 = scmp.ne.s32.totalorder %s382, %s398
      %p400 = scmp.eq.s32.totalorder %s33, 0
      %p401 = por %p399, %p400
      %s402 = ssub.s32 %s27, %s34
      %p403 = scmp.eq.s32.totalorder %s402, 0
      %s405 = sadd.s32 %s404, 1
      %s406 = scalar_select %p403, %s404, %s405
      %p409 = pneg %p403
      %p410 = scmp.eq.s32.totalorder %s27, 1
      %p411 = por %p409, %p410
      %p412 = scmp.ne.s32.totalorder %s404, %s407
      %p413 = scmp.eq.s32.totalorder %s27, 0
      %p414 = por %p412, %p413
      %p415 = scmp.ne.s32.totalorder %s404, %s407
      %p416 = scmp.eq.s32.totalorder %s32, 1
      %p417 = por %p415, %p416
      %p418 = scmp.ne.s32.totalorder %s407, %s408
      %p419 = scmp.eq.s32.totalorder %s32, 0
      %p420 = por %p418, %p419
      %p421 = scmp.ne.s32.totalorder %s407, %s408
      %p422 = scmp.eq.s32.totalorder %s33, 1
      %p423 = por %p421, %p422
      %p425 = scmp.ne.s32.totalorder %s408, %s424
      %p426 = scmp.eq.s32.totalorder %s33, 0
      %p427 = por %p425, %p426
      %p428 = scmp.le.s32.totalorder 1, %s27
      %p429 = scmp.lt.s32.totalorder %s27, 3
      %p430 = pnand %p428, %p429
      %p431 = pneg %p430
      // Predicated region
      $region9: #{spex_plus_short_forward.2} parent=5 // pred_check
        _
      $region10: #{spex_plus_short_forward.2} parent=5 // pred_check_branch
        %433 = sbr.rel (%p430) target = $region12
      $region11: #{spex_plus_short_forward.2} parent=5 // pred_region
        %s434 = ssub.s32 %s27, 1
        // Predicated region
        $region13: #{spex_plus_short_forward.2} parent=11 // pred_check
          %p435 = pneg %p74
        $region14: #{spex_plus_short_forward.2} parent=11 // pred_check_branch
          %437 = sbr.rel (%p435) target = $region16
        $region15: #{spex_plus_short_forward.2} parent=11 // pred_region
          _
        $region16: #{spex_plus_short_forward.2} parent=11 // pred_fallthru
          _
        // Predicated region
        $region17: #{spex_plus_short_forward.2} parent=11 // pred_check
          %p438 = pneg %p95
        $region18: #{spex_plus_short_forward.2} parent=11 // pred_check_branch
          %440 = sbr.rel (%p438) target = $region20
        $region19: #{spex_plus_short_forward.2} parent=11 // pred_region
          _
        $region20: #{spex_plus_short_forward.2} parent=11 // pred_fallthru
          _
        // Predicated region
        $region21: #{spex_plus_short_forward.2} parent=11 // pred_check
          %p441 = pneg %p116
        $region22: #{spex_plus_short_forward.2} parent=11 // pred_check_branch
          %443 = sbr.rel (%p441) target = $region24
        $region23: #{spex_plus_short_forward.2} parent=11 // pred_region
          _
        $region24: #{spex_plus_short_forward.2} parent=11 // pred_fallthru
          _
        // Predicated region
        $region25: #{spex_plus_short_forward.2} parent=11 // pred_check
          %p444 = pneg %p137
        $region26: #{spex_plus_short_forward.2} parent=11 // pred_check_branch
          %446 = sbr.rel (%p444) target = $region28
        $region27: #{spex_plus_short_forward.2} parent=11 // pred_region
          _
        $region28: #{spex_plus_short_forward.2} parent=11 // pred_fallthru
          _
        // Predicated region
        $region29: #{spex_plus_short_forward.2} parent=11 // pred_check
          %p447 = pneg %p158
        $region30: #{spex_plus_short_forward.2} parent=11 // pred_check_branch
          %449 = sbr.rel (%p447) target = $region32
        $region31: #{spex_plus_short_forward.2} parent=11 // pred_region
          _
        $region32: #{spex_plus_short_forward.2} parent=11 // pred_fallthru
          _
        // Predicated region
        $region33: #{spex_plus_short_forward.2} parent=11 // pred_check
          %p450 = pneg %p179
        $region34: #{spex_plus_short_forward.2} parent=11 // pred_check_branch
          %452 = sbr.rel (%p450) target = $region36
        $region35: #{spex_plus_short_forward.2} parent=11 // pred_region
          _
        $region36: #{spex_plus_short_forward.2} parent=11 // pred_fallthru
          _
        // Predicated region
        $region37: #{spex_plus_short_forward.2} parent=11 // pred_check
          %p453 = pneg %p200
        $region38: #{spex_plus_short_forward.2} parent=11 // pred_check_branch
          %455 = sbr.rel (%p453) target = $region40
        $region39: #{spex_plus_short_forward.2} parent=11 // pred_region
          _
        $region40: #{spex_plus_short_forward.2} parent=11 // pred_fallthru
          _
        // Predicated region
        $region41: #{spex_plus_short_forward.2} parent=11 // pred_check
          %p456 = pneg %p221
        $region42: #{spex_plus_short_forward.2} parent=11 // pred_check_branch
          %458 = sbr.rel (%p456) target = $region44
        $region43: #{spex_plus_short_forward.2} parent=11 // pred_region
          _
        $region44: #{spex_plus_short_forward.2} parent=11 // pred_fallthru
          _
        // Predicated region
        $region45: #{spex_plus_short_forward.2} parent=11 // pred_check
          %p459 = pneg %p242
        $region46: #{spex_plus_short_forward.2} parent=11 // pred_check_branch
          %461 = sbr.rel (%p459) target = $region48
        $region47: #{spex_plus_short_forward.2} parent=11 // pred_region
          _
        $region48: #{spex_plus_short_forward.2} parent=11 // pred_fallthru
          _
        // Predicated region
        $region49: #{spex_plus_short_forward.2} parent=11 // pred_check
          %p462 = pneg %p263
        $region50: #{spex_plus_short_forward.2} parent=11 // pred_check_branch
          %464 = sbr.rel (%p462) target = $region52
        $region51: #{spex_plus_short_forward.2} parent=11 // pred_region
          _
        $region52: #{spex_plus_short_forward.2} parent=11 // pred_fallthru
          _
        // Predicated region
        $region53: #{spex_plus_short_forward.2} parent=11 // pred_check
          %p465 = pneg %p284
        $region54: #{spex_plus_short_forward.2} parent=11 // pred_check_branch
          %467 = sbr.rel (%p465) target = $region56
        $region55: #{spex_plus_short_forward.2} parent=11 // pred_region
          _
        $region56: #{spex_plus_short_forward.2} parent=11 // pred_fallthru
          _
        // Predicated region
        $region57: #{spex_plus_short_forward.2} parent=11 // pred_check
          %p468 = pneg %p305
        $region58: #{spex_plus_short_forward.2} parent=11 // pred_check_branch
          %470 = sbr.rel (%p468) target = $region60
        $region59: #{spex_plus_short_forward.2} parent=11 // pred_region
          _
        $region60: #{spex_plus_short_forward.2} parent=11 // pred_fallthru
          _
        // Predicated region
        $region61: #{spex_plus_short_forward.2} parent=11 // pred_check
          %p471 = pneg %p326
        $region62: #{spex_plus_short_forward.2} parent=11 // pred_check_branch
          %473 = sbr.rel (%p471) target = $region64
        $region63: #{spex_plus_short_forward.2} parent=11 // pred_region
          _
        $region64: #{spex_plus_short_forward.2} parent=11 // pred_fallthru
          _
        // Predicated region
        $region65: #{spex_plus_short_forward.2} parent=11 // pred_check
          %p474 = pneg %p347
        $region66: #{spex_plus_short_forward.2} parent=11 // pred_check_branch
          %476 = sbr.rel (%p474) target = $region68
        $region67: #{spex_plus_short_forward.2} parent=11 // pred_region
          _
        $region68: #{spex_plus_short_forward.2} parent=11 // pred_fallthru
          _
        // Predicated region
        $region69: #{spex_plus_short_forward.2} parent=11 // pred_check
          %p477 = pneg %p368
        $region70: #{spex_plus_short_forward.2} parent=11 // pred_check_branch
          %479 = sbr.rel (%p477) target = $region72
        $region71: #{spex_plus_short_forward.2} parent=11 // pred_region
          _
        $region72: #{spex_plus_short_forward.2} parent=11 // pred_fallthru
          _
      $region12: #{spex_plus_short_forward.2} parent=5 // pred_fallthru
        _
      %p480 = scmp.lt.s32.totalorder %s27, 2
      // Predicated region
      $region73: #{spex_plus_short_forward.2} parent=5 // pred_check
        %p481 = pneg %p480
      $region74: #{spex_plus_short_forward.2} parent=5 // pred_check_branch
        %483 = sbr.rel (%p481) target = $region76
      $region75: #{spex_plus_short_forward.2} parent=5 // pred_region
        // Predicated region
        $region77: #{spex_plus_short_forward.2} parent=75 // pred_check
          %p484 = pneg %p47
        $region78: #{spex_plus_short_forward.2} parent=75 // pred_check_branch
          %486 = sbr.rel (%p484) target = $region80
        $region79: #{spex_plus_short_forward.2} parent=75 // pred_region
          %p487 = scmp.lt.s32.totalorder %s27, 1
          %s488 = scalar_select %p487, %s27, 1
          %s489 = smul.addr %s488, 13
          %s490 = smul.addr %s489, 8
          %s491 = scalar_lea.vmem %s0, %s490
        $region80: #{spex_plus_short_forward.2} parent=75 // pred_fallthru
          _
      $region76: #{spex_plus_short_forward.2} parent=5 // pred_fallthru
        _
      %p492 = scmp.le.s32.totalorder 1, %s27
      %p493 = scmp.lt.s32.totalorder %s27, 3
      %p494 = pnand %p492, %p493
      %p495 = pneg %p494
      // Predicated region
      $region81: #{spex_plus_short_forward.2} parent=5 // pred_check
        _
      $region82: #{spex_plus_short_forward.2} parent=5 // pred_check_branch
        %497 = sbr.rel (%p494) target = $region84
      $region83: #{spex_plus_short_forward.2} parent=5 // pred_region
        %s498 = ssub.s32 %s27, 1
        %p499 = scmp.lt.s32.totalorder %s32, 1
        %s500 = scalar_select %p499, %s32, 1
        %s501 = smul.addr %s500, 13
        %s502 = smul.addr %s501, 8
        %s503 = scalar_lea.vmem %s0, %s502
        %p504 = pneg %p53
        %p505 = pneg %p50
        %p506 = pneg %p74
        %p507 = pneg %p71
        %p508 = pneg %p95
        %p509 = pneg %p92
        %p510 = pneg %p116
        %p511 = pneg %p113
        %p512 = pneg %p137
        %p513 = pneg %p134
        %p514 = pneg %p158
        %p515 = pneg %p155
        %p516 = pneg %p179
        %p517 = pneg %p176
        %p518 = pneg %p200
        %p519 = pneg %p197
        %p520 = pneg %p221
        %p521 = pneg %p218
        %p522 = pneg %p242
        %p523 = pneg %p239
        %p524 = pneg %p263
        %p525 = pneg %p260
        %p526 = pneg %p284
        %p527 = pneg %p281
        %p528 = pneg %p305
        %p529 = pneg %p302
        %p530 = pneg %p326
        %p531 = pneg %p323
        %p532 = pneg %p347
        %p533 = pneg %p344
        %p534 = pneg %p368
        %p535 = pneg %p365
        %p536 = pneg %p394
        %p537 = pneg %p391
        %p538 = scmp.lt.s32.totalorder %s32, 1
        %s539 = scalar_select %p538, %s32, 1
        %s540 = scalar_lea.vmem %s16, %s539
        %p541 = pneg %p420
        %p542 = pneg %p417
        %s543 = sand.u32 %s407, 1
        %s544 = scalar_lea.sflag [#allocation5], %s543
        %s545 = sand.u32 %s407, 1
        %s546 = scalar_lea.vmem [#allocation4], %s545
        %p547 = scmp.lt.s32.totalorder %s32, 1
        %s548 = scalar_select %p547, %s32, 1
        %s549 = smul.addr %s548, 13
        %s550 = smul.addr %s549, 8
        %s551 = scalar_lea.vmem %s0, %s550
        %p552 = scmp.lt.s32.totalorder %s32, 1
        %s553 = scalar_select %p552, %s32, 1
        %s554 = scalar_lea.vmem %s16, %s553
        %v555 = vld [vmem:[%s551] sm:$0xff]
        %v556 = vld [vmem:[%s551 + $0x8] sm:$0xff]
        %v557 = vld [vmem:[%s551 + $0x10] sm:$0xff]
        %v558 = vld [vmem:[%s551 + $0x18] sm:$0xff]
        %v559 = vld [vmem:[%s551 + $0x20] sm:$0xff]
        %v560 = vld [vmem:[%s551 + $0x28] sm:$0xff]
        %v561 = vld [vmem:[%s551 + $0x30] sm:$0xff]
        %v562 = vld [vmem:[%s551 + $0x38] sm:$0xff]
        %v563 = vld [vmem:[%s551 + $0x40] sm:$0xff]
        %v564 = vld [vmem:[%s551 + $0x48] sm:$0xff]
        %v565 = vld [vmem:[%s551 + $0x50] sm:$0xff]
        %v566 = vld [vmem:[%s551 + $0x58] sm:$0xff]
        %v567 = vld [vmem:[%s551 + $0x60] sm:$0x7]
        %v568 = vld [vmem:[%s1] sm:$0xf]
        %v569 = vld [vmem:[%s551 + $0x1] sm:$0xff]
        %v570 = vld [vmem:[%s551 + $0x9] sm:$0xff]
        %v571 = vld [vmem:[%s551 + $0x11] sm:$0xff]
        %v572 = vld [vmem:[%s551 + $0x19] sm:$0xff]
        %v573 = vld [vmem:[%s551 + $0x21] sm:$0xff]
        %v574 = vld [vmem:[%s551 + $0x29] sm:$0xff]
        %v575 = vld [vmem:[%s551 + $0x31] sm:$0xff]
        %v576 = vld [vmem:[%s551 + $0x39] sm:$0xff]
        %v577 = vld [vmem:[%s551 + $0x41] sm:$0xff]
        %v578 = vld [vmem:[%s551 + $0x49] sm:$0xff]
        %v579 = vld [vmem:[%s551 + $0x51] sm:$0xff]
        %v580 = vld [vmem:[%s551 + $0x59] sm:$0xff]
        %v581 = vld [vmem:[%s551 + $0x61] sm:$0x7]
        %v582 = vld [vmem:[%s2] sm:$0xf]
        %vm583 = vcmask 31744
        %v585 = vsel %vm583, %v569, 0
        %v588 = vsel %vm583, %v570, 0
        %v591 = vsel %vm583, %v571, 0
        %v594 = vsel %vm583, %v572, 0
        %v597 = vsel %vm583, %v573, 0
        %v600 = vsel %vm583, %v574, 0
        %v603 = vsel %vm583, %v575, 0
        %v606 = vsel %vm583, %v576, 0
        %v609 = vsel %vm583, %v577, 0
        %v612 = vsel %vm583, %v578, 0
        %v615 = vsel %vm583, %v579, 0
        %v618 = vsel %vm583, %v580, 0
        %v621 = vsel %vm583, %v581, 0
        %vm623 = vcmask 1043456
        %v625 = vsel %vm623, %v582, 0
        %627 = vmatprep.subr.mxu0 0.0
        %628 = vmatpush1.msra.mxu0 %v625
        %629 = vmatprep.subr.mxu0 0.0
        %630 = vmatpush1.msra.mxu0 0.0
        %631 = vmatprep.subr.mxu0 0.0
        %632 = vmatpush1.msra.mxu0 0.0
        %633 = vmatprep.subr.mxu0 0.0
        %634 = vmatpush1.msra.mxu0 0.0
        %635 = vmatprep.subr.mxu0 0.0
        %636 = vmatpush1.msra.mxu0 0.0
        %637 = vmatprep.subr.mxu0 0.0
        %638 = vmatpush1.msra.mxu0 0.0
        %639 = vmatprep.subr.mxu0 0.0
        %640 = vmatpush1.msra.mxu0 0.0
        %641 = vmatprep.subr.mxu0 0.0
        %642 = vmatpush1.msra.mxu0 0.0
        %643 = vmatprep.subr.mxu0 0.0
        %644 = vmatpush1.msra.mxu0 0.0
        %645 = vmatprep.subr.mxu0 0.0
        %646 = vmatpush1.msra.mxu0 0.0
        %647 = vmatprep.subr.mxu0 0.0
        %648 = vmatpush1.msra.mxu0 0.0
        %649 = vmatprep.subr.mxu0 0.0
        %650 = vmatpush1.msra.mxu0 0.0
        %651 = vmatprep.subr.mxu0 0.0
        %652 = vmatpush1.msra.mxu0 0.0
        %653 = vmatprep.subr.mxu0 0.0
        %654 = vmatpush1.msra.mxu0 0.0
        %655 = vmatprep.subr.mxu0 0.0
        %656 = vmatpush1.msra.mxu0 0.0
        %657 = vmatprep.subr.mxu0 0.0
        %658 = vmatpush1.msra.mxu0 0.0
        %659 = vmatprep.subr.mxu0 0.0
        %660 = vmatpush1.msra.mxu0 0.0
        %661 = vmatprep.subr.mxu0 0.0
        %662 = vmatpush1.msra.mxu0 0.0
        %663 = vmatprep.subr.mxu0 0.0
        %664 = vmatpush1.msra.mxu0 0.0
        %665 = vmatprep.subr.mxu0 0.0
        %666 = vmatpush1.msra.mxu0 0.0
        %667 = vmatprep.subr.mxu0 0.0
        %668 = vmatpush1.msra.mxu0 0.0
        %669 = vmatprep.subr.mxu0 0.0
        %670 = vmatpush1.msra.mxu0 0.0
        %671 = vmatprep.subr.mxu0 0.0
        %672 = vmatpush1.msra.mxu0 0.0
        %673 = vmatprep.subr.mxu0 0.0
        %674 = vmatpush1.msra.mxu0 0.0
        %675 = vmatprep.subr.mxu0 0.0
        %676 = vmatpush1.msra.mxu0 0.0
        %677 = vmatprep.subr.mxu0 0.0
        %678 = vmatpush1.msra.mxu0 0.0
        %679 = vmatprep.subr.mxu0 0.0
        %680 = vmatpush1.msra.mxu0 0.0
        %681 = vmatprep.subr.mxu0 0.0
        %682 = vmatpush1.msra.mxu0 0.0
        %683 = vmatprep.subr.mxu0 0.0
        %684 = vmatpush1.msra.mxu0 0.0
        %685 = vmatprep.subr.mxu0 0.0
        %686 = vmatpush1.msra.mxu0 0.0
        %687 = vmatprep.subr.mxu0 0.0
        %688 = vmatpush1.msra.mxu0 0.0
        %689 = vmatprep.subr.mxu0 0.0
        %690 = vmatpush1.msra.mxu0 0.0
        %691 = vmatprep.mubr.f32.mxu0 0.0
        %692 = vmatmul.mubr.f32.gmra.mrb[0].mxu0 %v585
        %v693 = vpop.f32.mrb[0].mxu0
        %v694 = vadd.f32 0.0, %v693
        %v695 = vpop.f32.mrb[0].mxu0
        %696 = vmatprep.mubr.f32.mxu0 0.0
        %697 = vmatmul.mubr.f32.gmra.mrb[0].mxu0 %v588
        %v698 = vpop.f32.mrb[0].mxu0
        %v699 = vadd.f32 0.0, %v698
        %v700 = vpop.f32.mrb[0].mxu0
        %701 = vmatprep.mubr.f32.mxu0 0.0
        %702 = vmatmul.mubr.f32.gmra.mrb[0].mxu0 %v591
        %v703 = vpop.f32.mrb[0].mxu0
        %v704 = vadd.f32 0.0, %v703
        %v705 = vpop.f32.mrb[0].mxu0
        %706 = vmatprep.mubr.f32.mxu0 0.0
        %707 = vmatmul.mubr.f32.gmra.mrb[0].mxu0 %v594
        %v708 = vpop.f32.mrb[0].mxu0
        %v709 = vadd.f32 0.0, %v708
        %v710 = vpop.f32.mrb[0].mxu0
        %711 = vmatprep.mubr.f32.mxu0 0.0
        %712 = vmatmul.mubr.f32.gmra.mrb[0].mxu0 %v597
        %v713 = vpop.f32.mrb[0].mxu0
        %v714 = vadd.f32 0.0, %v713
        %v715 = vpop.f32.mrb[0].mxu0
        %716 = vmatprep.mubr.f32.mxu0 0.0
        %717 = vmatmul.mubr.f32.gmra.mrb[0].mxu0 %v600
        %v718 = vpop.f32.mrb[0].mxu0
        %v719 = vadd.f32 0.0, %v718
        %v720 = vpop.f32.mrb[0].mxu0
        %721 = vmatprep.mubr.f32.mxu0 0.0
        %722 = vmatmul.mubr.f32.gmra.mrb[0].mxu0 %v603
        %v723 = vpop.f32.mrb[0].mxu0
        %v724 = vadd.f32 0.0, %v723
        %v725 = vpop.f32.mrb[0].mxu0
        %726 = vmatprep.mubr.f32.mxu0 0.0
        %727 = vmatmul.mubr.f32.gmra.mrb[0].mxu0 %v606
        %v728 = vpop.f32.mrb[0].mxu0
        %v729 = vadd.f32 0.0, %v728
        %v730 = vpop.f32.mrb[0].mxu0
        %731 = vmatprep.mubr.f32.mxu0 0.0
        %732 = vmatmul.mubr.f32.gmra.mrb[0].mxu0 %v609
        %v733 = vpop.f32.mrb[0].mxu0
        %v734 = vadd.f32 0.0, %v733
        %v735 = vpop.f32.mrb[0].mxu0
        %736 = vmatprep.mubr.f32.mxu0 0.0
        %737 = vmatmul.mubr.f32.gmra.mrb[0].mxu0 %v612
        %v738 = vpop.f32.mrb[0].mxu0
        %v739 = vadd.f32 0.0, %v738
        %v740 = vpop.f32.mrb[0].mxu0
        %741 = vmatprep.mubr.f32.mxu0 0.0
        %742 = vmatmul.mubr.f32.gmra.mrb[0].mxu0 %v615
        %v743 = vpop.f32.mrb[0].mxu0
        %v744 = vadd.f32 0.0, %v743
        %v745 = vpop.f32.mrb[0].mxu0
        %746 = vmatprep.mubr.f32.mxu0 0.0
        %747 = vmatmul.mubr.f32.gmra.mrb[0].mxu0 %v618
        %v748 = vpop.f32.mrb[0].mxu0
        %v749 = vadd.f32 0.0, %v748
        %v750 = vpop.f32.mrb[0].mxu0
        %751 = vmatprep.mubr.f32.mxu0 0.0
        %752 = vmatmul.mubr.f32.gmra.mrb[0].mxu0 %v621
        %v753 = vpop.f32.mrb[0].mxu0
        %v754 = vadd.f32 0.0, %v753
        %v755 = vpop.f32.mrb[0].mxu0
        %756 = vdwg.mxu0
        %v758 = vsel %vm583, %v555, 0
        %v761 = vsel %vm583, %v556, 0
        %v764 = vsel %vm583, %v557, 0
        %v767 = vsel %vm583, %v558, 0
        %v770 = vsel %vm583, %v559, 0
        %v773 = vsel %vm583, %v560, 0
        %v776 = vsel %vm583, %v561, 0
        %v779 = vsel %vm583, %v562, 0
        %v782 = vsel %vm583, %v563, 0
        %v785 = vsel %vm583, %v564, 0
        %v788 = vsel %vm583, %v565, 0
        %v791 = vsel %vm583, %v566, 0
        %v794 = vsel %vm583, %v567, 0
        %v797 = vsel %vm623, %v568, 0
        %799 = vmatprep.subr.mxu0 0.0
        %800 = vmatpush1.msra.mxu0 %v797
        %801 = vmatprep.subr.mxu0 0.0
        %802 = vmatpush1.msra.mxu0 0.0
        %803 = vmatprep.subr.mxu0 0.0
        %804 = vmatpush1.msra.mxu0 0.0
        %805 = vmatprep.subr.mxu0 0.0
        %806 = vmatpush1.msra.mxu0 0.0
        %807 = vmatprep.subr.mxu0 0.0
        %808 = vmatpush1.msra.mxu0 0.0
        %809 = vmatprep.subr.mxu0 0.0
        %810 = vmatpush1.msra.mxu0 0.0
        %811 = vmatprep.subr.mxu0 0.0
        %812 = vmatpush1.msra.mxu0 0.0
        %813 = vmatprep.subr.mxu0 0.0
        %814 = vmatpush1.msra.mxu0 0.0
        %815 = vmatprep.subr.mxu0 0.0
        %816 = vmatpush1.msra.mxu0 0.0
        %817 = vmatprep.subr.mxu0 0.0
        %818 = vmatpush1.msra.mxu0 0.0
        %819 = vmatprep.subr.mxu0 0.0
        %820 = vmatpush1.msra.mxu0 0.0
        %821 = vmatprep.subr.mxu0 0.0
        %822 = vmatpush1.msra.mxu0 0.0
        %823 = vmatprep.subr.mxu0 0.0
        %824 = vmatpush1.msra.mxu0 0.0
        %825 = vmatprep.subr.mxu0 0.0
        %826 = vmatpush1.msra.mxu0 0.0
        %827 = vmatprep.subr.mxu0 0.0
        %828 = vmatpush1.msra.mxu0 0.0
        %829 = vmatprep.subr.mxu0 0.0
        %830 = vmatpush1.msra.mxu0 0.0
        %831 = vmatprep.subr.mxu0 0.0
        %832 = vmatpush1.msra.mxu0 0.0
        %833 = vmatprep.subr.mxu0 0.0
        %834 = vmatpush1.msra.mxu0 0.0
        %835 = vmatprep.subr.mxu0 0.0
        %836 = vmatpush1.msra.mxu0 0.0
        %837 = vmatprep.subr.mxu0 0.0
        %838 = vmatpush1.msra.mxu0 0.0
        %839 = vmatprep.subr.mxu0 0.0
        %840 = vmatpush1.msra.mxu0 0.0
        %841 = vmatprep.subr.mxu0 0.0
        %842 = vmatpush1.msra.mxu0 0.0
        %843 = vmatprep.subr.mxu0 0.0
        %844 = vmatpush1.msra.mxu0 0.0
        %845 = vmatprep.subr.mxu0 0.0
        %846 = vmatpush1.msra.mxu0 0.0
        %847 = vmatprep.subr.mxu0 0.0
        %848 = vmatpush1.msra.mxu0 0.0
        %849 = vmatprep.subr.mxu0 0.0
        %850 = vmatpush1.msra.mxu0 0.0
        %851 = vmatprep.subr.mxu0 0.0
        %852 = vmatpush1.msra.mxu0 0.0
        %853 = vmatprep.subr.mxu0 0.0
        %854 = vmatpush1.msra.mxu0 0.0
        %855 = vmatprep.subr.mxu0 0.0
        %856 = vmatpush1.msra.mxu0 0.0
        %857 = vmatprep.subr.mxu0 0.0
        %858 = vmatpush1.msra.mxu0 0.0
        %859 = vmatprep.subr.mxu0 0.0
        %860 = vmatpush1.msra.mxu0 0.0
        %861 = vmatprep.subr.mxu0 0.0
        %862 = vmatpush1.msra.mxu0 0.0
        %863 = vmatprep.mubr.f32.mxu0 0.0
        %864 = vmatmul.mubr.f32.gmra.mrb[0].mxu0 %v758
        %v865 = vpop.f32.mrb[0].mxu0
        %v866 = vadd.f32 %v694, %v865
        %v867 = vpop.f32.mrb[0].mxu0
        %868 = vmatprep.mubr.f32.mxu0 0.0
        %869 = vmatmul.mubr.f32.gmra.mrb[0].mxu0 %v761
        %v870 = vpop.f32.mrb[0].mxu0
        %v871 = vadd.f32 %v699, %v870
        %v872 = vpop.f32.mrb[0].mxu0
        %873 = vmatprep.mubr.f32.mxu0 0.0
        %874 = vmatmul.mubr.f32.gmra.mrb[0].mxu0 %v764
        %v875 = vpop.f32.mrb[0].mxu0
        %v876 = vadd.f32 %v704, %v875
        %v877 = vpop.f32.mrb[0].mxu0
        %878 = vmatprep.mubr.f32.mxu0 0.0
        %879 = vmatmul.mubr.f32.gmra.mrb[0].mxu0 %v767
        %v880 = vpop.f32.mrb[0].mxu0
        %v881 = vadd.f32 %v709, %v880
        %v882 = vpop.f32.mrb[0].mxu0
        %883 = vmatprep.mubr.f32.mxu0 0.0
        %884 = vmatmul.mubr.f32.gmra.mrb[0].mxu0 %v770
        %v885 = vpop.f32.mrb[0].mxu0
        %v886 = vadd.f32 %v714, %v885
        %v887 = vpop.f32.mrb[0].mxu0
        %888 = vmatprep.mubr.f32.mxu0 0.0
        %889 = vmatmul.mubr.f32.gmra.mrb[0].mxu0 %v773
        %v890 = vpop.f32.mrb[0].mxu0
        %v891 = vadd.f32 %v719, %v890
        %v892 = vpop.f32.mrb[0].mxu0
        %893 = vmatprep.mubr.f32.mxu0 0.0
        %894 = vmatmul.mubr.f32.gmra.mrb[0].mxu0 %v776
        %v895 = vpop.f32.mrb[0].mxu0
        %v896 = vadd.f32 %v724, %v895
        %v897 = vpop.f32.mrb[0].mxu0
        %898 = vmatprep.mubr.f32.mxu0 0.0
        %899 = vmatmul.mubr.f32.gmra.mrb[0].mxu0 %v779
        %v900 = vpop.f32.mrb[0].mxu0
        %v901 = vadd.f32 %v729, %v900
        %v902 = vpop.f32.mrb[0].mxu0
        %903 = vmatprep.mubr.f32.mxu0 0.0
        %904 = vmatmul.mubr.f32.gmra.mrb[0].mxu0 %v782
        %v905 = vpop.f32.mrb[0].mxu0
        %v906 = vadd.f32 %v734, %v905
        %v907 = vpop.f32.mrb[0].mxu0
        %908 = vmatprep.mubr.f32.mxu0 0.0
        %909 = vmatmul.mubr.f32.gmra.mrb[0].mxu0 %v785
        %v910 = vpop.f32.mrb[0].mxu0
        %v911 = vadd.f32 %v739, %v910
        %v912 = vpop.f32.mrb[0].mxu0
        %913 = vmatprep.mubr.f32.mxu0 0.0
        %914 = vmatmul.mubr.f32.gmra.mrb[0].mxu0 %v788
        %v915 = vpop.f32.mrb[0].mxu0
        %v916 = vadd.f32 %v744, %v915
        %v917 = vpop.f32.mrb[0].mxu0
        %918 = vmatprep.mubr.f32.mxu0 0.0
        %919 = vmatmul.mubr.f32.gmra.mrb[0].mxu0 %v791
        %v920 = vpop.f32.mrb[0].mxu0
        %v921 = vadd.f32 %v749, %v920
        %v922 = vpop.f32.mrb[0].mxu0
        %923 = vmatprep.mubr.f32.mxu0 0.0
        %924 = vmatmul.mubr.f32.gmra.mrb[0].mxu0 %v794
        %v925 = vpop.f32.mrb[0].mxu0
        %v926 = vadd.f32 %v754, %v925
        %v927 = vpop.f32.mrb[0].mxu0
        %928 = vdwg.mxu0
        %v929 = vld [vmem:[%s3] sm:$0x1]
        %v930 = vlaneseq
        %v931 = vshrl.u32 %v930, 7
        %v932 = vsub.s32 0, %v931
        %v933 = vrot.slane %v929, %v932
        %v934 = vadd.f32 %v866, %v933
        %v935 = vadd.f32 %v871, %v933
        %v936 = vadd.f32 %v876, %v933
        %v937 = vadd.f32 %v881, %v933
        %v938 = vadd.f32 %v886, %v933
        %v939 = vadd.f32 %v891, %v933
        %v940 = vadd.f32 %v896, %v933
        %v941 = vadd.f32 %v901, %v933
        %v942 = vadd.f32 %v906, %v933
        %v943 = vadd.f32 %v911, %v933
        %v944 = vadd.f32 %v916, %v933
        %v945 = vadd.f32 %v921, %v933
        %v946 = vadd.f32 %v926, %v933
        %v947 = vmax.f32 %v934, 0.0
        %v948 = vmax.f32 %v935, 0.0
        %v949 = vmax.f32 %v936, 0.0
        %v950 = vmax.f32 %v937, 0.0
        %v951 = vmax.f32 %v938, 0.0
        %v952 = vmax.f32 %v939, 0.0
        %v953 = vmax.f32 %v940, 0.0
        %v954 = vmax.f32 %v941, 0.0
        %v955 = vmax.f32 %v942, 0.0
        %v956 = vmax.f32 %v943, 0.0
        %v957 = vmax.f32 %v944, 0.0
        %v958 = vmax.f32 %v945, 0.0
        %v959 = vmax.f32 %v946, 0.0
        %vm960 = vcmask 261120
        %v961 = vsel %vm960, %v947, 0.0
        %962 = vadd.xlane.f32.xlu0 %v961
        %v963 = vpop.xlane.xlu0 %962
        %v964 = vsel %vm960, %v948, 0.0
        %965 = vadd.xlane.f32.xlu0 %v964
        %v966 = vpop.xlane.xlu0 %965
        %v967 = vsel %vm960, %v949, 0.0
        %968 = vadd.xlane.f32.xlu0 %v967
        %v969 = vpop.xlane.xlu0 %968
        %v970 = vsel %vm960, %v950, 0.0
        %971 = vadd.xlane.f32.xlu0 %v970
        %v972 = vpop.xlane.xlu0 %971
        %v973 = vsel %vm960, %v951, 0.0
        %974 = vadd.xlane.f32.xlu0 %v973
        %v975 = vpop.xlane.xlu0 %974
        %v976 = vsel %vm960, %v952, 0.0
        %977 = vadd.xlane.f32.xlu0 %v976
        %v978 = vpop.xlane.xlu0 %977
        %v979 = vsel %vm960, %v953, 0.0
        %980 = vadd.xlane.f32.xlu0 %v979
        %v981 = vpop.xlane.xlu0 %980
        %v982 = vsel %vm960, %v954, 0.0
        %983 = vadd.xlane.f32.xlu0 %v982
        %v984 = vpop.xlane.xlu0 %983
        %v985 = vsel %vm960, %v955, 0.0
        %986 = vadd.xlane.f32.xlu0 %v985
        %v987 = vpop.xlane.xlu0 %986
        %v988 = vsel %vm960, %v956, 0.0
        %989 = vadd.xlane.f32.xlu0 %v988
        %v990 = vpop.xlane.xlu0 %989
        %v991 = vsel %vm960, %v957, 0.0
        %992 = vadd.xlane.f32.xlu0 %v991
        %v993 = vpop.xlane.xlu0 %992
        %v994 = vsel %vm960, %v958, 0.0
        %995 = vadd.xlane.f32.xlu0 %v994
        %v996 = vpop.xlane.xlu0 %995
        %vm997 = vcmask 256000
        %v998 = vsel %vm997, %v959, 0.0
        %999 = vadd.xlane.f32.xlu0 %v998
        %v1000 = vpop.xlane.xlu0 %999
        %v1001 = vrcp.pop 32.0
        %v1002 = vmul.f32 %v963, %v1001
        %v1003 = vmul.f32 %v966, %v1001
        %v1004 = vmul.f32 %v969, %v1001
        %v1005 = vmul.f32 %v972, %v1001
        %v1006 = vmul.f32 %v975, %v1001
        %v1007 = vmul.f32 %v978, %v1001
        %v1008 = vmul.f32 %v981, %v1001
        %v1009 = vmul.f32 %v984, %v1001
        %v1010 = vmul.f32 %v987, %v1001
        %v1011 = vmul.f32 %v990, %v1001
        %v1012 = vmul.f32 %v993, %v1001
        %v1013 = vmul.f32 %v996, %v1001
        %v1014 = vmul.f32 %v1000, %v1001
        %v1015 = vmul.f32 %v947, %v947
        %v1016 = vmul.f32 %v948, %v948
        %v1017 = vmul.f32 %v949, %v949
        %v1018 = vmul.f32 %v950, %v950
        %v1019 = vmul.f32 %v951, %v951
        %v1020 = vmul.f32 %v952, %v952
        %v1021 = vmul.f32 %v953, %v953
        %v1022 = vmul.f32 %v954, %v954
        %v1023 = vmul.f32 %v955, %v955
        %v1024 = vmul.f32 %v956, %v956
        %v1025 = vmul.f32 %v957, %v957
        %v1026 = vmul.f32 %v958, %v958
        %v1027 = vmul.f32 %v959, %v959
        %v1028 = vsel %vm960, %v1015, 0.0
        %1029 = vadd.xlane.f32.xlu0 %v1028
        %v1030 = vpop.xlane.xlu0 %1029
        %v1031 = vsel %vm960, %v1016, 0.0
        %1032 = vadd.xlane.f32.xlu0 %v1031
        %v1033 = vpop.xlane.xlu0 %1032
        %v1034 = vsel %vm960, %v1017, 0.0
        %1035 = vadd.xlane.f32.xlu0 %v1034
        %v1036 = vpop.xlane.xlu0 %1035
        %v1037 = vsel %vm960, %v1018, 0.0
        %1038 = vadd.xlane.f32.xlu0 %v1037
        %v1039 = vpop.xlane.xlu0 %1038
        %v1040 = vsel %vm960, %v1019, 0.0
        %1041 = vadd.xlane.f32.xlu0 %v1040
        %v1042 = vpop.xlane.xlu0 %1041
        %v1043 = vsel %vm960, %v1020, 0.0
        %1044 = vadd.xlane.f32.xlu0 %v1043
        %v1045 = vpop.xlane.xlu0 %1044
        %v1046 = vsel %vm960, %v1021, 0.0
        %1047 = vadd.xlane.f32.xlu0 %v1046
        %v1048 = vpop.xlane.xlu0 %1047
        %v1049 = vsel %vm960, %v1022, 0.0
        %1050 = vadd.xlane.f32.xlu0 %v1049
        %v1051 = vpop.xlane.xlu0 %1050
        %v1052 = vsel %vm960, %v1023, 0.0
        %1053 = vadd.xlane.f32.xlu0 %v1052
        %v1054 = vpop.xlane.xlu0 %1053
        %v1055 = vsel %vm960, %v1024, 0.0
        %1056 = vadd.xlane.f32.xlu0 %v1055
        %v1057 = vpop.xlane.xlu0 %1056
        %v1058 = vsel %vm960, %v1025, 0.0
        %1059 = vadd.xlane.f32.xlu0 %v1058
        %v1060 = vpop.xlane.xlu0 %1059
        %v1061 = vsel %vm960, %v1026, 0.0
        %1062 = vadd.xlane.f32.xlu0 %v1061
        %v1063 = vpop.xlane.xlu0 %1062
        %v1064 = vsel %vm997, %v1027, 0.0
        %1065 = vadd.xlane.f32.xlu0 %v1064
        %v1066 = vpop.xlane.xlu0 %1065
        %v1067 = vmul.f32 %v1030, %v1001
        %v1068 = vmul.f32 %v1033, %v1001
        %v1069 = vmul.f32 %v1036, %v1001
        %v1070 = vmul.f32 %v1039, %v1001
        %v1071 = vmul.f32 %v1042, %v1001
        %v1072 = vmul.f32 %v1045, %v1001
        %v1073 = vmul.f32 %v1048, %v1001
        %v1074 = vmul.f32 %v1051, %v1001
        %v1075 = vmul.f32 %v1054, %v1001
        %v1076 = vmul.f32 %v1057, %v1001
        %v1077 = vmul.f32 %v1060, %v1001
        %v1078 = vmul.f32 %v1063, %v1001
        %v1079 = vmul.f32 %v1066, %v1001
        %v1080 = vmul.f32 %v1002, %v1002
        %v1081 = vmul.f32 %v1003, %v1003
        %v1082 = vmul.f32 %v1004, %v1004
        %v1083 = vmul.f32 %v1005, %v1005
        %v1084 = vmul.f32 %v1006, %v1006
        %v1085 = vmul.f32 %v1007, %v1007
        %v1086 = vmul.f32 %v1008, %v1008
        %v1087 = vmul.f32 %v1009, %v1009
        %v1088 = vmul.f32 %v1010, %v1010
        %v1089 = vmul.f32 %v1011, %v1011
        %v1090 = vmul.f32 %v1012, %v1012
        %v1091 = vmul.f32 %v1013, %v1013
        %v1092 = vmul.f32 %v1014, %v1014
        %v1093 = vsub.f32 %v1067, %v1080
        %v1094 = vsub.f32 %v1068, %v1081
        %v1095 = vsub.f32 %v1069, %v1082
        %v1096 = vsub.f32 %v1070, %v1083
        %v1097 = vsub.f32 %v1071, %v1084
        %v1098 = vsub.f32 %v1072, %v1085
        %v1099 = vsub.f32 %v1073, %v1086
        %v1100 = vsub.f32 %v1074, %v1087
        %v1101 = vsub.f32 %v1075, %v1088
        %v1102 = vsub.f32 %v1076, %v1089
        %v1103 = vsub.f32 %v1077, %v1090
        %v1104 = vsub.f32 %v1078, %v1091
        %v1105 = vsub.f32 %v1079, %v1092
        %v1106 = vmax.f32 %v1093, 0.0
        %v1107 = vmax.f32 %v1094, 0.0
        %v1108 = vmax.f32 %v1095, 0.0
        %v1109 = vmax.f32 %v1096, 0.0
        %v1110 = vmax.f32 %v1097, 0.0
        %v1111 = vmax.f32 %v1098, 0.0
        %v1112 = vmax.f32 %v1099, 0.0
        %v1113 = vmax.f32 %v1100, 0.0
        %v1114 = vmax.f32 %v1101, 0.0
        %v1115 = vmax.f32 %v1102, 0.0
        %v1116 = vmax.f32 %v1103, 0.0
        %v1117 = vmax.f32 %v1104, 0.0
        %v1118 = vmax.f32 %v1105, 0.0
        %v1119 = vsub.f32 %v947, %v1002
        %v1120 = vsub.f32 %v948, %v1003
        %v1121 = vsub.f32 %v949, %v1004
        %v1122 = vsub.f32 %v950, %v1005
        %v1123 = vsub.f32 %v951, %v1006
        %v1124 = vsub.f32 %v952, %v1007
        %v1125 = vsub.f32 %v953, %v1008
        %v1126 = vsub.f32 %v954, %v1009
        %v1127 = vsub.f32 %v955, %v1010
        %v1128 = vsub.f32 %v956, %v1011
        %v1129 = vsub.f32 %v957, %v1012
        %v1130 = vsub.f32 %v958, %v1013
        %v1131 = vsub.f32 %v959, %v1014
        %v1132 = vadd.f32 %v1106, 1e-05
        %v1133 = vadd.f32 %v1107, 1e-05
        %v1134 = vadd.f32 %v1108, 1e-05
        %v1135 = vadd.f32 %v1109, 1e-05
        %v1136 = vadd.f32 %v1110, 1e-05
        %v1137 = vadd.f32 %v1111, 1e-05
        %v1138 = vadd.f32 %v1112, 1e-05
        %v1139 = vadd.f32 %v1113, 1e-05
        %v1140 = vadd.f32 %v1114, 1e-05
        %v1141 = vadd.f32 %v1115, 1e-05
        %v1142 = vadd.f32 %v1116, 1e-05
        %v1143 = vadd.f32 %v1117, 1e-05
        %v1144 = vadd.f32 %v1118, 1e-05
        %v1145 = vrsqrt.pop %v1132
        %v1146 = vrsqrt.pop %v1133
        %v1147 = vrsqrt.pop %v1134
        %v1148 = vrsqrt.pop %v1135
        %v1149 = vrsqrt.pop %v1136
        %v1150 = vrsqrt.pop %v1137
        %v1151 = vrsqrt.pop %v1138
        %v1152 = vrsqrt.pop %v1139
        %v1153 = vrsqrt.pop %v1140
        %v1154 = vrsqrt.pop %v1141
        %v1155 = vrsqrt.pop %v1142
        %v1156 = vrsqrt.pop %v1143
        %v1157 = vrsqrt.pop %v1144
        %v1158 = vmul.f32 %v1119, %v1145
        %v1159 = vmul.f32 %v1120, %v1146
        %v1160 = vmul.f32 %v1121, %v1147
        %v1161 = vmul.f32 %v1122, %v1148
        %v1162 = vmul.f32 %v1123, %v1149
        %v1163 = vmul.f32 %v1124, %v1150
        %v1164 = vmul.f32 %v1125, %v1151
        %v1165 = vmul.f32 %v1126, %v1152
        %v1166 = vmul.f32 %v1127, %v1153
        %v1167 = vmul.f32 %v1128, %v1154
        %v1168 = vmul.f32 %v1129, %v1155
        %v1169 = vmul.f32 %v1130, %v1156
        %v1170 = vmul.f32 %v1131, %v1157
        %v1171 = vld [vmem:[%s3 + $0x1] sm:$0x1]
        %v1172 = vlaneseq
        %v1173 = vshrl.u32 %v1172, 7
        %v1174 = vsub.s32 0, %v1173
        %v1175 = vrot.slane %v1171, %v1174
        %v1176 = vmul.f32 %v1158, %v1175
        %v1177 = vmul.f32 %v1159, %v1175
        %v1178 = vmul.f32 %v1160, %v1175
        %v1179 = vmul.f32 %v1161, %v1175
        %v1180 = vmul.f32 %v1162, %v1175
        %v1181 = vmul.f32 %v1163, %v1175
        %v1182 = vmul.f32 %v1164, %v1175
        %v1183 = vmul.f32 %v1165, %v1175
        %v1184 = vmul.f32 %v1166, %v1175
        %v1185 = vmul.f32 %v1167, %v1175
        %v1186 = vmul.f32 %v1168, %v1175
        %v1187 = vmul.f32 %v1169, %v1175
        %v1188 = vmul.f32 %v1170, %v1175
        %v1189 = vld [vmem:[%s3 + $0x2] sm:$0x1]
        %v1190 = vlaneseq
        %v1191 = vshrl.u32 %v1190, 7
        %v1192 = vsub.s32 0, %v1191
        %v1193 = vrot.slane %v1189, %v1192
        %v1194 = vadd.f32 %v1176, %v1193
        %v1195 = vadd.f32 %v1177, %v1193
        %v1196 = vadd.f32 %v1178, %v1193
        %v1197 = vadd.f32 %v1179, %v1193
        %v1198 = vadd.f32 %v1180, %v1193
        %v1199 = vadd.f32 %v1181, %v1193
        %v1200 = vadd.f32 %v1182, %v1193
        %v1201 = vadd.f32 %v1183, %v1193
        %v1202 = vadd.f32 %v1184, %v1193
        %v1203 = vadd.f32 %v1185, %v1193
        %v1204 = vadd.f32 %v1186, %v1193
        %v1205 = vadd.f32 %v1187, %v1193
        %v1206 = vadd.f32 %v1188, %v1193
        %v1207 = vld [vmem:[%s4] sm:$0xff]
        %v1208 = vld [vmem:[%s4 + $0x8] sm:$0xff]
        %v1209 = vld [vmem:[%s4 + $0x10] sm:$0xff]
        %v1210 = vld [vmem:[%s4 + $0x18] sm:$0xff]
        %v1211 = vld [vmem:[%s3 + $0x3] sm:$0x1]
        %v1212 = vlaneseq
        %v1213 = vshrl.u32 %v1212, 7
        %v1214 = vsub.s32 0, %v1213
        %v1215 = vrot.slane %v1211, %v1214
        %v1217 = vsel %vm960, %v1194, 0
        %v1220 = vsel %vm960, %v1195, 0
        %v1223 = vsel %vm960, %v1196, 0
        %v1226 = vsel %vm960, %v1197, 0
        %v1229 = vsel %vm960, %v1198, 0
        %v1232 = vsel %vm960, %v1199, 0
        %v1235 = vsel %vm960, %v1200, 0
        %v1238 = vsel %vm960, %v1201, 0
        %v1241 = vsel %vm960, %v1202, 0
        %v1244 = vsel %vm960, %v1203, 0
        %v1247 = vsel %vm960, %v1204, 0
        %v1250 = vsel %vm960, %v1205, 0
        %v1253 = vsel %vm960, %v1206, 0
        %1255 = vmatprep.subr.mxu0 0.0
        %1256 = vmatpush1.msra.mxu0 %v1207
        %1257 = vmatprep.subr.mxu0 0.0
        %1258 = vmatpush1.msra.mxu0 %v1208
        %1259 = vmatprep.subr.mxu0 0.0
        %1260 = vmatpush1.msra.mxu0 %v1209
        %1261 = vmatprep.subr.mxu0 0.0
        %1262 = vmatpush1.msra.mxu0 %v1210
        %1263 = vmatprep.subr.mxu0 0.0
        %1264 = vmatpush1.msra.mxu0 0.0
        %1265 = vmatprep.subr.mxu0 0.0
        %1266 = vmatpush1.msra.mxu0 0.0
        %1267 = vmatprep.subr.mxu0 0.0
        %1268 = vmatpush1.msra.mxu0 0.0
        %1269 = vmatprep.subr.mxu0 0.0
        %1270 = vmatpush1.msra.mxu0 0.0
        %1271 = vmatprep.subr.mxu0 0.0
        %1272 = vmatpush1.msra.mxu0 0.0
        %1273 = vmatprep.subr.mxu0 0.0
        %1274 = vmatpush1.msra.mxu0 0.0
        %1275 = vmatprep.subr.mxu0 0.0
        %1276 = vmatpush1.msra.mxu0 0.0
        %1277 = vmatprep.subr.mxu0 0.0
        %1278 = vmatpush1.msra.mxu0 0.0
        %1279 = vmatprep.subr.mxu0 0.0
        %1280 = vmatpush1.msra.mxu0 0.0
        %1281 = vmatprep.subr.mxu0 0.0
        %1282 = vmatpush1.msra.mxu0 0.0
        %1283 = vmatprep.subr.mxu0 0.0
        %1284 = vmatpush1.msra.mxu0 0.0
        %1285 = vmatprep.subr.mxu0 0.0
        %1286 = vmatpush1.msra.mxu0 0.0
        %1287 = vmatprep.subr.mxu0 0.0
        %1288 = vmatpush1.msra.mxu0 0.0
        %1289 = vmatprep.subr.mxu0 0.0
        %1290 = vmatpush1.msra.mxu0 0.0
        %1291 = vmatprep.subr.mxu0 0.0
        %1292 = vmatpush1.msra.mxu0 0.0
        %1293 = vmatprep.subr.mxu0 0.0
        %1294 = vmatpush1.msra.mxu0 0.0
        %1295 = vmatprep.subr.mxu0 0.0
        %1296 = vmatpush1.msra.mxu0 0.0
        %1297 = vmatprep.subr.mxu0 0.0
        %1298 = vmatpush1.msra.mxu0 0.0
        %1299 = vmatprep.subr.mxu0 0.0
        %1300 = vmatpush1.msra.mxu0 0.0
        %1301 = vmatprep.subr.mxu0 0.0
        %1302 = vmatpush1.msra.mxu0 0.0
        %1303 = vmatprep.subr.mxu0 0.0
        %1304 = vmatpush1.msra.mxu0 0.0
        %1305 = vmatprep.subr.mxu0 0.0
        %1306 = vmatpush1.msra.mxu0 0.0
        %1307 = vmatprep.subr.mxu0 0.0
        %1308 = vmatpush1.msra.mxu0 0.0
        %1309 = vmatprep.subr.mxu0 0.0
        %1310 = vmatpush1.msra.mxu0 0.0
        %1311 = vmatprep.subr.mxu0 0.0
        %1312 = vmatpush1.msra.mxu0 0.0
        %1313 = vmatprep.subr.mxu0 0.0
        %1314 = vmatpush1.msra.mxu0 0.0
        %1315 = vmatprep.subr.mxu0 0.0
        %1316 = vmatpush1.msra.mxu0 0.0
        %1317 = vmatprep.subr.mxu0 0.0
        %1318 = vmatpush1.msra.mxu0 0.0
        %1319 = vmatprep.mubr.f32.mxu0 0.0
        %1320 = vmatmul.mubr.f32.gmra.mrb[0].mxu0 %v1217
        %v1321 = vpop.f32.mrb[0].mxu0
        %v1322 = vadd.f32 %v1215, %v1321
        %v1323 = vpop.f32.mrb[0].mxu0
        %1324 = vmatprep.mubr.f32.mxu0 0.0
        %1325 = vmatmul.mubr.f32.gmra.mrb[0].mxu0 %v1220
        %v1326 = vpop.f32.mrb[0].mxu0
        %v1327 = vadd.f32 %v1215, %v1326
        %v1328 = vpop.f32.mrb[0].mxu0
        %1329 = vmatprep.mubr.f32.mxu0 0.0
        %1330 = vmatmul.mubr.f32.gmra.mrb[0].mxu0 %v1223
        %v1331 = vpop.f32.mrb[0].mxu0
        %v1332 = vadd.f32 %v1215, %v1331
        %v1333 = vpop.f32.mrb[0].mxu0
        %1334 = vmatprep.mubr.f32.mxu0 0.0
        %1335 = vmatmul.mubr.f32.gmra.mrb[0].mxu0 %v1226
        %v1336 = vpop.f32.mrb[0].mxu0
        %v1337 = vadd.f32 %v1215, %v1336
        %v1338 = vpop.f32.mrb[0].mxu0
        %1339 = vmatprep.mubr.f32.mxu0 0.0
        %1340 = vmatmul.mubr.f32.gmra.mrb[0].mxu0 %v1229
        %v1341 = vpop.f32.mrb[0].mxu0
        %v1342 = vadd.f32 %v1215, %v1341
        %v1343 = vpop.f32.mrb[0].mxu0
        %1344 = vmatprep.mubr.f32.mxu0 0.0
        %1345 = vmatmul.mubr.f32.gmra.mrb[0].mxu0 %v1232
        %v1346 = vpop.f32.mrb[0].mxu0
        %v1347 = vadd.f32 %v1215, %v1346
        %v1348 = vpop.f32.mrb[0].mxu0
        %1349 = vmatprep.mubr.f32.mxu0 0.0
        %1350 = vmatmul.mubr.f32.gmra.mrb[0].mxu0 %v1235
        %v1351 = vpop.f32.mrb[0].mxu0
        %v1352 = vadd.f32 %v1215, %v1351
        %v1353 = vpop.f32.mrb[0].mxu0
        %1354 = vmatprep.mubr.f32.mxu0 0.0
        %1355 = vmatmul.mubr.f32.gmra.mrb[0].mxu0 %v1238
        %v1356 = vpop.f32.mrb[0].mxu0
        %v1357 = vadd.f32 %v1215, %v1356
        %v1358 = vpop.f32.mrb[0].mxu0
        %1359 = vmatprep.mubr.f32.mxu0 0.0
        %1360 = vmatmul.mubr.f32.gmra.mrb[0].mxu0 %v1241
        %v1361 = vpop.f32.mrb[0].mxu0
        %v1362 = vadd.f32 %v1215, %v1361
        %v1363 = vpop.f32.mrb[0].mxu0
        %1364 = vmatprep.mubr.f32.mxu0 0.0
        %1365 = vmatmul.mubr.f32.gmra.mrb[0].mxu0 %v1244
        %v1366 = vpop.f32.mrb[0].mxu0
        %v1367 = vadd.f32 %v1215, %v1366
        %v1368 = vpop.f32.mrb[0].mxu0
        %1369 = vmatprep.mubr.f32.mxu0 0.0
        %1370 = vmatmul.mubr.f32.gmra.mrb[0].mxu0 %v1247
        %v1371 = vpop.f32.mrb[0].mxu0
        %v1372 = vadd.f32 %v1215, %v1371
        %v1373 = vpop.f32.mrb[0].mxu0
        %1374 = vmatprep.mubr.f32.mxu0 0.0
        %1375 = vmatmul.mubr.f32.gmra.mrb[0].mxu0 %v1250
        %v1376 = vpop.f32.mrb[0].mxu0
        %v1377 = vadd.f32 %v1215, %v1376
        %v1378 = vpop.f32.mrb[0].mxu0
        %1379 = vmatprep.mubr.f32.mxu0 0.0
        %1380 = vmatmul.mubr.f32.gmra.mrb[0].mxu0 %v1253
        %v1381 = vpop.f32.mrb[0].mxu0
        %v1382 = vadd.f32 %v1215, %v1381
        %v1383 = vpop.f32.mrb[0].mxu0
        %1384 = vdwg.mxu0
        %v1385 = vld [vmem:[%s5] sm:$0xff]
        %v1386 = vld [vmem:[%s5 + $0x8] sm:$0xff]
        %v1387 = vld [vmem:[%s5 + $0x10] sm:$0xff]
        %v1388 = vld [vmem:[%s5 + $0x18] sm:$0xff]
        %v1389 = vld [vmem:[%s7] sm:$0x1]
        %v1390 = vlaneseq
        %v1391 = vshrl.u32 %v1390, 7
        %v1392 = vsub.s32 0, %v1391
        %v1393 = vrot.slane %v1389, %v1392
        %v1395 = vsel %vm960, %v1322, 0
        %v1398 = vsel %vm960, %v1327, 0
        %v1401 = vsel %vm960, %v1332, 0
        %v1404 = vsel %vm960, %v1337, 0
        %v1407 = vsel %vm960, %v1342, 0
        %v1410 = vsel %vm960, %v1347, 0
        %v1413 = vsel %vm960, %v1352, 0
        %v1416 = vsel %vm960, %v1357, 0
        %v1419 = vsel %vm960, %v1362, 0
        %v1422 = vsel %vm960, %v1367, 0
        %v1425 = vsel %vm960, %v1372, 0
        %v1428 = vsel %vm960, %v1377, 0
        %v1431 = vsel %vm960, %v1382, 0
        %1433 = vmatprep.subr.mxu0 0.0
        %1434 = vmatpush1.msra.mxu0 %v1385
        %1435 = vmatprep.subr.mxu0 0.0
        %1436 = vmatpush1.msra.mxu0 %v1386
        %1437 = vmatprep.subr.mxu0 0.0
        %1438 = vmatpush1.msra.mxu0 %v1387
        %1439 = vmatprep.subr.mxu0 0.0
        %1440 = vmatpush1.msra.mxu0 %v1388
        %1441 = vmatprep.subr.mxu0 0.0
        %1442 = vmatpush1.msra.mxu0 0.0
        %1443 = vmatprep.subr.mxu0 0.0
        %1444 = vmatpush1.msra.mxu0 0.0
        %1445 = vmatprep.subr.mxu0 0.0
        %1446 = vmatpush1.msra.mxu0 0.0
        %1447 = vmatprep.subr.mxu0 0.0
        %1448 = vmatpush1.msra.mxu0 0.0
        %1449 = vmatprep.subr.mxu0 0.0
        %1450 = vmatpush1.msra.mxu0 0.0
        %1451 = vmatprep.subr.mxu0 0.0
        %1452 = vmatpush1.msra.mxu0 0.0
        %1453 = vmatprep.subr.mxu0 0.0
        %1454 = vmatpush1.msra.mxu0 0.0
        %1455 = vmatprep.subr.mxu0 0.0
        %1456 = vmatpush1.msra.mxu0 0.0
        %1457 = vmatprep.subr.mxu0 0.0
        %1458 = vmatpush1.msra.mxu0 0.0
        %1459 = vmatprep.subr.mxu0 0.0
        %1460 = vmatpush1.msra.mxu0 0.0
        %1461 = vmatprep.subr.mxu0 0.0
        %1462 = vmatpush1.msra.mxu0 0.0
        %1463 = vmatprep.subr.mxu0 0.0
        %1464 = vmatpush1.msra.mxu0 0.0
        %1465 = vmatprep.subr.mxu0 0.0
        %1466 = vmatpush1.msra.mxu0 0.0
        %1467 = vmatprep.subr.mxu0 0.0
        %1468 = vmatpush1.msra.mxu0 0.0
        %1469 = vmatprep.subr.mxu0 0.0
        %1470 = vmatpush1.msra.mxu0 0.0
        %1471 = vmatprep.subr.mxu0 0.0
        %1472 = vmatpush1.msra.mxu0 0.0
        %1473 = vmatprep.subr.mxu0 0.0
        %1474 = vmatpush1.msra.mxu0 0.0
        %1475 = vmatprep.subr.mxu0 0.0
        %1476 = vmatpush1.msra.mxu0 0.0
        %1477 = vmatprep.subr.mxu0 0.0
        %1478 = vmatpush1.msra.mxu0 0.0
        %1479 = vmatprep.subr.mxu0 0.0
        %1480 = vmatpush1.msra.mxu0 0.0
        %1481 = vmatprep.subr.mxu0 0.0
        %1482 = vmatpush1.msra.mxu0 0.0
        %1483 = vmatprep.subr.mxu0 0.0
        %1484 = vmatpush1.msra.mxu0 0.0
        %1485 = vmatprep.subr.mxu0 0.0
        %1486 = vmatpush1.msra.mxu0 0.0
        %1487 = vmatprep.subr.mxu0 0.0
        %1488 = vmatpush1.msra.mxu0 0.0
        %1489 = vmatprep.subr.mxu0 0.0
        %1490 = vmatpush1.msra.mxu0 0.0
        %1491 = vmatprep.subr.mxu0 0.0
        %1492 = vmatpush1.msra.mxu0 0.0
        %1493 = vmatprep.subr.mxu0 0.0
        %1494 = vmatpush1.msra.mxu0 0.0
        %1495 = vmatprep.subr.mxu0 0.0
        %1496 = vmatpush1.msra.mxu0 0.0
        %1497 = vmatprep.mubr.f32.mxu0 0.0
        %1498 = vmatmul.mubr.f32.gmra.mrb[0].mxu0 %v1395
        %v1499 = vpop.f32.mrb[0].mxu0
        %v1500 = vadd.f32 %v1393, %v1499
        %v1501 = vpop.f32.mrb[0].mxu0
        %1502 = vmatprep.mubr.f32.mxu0 0.0
        %1503 = vmatmul.mubr.f32.gmra.mrb[0].mxu0 %v1398
        %v1504 = vpop.f32.mrb[0].mxu0
        %v1505 = vadd.f32 %v1393, %v1504
        %v1506 = vpop.f32.mrb[0].mxu0
        %1507 = vmatprep.mubr.f32.mxu0 0.0
        %1508 = vmatmul.mubr.f32.gmra.mrb[0].mxu0 %v1401
        %v1509 = vpop.f32.mrb[0].mxu0
        %v1510 = vadd.f32 %v1393, %v1509
        %v1511 = vpop.f32.mrb[0].mxu0
        %1512 = vmatprep.mubr.f32.mxu0 0.0
        %1513 = vmatmul.mubr.f32.gmra.mrb[0].mxu0 %v1404
        %v1514 = vpop.f32.mrb[0].mxu0
        %v1515 = vadd.f32 %v1393, %v1514
        %v1516 = vpop.f32.mrb[0].mxu0
        %1517 = vmatprep.mubr.f32.mxu0 0.0
        %1518 = vmatmul.mubr.f32.gmra.mrb[0].mxu0 %v1407
        %v1519 = vpop.f32.mrb[0].mxu0
        %v1520 = vadd.f32 %v1393, %v1519
        %v1521 = vpop.f32.mrb[0].mxu0
        %1522 = vmatprep.mubr.f32.mxu0 0.0
        %1523 = vmatmul.mubr.f32.gmra.mrb[0].mxu0 %v1410
        %v1524 = vpop.f32.mrb[0].mxu0
        %v1525 = vadd.f32 %v1393, %v1524
        %v1526 = vpop.f32.mrb[0].mxu0
        %1527 = vmatprep.mubr.f32.mxu0 0.0
        %1528 = vmatmul.mubr.f32.gmra.mrb[0].mxu0 %v1413
        %v1529 = vpop.f32.mrb[0].mxu0
        %v1530 = vadd.f32 %v1393, %v1529
        %v1531 = vpop.f32.mrb[0].mxu0
        %1532 = vmatprep.mubr.f32.mxu0 0.0
        %1533 = vmatmul.mubr.f32.gmra.mrb[0].mxu0 %v1416
        %v1534 = vpop.f32.mrb[0].mxu0
        %v1535 = vadd.f32 %v1393, %v1534
        %v1536 = vpop.f32.mrb[0].mxu0
        %1537 = vmatprep.mubr.f32.mxu0 0.0
        %1538 = vmatmul.mubr.f32.gmra.mrb[0].mxu0 %v1419
        %v1539 = vpop.f32.mrb[0].mxu0
        %v1540 = vadd.f32 %v1393, %v1539
        %v1541 = vpop.f32.mrb[0].mxu0
        %1542 = vmatprep.mubr.f32.mxu0 0.0
        %1543 = vmatmul.mubr.f32.gmra.mrb[0].mxu0 %v1422
        %v1544 = vpop.f32.mrb[0].mxu0
        %v1545 = vadd.f32 %v1393, %v1544
        %v1546 = vpop.f32.mrb[0].mxu0
        %1547 = vmatprep.mubr.f32.mxu0 0.0
        %1548 = vmatmul.mubr.f32.gmra.mrb[0].mxu0 %v1425
        %v1549 = vpop.f32.mrb[0].mxu0
        %v1550 = vadd.f32 %v1393, %v1549
        %v1551 = vpop.f32.mrb[0].mxu0
        %1552 = vmatprep.mubr.f32.mxu0 0.0
        %1553 = vmatmul.mubr.f32.gmra.mrb[0].mxu0 %v1428
        %v1554 = vpop.f32.mrb[0].mxu0
        %v1555 = vadd.f32 %v1393, %v1554
        %v1556 = vpop.f32.mrb[0].mxu0
        %1557 = vmatprep.mubr.f32.mxu0 0.0
        %1558 = vmatmul.mubr.f32.gmra.mrb[0].mxu0 %v1431
        %v1559 = vpop.f32.mrb[0].mxu0
        %v1560 = vadd.f32 %v1393, %v1559
        %v1561 = vpop.f32.mrb[0].mxu0
        %1562 = vdwg.mxu0
        %vm1563 = vcmp.ge.f32.partialorder %v1500, 0.0
        %vm1564 = vcmp.ge.f32.partialorder %v1505, 0.0
        %vm1565 = vcmp.ge.f32.partialorder %v1510, 0.0
        %vm1566 = vcmp.ge.f32.partialorder %v1515, 0.0
        %vm1567 = vcmp.ge.f32.partialorder %v1520, 0.0
        %vm1568 = vcmp.ge.f32.partialorder %v1525, 0.0
        %vm1569 = vcmp.ge.f32.partialorder %v1530, 0.0
        %vm1570 = vcmp.ge.f32.partialorder %v1535, 0.0
        %vm1571 = vcmp.ge.f32.partialorder %v1540, 0.0
        %vm1572 = vcmp.ge.f32.partialorder %v1545, 0.0
        %vm1573 = vcmp.ge.f32.partialorder %v1550, 0.0
        %vm1574 = vcmp.ge.f32.partialorder %v1555, 0.0
        %vm1575 = vcmp.ge.f32.partialorder %v1560, 0.0
        %v1576 = vld [vmem:[%s7 + $0x1] sm:$0x1]
        %v1577 = vlaneseq
        %v1578 = vshrl.u32 %v1577, 7
        %v1579 = vsub.s32 0, %v1578
        %v1580 = vrot.slane %v1576, %v1579
        %v1581 = vmul.f32 %v1580, %v1500
        %v1582 = vmul.f32 %v1580, %v1505
        %v1583 = vmul.f32 %v1580, %v1510
        %v1584 = vmul.f32 %v1580, %v1515
        %v1585 = vmul.f32 %v1580, %v1520
        %v1586 = vmul.f32 %v1580, %v1525
        %v1587 = vmul.f32 %v1580, %v1530
        %v1588 = vmul.f32 %v1580, %v1535
        %v1589 = vmul.f32 %v1580, %v1540
        %v1590 = vmul.f32 %v1580, %v1545
        %v1591 = vmul.f32 %v1580, %v1550
        %v1592 = vmul.f32 %v1580, %v1555
        %v1593 = vmul.f32 %v1580, %v1560
        %v1594 = vsel %vm1563, %v1500, %v1581
        %v1595 = vsel %vm1564, %v1505, %v1582
        %v1596 = vsel %vm1565, %v1510, %v1583
        %v1597 = vsel %vm1566, %v1515, %v1584
        %v1598 = vsel %vm1567, %v1520, %v1585
        %v1599 = vsel %vm1568, %v1525, %v1586
        %v1600 = vsel %vm1569, %v1530, %v1587
        %v1601 = vsel %vm1570, %v1535, %v1588
        %v1602 = vsel %vm1571, %v1540, %v1589
        %v1603 = vsel %vm1572, %v1545, %v1590
        %v1604 = vsel %vm1573, %v1550, %v1591
        %v1605 = vsel %vm1574, %v1555, %v1592
        %v1606 = vsel %vm1575, %v1560, %v1593
        %v1607 = vld [vmem:[%s6] sm:$0xff]
        %v1608 = vld [vmem:[%s6 + $0x8] sm:$0xff]
        %v1609 = vld [vmem:[%s6 + $0x10] sm:$0xff]
        %v1610 = vld [vmem:[%s6 + $0x18] sm:$0xff]
        %v1611 = vld [vmem:[%s7 + $0x2] sm:$0x1]
        %v1612 = vlaneseq
        %v1613 = vshrl.u32 %v1612, 7
        %v1614 = vsub.s32 0, %v1613
        %v1615 = vrot.slane %v1611, %v1614
        %v1617 = vsel %vm960, %v1594, 0
        %v1620 = vsel %vm960, %v1595, 0
        %v1623 = vsel %vm960, %v1596, 0
        %v1626 = vsel %vm960, %v1597, 0
        %v1629 = vsel %vm960, %v1598, 0
        %v1632 = vsel %vm960, %v1599, 0
        %v1635 = vsel %vm960, %v1600, 0
        %v1638 = vsel %vm960, %v1601, 0
        %v1641 = vsel %vm960, %v1602, 0
        %v1644 = vsel %vm960, %v1603, 0
        %v1647 = vsel %vm960, %v1604, 0
        %v1650 = vsel %vm960, %v1605, 0
        %v1653 = vsel %vm960, %v1606, 0
        %1655 = vmatprep.subr.mxu0 0.0
        %1656 = vmatpush1.msra.mxu0 %v1607
        %1657 = vmatprep.subr.mxu0 0.0
        %1658 = vmatpush1.msra.mxu0 %v1608
        %1659 = vmatprep.subr.mxu0 0.0
        %1660 = vmatpush1.msra.mxu0 %v1609
        %1661 = vmatprep.subr.mxu0 0.0
        %1662 = vmatpush1.msra.mxu0 %v1610
        %1663 = vmatprep.subr.mxu0 0.0
        %1664 = vmatpush1.msra.mxu0 0.0
        %1665 = vmatprep.subr.mxu0 0.0
        %1666 = vmatpush1.msra.mxu0 0.0
        %1667 = vmatprep.subr.mxu0 0.0
        %1668 = vmatpush1.msra.mxu0 0.0
        %1669 = vmatprep.subr.mxu0 0.0
        %1670 = vmatpush1.msra.mxu0 0.0
        %1671 = vmatprep.subr.mxu0 0.0
        %1672 = vmatpush1.msra.mxu0 0.0
        %1673 = vmatprep.subr.mxu0 0.0
        %1674 = vmatpush1.msra.mxu0 0.0
        %1675 = vmatprep.subr.mxu0 0.0
        %1676 = vmatpush1.msra.mxu0 0.0
        %1677 = vmatprep.subr.mxu0 0.0
        %1678 = vmatpush1.msra.mxu0 0.0
        %1679 = vmatprep.subr.mxu0 0.0
        %1680 = vmatpush1.msra.mxu0 0.0
        %1681 = vmatprep.subr.mxu0 0.0
        %1682 = vmatpush1.msra.mxu0 0.0
        %1683 = vmatprep.subr.mxu0 0.0
        %1684 = vmatpush1.msra.mxu0 0.0
        %1685 = vmatprep.subr.mxu0 0.0
        %1686 = vmatpush1.msra.mxu0 0.0
        %1687 = vmatprep.subr.mxu0 0.0
        %1688 = vmatpush1.msra.mxu0 0.0
        %1689 = vmatprep.subr.mxu0 0.0
        %1690 = vmatpush1.msra.mxu0 0.0
        %1691 = vmatprep.subr.mxu0 0.0
        %1692 = vmatpush1.msra.mxu0 0.0
        %1693 = vmatprep.subr.mxu0 0.0
        %1694 = vmatpush1.msra.mxu0 0.0
        %1695 = vmatprep.subr.mxu0 0.0
        %1696 = vmatpush1.msra.mxu0 0.0
        %1697 = vmatprep.subr.mxu0 0.0
        %1698 = vmatpush1.msra.mxu0 0.0
        %1699 = vmatprep.subr.mxu0 0.0
        %1700 = vmatpush1.msra.mxu0 0.0
        %1701 = vmatprep.subr.mxu0 0.0
        %1702 = vmatpush1.msra.mxu0 0.0
        %1703 = vmatprep.subr.mxu0 0.0
        %1704 = vmatpush1.msra.mxu0 0.0
        %1705 = vmatprep.subr.mxu0 0.0
        %1706 = vmatpush1.msra.mxu0 0.0
        %1707 = vmatprep.subr.mxu0 0.0
        %1708 = vmatpush1.msra.mxu0 0.0
        %1709 = vmatprep.subr.mxu0 0.0
        %1710 = vmatpush1.msra.mxu0 0.0
        %1711 = vmatprep.subr.mxu0 0.0
        %1712 = vmatpush1.msra.mxu0 0.0
        %1713 = vmatprep.subr.mxu0 0.0
        %1714 = vmatpush1.msra.mxu0 0.0
        %1715 = vmatprep.subr.mxu0 0.0
        %1716 = vmatpush1.msra.mxu0 0.0
        %1717 = vmatprep.subr.mxu0 0.0
        %1718 = vmatpush1.msra.mxu0 0.0
        %1719 = vmatprep.mubr.f32.mxu0 0.0
        %1720 = vmatmul.mubr.f32.gmra.mrb[0].mxu0 %v1617
        %v1721 = vpop.f32.mrb[0].mxu0
        %v1722 = vadd.f32 %v1615, %v1721
        %v1723 = vpop.f32.mrb[0].mxu0
        %1724 = vmatprep.mubr.f32.mxu0 0.0
        %1725 = vmatmul.mubr.f32.gmra.mrb[0].mxu0 %v1620
        %v1726 = vpop.f32.mrb[0].mxu0
        %v1727 = vadd.f32 %v1615, %v1726
        %v1728 = vpop.f32.mrb[0].mxu0
        %1729 = vmatprep.mubr.f32.mxu0 0.0
        %1730 = vmatmul.mubr.f32.gmra.mrb[0].mxu0 %v1623
        %v1731 = vpop.f32.mrb[0].mxu0
        %v1732 = vadd.f32 %v1615, %v1731
        %v1733 = vpop.f32.mrb[0].mxu0
        %1734 = vmatprep.mubr.f32.mxu0 0.0
        %1735 = vmatmul.mubr.f32.gmra.mrb[0].mxu0 %v1626
        %v1736 = vpop.f32.mrb[0].mxu0
        %v1737 = vadd.f32 %v1615, %v1736
        %v1738 = vpop.f32.mrb[0].mxu0
        %1739 = vmatprep.mubr.f32.mxu0 0.0
        %1740 = vmatmul.mubr.f32.gmra.mrb[0].mxu0 %v1629
        %v1741 = vpop.f32.mrb[0].mxu0
        %v1742 = vadd.f32 %v1615, %v1741
        %v1743 = vpop.f32.mrb[0].mxu0
        %1744 = vmatprep.mubr.f32.mxu0 0.0
        %1745 = vmatmul.mubr.f32.gmra.mrb[0].mxu0 %v1632
        %v1746 = vpop.f32.mrb[0].mxu0
        %v1747 = vadd.f32 %v1615, %v1746
        %v1748 = vpop.f32.mrb[0].mxu0
        %1749 = vmatprep.mubr.f32.mxu0 0.0
        %1750 = vmatmul.mubr.f32.gmra.mrb[0].mxu0 %v1635
        %v1751 = vpop.f32.mrb[0].mxu0
        %v1752 = vadd.f32 %v1615, %v1751
        %v1753 = vpop.f32.mrb[0].mxu0
        %1754 = vmatprep.mubr.f32.mxu0 0.0
        %1755 = vmatmul.mubr.f32.gmra.mrb[0].mxu0 %v1638
        %v1756 = vpop.f32.mrb[0].mxu0
        %v1757 = vadd.f32 %v1615, %v1756
        %v1758 = vpop.f32.mrb[0].mxu0
        %1759 = vmatprep.mubr.f32.mxu0 0.0
        %1760 = vmatmul.mubr.f32.gmra.mrb[0].mxu0 %v1641
        %v1761 = vpop.f32.mrb[0].mxu0
        %v1762 = vadd.f32 %v1615, %v1761
        %v1763 = vpop.f32.mrb[0].mxu0
        %1764 = vmatprep.mubr.f32.mxu0 0.0
        %1765 = vmatmul.mubr.f32.gmra.mrb[0].mxu0 %v1644
        %v1766 = vpop.f32.mrb[0].mxu0
        %v1767 = vadd.f32 %v1615, %v1766
        %v1768 = vpop.f32.mrb[0].mxu0
        %1769 = vmatprep.mubr.f32.mxu0 0.0
        %1770 = vmatmul.mubr.f32.gmra.mrb[0].mxu0 %v1647
        %v1771 = vpop.f32.mrb[0].mxu0
        %v1772 = vadd.f32 %v1615, %v1771
        %v1773 = vpop.f32.mrb[0].mxu0
        %1774 = vmatprep.mubr.f32.mxu0 0.0
        %1775 = vmatmul.mubr.f32.gmra.mrb[0].mxu0 %v1650
        %v1776 = vpop.f32.mrb[0].mxu0
        %v1777 = vadd.f32 %v1615, %v1776
        %v1778 = vpop.f32.mrb[0].mxu0
        %1779 = vmatprep.mubr.f32.mxu0 0.0
        %1780 = vmatmul.mubr.f32.gmra.mrb[0].mxu0 %v1653
        %v1781 = vpop.f32.mrb[0].mxu0
        %v1782 = vadd.f32 %v1615, %v1781
        %v1783 = vpop.f32.mrb[0].mxu0
        %1784 = vdwg.mxu0
        %v1785 = vadd.f32 %v1722, %v1322
        %v1786 = vadd.f32 %v1727, %v1327
        %v1787 = vadd.f32 %v1732, %v1332
        %v1788 = vadd.f32 %v1737, %v1337
        %v1789 = vadd.f32 %v1742, %v1342
        %v1790 = vadd.f32 %v1747, %v1347
        %v1791 = vadd.f32 %v1752, %v1352
        %v1792 = vadd.f32 %v1757, %v1357
        %v1793 = vadd.f32 %v1762, %v1362
        %v1794 = vadd.f32 %v1767, %v1367
        %v1795 = vadd.f32 %v1772, %v1372
        %v1796 = vadd.f32 %v1777, %v1377
        %v1797 = vadd.f32 %v1782, %v1382
        %vm1798 = vcmp.ge.f32.partialorder %v1785, 0.0
        %vm1799 = vcmp.ge.f32.partialorder %v1786, 0.0
        %vm1800 = vcmp.ge.f32.partialorder %v1787, 0.0
        %vm1801 = vcmp.ge.f32.partialorder %v1788, 0.0
        %vm1802 = vcmp.ge.f32.partialorder %v1789, 0.0
        %vm1803 = vcmp.ge.f32.partialorder %v1790, 0.0
        %vm1804 = vcmp.ge.f32.partialorder %v1791, 0.0
        %vm1805 = vcmp.ge.f32.partialorder %v1792, 0.0
        %vm1806 = vcmp.ge.f32.partialorder %v1793, 0.0
        %vm1807 = vcmp.ge.f32.partialorder %v1794, 0.0
        %vm1808 = vcmp.ge.f32.partialorder %v1795, 0.0
        %vm1809 = vcmp.ge.f32.partialorder %v1796, 0.0
        %vm1810 = vcmp.ge.f32.partialorder %v1797, 0.0
        %v1811 = vld [vmem:[%s7 + $0x3] sm:$0x1]
        %v1812 = vlaneseq
        %v1813 = vshrl.u32 %v1812, 7
        %v1814 = vsub.s32 0, %v1813
        %v1815 = vrot.slane %v1811, %v1814
        %v1816 = vmul.f32 %v1815, %v1785
        %v1817 = vmul.f32 %v1815, %v1786
        %v1818 = vmul.f32 %v1815, %v1787
        %v1819 = vmul.f32 %v1815, %v1788
        %v1820 = vmul.f32 %v1815, %v1789
        %v1821 = vmul.f32 %v1815, %v1790
        %v1822 = vmul.f32 %v1815, %v1791
        %v1823 = vmul.f32 %v1815, %v1792
        %v1824 = vmul.f32 %v1815, %v1793
        %v1825 = vmul.f32 %v1815, %v1794
        %v1826 = vmul.f32 %v1815, %v1795
        %v1827 = vmul.f32 %v1815, %v1796
        %v1828 = vmul.f32 %v1815, %v1797
        %v1829 = vsel %vm1798, %v1785, %v1816
        %v1830 = vsel %vm1799, %v1786, %v1817
        %v1831 = vsel %vm1800, %v1787, %v1818
        %v1832 = vsel %vm1801, %v1788, %v1819
        %v1833 = vsel %vm1802, %v1789, %v1820
        %v1834 = vsel %vm1803, %v1790, %v1821
        %v1835 = vsel %vm1804, %v1791, %v1822
        %v1836 = vsel %vm1805, %v1792, %v1823
        %v1837 = vsel %vm1806, %v1793, %v1824
        %v1838 = vsel %vm1807, %v1794, %v1825
        %v1839 = vsel %vm1808, %v1795, %v1826
        %v1840 = vsel %vm1809, %v1796, %v1827
        %v1841 = vsel %vm1810, %v1797, %v1828
        %1842 = vst.msk [vmem:[#allocation2] sm:$0xff] %vm960, %v1829
        %1843 = vst.msk [vmem:[#allocation2 + $0x8] sm:$0xff] %vm960, %v1830
        %1844 = vst.msk [vmem:[#allocation2 + $0x10] sm:$0xff] %vm960, %v1831
        %1845 = vst.msk [vmem:[#allocation2 + $0x18] sm:$0xff] %vm960, %v1832
        %1846 = vst.msk [vmem:[#allocation2 + $0x20] sm:$0xff] %vm960, %v1833
        %1847 = vst.msk [vmem:[#allocation2 + $0x28] sm:$0xff] %vm960, %v1834
        %1848 = vst.msk [vmem:[#allocation2 + $0x30] sm:$0xff] %vm960, %v1835
        %1849 = vst.msk [vmem:[#allocation2 + $0x38] sm:$0xff] %vm960, %v1836
        %1850 = vst.msk [vmem:[#allocation2 + $0x40] sm:$0xff] %vm960, %v1837
        %1851 = vst.msk [vmem:[#allocation2 + $0x48] sm:$0xff] %vm960, %v1838
        %1852 = vst.msk [vmem:[#allocation2 + $0x50] sm:$0xff] %vm960, %v1839
        %1853 = vst.msk [vmem:[#allocation2 + $0x58] sm:$0xff] %vm960, %v1840
        %1854 = vst.msk [vmem:[#allocation2 + $0x60] sm:$0x7] %vm997, %v1841
        %v1855 = vld [vmem:[#allocation2] ss:$3 sm:$0xff]
        %s1856 = scalar_lea.vmem [#allocation2], 24
        %v1857 = vld [vmem:[%s1856] ss:$3 sm:$0xff]
        %s1858 = scalar_lea.vmem [#allocation2], 48
        %v1859 = vld [vmem:[%s1858] ss:$3 sm:$0xff]
        %s1860 = scalar_lea.vmem [#allocation2], 72
        %v1861 = vld [vmem:[%s1860] ss:$3 sm:$0xff]
        %s1862 = scalar_lea.vmem [#allocation2], 96
        %v1863 = vld [vmem:[%s1862] ss:$3 sm:$0x1]
        %s1864 = scalar_lea.vmem [#allocation2], 1
        %v1865 = vld [vmem:[%s1864] ss:$3 sm:$0xff]
        %s1866 = scalar_lea.vmem [#allocation2], 25
        %v1867 = vld [vmem:[%s1866] ss:$3 sm:$0xff]
        %s1868 = scalar_lea.vmem [#allocation2], 49
        %v1869 = vld [vmem:[%s1868] ss:$3 sm:$0xff]
        %s1870 = scalar_lea.vmem [#allocation2], 73
        %v1871 = vld [vmem:[%s1870] ss:$3 sm:$0xff]
        %s1872 = scalar_lea.vmem [#allocation2], 97
        %v1873 = vld [vmem:[%s1872] ss:$3 sm:$0x1]
        %v1874 = vmax.f32 %v1855, %v1865
        %v1875 = vmax.f32 %v1857, %v1867
        %v1876 = vmax.f32 %v1859, %v1869
        %v1877 = vmax.f32 %v1861, %v1871
        %v1878 = vmax.f32 %v1863, %v1873
        %s1879 = scalar_lea.vmem [#allocation2], 2
        %v1880 = vld [vmem:[%s1879] ss:$3 sm:$0xff]
        %s1881 = scalar_lea.vmem [#allocation2], 26
        %v1882 = vld [vmem:[%s1881] ss:$3 sm:$0xff]
        %s1883 = scalar_lea.vmem [#allocation2], 50
        %v1884 = vld [vmem:[%s1883] ss:$3 sm:$0xff]
        %s1885 = scalar_lea.vmem [#allocation2], 74
        %v1886 = vld [vmem:[%s1885] ss:$3 sm:$0xff]
        %s1887 = scalar_lea.vmem [#allocation2], 98
        %v1888 = vld [vmem:[%s1887] ss:$3 sm:$0x1]
        %v1889 = vmax.f32 %v1874, %v1880
        %v1890 = vmax.f32 %v1875, %v1882
        %v1891 = vmax.f32 %v1876, %v1884
        %v1892 = vmax.f32 %v1877, %v1886
        %v1893 = vmax.f32 %v1878, %v1888
        %v1894 = vld [vmem:[%s8] sm:$0xff]
        %v1895 = vld [vmem:[%s8 + $0x8] sm:$0xff]
        %v1896 = vld [vmem:[%s8 + $0x10] sm:$0xff]
        %v1897 = vld [vmem:[%s8 + $0x18] sm:$0xff]
        %v1898 = vld [vmem:[%s10] sm:$0x1]
        %v1899 = vlaneseq
        %v1900 = vshrl.u32 %v1899, 7
        %v1901 = vsub.s32 0, %v1900
        %v1902 = vrot.slane %v1898, %v1901
        %v1904 = vsel %vm960, %v1889, 0
        %v1907 = vsel %vm960, %v1890, 0
        %v1910 = vsel %vm960, %v1891, 0
        %v1913 = vsel %vm960, %v1892, 0
        %v1916 = vsel %vm960, %v1893, 0
        %1918 = vmatprep.subr.mxu0 0.0
        %1919 = vmatpush1.msra.mxu0 %v1894
        %1920 = vmatprep.subr.mxu0 0.0
        %1921 = vmatpush1.msra.mxu0 %v1895
        %1922 = vmatprep.subr.mxu0 0.0
        %1923 = vmatpush1.msra.mxu0 %v1896
        %1924 = vmatprep.subr.mxu0 0.0
        %1925 = vmatpush1.msra.mxu0 %v1897
        %1926 = vmatprep.subr.mxu0 0.0
        %1927 = vmatpush1.msra.mxu0 0.0
        %1928 = vmatprep.subr.mxu0 0.0
        %1929 = vmatpush1.msra.mxu0 0.0
        %1930 = vmatprep.subr.mxu0 0.0
        %1931 = vmatpush1.msra.mxu0 0.0
        %1932 = vmatprep.subr.mxu0 0.0
        %1933 = vmatpush1.msra.mxu0 0.0
        %1934 = vmatprep.subr.mxu0 0.0
        %1935 = vmatpush1.msra.mxu0 0.0
        %1936 = vmatprep.subr.mxu0 0.0
        %1937 = vmatpush1.msra.mxu0 0.0
        %1938 = vmatprep.subr.mxu0 0.0
        %1939 = vmatpush1.msra.mxu0 0.0
        %1940 = vmatprep.subr.mxu0 0.0
        %1941 = vmatpush1.msra.mxu0 0.0
        %1942 = vmatprep.subr.mxu0 0.0
        %1943 = vmatpush1.msra.mxu0 0.0
        %1944 = vmatprep.subr.mxu0 0.0
        %1945 = vmatpush1.msra.mxu0 0.0
        %1946 = vmatprep.subr.mxu0 0.0
        %1947 = vmatpush1.msra.mxu0 0.0
        %1948 = vmatprep.subr.mxu0 0.0
        %1949 = vmatpush1.msra.mxu0 0.0
        %1950 = vmatprep.subr.mxu0 0.0
        %1951 = vmatpush1.msra.mxu0 0.0
        %1952 = vmatprep.subr.mxu0 0.0
        %1953 = vmatpush1.msra.mxu0 0.0
        %1954 = vmatprep.subr.mxu0 0.0
        %1955 = vmatpush1.msra.mxu0 0.0
        %1956 = vmatprep.subr.mxu0 0.0
        %1957 = vmatpush1.msra.mxu0 0.0
        %1958 = vmatprep.subr.mxu0 0.0
        %1959 = vmatpush1.msra.mxu0 0.0
        %1960 = vmatprep.subr.mxu0 0.0
        %1961 = vmatpush1.msra.mxu0 0.0
        %1962 = vmatprep.subr.mxu0 0.0
        %1963 = vmatpush1.msra.mxu0 0.0
        %1964 = vmatprep.subr.mxu0 0.0
        %1965 = vmatpush1.msra.mxu0 0.0
        %1966 = vmatprep.subr.mxu0 0.0
        %1967 = vmatpush1.msra.mxu0 0.0
        %1968 = vmatprep.subr.mxu0 0.0
        %1969 = vmatpush1.msra.mxu0 0.0
        %1970 = vmatprep.subr.mxu0 0.0
        %1971 = vmatpush1.msra.mxu0 0.0
        %1972 = vmatprep.subr.mxu0 0.0
        %1973 = vmatpush1.msra.mxu0 0.0
        %1974 = vmatprep.subr.mxu0 0.0
        %1975 = vmatpush1.msra.mxu0 0.0
        %1976 = vmatprep.subr.mxu0 0.0
        %1977 = vmatpush1.msra.mxu0 0.0
        %1978 = vmatprep.subr.mxu0 0.0
        %1979 = vmatpush1.msra.mxu0 0.0
        %1980 = vmatprep.subr.mxu0 0.0
        %1981 = vmatpush1.msra.mxu0 0.0
        %1982 = vmatprep.mubr.f32.mxu0 0.0
        %1983 = vmatmul.mubr.f32.gmra.mrb[0].mxu0 %v1904
        %v1984 = vpop.f32.mrb[0].mxu0
        %v1985 = vadd.f32 %v1902, %v1984
        %v1986 = vpop.f32.mrb[0].mxu0
        %1987 = vmatprep.mubr.f32.mxu0 0.0
        %1988 = vmatmul.mubr.f32.gmra.mrb[0].mxu0 %v1907
        %v1989 = vpop.f32.mrb[0].mxu0
        %v1990 = vadd.f32 %v1902, %v1989
        %v1991 = vpop.f32.mrb[0].mxu0
        %1992 = vmatprep.mubr.f32.mxu0 0.0
        %1993 = vmatmul.mubr.f32.gmra.mrb[0].mxu0 %v1910
        %v1994 = vpop.f32.mrb[0].mxu0
        %v1995 = vadd.f32 %v1902, %v1994
        %v1996 = vpop.f32.mrb[0].mxu0
        %1997 = vmatprep.mubr.f32.mxu0 0.0
        %1998 = vmatmul.mubr.f32.gmra.mrb[0].mxu0 %v1913
        %v1999 = vpop.f32.mrb[0].mxu0
        %v2000 = vadd.f32 %v1902, %v1999
        %v2001 = vpop.f32.mrb[0].mxu0
        %2002 = vmatprep.mubr.f32.mxu0 0.0
        %2003 = vmatmul.mubr.f32.gmra.mrb[0].mxu0 %v1916
        %v2004 = vpop.f32.mrb[0].mxu0
        %v2005 = vadd.f32 %v1902, %v2004
        %v2006 = vpop.f32.mrb[0].mxu0
        %2007 = vdwg.mxu0
        %vm2008 = vcmp.ge.f32.partialorder %v1985, 0.0
        %vm2009 = vcmp.ge.f32.partialorder %v1990, 0.0
        %vm2010 = vcmp.ge.f32.partialorder %v1995, 0.0
        %vm2011 = vcmp.ge.f32.partialorder %v2000, 0.0
        %vm2012 = vcmp.ge.f32.partialorder %v2005, 0.0
        %v2013 = vld [vmem:[%s10 + $0x1] sm:$0x1]
        %v2014 = vlaneseq
        %v2015 = vshrl.u32 %v2014, 7
        %v2016 = vsub.s32 0, %v2015
        %v2017 = vrot.slane %v2013, %v2016
        %v2018 = vmul.f32 %v2017, %v1985
        %v2019 = vmul.f32 %v2017, %v1990
        %v2020 = vmul.f32 %v2017, %v1995
        %v2021 = vmul.f32 %v2017, %v2000
        %v2022 = vmul.f32 %v2017, %v2005
        %v2023 = vsel %vm2008, %v1985, %v2018
        %v2024 = vsel %vm2009, %v1990, %v2019
        %v2025 = vsel %vm2010, %v1995, %v2020
        %v2026 = vsel %vm2011, %v2000, %v2021
        %v2027 = vsel %vm2012, %v2005, %v2022
        %v2028 = vld [vmem:[%s9] sm:$0xff]
        %v2029 = vld [vmem:[%s9 + $0x8] sm:$0xff]
        %v2030 = vld [vmem:[%s9 + $0x10] sm:$0xff]
        %v2031 = vld [vmem:[%s9 + $0x18] sm:$0xff]
        %v2032 = vld [vmem:[%s9 + $0x20] sm:$0xff]
        %v2033 = vld [vmem:[%s10 + $0x2] sm:$0x1]
        %v2034 = vlaneseq
        %v2035 = vshrl.u32 %v2034, 7
        %v2036 = vsub.s32 0, %v2035
        %v2037 = vrot.slane %v2033, %v2036
        %vm2038 = vcmask 326656
        %v2040 = vsel %vm2038, %v2023, 0
        %v2043 = vsel %vm2038, %v2024, 0
        %v2046 = vsel %vm2038, %v2025, 0
        %v2049 = vsel %vm2038, %v2026, 0
        %v2052 = vsel %vm2038, %v2027, 0
        %2054 = vmatprep.subr.mxu0 0.0
        %2055 = vmatpush1.msra.mxu0 %v2028
        %2056 = vmatprep.subr.mxu0 0.0
        %2057 = vmatpush1.msra.mxu0 %v2029
        %2058 = vmatprep.subr.mxu0 0.0
        %2059 = vmatpush1.msra.mxu0 %v2030
        %2060 = vmatprep.subr.mxu0 0.0
        %2061 = vmatpush1.msra.mxu0 %v2031
        %2062 = vmatprep.subr.mxu0 0.0
        %2063 = vmatpush1.msra.mxu0 %v2032
        %2064 = vmatprep.subr.mxu0 0.0
        %2065 = vmatpush1.msra.mxu0 0.0
        %2066 = vmatprep.subr.mxu0 0.0
        %2067 = vmatpush1.msra.mxu0 0.0
        %2068 = vmatprep.subr.mxu0 0.0
        %2069 = vmatpush1.msra.mxu0 0.0
        %2070 = vmatprep.subr.mxu0 0.0
        %2071 = vmatpush1.msra.mxu0 0.0
        %2072 = vmatprep.subr.mxu0 0.0
        %2073 = vmatpush1.msra.mxu0 0.0
        %2074 = vmatprep.subr.mxu0 0.0
        %2075 = vmatpush1.msra.mxu0 0.0
        %2076 = vmatprep.subr.mxu0 0.0
        %2077 = vmatpush1.msra.mxu0 0.0
        %2078 = vmatprep.subr.mxu0 0.0
        %2079 = vmatpush1.msra.mxu0 0.0
        %2080 = vmatprep.subr.mxu0 0.0
        %2081 = vmatpush1.msra.mxu0 0.0
        %2082 = vmatprep.subr.mxu0 0.0
        %2083 = vmatpush1.msra.mxu0 0.0
        %2084 = vmatprep.subr.mxu0 0.0
        %2085 = vmatpush1.msra.mxu0 0.0
        %2086 = vmatprep.subr.mxu0 0.0
        %2087 = vmatpush1.msra.mxu0 0.0
        %2088 = vmatprep.subr.mxu0 0.0
        %2089 = vmatpush1.msra.mxu0 0.0
        %2090 = vmatprep.subr.mxu0 0.0
        %2091 = vmatpush1.msra.mxu0 0.0
        %2092 = vmatprep.subr.mxu0 0.0
        %2093 = vmatpush1.msra.mxu0 0.0
        %2094 = vmatprep.subr.mxu0 0.0
        %2095 = vmatpush1.msra.mxu0 0.0
        %2096 = vmatprep.subr.mxu0 0.0
        %2097 = vmatpush1.msra.mxu0 0.0
        %2098 = vmatprep.subr.mxu0 0.0
        %2099 = vmatpush1.msra.mxu0 0.0
        %2100 = vmatprep.subr.mxu0 0.0
        %2101 = vmatpush1.msra.mxu0 0.0
        %2102 = vmatprep.subr.mxu0 0.0
        %2103 = vmatpush1.msra.mxu0 0.0
        %2104 = vmatprep.subr.mxu0 0.0
        %2105 = vmatpush1.msra.mxu0 0.0
        %2106 = vmatprep.subr.mxu0 0.0
        %2107 = vmatpush1.msra.mxu0 0.0
        %2108 = vmatprep.subr.mxu0 0.0
        %2109 = vmatpush1.msra.mxu0 0.0
        %2110 = vmatprep.subr.mxu0 0.0
        %2111 = vmatpush1.msra.mxu0 0.0
        %2112 = vmatprep.subr.mxu0 0.0
        %2113 = vmatpush1.msra.mxu0 0.0
        %2114 = vmatprep.subr.mxu0 0.0
        %2115 = vmatpush1.msra.mxu0 0.0
        %2116 = vmatprep.subr.mxu0 0.0
        %2117 = vmatpush1.msra.mxu0 0.0
        %2118 = vmatprep.mubr.f32.mxu0 0.0
        %2119 = vmatmul.mubr.f32.gmra.mrb[0].mxu0 %v2040
        %v2120 = vpop.f32.mrb[0].mxu0
        %v2121 = vadd.f32 %v2037, %v2120
        %v2122 = vpop.f32.mrb[0].mxu0
        %2123 = vmatprep.mubr.f32.mxu0 0.0
        %2124 = vmatmul.mubr.f32.gmra.mrb[0].mxu0 %v2043
        %v2125 = vpop.f32.mrb[0].mxu0
        %v2126 = vadd.f32 %v2037, %v2125
        %v2127 = vpop.f32.mrb[0].mxu0
        %2128 = vmatprep.mubr.f32.mxu0 0.0
        %2129 = vmatmul.mubr.f32.gmra.mrb[0].mxu0 %v2046
        %v2130 = vpop.f32.mrb[0].mxu0
        %v2131 = vadd.f32 %v2037, %v2130
        %v2132 = vpop.f32.mrb[0].mxu0
        %2133 = vmatprep.mubr.f32.mxu0 0.0
        %2134 = vmatmul.mubr.f32.gmra.mrb[0].mxu0 %v2049
        %v2135 = vpop.f32.mrb[0].mxu0
        %v2136 = vadd.f32 %v2037, %v2135
        %v2137 = vpop.f32.mrb[0].mxu0
        %2138 = vmatprep.mubr.f32.mxu0 0.0
        %2139 = vmatmul.mubr.f32.gmra.mrb[0].mxu0 %v2052
        %v2140 = vpop.f32.mrb[0].mxu0
        %v2141 = vadd.f32 %v2037, %v2140
        %v2142 = vpop.f32.mrb[0].mxu0
        %2143 = vdwg.mxu0
        %v2144 = vld [vmem:[%s11] sm:$0xff]
        %v2145 = vld [vmem:[%s11 + $0x8] sm:$0xff]
        %v2146 = vld [vmem:[%s11 + $0x10] sm:$0xff]
        %v2147 = vld [vmem:[%s11 + $0x18] sm:$0xff]
        %v2148 = vld [vmem:[%s10 + $0x4] sm:$0x1]
        %v2149 = vlaneseq
        %v2150 = vshrl.u32 %v2149, 7
        %v2151 = vsub.s32 0, %v2150
        %v2152 = vrot.slane %v2148, %v2151
        %2153 = vmatprep.subr.mxu0 0.0
        %2154 = vmatpush1.msra.mxu0 %v2144
        %2155 = vmatprep.subr.mxu0 0.0
        %2156 = vmatpush1.msra.mxu0 %v2145
        %2157 = vmatprep.subr.mxu0 0.0
        %2158 = vmatpush1.msra.mxu0 %v2146
        %2159 = vmatprep.subr.mxu0 0.0
        %2160 = vmatpush1.msra.mxu0 %v2147
        %2161 = vmatprep.subr.mxu0 0.0
        %2162 = vmatpush1.msra.mxu0 0.0
        %2163 = vmatprep.subr.mxu0 0.0
        %2164 = vmatpush1.msra.mxu0 0.0
        %2165 = vmatprep.subr.mxu0 0.0
        %2166 = vmatpush1.msra.mxu0 0.0
        %2167 = vmatprep.subr.mxu0 0.0
        %2168 = vmatpush1.msra.mxu0 0.0
        %2169 = vmatprep.subr.mxu0 0.0
        %2170 = vmatpush1.msra.mxu0 0.0
        %2171 = vmatprep.subr.mxu0 0.0
        %2172 = vmatpush1.msra.mxu0 0.0
        %2173 = vmatprep.subr.mxu0 0.0
        %2174 = vmatpush1.msra.mxu0 0.0
        %2175 = vmatprep.subr.mxu0 0.0
        %2176 = vmatpush1.msra.mxu0 0.0
        %2177 = vmatprep.subr.mxu0 0.0
        %2178 = vmatpush1.msra.mxu0 0.0
        %2179 = vmatprep.subr.mxu0 0.0
        %2180 = vmatpush1.msra.mxu0 0.0
        %2181 = vmatprep.subr.mxu0 0.0
        %2182 = vmatpush1.msra.mxu0 0.0
        %2183 = vmatprep.subr.mxu0 0.0
        %2184 = vmatpush1.msra.mxu0 0.0
        %2185 = vmatprep.subr.mxu0 0.0
        %2186 = vmatpush1.msra.mxu0 0.0
        %2187 = vmatprep.subr.mxu0 0.0
        %2188 = vmatpush1.msra.mxu0 0.0
        %2189 = vmatprep.subr.mxu0 0.0
        %2190 = vmatpush1.msra.mxu0 0.0
        %2191 = vmatprep.subr.mxu0 0.0
        %2192 = vmatpush1.msra.mxu0 0.0
        %2193 = vmatprep.subr.mxu0 0.0
        %2194 = vmatpush1.msra.mxu0 0.0
        %2195 = vmatprep.subr.mxu0 0.0
        %2196 = vmatpush1.msra.mxu0 0.0
        %2197 = vmatprep.subr.mxu0 0.0
        %2198 = vmatpush1.msra.mxu0 0.0
        %2199 = vmatprep.subr.mxu0 0.0
        %2200 = vmatpush1.msra.mxu0 0.0
        %2201 = vmatprep.subr.mxu0 0.0
        %2202 = vmatpush1.msra.mxu0 0.0
        %2203 = vmatprep.subr.mxu0 0.0
        %2204 = vmatpush1.msra.mxu0 0.0
        %2205 = vmatprep.subr.mxu0 0.0
        %2206 = vmatpush1.msra.mxu0 0.0
        %2207 = vmatprep.subr.mxu0 0.0
        %2208 = vmatpush1.msra.mxu0 0.0
        %2209 = vmatprep.subr.mxu0 0.0
        %2210 = vmatpush1.msra.mxu0 0.0
        %2211 = vmatprep.subr.mxu0 0.0
        %2212 = vmatpush1.msra.mxu0 0.0
        %2213 = vmatprep.subr.mxu0 0.0
        %2214 = vmatpush1.msra.mxu0 0.0
        %2215 = vmatprep.subr.mxu0 0.0
        %2216 = vmatpush1.msra.mxu0 0.0
        %2217 = vmatprep.mubr.f32.mxu0 0.0
        %2218 = vmatmul.mubr.f32.gmra.mrb[0].mxu0 %v1904
        %v2219 = vpop.f32.mrb[0].mxu0
        %v2220 = vadd.f32 %v2152, %v2219
        %v2221 = vpop.f32.mrb[0].mxu0
        %2222 = vmatprep.mubr.f32.mxu0 0.0
        %2223 = vmatmul.mubr.f32.gmra.mrb[0].mxu0 %v1907
        %v2224 = vpop.f32.mrb[0].mxu0
        %v2225 = vadd.f32 %v2152, %v2224
        %v2226 = vpop.f32.mrb[0].mxu0
        %2227 = vmatprep.mubr.f32.mxu0 0.0
        %2228 = vmatmul.mubr.f32.gmra.mrb[0].mxu0 %v1910
        %v2229 = vpop.f32.mrb[0].mxu0
        %v2230 = vadd.f32 %v2152, %v2229
        %v2231 = vpop.f32.mrb[0].mxu0
        %2232 = vmatprep.mubr.f32.mxu0 0.0
        %2233 = vmatmul.mubr.f32.gmra.mrb[0].mxu0 %v1913
        %v2234 = vpop.f32.mrb[0].mxu0
        %v2235 = vadd.f32 %v2152, %v2234
        %v2236 = vpop.f32.mrb[0].mxu0
        %2237 = vmatprep.mubr.f32.mxu0 0.0
        %2238 = vmatmul.mubr.f32.gmra.mrb[0].mxu0 %v1916
        %v2239 = vpop.f32.mrb[0].mxu0
        %v2240 = vadd.f32 %v2152, %v2239
        %v2241 = vpop.f32.mrb[0].mxu0
        %2242 = vdwg.mxu0
        %v2243 = vadd.f32 %v2121, %v2220
        %v2244 = vadd.f32 %v2126, %v2225
        %v2245 = vadd.f32 %v2131, %v2230
        %v2246 = vadd.f32 %v2136, %v2235
        %v2247 = vadd.f32 %v2141, %v2240
        %vm2248 = vcmp.ge.f32.partialorder %v2243, 0.0
        %vm2249 = vcmp.ge.f32.partialorder %v2244, 0.0
        %vm2250 = vcmp.ge.f32.partialorder %v2245, 0.0
        %vm2251 = vcmp.ge.f32.partialorder %v2246, 0.0
        %vm2252 = vcmp.ge.f32.partialorder %v2247, 0.0
        %v2253 = vld [vmem:[%s10 + $0x3] sm:$0x1]
        %v2254 = vlaneseq
        %v2255 = vshrl.u32 %v2254, 7
        %v2256 = vsub.s32 0, %v2255
        %v2257 = vrot.slane %v2253, %v2256
        %v2258 = vmul.f32 %v2257, %v2243
        %v2259 = vmul.f32 %v2257, %v2244
        %v2260 = vmul.f32 %v2257, %v2245
        %v2261 = vmul.f32 %v2257, %v2246
        %v2262 = vmul.f32 %v2257, %v2247
        %v2263 = vsel %vm2248, %v2243, %v2258
        %v2264 = vsel %vm2249, %v2244, %v2259
        %v2265 = vsel %vm2250, %v2245, %v2260
        %v2266 = vsel %vm2251, %v2246, %v2261
        %v2267 = vsel %vm2252, %v2247, %v2262
        %2268 = vst.msk [vmem:[#allocation3] sm:$0xff] %vm2038, %v2263
        %2269 = vst.msk [vmem:[#allocation3 + $0x8] sm:$0xff] %vm2038, %v2264
        %2270 = vst.msk [vmem:[#allocation3 + $0x10] sm:$0xff] %vm2038, %v2265
        %2271 = vst.msk [vmem:[#allocation3 + $0x18] sm:$0xff] %vm2038, %v2266
        %vm2272 = vcmask 319488
        %2273 = vst.msk [vmem:[#allocation3 + $0x20] sm:$0x1] %vm2272, %v2267
        %v2274 = vld [vmem:[#allocation3] ss:$3 sm:$0xff]
        %s2275 = scalar_lea.vmem [#allocation3], 24
        %v2276 = vld [vmem:[%s2275] ss:$3 sm:$0x7]
        %s2277 = scalar_lea.vmem [#allocation3], 1
        %v2278 = vld [vmem:[%s2277] ss:$3 sm:$0xff]
        %s2279 = scalar_lea.vmem [#allocation3], 25
        %v2280 = vld [vmem:[%s2279] ss:$3 sm:$0x7]
        %v2281 = vmax.f32 %v2274, %v2278
        %v2282 = vmax.f32 %v2276, %v2280
        %s2283 = scalar_lea.vmem [#allocation3], 2
        %v2284 = vld [vmem:[%s2283] ss:$3 sm:$0xff]
        %s2285 = scalar_lea.vmem [#allocation3], 26
        %v2286 = vld [vmem:[%s2285] ss:$3 sm:$0x7]
        %v2287 = vmax.f32 %v2281, %v2284
        %v2288 = vmax.f32 %v2282, %v2286
        %v2289 = vld [vmem:[%s12] sm:$0xff]
        %v2290 = vld [vmem:[%s12 + $0x8] sm:$0xff]
        %v2291 = vld [vmem:[%s12 + $0x10] sm:$0xff]
        %v2292 = vld [vmem:[%s12 + $0x18] sm:$0xff]
        %v2293 = vld [vmem:[%s12 + $0x20] sm:$0xff]
        %v2294 = vld [vmem:[%s13] sm:$0x1]
        %v2296 = vlaneseq
        %v2297 = vshrl.u32 %v2296, 7
        %v2298 = vsub.s32 0, %v2297
        %v2299 = vrot.slane %v2294, %v2298
        %v2302 = vsel %vm2038, %v2287, 0
        %v2305 = vsel %vm2038, %v2288, 0
        %2307 = vmatprep.subr.mxu0 0.0
        %2308 = vmatpush1.msra.mxu0 %v2289
        %2309 = vmatprep.subr.mxu0 0.0
        %2310 = vmatpush1.msra.mxu0 %v2290
        %2311 = vmatprep.subr.mxu0 0.0
        %2312 = vmatpush1.msra.mxu0 %v2291
        %2313 = vmatprep.subr.mxu0 0.0
        %2314 = vmatpush1.msra.mxu0 %v2292
        %2315 = vmatprep.subr.mxu0 0.0
        %2316 = vmatpush1.msra.mxu0 %v2293
        %2317 = vmatprep.subr.mxu0 0.0
        %2318 = vmatpush1.msra.mxu0 0.0
        %2319 = vmatprep.subr.mxu0 0.0
        %2320 = vmatpush1.msra.mxu0 0.0
        %2321 = vmatprep.subr.mxu0 0.0
        %2322 = vmatpush1.msra.mxu0 0.0
        %2323 = vmatprep.subr.mxu0 0.0
        %2324 = vmatpush1.msra.mxu0 0.0
        %2325 = vmatprep.subr.mxu0 0.0
        %2326 = vmatpush1.msra.mxu0 0.0
        %2327 = vmatprep.subr.mxu0 0.0
        %2328 = vmatpush1.msra.mxu0 0.0
        %2329 = vmatprep.subr.mxu0 0.0
        %2330 = vmatpush1.msra.mxu0 0.0
        %2331 = vmatprep.subr.mxu0 0.0
        %2332 = vmatpush1.msra.mxu0 0.0
        %2333 = vmatprep.subr.mxu0 0.0
        %2334 = vmatpush1.msra.mxu0 0.0
        %2335 = vmatprep.subr.mxu0 0.0
        %2336 = vmatpush1.msra.mxu0 0.0
        %2337 = vmatprep.subr.mxu0 0.0
        %2338 = vmatpush1.msra.mxu0 0.0
        %2339 = vmatprep.subr.mxu0 0.0
        %2340 = vmatpush1.msra.mxu0 0.0
        %2341 = vmatprep.subr.mxu0 0.0
        %2342 = vmatpush1.msra.mxu0 0.0
        %2343 = vmatprep.subr.mxu0 0.0
        %2344 = vmatpush1.msra.mxu0 0.0
        %2345 = vmatprep.subr.mxu0 0.0
        %2346 = vmatpush1.msra.mxu0 0.0
        %2347 = vmatprep.subr.mxu0 0.0
        %2348 = vmatpush1.msra.mxu0 0.0
        %2349 = vmatprep.subr.mxu0 0.0
        %2350 = vmatpush1.msra.mxu0 0.0
        %2351 = vmatprep.subr.mxu0 0.0
        %2352 = vmatpush1.msra.mxu0 0.0
        %2353 = vmatprep.subr.mxu0 0.0
        %2354 = vmatpush1.msra.mxu0 0.0
        %2355 = vmatprep.subr.mxu0 0.0
        %2356 = vmatpush1.msra.mxu0 0.0
        %2357 = vmatprep.subr.mxu0 0.0
        %2358 = vmatpush1.msra.mxu0 0.0
        %2359 = vmatprep.subr.mxu0 0.0
        %2360 = vmatpush1.msra.mxu0 0.0
        %2361 = vmatprep.subr.mxu0 0.0
        %2362 = vmatpush1.msra.mxu0 0.0
        %2363 = vmatprep.subr.mxu0 0.0
        %2364 = vmatpush1.msra.mxu0 0.0
        %2365 = vmatprep.subr.mxu0 0.0
        %2366 = vmatpush1.msra.mxu0 0.0
        %2367 = vmatprep.subr.mxu0 0.0
        %2368 = vmatpush1.msra.mxu0 0.0
        %2369 = vmatprep.subr.mxu0 0.0
        %2370 = vmatpush1.msra.mxu0 0.0
        %2371 = vmatprep.mubr.f32.mxu0 0.0
        %2372 = vmatmul.mubr.f32.gmra.mrb[0].mxu0 %v2302
        %v2373 = vpop.f32.mrb[0].mxu0
        %v2374 = vadd.f32 %v2299, %v2373
        %v2375 = vpop.f32.mrb[0].mxu0
        %2376 = vmatprep.mubr.f32.mxu0 0.0
        %2377 = vmatmul.mubr.f32.gmra.mrb[0].mxu0 %v2305
        %v2378 = vpop.f32.mrb[0].mxu0
        %v2379 = vadd.f32 %v2299, %v2378
        %v2380 = vpop.f32.mrb[0].mxu0
        %2381 = vdwg.mxu0
        %v2382 = vsel %vm2038, %v2374, 0.0
        %vm2383 = vcmask 321536
        %v2384 = vsel %vm2383, %v2379, 0.0
        %v2385 = vadd.f32 %v2382, %v2384
        %v2386 = vrot.slane %v2385, 4
        %v2387 = vadd.f32 %v2385, %v2386
        %v2388 = vrot.slane %v2387, 2
        %v2389 = vadd.f32 %v2387, %v2388
        %v2390 = vrot.slane %v2389, 1
        %v2391 = vadd.f32 %v2389, %v2390
        %v2392 = vrcp.pop 11.0
        %v2393 = vmul.f32 %v2391, %v2392
        %2394 = vst.msk [vmem:[%s554] sm:$0x1] %vm2272, %v2393
        %v2395 = vld [vmem:[%s14] sm:$0xff]
        %v2396 = vld [vmem:[%s14 + $0x8] sm:$0xff]
        %v2397 = vld [vmem:[%s14 + $0x10] sm:$0xff]
        %v2398 = vld [vmem:[%s14 + $0x18] sm:$0xff]
        %v2399 = vld [vmem:[%s14 + $0x20] sm:$0xff]
        %v2400 = vld [vmem:[%s15] sm:$0x1]
        %v2402 = vsel %vm2038, %v2393, 0
        %2404 = vmatprep.subr.mxu0 0.0
        %2405 = vmatpush1.msra.mxu0 %v2395
        %2406 = vmatprep.subr.mxu0 0.0
        %2407 = vmatpush1.msra.mxu0 %v2396
        %2408 = vmatprep.subr.mxu0 0.0
        %2409 = vmatpush1.msra.mxu0 %v2397
        %2410 = vmatprep.subr.mxu0 0.0
        %2411 = vmatpush1.msra.mxu0 %v2398
        %2412 = vmatprep.subr.mxu0 0.0
        %2413 = vmatpush1.msra.mxu0 %v2399
        %2414 = vmatprep.subr.mxu0 0.0
        %2415 = vmatpush1.msra.mxu0 0.0
        %2416 = vmatprep.subr.mxu0 0.0
        %2417 = vmatpush1.msra.mxu0 0.0
        %2418 = vmatprep.subr.mxu0 0.0
        %2419 = vmatpush1.msra.mxu0 0.0
        %2420 = vmatprep.subr.mxu0 0.0
        %2421 = vmatpush1.msra.mxu0 0.0
        %2422 = vmatprep.subr.mxu0 0.0
        %2423 = vmatpush1.msra.mxu0 0.0
        %2424 = vmatprep.subr.mxu0 0.0
        %2425 = vmatpush1.msra.mxu0 0.0
        %2426 = vmatprep.subr.mxu0 0.0
        %2427 = vmatpush1.msra.mxu0 0.0
        %2428 = vmatprep.subr.mxu0 0.0
        %2429 = vmatpush1.msra.mxu0 0.0
        %2430 = vmatprep.subr.mxu0 0.0
        %2431 = vmatpush1.msra.mxu0 0.0
        %2432 = vmatprep.subr.mxu0 0.0
        %2433 = vmatpush1.msra.mxu0 0.0
        %2434 = vmatprep.subr.mxu0 0.0
        %2435 = vmatpush1.msra.mxu0 0.0
        %2436 = vmatprep.subr.mxu0 0.0
        %2437 = vmatpush1.msra.mxu0 0.0
        %2438 = vmatprep.subr.mxu0 0.0
        %2439 = vmatpush1.msra.mxu0 0.0
        %2440 = vmatprep.subr.mxu0 0.0
        %2441 = vmatpush1.msra.mxu0 0.0
        %2442 = vmatprep.subr.mxu0 0.0
        %2443 = vmatpush1.msra.mxu0 0.0
        %2444 = vmatprep.subr.mxu0 0.0
        %2445 = vmatpush1.msra.mxu0 0.0
        %2446 = vmatprep.subr.mxu0 0.0
        %2447 = vmatpush1.msra.mxu0 0.0
        %2448 = vmatprep.subr.mxu0 0.0
        %2449 = vmatpush1.msra.mxu0 0.0
        %2450 = vmatprep.subr.mxu0 0.0
        %2451 = vmatpush1.msra.mxu0 0.0
        %2452 = vmatprep.subr.mxu0 0.0
        %2453 = vmatpush1.msra.mxu0 0.0
        %2454 = vmatprep.subr.mxu0 0.0
        %2455 = vmatpush1.msra.mxu0 0.0
        %2456 = vmatprep.subr.mxu0 0.0
        %2457 = vmatpush1.msra.mxu0 0.0
        %2458 = vmatprep.subr.mxu0 0.0
        %2459 = vmatpush1.msra.mxu0 0.0
        %2460 = vmatprep.subr.mxu0 0.0
        %2461 = vmatpush1.msra.mxu0 0.0
        %2462 = vmatprep.subr.mxu0 0.0
        %2463 = vmatpush1.msra.mxu0 0.0
        %2464 = vmatprep.subr.mxu0 0.0
        %2465 = vmatpush1.msra.mxu0 0.0
        %2466 = vmatprep.subr.mxu0 0.0
        %2467 = vmatpush1.msra.mxu0 0.0
        %2468 = vmatprep.mubr.f32.mxu0 0.0
        %2469 = vmatmul.mubr.f32.gmra.mrb[0].mxu0 %v2402
        %v2470 = vpop.f32.mrb[0].mxu0
        %v2471 = vadd.f32 %v2400, %v2470
        %v2472 = vpop.f32.mrb[0].mxu0
        %2473 = vdwg.mxu0
        %vm2474 = vcmask 73728
        %2475 = vst.msk [vmem:[%s546] sm:$0x1] %vm2474, %v2471
        %p2476 = scmp.lt.s32.totalorder %s32, 1
        %s2477 = scalar_select %p2476, %s32, 1
        %s2478 = scalar_lea.vmem %s16, %s2477
        %s2479 = sand.u32 %s407, 1
        %s2480 = scalar_lea.sflag [#allocation5], %s2479
        %s2481 = sand.u32 %s407, 1
        %s2482 = scalar_lea.vmem [#allocation4], %s2481
        // Predicated region
        $region85: #{spex_plus_short_forward.2} parent=83 // pred_check
          %p2483 = pneg %p391
        $region86: #{spex_plus_short_forward.2} parent=83 // pred_check_branch
          %2485 = sbr.rel (%p2483) target = $region88
        $region87: #{spex_plus_short_forward.2} parent=83 // pred_region
          _
        $region88: #{spex_plus_short_forward.2} parent=83 // pred_fallthru
          _
        // Predicated region
        $region89: #{spex_plus_short_forward.2} parent=83 // pred_check
          %p2486 = pneg %p417
        $region90: #{spex_plus_short_forward.2} parent=83 // pred_check_branch
          %2488 = sbr.rel (%p2486) target = $region92
        $region91: #{spex_plus_short_forward.2} parent=83 // pred_region
          %s2490 = ssub.s32 16, 16
          %2491 = vsyncadd %s2480, %s2490
          %s2492 = smul.addr %s32, 16
          %s2493 = scalar_lea.hbm %s17, %s2492
          %s2495 = sshll.u32 %s2482, 4
          %s2496 = int_to_ptr.vmem [resolvable:$true] %s2495
          %2498 = dma.vmem_to_hbm [thread:$0]  %s2496, 16, %s2493, %s2480
        $region92: #{spex_plus_short_forward.2} parent=83 // pred_fallthru
          _
      $region84: #{spex_plus_short_forward.2} parent=5 // pred_fallthru
        _
      %p2499 = scmp.le.s32.totalorder 2, %s27
      // Predicated region
      $region93: #{spex_plus_short_forward.2} parent=5 // pred_check
        %p2500 = pneg %p2499
      $region94: #{spex_plus_short_forward.2} parent=5 // pred_check_branch
        %2502 = sbr.rel (%p2500) target = $region96
      $region95: #{spex_plus_short_forward.2} parent=5 // pred_region
        %s2503 = ssub.s32 %s27, 2
        // Predicated region
        $region97: #{spex_plus_short_forward.2} parent=95 // pred_check
          %p2504 = pneg %p397
        $region98: #{spex_plus_short_forward.2} parent=95 // pred_check_branch
          %2506 = sbr.rel (%p2504) target = $region100
        $region99: #{spex_plus_short_forward.2} parent=95 // pred_region
          %p2507 = scmp.lt.s32.totalorder %s33, 1
          %s2508 = scalar_select %p2507, %s33, 1
          %s2509 = scalar_lea.vmem %s16, %s2508
        $region100: #{spex_plus_short_forward.2} parent=95 // pred_fallthru
          _
        // Predicated region
        $region101: #{spex_plus_short_forward.2} parent=95 // pred_check
          %p2510 = pneg %p423
        $region102: #{spex_plus_short_forward.2} parent=95 // pred_check_branch
          %2512 = sbr.rel (%p2510) target = $region104
        $region103: #{spex_plus_short_forward.2} parent=95 // pred_region
          %s2513 = sand.u32 %s408, 1
          %s2514 = scalar_lea.sflag [#allocation5], %s2513
          %s2515 = sand.u32 %s408, 1
          %s2516 = scalar_lea.vmem [#allocation4], %s2515
          %2517 = dma.done %s2514, 16
        $region104: #{spex_plus_short_forward.2} parent=95 // pred_fallthru
          _
      $region96: #{spex_plus_short_forward.2} parent=5 // pred_fallthru
        _
    $region6: #{spex_plus_short_forward.2} parent=1 // loop_footer
      %s31 = sadd.s32 1, %s27
    $region7: #{spex_plus_short_forward.2} parent=1 // loop_footer_branch
      %26 = sbr.rel target = $region3
    $region8: #{spex_plus_short_forward.2} parent=1 // loop_exit
      _
    %2518 = vsyncpa [#allocation5], 1
    %s2519 = scalar_lea.sflag [#allocation5], 1
    %2520 = vsyncpa %s2519, 1

// kernel: spex_plus_short_forward.3
$region0: #{spex_plus_short_forward.3}
  #allocation0 [shape = 'u32[]', space=smem, size = 0x4, offset = 0x4, fixed_abs, tag = 'smem constant byte address 0x4 - core index']
  #allocation1 [shape = 'u32[144,128]{1,0:T(1,128)}', space=vmem, size = 0x12000, scoped, tag = 'internal scratch']
  #allocation2 [shape = 'f32[1]{0:T(128)S(6)}', space=smem, size = 0x200, scoped, tag = 'scoped memory for spex_plus_short_forward.3']
  %s0 = inlined_call_operand.vmem [shape: f32[2,200,4], index: 0, kind: input, shape index: {}]
  %s1 = inlined_call_operand.vmem [shape: f32[2,1,40], index: 1, kind: input, shape index: {}]
  %s2 = inlined_call_operand.vmem [shape: f32[4,32], index: 2, kind: input, shape index: {}]
  %s3 = inlined_call_operand.vmem [shape: f32[4,32], index: 3, kind: input, shape index: {}]
  %s4 = inlined_call_operand.vmem [shape: f32[7,32], index: 4, kind: input, shape index: {}]
  %s5 = inlined_call_operand.vmem [shape: f32[32,32], index: 5, kind: input, shape index: {}]
  %s6 = inlined_call_operand.vmem [shape: f32[2,32,48], index: 6, kind: input, shape index: {}]
  %s7 = inlined_call_operand.vmem [shape: f32[1,40,48], index: 7, kind: input, shape index: {}]
  %s8 = inlined_call_operand.vmem [shape: f32[2,11,48], index: 8, kind: input, shape index: {}]
  %s9 = inlined_call_operand.vmem [shape: f32[2,48,32], index: 9, kind: input, shape index: {}]
  %s10 = inlined_call_operand.vmem [shape: f32[32,32], index: 10, kind: input, shape index: {}]
  %s11 = inlined_call_operand.vmem [shape: f32[32,8], index: 11, kind: input, shape index: {}]
  %s12 = inlined_call_operand.<no memory space> [shape: f32[1], index: 12, kind: input, shape index: {}]
  %s13 = inlined_call_operand.vmem [shape: f32[2,200,4], index: 13, kind: output, shape index: {}]
  %s14 = sld [smem:[#allocation0]]
  $region85: #{spex_plus_short_forward.3} parent=0
    _
  %s16 = ssub.s32 1, %s14
  %s17 = scalar_select 0, %s16, %s14
  %18 = sst [smem:[#allocation2]] %s12
  loop: start=0, step=1, limit=4
  $region2: #{spex_plus_short_forward.3} parent=0 // loop_pre_header
    _
  $region3: #{spex_plus_short_forward.3} parent=0 // loop_header
    %s20 = sphi 0, %s24
    %p21 = scmp.ge.s32.totalorder %s20, 4
    %s30 = sphi 0, %s32
    %s33 = sphi 0, %s30
    %s34 = sphi 0, %s33
    %s50 = sphi 0, %s34
    %s56 = sphi 0, %s58
    %s59 = sphi 0, %s56
    %s60 = sphi 0, %s59
    %s76 = sphi 0, %s60
    %s80 = sphi 0, %s80
    %s82 = sphi 0, %s80
    %s83 = sphi 0, %s82
    %s97 = sphi 0, %s83
    %s101 = sphi 0, %s101
    %s103 = sphi 0, %s101
    %s104 = sphi 0, %s103
    %s118 = sphi 0, %s104
    %s122 = sphi 0, %s122
    %s124 = sphi 0, %s122
    %s125 = sphi 0, %s124
    %s139 = sphi 0, %s125
    %s143 = sphi 0, %s143
    %s145 = sphi 0, %s143
    %s146 = sphi 0, %s145
    %s160 = sphi 0, %s146
    %s164 = sphi 0, %s164
    %s166 = sphi 0, %s164
    %s167 = sphi 0, %s166
    %s181 = sphi 0, %s167
    %s185 = sphi 0, %s185
    %s187 = sphi 0, %s185
    %s188 = sphi 0, %s187
    %s202 = sphi 0, %s188
    %s206 = sphi 0, %s206
    %s208 = sphi 0, %s206
    %s209 = sphi 0, %s208
    %s223 = sphi 0, %s209
    %s227 = sphi 0, %s227
    %s229 = sphi 0, %s227
    %s230 = sphi 0, %s229
    %s244 = sphi 0, %s230
    %s248 = sphi 0, %s248
    %s250 = sphi 0, %s248
    %s251 = sphi 0, %s250
    %s265 = sphi 0, %s251
    %s269 = sphi 0, %s269
    %s271 = sphi 0, %s269
    %s272 = sphi 0, %s271
    %s286 = sphi 0, %s272
    %s290 = sphi 0, %s290
    %s292 = sphi 0, %s290
    %s293 = sphi 0, %s292
    %s307 = sphi 0, %s293
    %s313 = sphi 0, %s315
    %s316 = sphi 0, %s313
    %s317 = sphi 0, %s316
    %s333 = sphi 0, %s317
  $region4: #{spex_plus_short_forward.3} parent=0 // loop_header_branch
    %23 = sbr.rel (%p21) target = $region8
  $region5: #{spex_plus_short_forward.3} parent=0 // loop_body
    %s25 = ssub.s32 %s20, 1
    %s26 = ssub.s32 %s20, 2
    %s27 = sadd.s32 %s20, 1
    %s28 = ssub.s32 %s20, %s27
    %p29 = scmp.eq.s32.totalorder %s28, 0
    %s31 = sadd.s32 %s30, 1
    %s32 = scalar_select %p29, %s30, %s31
    %p35 = pneg %p29
    %p36 = scmp.eq.s32.totalorder %s20, 1
    %p37 = por %p35, %p36
    %p38 = scmp.ne.s32.totalorder %s30, %s33
    %p39 = scmp.eq.s32.totalorder %s20, 0
    %p40 = por %p38, %p39
    %p41 = scmp.ne.s32.totalorder %s30, %s33
    %p42 = scmp.eq.s32.totalorder %s25, 1
    %p43 = por %p41, %p42
    %p44 = scmp.ne.s32.totalorder %s33, %s34
    %p45 = scmp.eq.s32.totalorder %s25, 0
    %p46 = por %p44, %p45
    %p47 = scmp.ne.s32.totalorder %s33, %s34
    %p48 = scmp.eq.s32.totalorder %s26, 1
    %p49 = por %p47, %p48
    %p51 = scmp.ne.s32.totalorder %s34, %s50
    %p52 = scmp.eq.s32.totalorder %s26, 0
    %p53 = por %p51, %p52
    %s54 = ssub.s32 %s20, %s27
    %p55 = scmp.eq.s32.totalorder %s54, 0
    %s57 = sadd.s32 %s56, 1
    %s58 = scalar_select %p55, %s56, %s57
    %p61 = pneg %p55
    %p62 = scmp.eq.s32.totalorder %s20, 1
    %p63 = por %p61, %p62
    %p64 = scmp.ne.s32.totalorder %s56, %s59
    %p65 = scmp.eq.s32.totalorder %s20, 0
    %p66 = por %p64, %p65
    %p67 = scmp.ne.s32.totalorder %s56, %s59
    %p68 = scmp.eq.s32.totalorder %s25, 1
    %p69 = por %p67, %p68
    %p70 = scmp.ne.s32.totalorder %s59, %s60
    %p71 = scmp.eq.s32.totalorder %s25, 0
    %p72 = por %p70, %p71
    %p73 = scmp.ne.s32.totalorder %s59, %s60
    %p74 = scmp.eq.s32.totalorder %s26, 1
    %p75 = por %p73, %p74
    %p77 = scmp.ne.s32.totalorder %s60, %s76
    %p78 = scmp.eq.s32.totalorder %s26, 0
    %p79 = por %p77, %p78
    %s81 = sadd.s32 %s80, 1
    %p84 = scmp.eq.s32.totalorder %s20, 1
    %p85 = scmp.ne.s32.totalorder %s80, %s82
    %p86 = scmp.eq.s32.totalorder %s20, 0
    %p87 = por %p85, %p86
    %p88 = scmp.ne.s32.totalorder %s80, %s82
    %p89 = scmp.eq.s32.totalorder %s25, 1
    %p90 = por %p88, %p89
    %p91 = scmp.ne.s32.totalorder %s82, %s83
    %p92 = scmp.eq.s32.totalorder %s25, 0
    %p93 = por %p91, %p92
    %p94 = scmp.ne.s32.totalorder %s82, %s83
    %p95 = scmp.eq.s32.totalorder %s26, 1
    %p96 = por %p94, %p95
    %p98 = scmp.ne.s32.totalorder %s83, %s97
    %p99 = scmp.eq.s32.totalorder %s26, 0
    %p100 = por %p98, %p99
    %s102 = sadd.s32 %s101, 1
    %p105 = scmp.eq.s32.totalorder %s20, 1
    %p106 = scmp.ne.s32.totalorder %s101, %s103
    %p107 = scmp.eq.s32.totalorder %s20, 0
    %p108 = por %p106, %p107
    %p109 = scmp.ne.s32.totalorder %s101, %s103
    %p110 = scmp.eq.s32.totalorder %s25, 1
    %p111 = por %p109, %p110
    %p112 = scmp.ne.s32.totalorder %s103, %s104
    %p113 = scmp.eq.s32.totalorder %s25, 0
    %p114 = por %p112, %p113
    %p115 = scmp.ne.s32.totalorder %s103, %s104
    %p116 = scmp.eq.s32.totalorder %s26, 1
    %p117 = por %p115, %p116
    %p119 = scmp.ne.s32.totalorder %s104, %s118
    %p120 = scmp.eq.s32.totalorder %s26, 0
    %p121 = por %p119, %p120
    %s123 = sadd.s32 %s122, 1
    %p126 = scmp.eq.s32.totalorder %s20, 1
    %p127 = scmp.ne.s32.totalorder %s122, %s124
    %p128 = scmp.eq.s32.totalorder %s20, 0
    %p129 = por %p127, %p128
    %p130 = scmp.ne.s32.totalorder %s122, %s124
    %p131 = scmp.eq.s32.totalorder %s25, 1
    %p132 = por %p130, %p131
    %p133 = scmp.ne.s32.totalorder %s124, %s125
    %p134 = scmp.eq.s32.totalorder %s25, 0
    %p135 = por %p133, %p134
    %p136 = scmp.ne.s32.totalorder %s124, %s125
    %p137 = scmp.eq.s32.totalorder %s26, 1
    %p138 = por %p136, %p137
    %p140 = scmp.ne.s32.totalorder %s125, %s139
    %p141 = scmp.eq.s32.totalorder %s26, 0
    %p142 = por %p140, %p141
    %s144 = sadd.s32 %s143, 1
    %p147 = scmp.eq.s32.totalorder %s20, 1
    %p148 = scmp.ne.s32.totalorder %s143, %s145
    %p149 = scmp.eq.s32.totalorder %s20, 0
    %p150 = por %p148, %p149
    %p151 = scmp.ne.s32.totalorder %s143, %s145
    %p152 = scmp.eq.s32.totalorder %s25, 1
    %p153 = por %p151, %p152
    %p154 = scmp.ne.s32.totalorder %s145, %s146
    %p155 = scmp.eq.s32.totalorder %s25, 0
    %p156 = por %p154, %p155
    %p157 = scmp.ne.s32.totalorder %s145, %s146
    %p158 = scmp.eq.s32.totalorder %s26, 1
    %p159 = por %p157, %p158
    %p161 = scmp.ne.s32.totalorder %s146, %s160
    %p162 = scmp.eq.s32.totalorder %s26, 0
    %p163 = por %p161, %p162
    %s165 = sadd.s32 %s164, 1
    %p168 = scmp.eq.s32.totalorder %s20, 1
    %p169 = scmp.ne.s32.totalorder %s164, %s166
    %p170 = scmp.eq.s32.totalorder %s20, 0
    %p171 = por %p169, %p170
    %p172 = scmp.ne.s32.totalorder %s164, %s166
    %p173 = scmp.eq.s32.totalorder %s25, 1
    %p174 = por %p172, %p173
    %p175 = scmp.ne.s32.totalorder %s166, %s167
    %p176 = scmp.eq.s32.totalorder %s25, 0
    %p177 = por %p175, %p176
    %p178 = scmp.ne.s32.totalorder %s166, %s167
    %p179 = scmp.eq.s32.totalorder %s26, 1
    %p180 = por %p178, %p179
    %p182 = scmp.ne.s32.totalorder %s167, %s181
    %p183 = scmp.eq.s32.totalorder %s26, 0
    %p184 = por %p182, %p183
    %s186 = sadd.s32 %s185, 1
    %p189 = scmp.eq.s32.totalorder %s20, 1
    %p190 = scmp.ne.s32.totalorder %s185, %s187
    %p191 = scmp.eq.s32.totalorder %s20, 0
    %p192 = por %p190, %p191
    %p193 = scmp.ne.s32.totalorder %s185, %s187
    %p194 = scmp.eq.s32.totalorder %s25, 1
    %p195 = por %p193, %p194
    %p196 = scmp.ne.s32.totalorder %s187, %s188
    %p197 = scmp.eq.s32.totalorder %s25, 0
    %p198 = por %p196, %p197
    %p199 = scmp.ne.s32.totalorder %s187, %s188
    %p200 = scmp.eq.s32.totalorder %s26, 1
    %p201 = por %p199, %p200
    %p203 = scmp.ne.s32.totalorder %s188, %s202
    %p204 = scmp.eq.s32.totalorder %s26, 0
    %p205 = por %p203, %p204
    %s207 = sadd.s32 %s206, 1
    %p210 = scmp.eq.s32.totalorder %s20, 1
    %p211 = scmp.ne.s32.totalorder %s206, %s208
    %p212 = scmp.eq.s32.totalorder %s20, 0
    %p213 = por %p211, %p212
    %p214 = scmp.ne.s32.totalorder %s206, %s208
    %p215 = scmp.eq.s32.totalorder %s25, 1
    %p216 = por %p214, %p215
    %p217 = scmp.ne.s32.totalorder %s208, %s209
    %p218 = scmp.eq.s32.totalorder %s25, 0
    %p219 = por %p217, %p218
    %p220 = scmp.ne.s32.totalorder %s208, %s209
    %p221 = scmp.eq.s32.totalorder %s26, 1
    %p222 = por %p220, %p221
    %p224 = scmp.ne.s32.totalorder %s209, %s223
    %p225 = scmp.eq.s32.totalorder %s26, 0
    %p226 = por %p224, %p225
    %s228 = sadd.s32 %s227, 1
    %p231 = scmp.eq.s32.totalorder %s20, 1
    %p232 = scmp.ne.s32.totalorder %s227, %s229
    %p233 = scmp.eq.s32.totalorder %s20, 0
    %p234 = por %p232, %p233
    %p235 = scmp.ne.s32.totalorder %s227, %s229
    %p236 = scmp.eq.s32.totalorder %s25, 1
    %p237 = por %p235, %p236
    %p238 = scmp.ne.s32.totalorder %s229, %s230
    %p239 = scmp.eq.s32.totalorder %s25, 0
    %p240 = por %p238, %p239
    %p241 = scmp.ne.s32.totalorder %s229, %s230
    %p242 = scmp.eq.s32.totalorder %s26, 1
    %p243 = por %p241, %p242
    %p245 = scmp.ne.s32.totalorder %s230, %s244
    %p246 = scmp.eq.s32.totalorder %s26, 0
    %p247 = por %p245, %p246
    %s249 = sadd.s32 %s248, 1
    %p252 = scmp.eq.s32.totalorder %s20, 1
    %p253 = scmp.ne.s32.totalorder %s248, %s250
    %p254 = scmp.eq.s32.totalorder %s20, 0
    %p255 = por %p253, %p254
    %p256 = scmp.ne.s32.totalorder %s248, %s250
    %p257 = scmp.eq.s32.totalorder %s25, 1
    %p258 = por %p256, %p257
    %p259 = scmp.ne.s32.totalorder %s250, %s251
    %p260 = scmp.eq.s32.totalorder %s25, 0
    %p261 = por %p259, %p260
    %p262 = scmp.ne.s32.totalorder %s250, %s251
    %p263 = scmp.eq.s32.totalorder %s26, 1
    %p264 = por %p262, %p263
    %p266 = scmp.ne.s32.totalorder %s251, %s265
    %p267 = scmp.eq.s32.totalorder %s26, 0
    %p268 = por %p266, %p267
    %s270 = sadd.s32 %s269, 1
    %p273 = scmp.eq.s32.totalorder %s20, 1
    %p274 = scmp.ne.s32.totalorder %s269, %s271
    %p275 = scmp.eq.s32.totalorder %s20, 0
    %p276 = por %p274, %p275
    %p277 = scmp.ne.s32.totalorder %s269, %s271
    %p278 = scmp.eq.s32.totalorder %s25, 1
    %p279 = por %p277, %p278
    %p280 = scmp.ne.s32.totalorder %s271, %s272
    %p281 = scmp.eq.s32.totalorder %s25, 0
    %p282 = por %p280, %p281
    %p283 = scmp.ne.s32.totalorder %s271, %s272
    %p284 = scmp.eq.s32.totalorder %s26, 1
    %p285 = por %p283, %p284
    %p287 = scmp.ne.s32.totalorder %s272, %s286
    %p288 = scmp.eq.s32.totalorder %s26, 0
    %p289 = por %p287, %p288
    %s291 = sadd.s32 %s290, 1
    %p294 = scmp.eq.s32.totalorder %s20, 1
    %p295 = scmp.ne.s32.totalorder %s290, %s292
    %p296 = scmp.eq.s32.totalorder %s20, 0
    %p297 = por %p295, %p296
    %p298 = scmp.ne.s32.totalorder %s290, %s292
    %p299 = scmp.eq.s32.totalorder %s25, 1
    %p300 = por %p298, %p299
    %p301 = scmp.ne.s32.totalorder %s292, %s293
    %p302 = scmp.eq.s32.totalorder %s25, 0
    %p303 = por %p301, %p302
    %p304 = scmp.ne.s32.totalorder %s292, %s293
    %p305 = scmp.eq.s32.totalorder %s26, 1
    %p306 = por %p304, %p305
    %p308 = scmp.ne.s32.totalorder %s293, %s307
    %p309 = scmp.eq.s32.totalorder %s26, 0
    %p310 = por %p308, %p309
    %s311 = ssub.s32 %s20, %s27
    %p312 = scmp.eq.s32.totalorder %s311, 0
    %s314 = sadd.s32 %s313, 1
    %s315 = scalar_select %p312, %s313, %s314
    %p318 = pneg %p312
    %p319 = scmp.eq.s32.totalorder %s20, 1
    %p320 = por %p318, %p319
    %p321 = scmp.ne.s32.totalorder %s313, %s316
    %p322 = scmp.eq.s32.totalorder %s20, 0
    %p323 = por %p321, %p322
    %p324 = scmp.ne.s32.totalorder %s313, %s316
    %p325 = scmp.eq.s32.totalorder %s25, 1
    %p326 = por %p324, %p325
    %p327 = scmp.ne.s32.totalorder %s316, %s317
    %p328 = scmp.eq.s32.totalorder %s25, 0
    %p329 = por %p327, %p328
    %p330 = scmp.ne.s32.totalorder %s316, %s317
    %p331 = scmp.eq.s32.totalorder %s26, 1
    %p332 = por %p330, %p331
    %p334 = scmp.ne.s32.totalorder %s317, %s333
    %p335 = scmp.eq.s32.totalorder %s26, 0
    %p336 = por %p334, %p335
    %p337 = scmp.le.s32.totalorder 1, %s20
    %p338 = scmp.lt.s32.totalorder %s20, 3
    %p339 = pnand %p337, %p338
    %p340 = pneg %p339
    // Predicated region
    $region9: #{spex_plus_short_forward.3} parent=5 // pred_check
      _
    $region10: #{spex_plus_short_forward.3} parent=5 // pred_check_branch
      %342 = sbr.rel (%p339) target = $region12
    $region11: #{spex_plus_short_forward.3} parent=5 // pred_region
      %s343 = ssub.s32 %s20, 1
      // Predicated region
      $region13: #{spex_plus_short_forward.3} parent=11 // pred_check
        %p344 = pneg %p93
      $region14: #{spex_plus_short_forward.3} parent=11 // pred_check_branch
        %346 = sbr.rel (%p344) target = $region16
      $region15: #{spex_plus_short_forward.3} parent=11 // pred_region
        _
      $region16: #{spex_plus_short_forward.3} parent=11 // pred_fallthru
        _
      // Predicated region
      $region17: #{spex_plus_short_forward.3} parent=11 // pred_check
        %p347 = pneg %p114
      $region18: #{spex_plus_short_forward.3} parent=11 // pred_check_branch
        %349 = sbr.rel (%p347) target = $region20
      $region19: #{spex_plus_short_forward.3} parent=11 // pred_region
        _
      $region20: #{spex_plus_short_forward.3} parent=11 // pred_fallthru
        _
      // Predicated region
      $region21: #{spex_plus_short_forward.3} parent=11 // pred_check
        %p350 = pneg %p135
      $region22: #{spex_plus_short_forward.3} parent=11 // pred_check_branch
        %352 = sbr.rel (%p350) target = $region24
      $region23: #{spex_plus_short_forward.3} parent=11 // pred_region
        _
      $region24: #{spex_plus_short_forward.3} parent=11 // pred_fallthru
        _
      // Predicated region
      $region25: #{spex_plus_short_forward.3} parent=11 // pred_check
        %p353 = pneg %p156
      $region26: #{spex_plus_short_forward.3} parent=11 // pred_check_branch
        %355 = sbr.rel (%p353) target = $region28
      $region27: #{spex_plus_short_forward.3} parent=11 // pred_region
        _
      $region28: #{spex_plus_short_forward.3} parent=11 // pred_fallthru
        _
      // Predicated region
      $region29: #{spex_plus_short_forward.3} parent=11 // pred_check
        %p356 = pneg %p177
      $region30: #{spex_plus_short_forward.3} parent=11 // pred_check_branch
        %358 = sbr.rel (%p356) target = $region32
      $region31: #{spex_plus_short_forward.3} parent=11 // pred_region
        _
      $region32: #{spex_plus_short_forward.3} parent=11 // pred_fallthru
        _
      // Predicated region
      $region33: #{spex_plus_short_forward.3} parent=11 // pred_check
        %p359 = pneg %p198
      $region34: #{spex_plus_short_forward.3} parent=11 // pred_check_branch
        %361 = sbr.rel (%p359) target = $region36
      $region35: #{spex_plus_short_forward.3} parent=11 // pred_region
        _
      $region36: #{spex_plus_short_forward.3} parent=11 // pred_fallthru
        _
      // Predicated region
      $region37: #{spex_plus_short_forward.3} parent=11 // pred_check
        %p362 = pneg %p219
      $region38: #{spex_plus_short_forward.3} parent=11 // pred_check_branch
        %364 = sbr.rel (%p362) target = $region40
      $region39: #{spex_plus_short_forward.3} parent=11 // pred_region
        _
      $region40: #{spex_plus_short_forward.3} parent=11 // pred_fallthru
        _
      // Predicated region
      $region41: #{spex_plus_short_forward.3} parent=11 // pred_check
        %p365 = pneg %p240
      $region42: #{spex_plus_short_forward.3} parent=11 // pred_check_branch
        %367 = sbr.rel (%p365) target = $region44
      $region43: #{spex_plus_short_forward.3} parent=11 // pred_region
        _
      $region44: #{spex_plus_short_forward.3} parent=11 // pred_fallthru
        _
      // Predicated region
      $region45: #{spex_plus_short_forward.3} parent=11 // pred_check
        %p368 = pneg %p261
      $region46: #{spex_plus_short_forward.3} parent=11 // pred_check_branch
        %370 = sbr.rel (%p368) target = $region48
      $region47: #{spex_plus_short_forward.3} parent=11 // pred_region
        _
      $region48: #{spex_plus_short_forward.3} parent=11 // pred_fallthru
        _
      // Predicated region
      $region49: #{spex_plus_short_forward.3} parent=11 // pred_check
        %p371 = pneg %p282
      $region50: #{spex_plus_short_forward.3} parent=11 // pred_check_branch
        %373 = sbr.rel (%p371) target = $region52
      $region51: #{spex_plus_short_forward.3} parent=11 // pred_region
        _
      $region52: #{spex_plus_short_forward.3} parent=11 // pred_fallthru
        _
      // Predicated region
      $region53: #{spex_plus_short_forward.3} parent=11 // pred_check
        %p374 = pneg %p303
      $region54: #{spex_plus_short_forward.3} parent=11 // pred_check_branch
        %376 = sbr.rel (%p374) target = $region56
      $region55: #{spex_plus_short_forward.3} parent=11 // pred_region
        _
      $region56: #{spex_plus_short_forward.3} parent=11 // pred_fallthru
        _
    $region12: #{spex_plus_short_forward.3} parent=5 // pred_fallthru
      _
    %p377 = scmp.lt.s32.totalorder %s20, 2
    // Predicated region
    $region57: #{spex_plus_short_forward.3} parent=5 // pred_check
      %p378 = pneg %p377
    $region58: #{spex_plus_short_forward.3} parent=5 // pred_check_branch
      %380 = sbr.rel (%p378) target = $region60
    $region59: #{spex_plus_short_forward.3} parent=5 // pred_region
      // Predicated region
      $region61: #{spex_plus_short_forward.3} parent=59 // pred_check
        %p381 = pneg %p40
      $region62: #{spex_plus_short_forward.3} parent=59 // pred_check_branch
        %383 = sbr.rel (%p381) target = $region64
      $region63: #{spex_plus_short_forward.3} parent=59 // pred_region
        %p384 = scmp.lt.s32.totalorder %s20, 1
        %s385 = scalar_select %p384, %s20, 1
        %s386 = smul.addr %s385, 25
        %s387 = smul.addr %s386, 8
        %s388 = scalar_lea.vmem %s0, %s387
      $region64: #{spex_plus_short_forward.3} parent=59 // pred_fallthru
        _
      // Predicated region
      $region65: #{spex_plus_short_forward.3} parent=59 // pred_check
        %p389 = pneg %p66
      $region66: #{spex_plus_short_forward.3} parent=59 // pred_check_branch
        %391 = sbr.rel (%p389) target = $region68
      $region67: #{spex_plus_short_forward.3} parent=59 // pred_region
        %p392 = scmp.lt.s32.totalorder %s20, 1
        %s393 = scalar_select %p392, %s20, 1
        %s394 = scalar_lea.vmem %s1, %s393
      $region68: #{spex_plus_short_forward.3} parent=59 // pred_fallthru
        _
    $region60: #{spex_plus_short_forward.3} parent=5 // pred_fallthru
      _
    %p395 = scmp.le.s32.totalorder 1, %s20
    %p396 = scmp.lt.s32.totalorder %s20, 3
    %p397 = pnand %p395, %p396
    %p398 = pneg %p397
    // Predicated region
    $region69: #{spex_plus_short_forward.3} parent=5 // pred_check
      _
    $region70: #{spex_plus_short_forward.3} parent=5 // pred_check_branch
      %400 = sbr.rel (%p397) target = $region72
    $region71: #{spex_plus_short_forward.3} parent=5 // pred_region
      %s401 = ssub.s32 %s20, 1
      %p402 = scmp.lt.s32.totalorder %s25, 1
      %s403 = scalar_select %p402, %s25, 1
      %s404 = smul.addr %s403, 25
      %s405 = smul.addr %s404, 8
      %s406 = scalar_lea.vmem %s0, %s405
      %p407 = pneg %p46
      %p408 = pneg %p43
      %p409 = scmp.lt.s32.totalorder %s25, 1
      %s410 = scalar_select %p409, %s25, 1
      %s411 = scalar_lea.vmem %s1, %s410
      %p412 = pneg %p72
      %p413 = pneg %p69
      %p414 = pneg %p93
      %p415 = pneg %p90
      %p416 = pneg %p114
      %p417 = pneg %p111
      %p418 = pneg %p135
      %p419 = pneg %p132
      %p420 = pneg %p156
      %p421 = pneg %p153
      %p422 = pneg %p177
      %p423 = pneg %p174
      %p424 = pneg %p198
      %p425 = pneg %p195
      %p426 = pneg %p219
      %p427 = pneg %p216
      %p428 = pneg %p240
      %p429 = pneg %p237
      %p430 = pneg %p261
      %p431 = pneg %p258
      %p432 = pneg %p282
      %p433 = pneg %p279
      %p434 = pneg %p303
      %p435 = pneg %p300
      %p436 = pneg %p329
      %p437 = pneg %p326
      %p438 = scmp.lt.s32.totalorder %s25, 1
      %s439 = scalar_select %p438, %s25, 1
      %s440 = smul.addr %s439, 25
      %s441 = smul.addr %s440, 8
      %s442 = scalar_lea.vmem %s13, %s441
      %p443 = scmp.lt.s32.totalorder %s25, 1
      %s444 = scalar_select %p443, %s25, 1
      %s445 = smul.addr %s444, 25
      %s446 = smul.addr %s445, 8
      %s447 = scalar_lea.vmem %s0, %s446
      %p448 = scmp.lt.s32.totalorder %s25, 1
      %s449 = scalar_select %p448, %s25, 1
      %s450 = scalar_lea.vmem %s1, %s449
      %p451 = scmp.lt.s32.totalorder %s25, 1
      %s452 = scalar_select %p451, %s25, 1
      %s453 = smul.addr %s452, 25
      %s454 = smul.addr %s453, 8
      %s455 = scalar_lea.vmem %s13, %s454
      %v456 = vld [vmem:[%s447] sm:$0xff]
      %v457 = vld [vmem:[%s447 + $0x8] sm:$0xff]
      %v458 = vld [vmem:[%s447 + $0x10] sm:$0xff]
      %v459 = vld [vmem:[%s447 + $0x18] sm:$0xff]
      %v460 = vld [vmem:[%s447 + $0x20] sm:$0xff]
      %v461 = vld [vmem:[%s447 + $0x28] sm:$0xff]
      %v462 = vld [vmem:[%s447 + $0x30] sm:$0xff]
      %v463 = vld [vmem:[%s447 + $0x38] sm:$0xff]
      %v464 = vld [vmem:[%s447 + $0x40] sm:$0xff]
      %v465 = vld [vmem:[%s447 + $0x48] sm:$0xff]
      %v466 = vld [vmem:[%s447 + $0x50] sm:$0xff]
      %v467 = vld [vmem:[%s447 + $0x58] sm:$0xff]
      %v468 = vld [vmem:[%s447 + $0x60] sm:$0xff]
      %v469 = vld [vmem:[%s447 + $0x68] sm:$0xff]
      %v470 = vld [vmem:[%s447 + $0x70] sm:$0xff]
      %v471 = vld [vmem:[%s447 + $0x78] sm:$0xff]
      %v472 = vld [vmem:[%s447 + $0x80] sm:$0xff]
      %v473 = vld [vmem:[%s447 + $0x88] sm:$0xff]
      %v474 = vld [vmem:[%s447 + $0x90] sm:$0xff]
      %v475 = vld [vmem:[%s447 + $0x98] sm:$0xff]
      %v476 = vld [vmem:[%s447 + $0xa0] sm:$0xff]
      %v477 = vld [vmem:[%s447 + $0xa8] sm:$0xff]
      %v478 = vld [vmem:[%s447 + $0xb0] sm:$0xff]
      %v479 = vld [vmem:[%s447 + $0xb8] sm:$0xff]
      %v480 = vld [vmem:[%s447 + $0xc0] sm:$0x7f]
      %v481 = vld [vmem:[%s2] sm:$0xf]
      %v482 = vld [vmem:[%s447 + $0x1] sm:$0xff]
      %v483 = vld [vmem:[%s447 + $0x9] sm:$0xff]
      %v484 = vld [vmem:[%s447 + $0x11] sm:$0xff]
      %v485 = vld [vmem:[%s447 + $0x19] sm:$0xff]
      %v486 = vld [vmem:[%s447 + $0x21] sm:$0xff]
      %v487 = vld [vmem:[%s447 + $0x29] sm:$0xff]
      %v488 = vld [vmem:[%s447 + $0x31] sm:$0xff]
      %v489 = vld [vmem:[%s447 + $0x39] sm:$0xff]
      %v490 = vld [vmem:[%s447 + $0x41] sm:$0xff]
      %v491 = vld [vmem:[%s447 + $0x49] sm:$0xff]
      %v492 = vld [vmem:[%s447 + $0x51] sm:$0xff]
      %v493 = vld [vmem:[%s447 + $0x59] sm:$0xff]
      %v494 = vld [vmem:[%s447 + $0x61] sm:$0xff]
      %v495 = vld [vmem:[%s447 + $0x69] sm:$0xff]
      %v496 = vld [vmem:[%s447 + $0x71] sm:$0xff]
      %v497 = vld [vmem:[%s447 + $0x79] sm:$0xff]
      %v498 = vld [vmem:[%s447 + $0x81] sm:$0xff]
      %v499 = vld [vmem:[%s447 + $0x89] sm:$0xff]
      %v500 = vld [vmem:[%s447 + $0x91] sm:$0xff]
      %v501 = vld [vmem:[%s447 + $0x99] sm:$0xff]
      %v502 = vld [vmem:[%s447 + $0xa1] sm:$0xff]
      %v503 = vld [vmem:[%s447 + $0xa9] sm:$0xff]
      %v504 = vld [vmem:[%s447 + $0xb1] sm:$0xff]
      %v505 = vld [vmem:[%s447 + $0xb9] sm:$0xff]
      %v506 = vld [vmem:[%s447 + $0xc1] sm:$0x7f]
      %v507 = vld [vmem:[%s3] sm:$0xf]
      %vm508 = vcmask 31744
      %v510 = vsel %vm508, %v482, 0
      %v513 = vsel %vm508, %v483, 0
      %v516 = vsel %vm508, %v484, 0
      %v519 = vsel %vm508, %v485, 0
      %v522 = vsel %vm508, %v486, 0
      %v525 = vsel %vm508, %v487, 0
      %v528 = vsel %vm508, %v488, 0
      %v531 = vsel %vm508, %v489, 0
      %v534 = vsel %vm508, %v490, 0
      %v537 = vsel %vm508, %v491, 0
      %v540 = vsel %vm508, %v492, 0
      %v543 = vsel %vm508, %v493, 0
      %v546 = vsel %vm508, %v494, 0
      %v549 = vsel %vm508, %v495, 0
      %v552 = vsel %vm508, %v496, 0
      %v555 = vsel %vm508, %v497, 0
      %v558 = vsel %vm508, %v498, 0
      %v561 = vsel %vm508, %v499, 0
      %v564 = vsel %vm508, %v500, 0
      %v567 = vsel %vm508, %v501, 0
      %v570 = vsel %vm508, %v502, 0
      %v573 = vsel %vm508, %v503, 0
      %v576 = vsel %vm508, %v504, 0
      %v579 = vsel %vm508, %v505, 0
      %v582 = vsel %vm508, %v506, 0
      %vm584 = vcmask 1043456
      %v586 = vsel %vm584, %v507, 0
      %588 = vmatprep.subr.mxu0 0.0
      %589 = vmatpush1.msra.mxu0 %v586
      %590 = vmatprep.subr.mxu0 0.0
      %591 = vmatpush1.msra.mxu0 0.0
      %592 = vmatprep.subr.mxu0 0.0
      %593 = vmatpush1.msra.mxu0 0.0
      %594 = vmatprep.subr.mxu0 0.0
      %595 = vmatpush1.msra.mxu0 0.0
      %596 = vmatprep.subr.mxu0 0.0
      %597 = vmatpush1.msra.mxu0 0.0
      %598 = vmatprep.subr.mxu0 0.0
      %599 = vmatpush1.msra.mxu0 0.0
      %600 = vmatprep.subr.mxu0 0.0
      %601 = vmatpush1.msra.mxu0 0.0
      %602 = vmatprep.subr.mxu0 0.0
      %603 = vmatpush1.msra.mxu0 0.0
      %604 = vmatprep.subr.mxu0 0.0
      %605 = vmatpush1.msra.mxu0 0.0
      %606 = vmatprep.subr.mxu0 0.0
      %607 = vmatpush1.msra.mxu0 0.0
      %608 = vmatprep.subr.mxu0 0.0
      %609 = vmatpush1.msra.mxu0 0.0
      %610 = vmatprep.subr.mxu0 0.0
      %611 = vmatpush1.msra.mxu0 0.0
      %612 = vmatprep.subr.mxu0 0.0
      %613 = vmatpush1.msra.mxu0 0.0
      %614 = vmatprep.subr.mxu0 0.0
      %615 = vmatpush1.msra.mxu0 0.0
      %616 = vmatprep.subr.mxu0 0.0
      %617 = vmatpush1.msra.mxu0 0.0
      %618 = vmatprep.subr.mxu0 0.0
      %619 = vmatpush1.msra.mxu0 0.0
      %620 = vmatprep.subr.mxu0 0.0
      %621 = vmatpush1.msra.mxu0 0.0
      %622 = vmatprep.subr.mxu0 0.0
      %623 = vmatpush1.msra.mxu0 0.0
      %624 = vmatprep.subr.mxu0 0.0
      %625 = vmatpush1.msra.mxu0 0.0
      %626 = vmatprep.subr.mxu0 0.0
      %627 = vmatpush1.msra.mxu0 0.0
      %628 = vmatprep.subr.mxu0 0.0
      %629 = vmatpush1.msra.mxu0 0.0
      %630 = vmatprep.subr.mxu0 0.0
      %631 = vmatpush1.msra.mxu0 0.0
      %632 = vmatprep.subr.mxu0 0.0
      %633 = vmatpush1.msra.mxu0 0.0
      %634 = vmatprep.subr.mxu0 0.0
      %635 = vmatpush1.msra.mxu0 0.0
      %636 = vmatprep.subr.mxu0 0.0
      %637 = vmatpush1.msra.mxu0 0.0
      %638 = vmatprep.subr.mxu0 0.0
      %639 = vmatpush1.msra.mxu0 0.0
      %640 = vmatprep.subr.mxu0 0.0
      %641 = vmatpush1.msra.mxu0 0.0
      %642 = vmatprep.subr.mxu0 0.0
      %643 = vmatpush1.msra.mxu0 0.0
      %644 = vmatprep.subr.mxu0 0.0
      %645 = vmatpush1.msra.mxu0 0.0
      %646 = vmatprep.subr.mxu0 0.0
      %647 = vmatpush1.msra.mxu0 0.0
      %648 = vmatprep.subr.mxu0 0.0
      %649 = vmatpush1.msra.mxu0 0.0
      %650 = vmatprep.subr.mxu0 0.0
      %651 = vmatpush1.msra.mxu0 0.0
      %652 = vmatprep.mubr.f32.mxu0 0.0
      %653 = vmatmul.mubr.f32.gmra.mrb[0].mxu0 %v510
      %v654 = vpop.f32.mrb[0].mxu0
      %v655 = vadd.f32 0.0, %v654
      %v656 = vpop.f32.mrb[0].mxu0
      %657 = vmatprep.mubr.f32.mxu0 0.0
      %658 = vmatmul.mubr.f32.gmra.mrb[0].mxu0 %v513
      %v659 = vpop.f32.mrb[0].mxu0
      %v660 = vadd.f32 0.0, %v659
      %v661 = vpop.f32.mrb[0].mxu0
      %662 = vmatprep.mubr.f32.mxu0 0.0
      %663 = vmatmul.mubr.f32.gmra.mrb[0].mxu0 %v516
      %v664 = vpop.f32.mrb[0].mxu0
      %v665 = vadd.f32 0.0, %v664
      %v666 = vpop.f32.mrb[0].mxu0
      %667 = vmatprep.mubr.f32.mxu0 0.0
      %668 = vmatmul.mubr.f32.gmra.mrb[0].mxu0 %v519
      %v669 = vpop.f32.mrb[0].mxu0
      %v670 = vadd.f32 0.0, %v669
      %v671 = vpop.f32.mrb[0].mxu0
      %672 = vmatprep.mubr.f32.mxu0 0.0
      %673 = vmatmul.mubr.f32.gmra.mrb[0].mxu0 %v522
      %v674 = vpop.f32.mrb[0].mxu0
      %v675 = vadd.f32 0.0, %v674
      %v676 = vpop.f32.mrb[0].mxu0
      %677 = vmatprep.mubr.f32.mxu0 0.0
      %678 = vmatmul.mubr.f32.gmra.mrb[0].mxu0 %v525
      %v679 = vpop.f32.mrb[0].mxu0
      %v680 = vadd.f32 0.0, %v679
      %v681 = vpop.f32.mrb[0].mxu0
      %682 = vmatprep.mubr.f32.mxu0 0.0
      %683 = vmatmul.mubr.f32.gmra.mrb[0].mxu0 %v528
      %v684 = vpop.f32.mrb[0].mxu0
      %v685 = vadd.f32 0.0, %v684
      %v686 = vpop.f32.mrb[0].mxu0
      %687 = vmatprep.mubr.f32.mxu0 0.0
      %688 = vmatmul.mubr.f32.gmra.mrb[0].mxu0 %v531
      %v689 = vpop.f32.mrb[0].mxu0
      %v690 = vadd.f32 0.0, %v689
      %v691 = vpop.f32.mrb[0].mxu0
      %692 = vmatprep.mubr.f32.mxu0 0.0
      %693 = vmatmul.mubr.f32.gmra.mrb[0].mxu0 %v534
      %v694 = vpop.f32.mrb[0].mxu0
      %v695 = vadd.f32 0.0, %v694
      %v696 = vpop.f32.mrb[0].mxu0
      %697 = vmatprep.mubr.f32.mxu0 0.0
      %698 = vmatmul.mubr.f32.gmra.mrb[0].mxu0 %v537
      %v699 = vpop.f32.mrb[0].mxu0
      %v700 = vadd.f32 0.0, %v699
      %v701 = vpop.f32.mrb[0].mxu0
      %702 = vmatprep.mubr.f32.mxu0 0.0
      %703 = vmatmul.mubr.f32.gmra.mrb[0].mxu0 %v540
      %v704 = vpop.f32.mrb[0].mxu0
      %v705 = vadd.f32 0.0, %v704
      %v706 = vpop.f32.mrb[0].mxu0
      %707 = vmatprep.mubr.f32.mxu0 0.0
      %708 = vmatmul.mubr.f32.gmra.mrb[0].mxu0 %v543
      %v709 = vpop.f32.mrb[0].mxu0
      %v710 = vadd.f32 0.0, %v709
      %v711 = vpop.f32.mrb[0].mxu0
      %712 = vmatprep.mubr.f32.mxu0 0.0
      %713 = vmatmul.mubr.f32.gmra.mrb[0].mxu0 %v546
      %v714 = vpop.f32.mrb[0].mxu0
      %v715 = vadd.f32 0.0, %v714
      %v716 = vpop.f32.mrb[0].mxu0
      %717 = vmatprep.mubr.f32.mxu0 0.0
      %718 = vmatmul.mubr.f32.gmra.mrb[0].mxu0 %v549
      %v719 = vpop.f32.mrb[0].mxu0
      %v720 = vadd.f32 0.0, %v719
      %v721 = vpop.f32.mrb[0].mxu0
      %722 = vmatprep.mubr.f32.mxu0 0.0
      %723 = vmatmul.mubr.f32.gmra.mrb[0].mxu0 %v552
      %v724 = vpop.f32.mrb[0].mxu0
      %v725 = vadd.f32 0.0, %v724
      %v726 = vpop.f32.mrb[0].mxu0
      %727 = vmatprep.mubr.f32.mxu0 0.0
      %728 = vmatmul.mubr.f32.gmra.mrb[0].mxu0 %v555
      %v729 = vpop.f32.mrb[0].mxu0
      %v730 = vadd.f32 0.0, %v729
      %v731 = vpop.f32.mrb[0].mxu0
      %732 = vmatprep.mubr.f32.mxu0 0.0
      %733 = vmatmul.mubr.f32.gmra.mrb[0].mxu0 %v558
      %v734 = vpop.f32.mrb[0].mxu0
      %v735 = vadd.f32 0.0, %v734
      %v736 = vpop.f32.mrb[0].mxu0
      %737 = vmatprep.mubr.f32.mxu0 0.0
      %738 = vmatmul.mubr.f32.gmra.mrb[0].mxu0 %v561
      %v739 = vpop.f32.mrb[0].mxu0
      %v740 = vadd.f32 0.0, %v739
      %v741 = vpop.f32.mrb[0].mxu0
      %742 = vmatprep.mubr.f32.mxu0 0.0
      %743 = vmatmul.mubr.f32.gmra.mrb[0].mxu0 %v564
      %v744 = vpop.f32.mrb[0].mxu0
      %v745 = vadd.f32 0.0, %v744
      %v746 = vpop.f32.mrb[0].mxu0
      %747 = vmatprep.mubr.f32.mxu0 0.0
      %748 = vmatmul.mubr.f32.gmra.mrb[0].mxu0 %v567
      %v749 = vpop.f32.mrb[0].mxu0
      %v750 = vadd.f32 0.0, %v749
      %v751 = vpop.f32.mrb[0].mxu0
      %752 = vmatprep.mubr.f32.mxu0 0.0
      %753 = vmatmul.mubr.f32.gmra.mrb[0].mxu0 %v570
      %v754 = vpop.f32.mrb[0].mxu0
      %v755 = vadd.f32 0.0, %v754
      %v756 = vpop.f32.mrb[0].mxu0
      %757 = vmatprep.mubr.f32.mxu0 0.0
      %758 = vmatmul.mubr.f32.gmra.mrb[0].mxu0 %v573
      %v759 = vpop.f32.mrb[0].mxu0
      %v760 = vadd.f32 0.0, %v759
      %v761 = vpop.f32.mrb[0].mxu0
      %762 = vmatprep.mubr.f32.mxu0 0.0
      %763 = vmatmul.mubr.f32.gmra.mrb[0].mxu0 %v576
      %v764 = vpop.f32.mrb[0].mxu0
      %v765 = vadd.f32 0.0, %v764
      %v766 = vpop.f32.mrb[0].mxu0
      %767 = vmatprep.mubr.f32.mxu0 0.0
      %768 = vmatmul.mubr.f32.gmra.mrb[0].mxu0 %v579
      %v769 = vpop.f32.mrb[0].mxu0
      %v770 = vadd.f32 0.0, %v769
      %v771 = vpop.f32.mrb[0].mxu0
      %772 = vmatprep.mubr.f32.mxu0 0.0
      %773 = vmatmul.mubr.f32.gmra.mrb[0].mxu0 %v582
      %v774 = vpop.f32.mrb[0].mxu0
      %v775 = vadd.f32 0.0, %v774
      %v776 = vpop.f32.mrb[0].mxu0
      %777 = vdwg.mxu0
      %v779 = vsel %vm508, %v456, 0
      %v782 = vsel %vm508, %v457, 0
      %v785 = vsel %vm508, %v458, 0
      %v788 = vsel %vm508, %v459, 0
      %v791 = vsel %vm508, %v460, 0
      %v794 = vsel %vm508, %v461, 0
      %v797 = vsel %vm508, %v462, 0
      %v800 = vsel %vm508, %v463, 0
      %v803 = vsel %vm508, %v464, 0
      %v806 = vsel %vm508, %v465, 0
      %v809 = vsel %vm508, %v466, 0
      %v812 = vsel %vm508, %v467, 0
      %v815 = vsel %vm508, %v468, 0
      %v818 = vsel %vm508, %v469, 0
      %v821 = vsel %vm508, %v470, 0
      %v824 = vsel %vm508, %v471, 0
      %v827 = vsel %vm508, %v472, 0
      %v830 = vsel %vm508, %v473, 0
      %v833 = vsel %vm508, %v474, 0
      %v836 = vsel %vm508, %v475, 0
      %v839 = vsel %vm508, %v476, 0
      %v842 = vsel %vm508, %v477, 0
      %v845 = vsel %vm508, %v478, 0
      %v848 = vsel %vm508, %v479, 0
      %v851 = vsel %vm508, %v480, 0
      %v854 = vsel %vm584, %v481, 0
      %856 = vmatprep.subr.mxu0 0.0
      %857 = vmatpush1.msra.mxu0 %v854
      %858 = vmatprep.subr.mxu0 0.0
      %859 = vmatpush1.msra.mxu0 0.0
      %860 = vmatprep.subr.mxu0 0.0
      %861 = vmatpush1.msra.mxu0 0.0
      %862 = vmatprep.subr.mxu0 0.0
      %863 = vmatpush1.msra.mxu0 0.0
      %864 = vmatprep.subr.mxu0 0.0
      %865 = vmatpush1.msra.mxu0 0.0
      %866 = vmatprep.subr.mxu0 0.0
      %867 = vmatpush1.msra.mxu0 0.0
      %868 = vmatprep.subr.mxu0 0.0
      %869 = vmatpush1.msra.mxu0 0.0
      %870 = vmatprep.subr.mxu0 0.0
      %871 = vmatpush1.msra.mxu0 0.0
      %872 = vmatprep.subr.mxu0 0.0
      %873 = vmatpush1.msra.mxu0 0.0
      %874 = vmatprep.subr.mxu0 0.0
      %875 = vmatpush1.msra.mxu0 0.0
      %876 = vmatprep.subr.mxu0 0.0
      %877 = vmatpush1.msra.mxu0 0.0
      %878 = vmatprep.subr.mxu0 0.0
      %879 = vmatpush1.msra.mxu0 0.0
      %880 = vmatprep.subr.mxu0 0.0
      %881 = vmatpush1.msra.mxu0 0.0
      %882 = vmatprep.subr.mxu0 0.0
      %883 = vmatpush1.msra.mxu0 0.0
      %884 = vmatprep.subr.mxu0 0.0
      %885 = vmatpush1.msra.mxu0 0.0
      %886 = vmatprep.subr.mxu0 0.0
      %887 = vmatpush1.msra.mxu0 0.0
      %888 = vmatprep.subr.mxu0 0.0
      %889 = vmatpush1.msra.mxu0 0.0
      %890 = vmatprep.subr.mxu0 0.0
      %891 = vmatpush1.msra.mxu0 0.0
      %892 = vmatprep.subr.mxu0 0.0
      %893 = vmatpush1.msra.mxu0 0.0
      %894 = vmatprep.subr.mxu0 0.0
      %895 = vmatpush1.msra.mxu0 0.0
      %896 = vmatprep.subr.mxu0 0.0
      %897 = vmatpush1.msra.mxu0 0.0
      %898 = vmatprep.subr.mxu0 0.0
      %899 = vmatpush1.msra.mxu0 0.0
      %900 = vmatprep.subr.mxu0 0.0
      %901 = vmatpush1.msra.mxu0 0.0
      %902 = vmatprep.subr.mxu0 0.0
      %903 = vmatpush1.msra.mxu0 0.0
      %904 = vmatprep.subr.mxu0 0.0
      %905 = vmatpush1.msra.mxu0 0.0
      %906 = vmatprep.subr.mxu0 0.0
      %907 = vmatpush1.msra.mxu0 0.0
      %908 = vmatprep.subr.mxu0 0.0
      %909 = vmatpush1.msra.mxu0 0.0
      %910 = vmatprep.subr.mxu0 0.0
      %911 = vmatpush1.msra.mxu0 0.0
      %912 = vmatprep.subr.mxu0 0.0
      %913 = vmatpush1.msra.mxu0 0.0
      %914 = vmatprep.subr.mxu0 0.0
      %915 = vmatpush1.msra.mxu0 0.0
      %916 = vmatprep.subr.mxu0 0.0
      %917 = vmatpush1.msra.mxu0 0.0
      %918 = vmatprep.subr.mxu0 0.0
      %919 = vmatpush1.msra.mxu0 0.0
      %920 = vmatprep.mubr.f32.mxu0 0.0
      %921 = vmatmul.mubr.f32.gmra.mrb[0].mxu0 %v779
      %v922 = vpop.f32.mrb[0].mxu0
      %v923 = vadd.f32 %v655, %v922
      %v924 = vpop.f32.mrb[0].mxu0
      %925 = vmatprep.mubr.f32.mxu0 0.0
      %926 = vmatmul.mubr.f32.gmra.mrb[0].mxu0 %v782
      %v927 = vpop.f32.mrb[0].mxu0
      %v928 = vadd.f32 %v660, %v927
      %v929 = vpop.f32.mrb[0].mxu0
      %930 = vmatprep.mubr.f32.mxu0 0.0
      %931 = vmatmul.mubr.f32.gmra.mrb[0].mxu0 %v785
      %v932 = vpop.f32.mrb[0].mxu0
      %v933 = vadd.f32 %v665, %v932
      %v934 = vpop.f32.mrb[0].mxu0
      %935 = vmatprep.mubr.f32.mxu0 0.0
      %936 = vmatmul.mubr.f32.gmra.mrb[0].mxu0 %v788
      %v937 = vpop.f32.mrb[0].mxu0
      %v938 = vadd.f32 %v670, %v937
      %v939 = vpop.f32.mrb[0].mxu0
      %940 = vmatprep.mubr.f32.mxu0 0.0
      %941 = vmatmul.mubr.f32.gmra.mrb[0].mxu0 %v791
      %v942 = vpop.f32.mrb[0].mxu0
      %v943 = vadd.f32 %v675, %v942
      %v944 = vpop.f32.mrb[0].mxu0
      %945 = vmatprep.mubr.f32.mxu0 0.0
      %946 = vmatmul.mubr.f32.gmra.mrb[0].mxu0 %v794
      %v947 = vpop.f32.mrb[0].mxu0
      %v948 = vadd.f32 %v680, %v947
      %v949 = vpop.f32.mrb[0].mxu0
      %950 = vmatprep.mubr.f32.mxu0 0.0
      %951 = vmatmul.mubr.f32.gmra.mrb[0].mxu0 %v797
      %v952 = vpop.f32.mrb[0].mxu0
      %v953 = vadd.f32 %v685, %v952
      %v954 = vpop.f32.mrb[0].mxu0
      %955 = vmatprep.mubr.f32.mxu0 0.0
      %956 = vmatmul.mubr.f32.gmra.mrb[0].mxu0 %v800
      %v957 = vpop.f32.mrb[0].mxu0
      %v958 = vadd.f32 %v690, %v957
      %v959 = vpop.f32.mrb[0].mxu0
      %960 = vmatprep.mubr.f32.mxu0 0.0
      %961 = vmatmul.mubr.f32.gmra.mrb[0].mxu0 %v803
      %v962 = vpop.f32.mrb[0].mxu0
      %v963 = vadd.f32 %v695, %v962
      %v964 = vpop.f32.mrb[0].mxu0
      %965 = vmatprep.mubr.f32.mxu0 0.0
      %966 = vmatmul.mubr.f32.gmra.mrb[0].mxu0 %v806
      %v967 = vpop.f32.mrb[0].mxu0
      %v968 = vadd.f32 %v700, %v967
      %v969 = vpop.f32.mrb[0].mxu0
      %970 = vmatprep.mubr.f32.mxu0 0.0
      %971 = vmatmul.mubr.f32.gmra.mrb[0].mxu0 %v809
      %v972 = vpop.f32.mrb[0].mxu0
      %v973 = vadd.f32 %v705, %v972
      %v974 = vpop.f32.mrb[0].mxu0
      %975 = vmatprep.mubr.f32.mxu0 0.0
      %976 = vmatmul.mubr.f32.gmra.mrb[0].mxu0 %v812
      %v977 = vpop.f32.mrb[0].mxu0
      %v978 = vadd.f32 %v710, %v977
      %v979 = vpop.f32.mrb[0].mxu0
      %980 = vmatprep.mubr.f32.mxu0 0.0
      %981 = vmatmul.mubr.f32.gmra.mrb[0].mxu0 %v815
      %v982 = vpop.f32.mrb[0].mxu0
      %v983 = vadd.f32 %v715, %v982
      %v984 = vpop.f32.mrb[0].mxu0
      %985 = vmatprep.mubr.f32.mxu0 0.0
      %986 = vmatmul.mubr.f32.gmra.mrb[0].mxu0 %v818
      %v987 = vpop.f32.mrb[0].mxu0
      %v988 = vadd.f32 %v720, %v987
      %v989 = vpop.f32.mrb[0].mxu0
      %990 = vmatprep.mubr.f32.mxu0 0.0
      %991 = vmatmul.mubr.f32.gmra.mrb[0].mxu0 %v821
      %v992 = vpop.f32.mrb[0].mxu0
      %v993 = vadd.f32 %v725, %v992
      %v994 = vpop.f32.mrb[0].mxu0
      %995 = vmatprep.mubr.f32.mxu0 0.0
      %996 = vmatmul.mubr.f32.gmra.mrb[0].mxu0 %v824
      %v997 = vpop.f32.mrb[0].mxu0
      %v998 = vadd.f32 %v730, %v997
      %v999 = vpop.f32.mrb[0].mxu0
      %1000 = vmatprep.mubr.f32.mxu0 0.0
      %1001 = vmatmul.mubr.f32.gmra.mrb[0].mxu0 %v827
      %v1002 = vpop.f32.mrb[0].mxu0
      %v1003 = vadd.f32 %v735, %v1002
      %v1004 = vpop.f32.mrb[0].mxu0
      %1005 = vmatprep.mubr.f32.mxu0 0.0
      %1006 = vmatmul.mubr.f32.gmra.mrb[0].mxu0 %v830
      %v1007 = vpop.f32.mrb[0].mxu0
      %v1008 = vadd.f32 %v740, %v1007
      %v1009 = vpop.f32.mrb[0].mxu0
      %1010 = vmatprep.mubr.f32.mxu0 0.0
      %1011 = vmatmul.mubr.f32.gmra.mrb[0].mxu0 %v833
      %v1012 = vpop.f32.mrb[0].mxu0
      %v1013 = vadd.f32 %v745, %v1012
      %v1014 = vpop.f32.mrb[0].mxu0
      %1015 = vmatprep.mubr.f32.mxu0 0.0
      %1016 = vmatmul.mubr.f32.gmra.mrb[0].mxu0 %v836
      %v1017 = vpop.f32.mrb[0].mxu0
      %v1018 = vadd.f32 %v750, %v1017
      %v1019 = vpop.f32.mrb[0].mxu0
      %1020 = vmatprep.mubr.f32.mxu0 0.0
      %1021 = vmatmul.mubr.f32.gmra.mrb[0].mxu0 %v839
      %v1022 = vpop.f32.mrb[0].mxu0
      %v1023 = vadd.f32 %v755, %v1022
      %v1024 = vpop.f32.mrb[0].mxu0
      %1025 = vmatprep.mubr.f32.mxu0 0.0
      %1026 = vmatmul.mubr.f32.gmra.mrb[0].mxu0 %v842
      %v1027 = vpop.f32.mrb[0].mxu0
      %v1028 = vadd.f32 %v760, %v1027
      %v1029 = vpop.f32.mrb[0].mxu0
      %1030 = vmatprep.mubr.f32.mxu0 0.0
      %1031 = vmatmul.mubr.f32.gmra.mrb[0].mxu0 %v845
      %v1032 = vpop.f32.mrb[0].mxu0
      %v1033 = vadd.f32 %v765, %v1032
      %v1034 = vpop.f32.mrb[0].mxu0
      %1035 = vmatprep.mubr.f32.mxu0 0.0
      %1036 = vmatmul.mubr.f32.gmra.mrb[0].mxu0 %v848
      %v1037 = vpop.f32.mrb[0].mxu0
      %v1038 = vadd.f32 %v770, %v1037
      %v1039 = vpop.f32.mrb[0].mxu0
      %1040 = vmatprep.mubr.f32.mxu0 0.0
      %1041 = vmatmul.mubr.f32.gmra.mrb[0].mxu0 %v851
      %v1042 = vpop.f32.mrb[0].mxu0
      %v1043 = vadd.f32 %v775, %v1042
      %v1044 = vpop.f32.mrb[0].mxu0
      %1045 = vdwg.mxu0
      %v1046 = vld [vmem:[%s4] sm:$0x1]
      %v1047 = vlaneseq
      %v1048 = vshrl.u32 %v1047, 7
      %v1049 = vsub.s32 0, %v1048
      %v1050 = vrot.slane %v1046, %v1049
      %v1051 = vadd.f32 %v923, %v1050
      %v1052 = vadd.f32 %v928, %v1050
      %v1053 = vadd.f32 %v933, %v1050
      %v1054 = vadd.f32 %v938, %v1050
      %v1055 = vadd.f32 %v943, %v1050
      %v1056 = vadd.f32 %v948, %v1050
      %v1057 = vadd.f32 %v953, %v1050
      %v1058 = vadd.f32 %v958, %v1050
      %v1059 = vadd.f32 %v963, %v1050
      %v1060 = vadd.f32 %v968, %v1050
      %v1061 = vadd.f32 %v973, %v1050
      %v1062 = vadd.f32 %v978, %v1050
      %v1063 = vadd.f32 %v983, %v1050
      %v1064 = vadd.f32 %v988, %v1050
      %v1065 = vadd.f32 %v993, %v1050
      %v1066 = vadd.f32 %v998, %v1050
      %v1067 = vadd.f32 %v1003, %v1050
      %v1068 = vadd.f32 %v1008, %v1050
      %v1069 = vadd.f32 %v1013, %v1050
      %v1070 = vadd.f32 %v1018, %v1050
      %v1071 = vadd.f32 %v1023, %v1050
      %v1072 = vadd.f32 %v1028, %v1050
      %v1073 = vadd.f32 %v1033, %v1050
      %v1074 = vadd.f32 %v1038, %v1050
      %v1075 = vadd.f32 %v1043, %v1050
      %v1076 = vmax.f32 %v1051, 0.0
      %v1077 = vmax.f32 %v1052, 0.0
      %v1078 = vmax.f32 %v1053, 0.0
      %v1079 = vmax.f32 %v1054, 0.0
      %v1080 = vmax.f32 %v1055, 0.0
      %v1081 = vmax.f32 %v1056, 0.0
      %v1082 = vmax.f32 %v1057, 0.0
      %v1083 = vmax.f32 %v1058, 0.0
      %v1084 = vmax.f32 %v1059, 0.0
      %v1085 = vmax.f32 %v1060, 0.0
      %v1086 = vmax.f32 %v1061, 0.0
      %v1087 = vmax.f32 %v1062, 0.0
      %v1088 = vmax.f32 %v1063, 0.0
      %v1089 = vmax.f32 %v1064, 0.0
      %v1090 = vmax.f32 %v1065, 0.0
      %v1091 = vmax.f32 %v1066, 0.0
      %v1092 = vmax.f32 %v1067, 0.0
      %v1093 = vmax.f32 %v1068, 0.0
      %v1094 = vmax.f32 %v1069, 0.0
      %v1095 = vmax.f32 %v1070, 0.0
      %v1096 = vmax.f32 %v1071, 0.0
      %v1097 = vmax.f32 %v1072, 0.0
      %v1098 = vmax.f32 %v1073, 0.0
      %v1099 = vmax.f32 %v1074, 0.0
      %v1100 = vmax.f32 %v1075, 0.0
      %vm1101 = vcmask 261120
      %v1102 = vsel %vm1101, %v1076, 0.0
      %1103 = vadd.xlane.f32.xlu0 %v1102
      %v1104 = vpop.xlane.xlu0 %1103
      %v1105 = vsel %vm1101, %v1077, 0.0
      %1106 = vadd.xlane.f32.xlu0 %v1105
      %v1107 = vpop.xlane.xlu0 %1106
      %v1108 = vsel %vm1101, %v1078, 0.0
      %1109 = vadd.xlane.f32.xlu0 %v1108
      %v1110 = vpop.xlane.xlu0 %1109
      %v1111 = vsel %vm1101, %v1079, 0.0
      %1112 = vadd.xlane.f32.xlu0 %v1111
      %v1113 = vpop.xlane.xlu0 %1112
      %v1114 = vsel %vm1101, %v1080, 0.0
      %1115 = vadd.xlane.f32.xlu0 %v1114
      %v1116 = vpop.xlane.xlu0 %1115
      %v1117 = vsel %vm1101, %v1081, 0.0
      %1118 = vadd.xlane.f32.xlu0 %v1117
      %v1119 = vpop.xlane.xlu0 %1118
      %v1120 = vsel %vm1101, %v1082, 0.0
      %1121 = vadd.xlane.f32.xlu0 %v1120
      %v1122 = vpop.xlane.xlu0 %1121
      %v1123 = vsel %vm1101, %v1083, 0.0
      %1124 = vadd.xlane.f32.xlu0 %v1123
      %v1125 = vpop.xlane.xlu0 %1124
      %v1126 = vsel %vm1101, %v1084, 0.0
      %1127 = vadd.xlane.f32.xlu0 %v1126
      %v1128 = vpop.xlane.xlu0 %1127
      %v1129 = vsel %vm1101, %v1085, 0.0
      %1130 = vadd.xlane.f32.xlu0 %v1129
      %v1131 = vpop.xlane.xlu0 %1130
      %v1132 = vsel %vm1101, %v1086, 0.0
      %1133 = vadd.xlane.f32.xlu0 %v1132
      %v1134 = vpop.xlane.xlu0 %1133
      %v1135 = vsel %vm1101, %v1087, 0.0
      %1136 = vadd.xlane.f32.xlu0 %v1135
      %v1137 = vpop.xlane.xlu0 %1136
      %v1138 = vsel %vm1101, %v1088, 0.0
      %1139 = vadd.xlane.f32.xlu0 %v1138
      %v1140 = vpop.xlane.xlu0 %1139
      %v1141 = vsel %vm1101, %v1089, 0.0
      %1142 = vadd.xlane.f32.xlu0 %v1141
      %v1143 = vpop.xlane.xlu0 %1142
      %v1144 = vsel %vm1101, %v1090, 0.0
      %1145 = vadd.xlane.f32.xlu0 %v1144
      %v1146 = vpop.xlane.xlu0 %1145
      %v1147 = vsel %vm1101, %v1091, 0.0
      %1148 = vadd.xlane.f32.xlu0 %v1147
      %v1149 = vpop.xlane.xlu0 %1148
      %v1150 = vsel %vm1101, %v1092, 0.0
      %1151 = vadd.xlane.f32.xlu0 %v1150
      %v1152 = vpop.xlane.xlu0 %1151
      %v1153 = vsel %vm1101, %v1093, 0.0
      %1154 = vadd.xlane.f32.xlu0 %v1153
      %v1155 = vpop.xlane.xlu0 %1154
      %v1156 = vsel %vm1101, %v1094, 0.0
      %1157 = vadd.xlane.f32.xlu0 %v1156
      %v1158 = vpop.xlane.xlu0 %1157
      %v1159 = vsel %vm1101, %v1095, 0.0
      %1160 = vadd.xlane.f32.xlu0 %v1159
      %v1161 = vpop.xlane.xlu0 %1160
      %v1162 = vsel %vm1101, %v1096, 0.0
      %1163 = vadd.xlane.f32.xlu0 %v1162
      %v1164 = vpop.xlane.xlu0 %1163
      %v1165 = vsel %vm1101, %v1097, 0.0
      %1166 = vadd.xlane.f32.xlu0 %v1165
      %v1167 = vpop.xlane.xlu0 %1166
      %v1168 = vsel %vm1101, %v1098, 0.0
      %1169 = vadd.xlane.f32.xlu0 %v1168
      %v1170 = vpop.xlane.xlu0 %1169
      %v1171 = vsel %vm1101, %v1099, 0.0
      %1172 = vadd.xlane.f32.xlu0 %v1171
      %v1173 = vpop.xlane.xlu0 %1172
      %vm1174 = vcmask 260096
      %v1175 = vsel %vm1174, %v1100, 0.0
      %1176 = vadd.xlane.f32.xlu0 %v1175
      %v1177 = vpop.xlane.xlu0 %1176
      %v1178 = vrcp.pop 32.0
      %v1179 = vmul.f32 %v1104, %v1178
      %v1180 = vmul.f32 %v1107, %v1178
      %v1181 = vmul.f32 %v1110, %v1178
      %v1182 = vmul.f32 %v1113, %v1178
      %v1183 = vmul.f32 %v1116, %v1178
      %v1184 = vmul.f32 %v1119, %v1178
      %v1185 = vmul.f32 %v1122, %v1178
      %v1186 = vmul.f32 %v1125, %v1178
      %v1187 = vmul.f32 %v1128, %v1178
      %v1188 = vmul.f32 %v1131, %v1178
      %v1189 = vmul.f32 %v1134, %v1178
      %v1190 = vmul.f32 %v1137, %v1178
      %v1191 = vmul.f32 %v1140, %v1178
      %v1192 = vmul.f32 %v1143, %v1178
      %v1193 = vmul.f32 %v1146, %v1178
      %v1194 = vmul.f32 %v1149, %v1178
      %v1195 = vmul.f32 %v1152, %v1178
      %v1196 = vmul.f32 %v1155, %v1178
      %v1197 = vmul.f32 %v1158, %v1178
      %v1198 = vmul.f32 %v1161, %v1178
      %v1199 = vmul.f32 %v1164, %v1178
      %v1200 = vmul.f32 %v1167, %v1178
      %v1201 = vmul.f32 %v1170, %v1178
      %v1202 = vmul.f32 %v1173, %v1178
      %v1203 = vmul.f32 %v1177, %v1178
      %v1204 = vmul.f32 %v1076, %v1076
      %v1205 = vmul.f32 %v1077, %v1077
      %v1206 = vmul.f32 %v1078, %v1078
      %v1207 = vmul.f32 %v1079, %v1079
      %v1208 = vmul.f32 %v1080, %v1080
      %v1209 = vmul.f32 %v1081, %v1081
      %v1210 = vmul.f32 %v1082, %v1082
      %v1211 = vmul.f32 %v1083, %v1083
      %v1212 = vmul.f32 %v1084, %v1084
      %v1213 = vmul.f32 %v1085, %v1085
      %v1214 = vmul.f32 %v1086, %v1086
      %v1215 = vmul.f32 %v1087, %v1087
      %v1216 = vmul.f32 %v1088, %v1088
      %v1217 = vmul.f32 %v1089, %v1089
      %v1218 = vmul.f32 %v1090, %v1090
      %v1219 = vmul.f32 %v1091, %v1091
      %v1220 = vmul.f32 %v1092, %v1092
      %v1221 = vmul.f32 %v1093, %v1093
      %v1222 = vmul.f32 %v1094, %v1094
      %v1223 = vmul.f32 %v1095, %v1095
      %v1224 = vmul.f32 %v1096, %v1096
      %v1225 = vmul.f32 %v1097, %v1097
      %v1226 = vmul.f32 %v1098, %v1098
      %v1227 = vmul.f32 %v1099, %v1099
      %v1228 = vmul.f32 %v1100, %v1100
      %v1229 = vsel %vm1101, %v1204, 0.0
      %1230 = vadd.xlane.f32.xlu0 %v1229
      %v1231 = vpop.xlane.xlu0 %1230
      %v1232 = vsel %vm1101, %v1205, 0.0
      %1233 = vadd.xlane.f32.xlu0 %v1232
      %v1234 = vpop.xlane.xlu0 %1233
      %v1235 = vsel %vm1101, %v1206, 0.0
      %1236 = vadd.xlane.f32.xlu0 %v1235
      %v1237 = vpop.xlane.xlu0 %1236
      %v1238 = vsel %vm1101, %v1207, 0.0
      %1239 = vadd.xlane.f32.xlu0 %v1238
      %v1240 = vpop.xlane.xlu0 %1239
      %v1241 = vsel %vm1101, %v1208, 0.0
      %1242 = vadd.xlane.f32.xlu0 %v1241
      %v1243 = vpop.xlane.xlu0 %1242
      %v1244 = vsel %vm1101, %v1209, 0.0
      %1245 = vadd.xlane.f32.xlu0 %v1244
      %v1246 = vpop.xlane.xlu0 %1245
      %v1247 = vsel %vm1101, %v1210, 0.0
      %1248 = vadd.xlane.f32.xlu0 %v1247
      %v1249 = vpop.xlane.xlu0 %1248
      %v1250 = vsel %vm1101, %v1211, 0.0
      %1251 = vadd.xlane.f32.xlu0 %v1250
      %v1252 = vpop.xlane.xlu0 %1251
      %v1253 = vsel %vm1101, %v1212, 0.0
      %1254 = vadd.xlane.f32.xlu0 %v1253
      %v1255 = vpop.xlane.xlu0 %1254
      %v1256 = vsel %vm1101, %v1213, 0.0
      %1257 = vadd.xlane.f32.xlu0 %v1256
      %v1258 = vpop.xlane.xlu0 %1257
      %v1259 = vsel %vm1101, %v1214, 0.0
      %1260 = vadd.xlane.f32.xlu0 %v1259
      %v1261 = vpop.xlane.xlu0 %1260
      %v1262 = vsel %vm1101, %v1215, 0.0
      %1263 = vadd.xlane.f32.xlu0 %v1262
      %v1264 = vpop.xlane.xlu0 %1263
      %v1265 = vsel %vm1101, %v1216, 0.0
      %1266 = vadd.xlane.f32.xlu0 %v1265
      %v1267 = vpop.xlane.xlu0 %1266
      %v1268 = vsel %vm1101, %v1217, 0.0
      %1269 = vadd.xlane.f32.xlu0 %v1268
      %v1270 = vpop.xlane.xlu0 %1269
      %v1271 = vsel %vm1101, %v1218, 0.0
      %1272 = vadd.xlane.f32.xlu0 %v1271
      %v1273 = vpop.xlane.xlu0 %1272
      %v1274 = vsel %vm1101, %v1219, 0.0
      %1275 = vadd.xlane.f32.xlu0 %v1274
      %v1276 = vpop.xlane.xlu0 %1275
      %v1277 = vsel %vm1101, %v1220, 0.0
      %1278 = vadd.xlane.f32.xlu0 %v1277
      %v1279 = vpop.xlane.xlu0 %1278
      %v1280 = vsel %vm1101, %v1221, 0.0
      %1281 = vadd.xlane.f32.xlu0 %v1280
      %v1282 = vpop.xlane.xlu0 %1281
      %v1283 = vsel %vm1101, %v1222, 0.0
      %1284 = vadd.xlane.f32.xlu0 %v1283
      %v1285 = vpop.xlane.xlu0 %1284
      %v1286 = vsel %vm1101, %v1223, 0.0
      %1287 = vadd.xlane.f32.xlu0 %v1286
      %v1288 = vpop.xlane.xlu0 %1287
      %v1289 = vsel %vm1101, %v1224, 0.0
      %1290 = vadd.xlane.f32.xlu0 %v1289
      %v1291 = vpop.xlane.xlu0 %1290
      %v1292 = vsel %vm1101, %v1225, 0.0
      %1293 = vadd.xlane.f32.xlu0 %v1292
      %v1294 = vpop.xlane.xlu0 %1293
      %v1295 = vsel %vm1101, %v1226, 0.0
      %1296 = vadd.xlane.f32.xlu0 %v1295
      %v1297 = vpop.xlane.xlu0 %1296
      %v1298 = vsel %vm1101, %v1227, 0.0
      %1299 = vadd.xlane.f32.xlu0 %v1298
      %v1300 = vpop.xlane.xlu0 %1299
      %v1301 = vsel %vm1174, %v1228, 0.0
      %1302 = vadd.xlane.f32.xlu0 %v1301
      %v1303 = vpop.xlane.xlu0 %1302
      %v1304 = vmul.f32 %v1231, %v1178
      %v1305 = vmul.f32 %v1234, %v1178
      %v1306 = vmul.f32 %v1237, %v1178
      %v1307 = vmul.f32 %v1240, %v1178
      %v1308 = vmul.f32 %v1243, %v1178
      %v1309 = vmul.f32 %v1246, %v1178
      %v1310 = vmul.f32 %v1249, %v1178
      %v1311 = vmul.f32 %v1252, %v1178
      %v1312 = vmul.f32 %v1255, %v1178
      %v1313 = vmul.f32 %v1258, %v1178
      %v1314 = vmul.f32 %v1261, %v1178
      %v1315 = vmul.f32 %v1264, %v1178
      %v1316 = vmul.f32 %v1267, %v1178
      %v1317 = vmul.f32 %v1270, %v1178
      %v1318 = vmul.f32 %v1273, %v1178
      %v1319 = vmul.f32 %v1276, %v1178
      %v1320 = vmul.f32 %v1279, %v1178
      %v1321 = vmul.f32 %v1282, %v1178
      %v1322 = vmul.f32 %v1285, %v1178
      %v1323 = vmul.f32 %v1288, %v1178
      %v1324 = vmul.f32 %v1291, %v1178
      %v1325 = vmul.f32 %v1294, %v1178
      %v1326 = vmul.f32 %v1297, %v1178
      %v1327 = vmul.f32 %v1300, %v1178
      %v1328 = vmul.f32 %v1303, %v1178
      %v1329 = vmul.f32 %v1179, %v1179
      %v1330 = vmul.f32 %v1180, %v1180
      %v1331 = vmul.f32 %v1181, %v1181
      %v1332 = vmul.f32 %v1182, %v1182
      %v1333 = vmul.f32 %v1183, %v1183
      %v1334 = vmul.f32 %v1184, %v1184
      %v1335 = vmul.f32 %v1185, %v1185
      %v1336 = vmul.f32 %v1186, %v1186
      %v1337 = vmul.f32 %v1187, %v1187
      %v1338 = vmul.f32 %v1188, %v1188
      %v1339 = vmul.f32 %v1189, %v1189
      %v1340 = vmul.f32 %v1190, %v1190
      %v1341 = vmul.f32 %v1191, %v1191
      %v1342 = vmul.f32 %v1192, %v1192
      %v1343 = vmul.f32 %v1193, %v1193
      %v1344 = vmul.f32 %v1194, %v1194
      %v1345 = vmul.f32 %v1195, %v1195
      %v1346 = vmul.f32 %v1196, %v1196
      %v1347 = vmul.f32 %v1197, %v1197
      %v1348 = vmul.f32 %v1198, %v1198
      %v1349 = vmul.f32 %v1199, %v1199
      %v1350 = vmul.f32 %v1200, %v1200
      %v1351 = vmul.f32 %v1201, %v1201
      %v1352 = vmul.f32 %v1202, %v1202
      %v1353 = vmul.f32 %v1203, %v1203
      %v1354 = vsub.f32 %v1304, %v1329
      %v1355 = vsub.f32 %v1305, %v1330
      %v1356 = vsub.f32 %v1306, %v1331
      %v1357 = vsub.f32 %v1307, %v1332
      %v1358 = vsub.f32 %v1308, %v1333
      %v1359 = vsub.f32 %v1309, %v1334
      %v1360 = vsub.f32 %v1310, %v1335
      %v1361 = vsub.f32 %v1311, %v1336
      %v1362 = vsub.f32 %v1312, %v1337
      %v1363 = vsub.f32 %v1313, %v1338
      %v1364 = vsub.f32 %v1314, %v1339
      %v1365 = vsub.f32 %v1315, %v1340
      %v1366 = vsub.f32 %v1316, %v1341
      %v1367 = vsub.f32 %v1317, %v1342
      %v1368 = vsub.f32 %v1318, %v1343
      %v1369 = vsub.f32 %v1319, %v1344
      %v1370 = vsub.f32 %v1320, %v1345
      %v1371 = vsub.f32 %v1321, %v1346
      %v1372 = vsub.f32 %v1322, %v1347
      %v1373 = vsub.f32 %v1323, %v1348
      %v1374 = vsub.f32 %v1324, %v1349
      %v1375 = vsub.f32 %v1325, %v1350
      %v1376 = vsub.f32 %v1326, %v1351
      %v1377 = vsub.f32 %v1327, %v1352
      %v1378 = vsub.f32 %v1328, %v1353
      %v1379 = vmax.f32 %v1354, 0.0
      %v1380 = vmax.f32 %v1355, 0.0
      %v1381 = vmax.f32 %v1356, 0.0
      %v1382 = vmax.f32 %v1357, 0.0
      %v1383 = vmax.f32 %v1358, 0.0
      %v1384 = vmax.f32 %v1359, 0.0
      %v1385 = vmax.f32 %v1360, 0.0
      %v1386 = vmax.f32 %v1361, 0.0
      %v1387 = vmax.f32 %v1362, 0.0
      %v1388 = vmax.f32 %v1363, 0.0
      %v1389 = vmax.f32 %v1364, 0.0
      %v1390 = vmax.f32 %v1365, 0.0
      %v1391 = vmax.f32 %v1366, 0.0
      %v1392 = vmax.f32 %v1367, 0.0
      %v1393 = vmax.f32 %v1368, 0.0
      %v1394 = vmax.f32 %v1369, 0.0
      %v1395 = vmax.f32 %v1370, 0.0
      %v1396 = vmax.f32 %v1371, 0.0
      %v1397 = vmax.f32 %v1372, 0.0
      %v1398 = vmax.f32 %v1373, 0.0
      %v1399 = vmax.f32 %v1374, 0.0
      %v1400 = vmax.f32 %v1375, 0.0
      %v1401 = vmax.f32 %v1376, 0.0
      %v1402 = vmax.f32 %v1377, 0.0
      %v1403 = vmax.f32 %v1378, 0.0
      %v1404 = vsub.f32 %v1076, %v1179
      %v1405 = vsub.f32 %v1077, %v1180
      %v1406 = vsub.f32 %v1078, %v1181
      %v1407 = vsub.f32 %v1079, %v1182
      %v1408 = vsub.f32 %v1080, %v1183
      %v1409 = vsub.f32 %v1081, %v1184
      %v1410 = vsub.f32 %v1082, %v1185
      %v1411 = vsub.f32 %v1083, %v1186
      %v1412 = vsub.f32 %v1084, %v1187
      %v1413 = vsub.f32 %v1085, %v1188
      %v1414 = vsub.f32 %v1086, %v1189
      %v1415 = vsub.f32 %v1087, %v1190
      %v1416 = vsub.f32 %v1088, %v1191
      %v1417 = vsub.f32 %v1089, %v1192
      %v1418 = vsub.f32 %v1090, %v1193
      %v1419 = vsub.f32 %v1091, %v1194
      %v1420 = vsub.f32 %v1092, %v1195
      %v1421 = vsub.f32 %v1093, %v1196
      %v1422 = vsub.f32 %v1094, %v1197
      %v1423 = vsub.f32 %v1095, %v1198
      %v1424 = vsub.f32 %v1096, %v1199
      %v1425 = vsub.f32 %v1097, %v1200
      %v1426 = vsub.f32 %v1098, %v1201
      %v1427 = vsub.f32 %v1099, %v1202
      %v1428 = vsub.f32 %v1100, %v1203
      %v1429 = vadd.f32 %v1379, 1e-05
      %v1430 = vadd.f32 %v1380, 1e-05
      %v1431 = vadd.f32 %v1381, 1e-05
      %v1432 = vadd.f32 %v1382, 1e-05
      %v1433 = vadd.f32 %v1383, 1e-05
      %v1434 = vadd.f32 %v1384, 1e-05
      %v1435 = vadd.f32 %v1385, 1e-05
      %v1436 = vadd.f32 %v1386, 1e-05
      %v1437 = vadd.f32 %v1387, 1e-05
      %v1438 = vadd.f32 %v1388, 1e-05
      %v1439 = vadd.f32 %v1389, 1e-05
      %v1440 = vadd.f32 %v1390, 1e-05
      %v1441 = vadd.f32 %v1391, 1e-05
      %v1442 = vadd.f32 %v1392, 1e-05
      %v1443 = vadd.f32 %v1393, 1e-05
      %v1444 = vadd.f32 %v1394, 1e-05
      %v1445 = vadd.f32 %v1395, 1e-05
      %v1446 = vadd.f32 %v1396, 1e-05
      %v1447 = vadd.f32 %v1397, 1e-05
      %v1448 = vadd.f32 %v1398, 1e-05
      %v1449 = vadd.f32 %v1399, 1e-05
      %v1450 = vadd.f32 %v1400, 1e-05
      %v1451 = vadd.f32 %v1401, 1e-05
      %v1452 = vadd.f32 %v1402, 1e-05
      %v1453 = vadd.f32 %v1403, 1e-05
      %v1454 = vrsqrt.pop %v1429
      %v1455 = vrsqrt.pop %v1430
      %v1456 = vrsqrt.pop %v1431
      %v1457 = vrsqrt.pop %v1432
      %v1458 = vrsqrt.pop %v1433
      %v1459 = vrsqrt.pop %v1434
      %v1460 = vrsqrt.pop %v1435
      %v1461 = vrsqrt.pop %v1436
      %v1462 = vrsqrt.pop %v1437
      %v1463 = vrsqrt.pop %v1438
      %v1464 = vrsqrt.pop %v1439
      %v1465 = vrsqrt.pop %v1440
      %v1466 = vrsqrt.pop %v1441
      %v1467 = vrsqrt.pop %v1442
      %v1468 = vrsqrt.pop %v1443
      %v1469 = vrsqrt.pop %v1444
      %v1470 = vrsqrt.pop %v1445
      %v1471 = vrsqrt.pop %v1446
      %v1472 = vrsqrt.pop %v1447
      %v1473 = vrsqrt.pop %v1448
      %v1474 = vrsqrt.pop %v1449
      %v1475 = vrsqrt.pop %v1450
      %v1476 = vrsqrt.pop %v1451
      %v1477 = vrsqrt.pop %v1452
      %v1478 = vrsqrt.pop %v1453
      %v1479 = vmul.f32 %v1404, %v1454
      %v1480 = vmul.f32 %v1405, %v1455
      %v1481 = vmul.f32 %v1406, %v1456
      %v1482 = vmul.f32 %v1407, %v1457
      %v1483 = vmul.f32 %v1408, %v1458
      %v1484 = vmul.f32 %v1409, %v1459
      %v1485 = vmul.f32 %v1410, %v1460
      %v1486 = vmul.f32 %v1411, %v1461
      %v1487 = vmul.f32 %v1412, %v1462
      %v1488 = vmul.f32 %v1413, %v1463
      %v1489 = vmul.f32 %v1414, %v1464
      %v1490 = vmul.f32 %v1415, %v1465
      %v1491 = vmul.f32 %v1416, %v1466
      %v1492 = vmul.f32 %v1417, %v1467
      %v1493 = vmul.f32 %v1418, %v1468
      %v1494 = vmul.f32 %v1419, %v1469
      %v1495 = vmul.f32 %v1420, %v1470
      %v1496 = vmul.f32 %v1421, %v1471
      %v1497 = vmul.f32 %v1422, %v1472
      %v1498 = vmul.f32 %v1423, %v1473
      %v1499 = vmul.f32 %v1424, %v1474
      %v1500 = vmul.f32 %v1425, %v1475
      %v1501 = vmul.f32 %v1426, %v1476
      %v1502 = vmul.f32 %v1427, %v1477
      %v1503 = vmul.f32 %v1428, %v1478
      %v1504 = vld [vmem:[%s4 + $0x1] sm:$0x1]
      %v1505 = vlaneseq
      %v1506 = vshrl.u32 %v1505, 7
      %v1507 = vsub.s32 0, %v1506
      %v1508 = vrot.slane %v1504, %v1507
      %v1509 = vmul.f32 %v1479, %v1508
      %v1510 = vmul.f32 %v1480, %v1508
      %v1511 = vmul.f32 %v1481, %v1508
      %v1512 = vmul.f32 %v1482, %v1508
      %v1513 = vmul.f32 %v1483, %v1508
      %v1514 = vmul.f32 %v1484, %v1508
      %v1515 = vmul.f32 %v1485, %v1508
      %v1516 = vmul.f32 %v1486, %v1508
      %v1517 = vmul.f32 %v1487, %v1508
      %v1518 = vmul.f32 %v1488, %v1508
      %v1519 = vmul.f32 %v1489, %v1508
      %v1520 = vmul.f32 %v1490, %v1508
      %v1521 = vmul.f32 %v1491, %v1508
      %v1522 = vmul.f32 %v1492, %v1508
      %v1523 = vmul.f32 %v1493, %v1508
      %v1524 = vmul.f32 %v1494, %v1508
      %v1525 = vmul.f32 %v1495, %v1508
      %v1526 = vmul.f32 %v1496, %v1508
      %v1527 = vmul.f32 %v1497, %v1508
      %v1528 = vmul.f32 %v1498, %v1508
      %v1529 = vmul.f32 %v1499, %v1508
      %v1530 = vmul.f32 %v1500, %v1508
      %v1531 = vmul.f32 %v1501, %v1508
      %v1532 = vmul.f32 %v1502, %v1508
      %v1533 = vmul.f32 %v1503, %v1508
      %v1534 = vld [vmem:[%s4 + $0x2] sm:$0x1]
      %v1535 = vlaneseq
      %v1536 = vshrl.u32 %v1535, 7
      %v1537 = vsub.s32 0, %v1536
      %v1538 = vrot.slane %v1534, %v1537
      %v1539 = vadd.f32 %v1509, %v1538
      %v1540 = vadd.f32 %v1510, %v1538
      %v1541 = vadd.f32 %v1511, %v1538
      %v1542 = vadd.f32 %v1512, %v1538
      %v1543 = vadd.f32 %v1513, %v1538
      %v1544 = vadd.f32 %v1514, %v1538
      %v1545 = vadd.f32 %v1515, %v1538
      %v1546 = vadd.f32 %v1516, %v1538
      %v1547 = vadd.f32 %v1517, %v1538
      %v1548 = vadd.f32 %v1518, %v1538
      %v1549 = vadd.f32 %v1519, %v1538
      %v1550 = vadd.f32 %v1520, %v1538
      %v1551 = vadd.f32 %v1521, %v1538
      %v1552 = vadd.f32 %v1522, %v1538
      %v1553 = vadd.f32 %v1523, %v1538
      %v1554 = vadd.f32 %v1524, %v1538
      %v1555 = vadd.f32 %v1525, %v1538
      %v1556 = vadd.f32 %v1526, %v1538
      %v1557 = vadd.f32 %v1527, %v1538
      %v1558 = vadd.f32 %v1528, %v1538
      %v1559 = vadd.f32 %v1529, %v1538
      %v1560 = vadd.f32 %v1530, %v1538
      %v1561 = vadd.f32 %v1531, %v1538
      %v1562 = vadd.f32 %v1532, %v1538
      %v1563 = vadd.f32 %v1533, %v1538
      %v1564 = vld [vmem:[%s5] sm:$0xff]
      %v1565 = vld [vmem:[%s5 + $0x8] sm:$0xff]
      %v1566 = vld [vmem:[%s5 + $0x10] sm:$0xff]
      %v1567 = vld [vmem:[%s5 + $0x18] sm:$0xff]
      %v1568 = vld [vmem:[%s4 + $0x3] sm:$0x1]
      %v1569 = vlaneseq
      %v1570 = vshrl.u32 %v1569, 7
      %v1571 = vsub.s32 0, %v1570
      %v1572 = vrot.slane %v1568, %v1571
      %v1574 = vsel %vm1101, %v1539, 0
      %v1577 = vsel %vm1101, %v1540, 0
      %v1580 = vsel %vm1101, %v1541, 0
      %v1583 = vsel %vm1101, %v1542, 0
      %v1586 = vsel %vm1101, %v1543, 0
      %v1589 = vsel %vm1101, %v1544, 0
      %v1592 = vsel %vm1101, %v1545, 0
      %v1595 = vsel %vm1101, %v1546, 0
      %v1598 = vsel %vm1101, %v1547, 0
      %v1601 = vsel %vm1101, %v1548, 0
      %v1604 = vsel %vm1101, %v1549, 0
      %v1607 = vsel %vm1101, %v1550, 0
      %v1610 = vsel %vm1101, %v1551, 0
      %v1613 = vsel %vm1101, %v1552, 0
      %v1616 = vsel %vm1101, %v1553, 0
      %v1619 = vsel %vm1101, %v1554, 0
      %v1622 = vsel %vm1101, %v1555, 0
      %v1625 = vsel %vm1101, %v1556, 0
      %v1628 = vsel %vm1101, %v1557, 0
      %v1631 = vsel %vm1101, %v1558, 0
      %v1634 = vsel %vm1101, %v1559, 0
      %v1637 = vsel %vm1101, %v1560, 0
      %v1640 = vsel %vm1101, %v1561, 0
      %v1643 = vsel %vm1101, %v1562, 0
      %v1646 = vsel %vm1101, %v1563, 0
      %1648 = vmatprep.subr.mxu0 0.0
      %1649 = vmatpush1.msra.mxu0 %v1564
      %1650 = vmatprep.subr.mxu0 0.0
      %1651 = vmatpush1.msra.mxu0 %v1565
      %1652 = vmatprep.subr.mxu0 0.0
      %1653 = vmatpush1.msra.mxu0 %v1566
      %1654 = vmatprep.subr.mxu0 0.0
      %1655 = vmatpush1.msra.mxu0 %v1567
      %1656 = vmatprep.subr.mxu0 0.0
      %1657 = vmatpush1.msra.mxu0 0.0
      %1658 = vmatprep.subr.mxu0 0.0
      %1659 = vmatpush1.msra.mxu0 0.0
      %1660 = vmatprep.subr.mxu0 0.0
      %1661 = vmatpush1.msra.mxu0 0.0
      %1662 = vmatprep.subr.mxu0 0.0
      %1663 = vmatpush1.msra.mxu0 0.0
      %1664 = vmatprep.subr.mxu0 0.0
      %1665 = vmatpush1.msra.mxu0 0.0
      %1666 = vmatprep.subr.mxu0 0.0
      %1667 = vmatpush1.msra.mxu0 0.0
      %1668 = vmatprep.subr.mxu0 0.0
      %1669 = vmatpush1.msra.mxu0 0.0
      %1670 = vmatprep.subr.mxu0 0.0
      %1671 = vmatpush1.msra.mxu0 0.0
      %1672 = vmatprep.subr.mxu0 0.0
      %1673 = vmatpush1.msra.mxu0 0.0
      %1674 = vmatprep.subr.mxu0 0.0
      %1675 = vmatpush1.msra.mxu0 0.0
      %1676 = vmatprep.subr.mxu0 0.0
      %1677 = vmatpush1.msra.mxu0 0.0
      %1678 = vmatprep.subr.mxu0 0.0
      %1679 = vmatpush1.msra.mxu0 0.0
      %1680 = vmatprep.subr.mxu0 0.0
      %1681 = vmatpush1.msra.mxu0 0.0
      %1682 = vmatprep.subr.mxu0 0.0
      %1683 = vmatpush1.msra.mxu0 0.0
      %1684 = vmatprep.subr.mxu0 0.0
      %1685 = vmatpush1.msra.mxu0 0.0
      %1686 = vmatprep.subr.mxu0 0.0
      %1687 = vmatpush1.msra.mxu0 0.0
      %1688 = vmatprep.subr.mxu0 0.0
      %1689 = vmatpush1.msra.mxu0 0.0
      %1690 = vmatprep.subr.mxu0 0.0
      %1691 = vmatpush1.msra.mxu0 0.0
      %1692 = vmatprep.subr.mxu0 0.0
      %1693 = vmatpush1.msra.mxu0 0.0
      %1694 = vmatprep.subr.mxu0 0.0
      %1695 = vmatpush1.msra.mxu0 0.0
      %1696 = vmatprep.subr.mxu0 0.0
      %1697 = vmatpush1.msra.mxu0 0.0
      %1698 = vmatprep.subr.mxu0 0.0
      %1699 = vmatpush1.msra.mxu0 0.0
      %1700 = vmatprep.subr.mxu0 0.0
      %1701 = vmatpush1.msra.mxu0 0.0
      %1702 = vmatprep.subr.mxu0 0.0
      %1703 = vmatpush1.msra.mxu0 0.0
      %1704 = vmatprep.subr.mxu0 0.0
      %1705 = vmatpush1.msra.mxu0 0.0
      %1706 = vmatprep.subr.mxu0 0.0
      %1707 = vmatpush1.msra.mxu0 0.0
      %1708 = vmatprep.subr.mxu0 0.0
      %1709 = vmatpush1.msra.mxu0 0.0
      %1710 = vmatprep.subr.mxu0 0.0
      %1711 = vmatpush1.msra.mxu0 0.0
      %1712 = vmatprep.mubr.f32.mxu0 0.0
      %1713 = vmatmul.mubr.f32.gmra.mrb[0].mxu0 %v1574
      %v1714 = vpop.f32.mrb[0].mxu0
      %v1715 = vadd.f32 %v1572, %v1714
      %v1716 = vpop.f32.mrb[0].mxu0
      %1717 = vmatprep.mubr.f32.mxu0 0.0
      %1718 = vmatmul.mubr.f32.gmra.mrb[0].mxu0 %v1577
      %v1719 = vpop.f32.mrb[0].mxu0
      %v1720 = vadd.f32 %v1572, %v1719
      %v1721 = vpop.f32.mrb[0].mxu0
      %1722 = vmatprep.mubr.f32.mxu0 0.0
      %1723 = vmatmul.mubr.f32.gmra.mrb[0].mxu0 %v1580
      %v1724 = vpop.f32.mrb[0].mxu0
      %v1725 = vadd.f32 %v1572, %v1724
      %v1726 = vpop.f32.mrb[0].mxu0
      %1727 = vmatprep.mubr.f32.mxu0 0.0
      %1728 = vmatmul.mubr.f32.gmra.mrb[0].mxu0 %v1583
      %v1729 = vpop.f32.mrb[0].mxu0
      %v1730 = vadd.f32 %v1572, %v1729
      %v1731 = vpop.f32.mrb[0].mxu0
      %1732 = vmatprep.mubr.f32.mxu0 0.0
      %1733 = vmatmul.mubr.f32.gmra.mrb[0].mxu0 %v1586
      %v1734 = vpop.f32.mrb[0].mxu0
      %v1735 = vadd.f32 %v1572, %v1734
      %v1736 = vpop.f32.mrb[0].mxu0
      %1737 = vmatprep.mubr.f32.mxu0 0.0
      %1738 = vmatmul.mubr.f32.gmra.mrb[0].mxu0 %v1589
      %v1739 = vpop.f32.mrb[0].mxu0
      %v1740 = vadd.f32 %v1572, %v1739
      %v1741 = vpop.f32.mrb[0].mxu0
      %1742 = vmatprep.mubr.f32.mxu0 0.0
      %1743 = vmatmul.mubr.f32.gmra.mrb[0].mxu0 %v1592
      %v1744 = vpop.f32.mrb[0].mxu0
      %v1745 = vadd.f32 %v1572, %v1744
      %v1746 = vpop.f32.mrb[0].mxu0
      %1747 = vmatprep.mubr.f32.mxu0 0.0
      %1748 = vmatmul.mubr.f32.gmra.mrb[0].mxu0 %v1595
      %v1749 = vpop.f32.mrb[0].mxu0
      %v1750 = vadd.f32 %v1572, %v1749
      %v1751 = vpop.f32.mrb[0].mxu0
      %1752 = vmatprep.mubr.f32.mxu0 0.0
      %1753 = vmatmul.mubr.f32.gmra.mrb[0].mxu0 %v1598
      %v1754 = vpop.f32.mrb[0].mxu0
      %v1755 = vadd.f32 %v1572, %v1754
      %v1756 = vpop.f32.mrb[0].mxu0
      %1757 = vmatprep.mubr.f32.mxu0 0.0
      %1758 = vmatmul.mubr.f32.gmra.mrb[0].mxu0 %v1601
      %v1759 = vpop.f32.mrb[0].mxu0
      %v1760 = vadd.f32 %v1572, %v1759
      %v1761 = vpop.f32.mrb[0].mxu0
      %1762 = vmatprep.mubr.f32.mxu0 0.0
      %1763 = vmatmul.mubr.f32.gmra.mrb[0].mxu0 %v1604
      %v1764 = vpop.f32.mrb[0].mxu0
      %v1765 = vadd.f32 %v1572, %v1764
      %v1766 = vpop.f32.mrb[0].mxu0
      %1767 = vmatprep.mubr.f32.mxu0 0.0
      %1768 = vmatmul.mubr.f32.gmra.mrb[0].mxu0 %v1607
      %v1769 = vpop.f32.mrb[0].mxu0
      %v1770 = vadd.f32 %v1572, %v1769
      %v1771 = vpop.f32.mrb[0].mxu0
      %1772 = vmatprep.mubr.f32.mxu0 0.0
      %1773 = vmatmul.mubr.f32.gmra.mrb[0].mxu0 %v1610
      %v1774 = vpop.f32.mrb[0].mxu0
      %v1775 = vadd.f32 %v1572, %v1774
      %v1776 = vpop.f32.mrb[0].mxu0
      %1777 = vmatprep.mubr.f32.mxu0 0.0
      %1778 = vmatmul.mubr.f32.gmra.mrb[0].mxu0 %v1613
      %v1779 = vpop.f32.mrb[0].mxu0
      %v1780 = vadd.f32 %v1572, %v1779
      %v1781 = vpop.f32.mrb[0].mxu0
      %1782 = vmatprep.mubr.f32.mxu0 0.0
      %1783 = vmatmul.mubr.f32.gmra.mrb[0].mxu0 %v1616
      %v1784 = vpop.f32.mrb[0].mxu0
      %v1785 = vadd.f32 %v1572, %v1784
      %v1786 = vpop.f32.mrb[0].mxu0
      %1787 = vmatprep.mubr.f32.mxu0 0.0
      %1788 = vmatmul.mubr.f32.gmra.mrb[0].mxu0 %v1619
      %v1789 = vpop.f32.mrb[0].mxu0
      %v1790 = vadd.f32 %v1572, %v1789
      %v1791 = vpop.f32.mrb[0].mxu0
      %1792 = vmatprep.mubr.f32.mxu0 0.0
      %1793 = vmatmul.mubr.f32.gmra.mrb[0].mxu0 %v1622
      %v1794 = vpop.f32.mrb[0].mxu0
      %v1795 = vadd.f32 %v1572, %v1794
      %v1796 = vpop.f32.mrb[0].mxu0
      %1797 = vmatprep.mubr.f32.mxu0 0.0
      %1798 = vmatmul.mubr.f32.gmra.mrb[0].mxu0 %v1625
      %v1799 = vpop.f32.mrb[0].mxu0
      %v1800 = vadd.f32 %v1572, %v1799
      %v1801 = vpop.f32.mrb[0].mxu0
      %1802 = vmatprep.mubr.f32.mxu0 0.0
      %1803 = vmatmul.mubr.f32.gmra.mrb[0].mxu0 %v1628
      %v1804 = vpop.f32.mrb[0].mxu0
      %v1805 = vadd.f32 %v1572, %v1804
      %v1806 = vpop.f32.mrb[0].mxu0
      %1807 = vmatprep.mubr.f32.mxu0 0.0
      %1808 = vmatmul.mubr.f32.gmra.mrb[0].mxu0 %v1631
      %v1809 = vpop.f32.mrb[0].mxu0
      %v1810 = vadd.f32 %v1572, %v1809
      %v1811 = vpop.f32.mrb[0].mxu0
      %1812 = vmatprep.mubr.f32.mxu0 0.0
      %1813 = vmatmul.mubr.f32.gmra.mrb[0].mxu0 %v1634
      %v1814 = vpop.f32.mrb[0].mxu0
      %v1815 = vadd.f32 %v1572, %v1814
      %v1816 = vpop.f32.mrb[0].mxu0
      %1817 = vmatprep.mubr.f32.mxu0 0.0
      %1818 = vmatmul.mubr.f32.gmra.mrb[0].mxu0 %v1637
      %v1819 = vpop.f32.mrb[0].mxu0
      %v1820 = vadd.f32 %v1572, %v1819
      %v1821 = vpop.f32.mrb[0].mxu0
      %1822 = vmatprep.mubr.f32.mxu0 0.0
      %1823 = vmatmul.mubr.f32.gmra.mrb[0].mxu0 %v1640
      %v1824 = vpop.f32.mrb[0].mxu0
      %v1825 = vadd.f32 %v1572, %v1824
      %v1826 = vpop.f32.mrb[0].mxu0
      %1827 = vmatprep.mubr.f32.mxu0 0.0
      %1828 = vmatmul.mubr.f32.gmra.mrb[0].mxu0 %v1643
      %v1829 = vpop.f32.mrb[0].mxu0
      %v1830 = vadd.f32 %v1572, %v1829
      %v1831 = vpop.f32.mrb[0].mxu0
      %1832 = vmatprep.mubr.f32.mxu0 0.0
      %1833 = vmatmul.mubr.f32.gmra.mrb[0].mxu0 %v1646
      %v1834 = vpop.f32.mrb[0].mxu0
      %v1835 = vadd.f32 %v1572, %v1834
      %v1836 = vpop.f32.mrb[0].mxu0
      %1837 = vdwg.mxu0
      %v1838 = vld [vmem:[%s450] sm:$0x1]
      %v1839 = vld [vmem:[%s8] sm:$0xff]
      %v1840 = vld [vmem:[%s8 + $0x8] sm:$0x7]
      %v1841 = vld [vmem:[%s6] sm:$0xff]
      %v1842 = vld [vmem:[%s6 + $0x8] sm:$0xff]
      %v1843 = vld [vmem:[%s6 + $0x10] sm:$0xff]
      %v1844 = vld [vmem:[%s6 + $0x18] sm:$0xff]
      %v1845 = vld [vmem:[%s7] sm:$0xff]
      %v1846 = vld [vmem:[%s7 + $0x8] sm:$0xff]
      %v1847 = vld [vmem:[%s7 + $0x10] sm:$0xff]
      %v1848 = vld [vmem:[%s7 + $0x18] sm:$0xff]
      %v1849 = vld [vmem:[%s7 + $0x20] sm:$0xff]
      %vm1850 = vcmask 326656
      %v1852 = vsel %vm1850, %v1838, 0
      %1854 = vmatprep.subr.mxu0 0.0
      %1855 = vmatpush1.msra.mxu0 %v1845
      %1856 = vmatprep.subr.mxu0 0.0
      %1857 = vmatpush1.msra.mxu0 %v1846
      %1858 = vmatprep.subr.mxu0 0.0
      %1859 = vmatpush1.msra.mxu0 %v1847
      %1860 = vmatprep.subr.mxu0 0.0
      %1861 = vmatpush1.msra.mxu0 %v1848
      %1862 = vmatprep.subr.mxu0 0.0
      %1863 = vmatpush1.msra.mxu0 %v1849
      %1864 = vmatprep.subr.mxu0 0.0
      %1865 = vmatpush1.msra.mxu0 0.0
      %1866 = vmatprep.subr.mxu0 0.0
      %1867 = vmatpush1.msra.mxu0 0.0
      %1868 = vmatprep.subr.mxu0 0.0
      %1869 = vmatpush1.msra.mxu0 0.0
      %1870 = vmatprep.subr.mxu0 0.0
      %1871 = vmatpush1.msra.mxu0 0.0
      %1872 = vmatprep.subr.mxu0 0.0
      %1873 = vmatpush1.msra.mxu0 0.0
      %1874 = vmatprep.subr.mxu0 0.0
      %1875 = vmatpush1.msra.mxu0 0.0
      %1876 = vmatprep.subr.mxu0 0.0
      %1877 = vmatpush1.msra.mxu0 0.0
      %1878 = vmatprep.subr.mxu0 0.0
      %1879 = vmatpush1.msra.mxu0 0.0
      %1880 = vmatprep.subr.mxu0 0.0
      %1881 = vmatpush1.msra.mxu0 0.0
      %1882 = vmatprep.subr.mxu0 0.0
      %1883 = vmatpush1.msra.mxu0 0.0
      %1884 = vmatprep.subr.mxu0 0.0
      %1885 = vmatpush1.msra.mxu0 0.0
      %1886 = vmatprep.subr.mxu0 0.0
      %1887 = vmatpush1.msra.mxu0 0.0
      %1888 = vmatprep.subr.mxu0 0.0
      %1889 = vmatpush1.msra.mxu0 0.0
      %1890 = vmatprep.subr.mxu0 0.0
      %1891 = vmatpush1.msra.mxu0 0.0
      %1892 = vmatprep.subr.mxu0 0.0
      %1893 = vmatpush1.msra.mxu0 0.0
      %1894 = vmatprep.subr.mxu0 0.0
      %1895 = vmatpush1.msra.mxu0 0.0
      %1896 = vmatprep.subr.mxu0 0.0
      %1897 = vmatpush1.msra.mxu0 0.0
      %1898 = vmatprep.subr.mxu0 0.0
      %1899 = vmatpush1.msra.mxu0 0.0
      %1900 = vmatprep.subr.mxu0 0.0
      %1901 = vmatpush1.msra.mxu0 0.0
      %1902 = vmatprep.subr.mxu0 0.0
      %1903 = vmatpush1.msra.mxu0 0.0
      %1904 = vmatprep.subr.mxu0 0.0
      %1905 = vmatpush1.msra.mxu0 0.0
      %1906 = vmatprep.subr.mxu0 0.0
      %1907 = vmatpush1.msra.mxu0 0.0
      %1908 = vmatprep.subr.mxu0 0.0
      %1909 = vmatpush1.msra.mxu0 0.0
      %1910 = vmatprep.subr.mxu0 0.0
      %1911 = vmatpush1.msra.mxu0 0.0
      %1912 = vmatprep.subr.mxu0 0.0
      %1913 = vmatpush1.msra.mxu0 0.0
      %1914 = vmatprep.subr.mxu0 0.0
      %1915 = vmatpush1.msra.mxu0 0.0
      %1916 = vmatprep.subr.mxu0 0.0
      %1917 = vmatpush1.msra.mxu0 0.0
      %1918 = vmatprep.mubr.f32.mxu0 0.0
      %1919 = vmatmul.mubr.f32.gmra.mrb[0].mxu0 %v1852
      %v1920 = vpop.f32.mrb[0].mxu0
      %v1921 = vadd.f32 0.0, %v1920
      %v1922 = vpop.f32.mrb[0].mxu0
      %1923 = vdwg.mxu0
      %v1924 = vlaneseq
      %v1925 = vshrl.u32 %v1924, 7
      %v1926 = vsub.s32 0, %v1925
      %v1927 = vrot.slane %v1921, %v1926
      %v1929 = vsel %vm1101, %v1715, 0
      %v1932 = vsel %vm1101, %v1720, 0
      %v1935 = vsel %vm1101, %v1725, 0
      %v1938 = vsel %vm1101, %v1730, 0
      %v1941 = vsel %vm1101, %v1735, 0
      %v1944 = vsel %vm1101, %v1740, 0
      %v1947 = vsel %vm1101, %v1745, 0
      %v1950 = vsel %vm1101, %v1750, 0
      %v1953 = vsel %vm1101, %v1755, 0
      %v1956 = vsel %vm1101, %v1760, 0
      %v1959 = vsel %vm1101, %v1765, 0
      %v1962 = vsel %vm1101, %v1770, 0
      %v1965 = vsel %vm1101, %v1775, 0
      %v1968 = vsel %vm1101, %v1780, 0
      %v1971 = vsel %vm1101, %v1785, 0
      %v1974 = vsel %vm1101, %v1790, 0
      %v1977 = vsel %vm1101, %v1795, 0
      %v1980 = vsel %vm1101, %v1800, 0
      %v1983 = vsel %vm1101, %v1805, 0
      %v1986 = vsel %vm1101, %v1810, 0
      %v1989 = vsel %vm1101, %v1815, 0
      %v1992 = vsel %vm1101, %v1820, 0
      %v1995 = vsel %vm1101, %v1825, 0
      %v1998 = vsel %vm1101, %v1830, 0
      %v2001 = vsel %vm1101, %v1835, 0
      %2003 = vmatprep.subr.mxu0 0.0
      %2004 = vmatpush1.msra.mxu0 %v1841
      %2005 = vmatprep.subr.mxu0 0.0
      %2006 = vmatpush1.msra.mxu0 %v1842
      %2007 = vmatprep.subr.mxu0 0.0
      %2008 = vmatpush1.msra.mxu0 %v1843
      %2009 = vmatprep.subr.mxu0 0.0
      %2010 = vmatpush1.msra.mxu0 %v1844
      %2011 = vmatprep.subr.mxu0 0.0
      %2012 = vmatpush1.msra.mxu0 0.0
      %2013 = vmatprep.subr.mxu0 0.0
      %2014 = vmatpush1.msra.mxu0 0.0
      %2015 = vmatprep.subr.mxu0 0.0
      %2016 = vmatpush1.msra.mxu0 0.0
      %2017 = vmatprep.subr.mxu0 0.0
      %2018 = vmatpush1.msra.mxu0 0.0
      %2019 = vmatprep.subr.mxu0 0.0
      %2020 = vmatpush1.msra.mxu0 0.0
      %2021 = vmatprep.subr.mxu0 0.0
      %2022 = vmatpush1.msra.mxu0 0.0
      %2023 = vmatprep.subr.mxu0 0.0
      %2024 = vmatpush1.msra.mxu0 0.0
      %2025 = vmatprep.subr.mxu0 0.0
      %2026 = vmatpush1.msra.mxu0 0.0
      %2027 = vmatprep.subr.mxu0 0.0
      %2028 = vmatpush1.msra.mxu0 0.0
      %2029 = vmatprep.subr.mxu0 0.0
      %2030 = vmatpush1.msra.mxu0 0.0
      %2031 = vmatprep.subr.mxu0 0.0
      %2032 = vmatpush1.msra.mxu0 0.0
      %2033 = vmatprep.subr.mxu0 0.0
      %2034 = vmatpush1.msra.mxu0 0.0
      %2035 = vmatprep.subr.mxu0 0.0
      %2036 = vmatpush1.msra.mxu0 0.0
      %2037 = vmatprep.subr.mxu0 0.0
      %2038 = vmatpush1.msra.mxu0 0.0
      %2039 = vmatprep.subr.mxu0 0.0
      %2040 = vmatpush1.msra.mxu0 0.0
      %2041 = vmatprep.subr.mxu0 0.0
      %2042 = vmatpush1.msra.mxu0 0.0
      %2043 = vmatprep.subr.mxu0 0.0
      %2044 = vmatpush1.msra.mxu0 0.0
      %2045 = vmatprep.subr.mxu0 0.0
      %2046 = vmatpush1.msra.mxu0 0.0
      %2047 = vmatprep.subr.mxu0 0.0
      %2048 = vmatpush1.msra.mxu0 0.0
      %2049 = vmatprep.subr.mxu0 0.0
      %2050 = vmatpush1.msra.mxu0 0.0
      %2051 = vmatprep.subr.mxu0 0.0
      %2052 = vmatpush1.msra.mxu0 0.0
      %2053 = vmatprep.subr.mxu0 0.0
      %2054 = vmatpush1.msra.mxu0 0.0
      %2055 = vmatprep.subr.mxu0 0.0
      %2056 = vmatpush1.msra.mxu0 0.0
      %2057 = vmatprep.subr.mxu0 0.0
      %2058 = vmatpush1.msra.mxu0 0.0
      %2059 = vmatprep.subr.mxu0 0.0
      %2060 = vmatpush1.msra.mxu0 0.0
      %2061 = vmatprep.subr.mxu0 0.0
      %2062 = vmatpush1.msra.mxu0 0.0
      %2063 = vmatprep.subr.mxu0 0.0
      %2064 = vmatpush1.msra.mxu0 0.0
      %2065 = vmatprep.subr.mxu0 0.0
      %2066 = vmatpush1.msra.mxu0 0.0
      %2067 = vmatprep.mubr.f32.mxu0 0.0
      %2068 = vmatmul.mubr.f32.gmra.mrb[0].mxu0 %v1929
      %v2069 = vpop.f32.mrb[0].mxu0
      %v2070 = vadd.f32 %v1927, %v2069
      %v2071 = vpop.f32.mrb[0].mxu0
      %2072 = vmatprep.mubr.f32.mxu0 0.0
      %2073 = vmatmul.mubr.f32.gmra.mrb[0].mxu0 %v1932
      %v2074 = vpop.f32.mrb[0].mxu0
      %v2075 = vadd.f32 %v1927, %v2074
      %v2076 = vpop.f32.mrb[0].mxu0
      %2077 = vmatprep.mubr.f32.mxu0 0.0
      %2078 = vmatmul.mubr.f32.gmra.mrb[0].mxu0 %v1935
      %v2079 = vpop.f32.mrb[0].mxu0
      %v2080 = vadd.f32 %v1927, %v2079
      %v2081 = vpop.f32.mrb[0].mxu0
      %2082 = vmatprep.mubr.f32.mxu0 0.0
      %2083 = vmatmul.mubr.f32.gmra.mrb[0].mxu0 %v1938
      %v2084 = vpop.f32.mrb[0].mxu0
      %v2085 = vadd.f32 %v1927, %v2084
      %v2086 = vpop.f32.mrb[0].mxu0
      %2087 = vmatprep.mubr.f32.mxu0 0.0
      %2088 = vmatmul.mubr.f32.gmra.mrb[0].mxu0 %v1941
      %v2089 = vpop.f32.mrb[0].mxu0
      %v2090 = vadd.f32 %v1927, %v2089
      %v2091 = vpop.f32.mrb[0].mxu0
      %2092 = vmatprep.mubr.f32.mxu0 0.0
      %2093 = vmatmul.mubr.f32.gmra.mrb[0].mxu0 %v1944
      %v2094 = vpop.f32.mrb[0].mxu0
      %v2095 = vadd.f32 %v1927, %v2094
      %v2096 = vpop.f32.mrb[0].mxu0
      %2097 = vmatprep.mubr.f32.mxu0 0.0
      %2098 = vmatmul.mubr.f32.gmra.mrb[0].mxu0 %v1947
      %v2099 = vpop.f32.mrb[0].mxu0
      %v2100 = vadd.f32 %v1927, %v2099
      %v2101 = vpop.f32.mrb[0].mxu0
      %2102 = vmatprep.mubr.f32.mxu0 0.0
      %2103 = vmatmul.mubr.f32.gmra.mrb[0].mxu0 %v1950
      %v2104 = vpop.f32.mrb[0].mxu0
      %v2105 = vadd.f32 %v1927, %v2104
      %v2106 = vpop.f32.mrb[0].mxu0
      %2107 = vmatprep.mubr.f32.mxu0 0.0
      %2108 = vmatmul.mubr.f32.gmra.mrb[0].mxu0 %v1953
      %v2109 = vpop.f32.mrb[0].mxu0
      %v2110 = vadd.f32 %v1927, %v2109
      %v2111 = vpop.f32.mrb[0].mxu0
      %2112 = vmatprep.mubr.f32.mxu0 0.0
      %2113 = vmatmul.mubr.f32.gmra.mrb[0].mxu0 %v1956
      %v2114 = vpop.f32.mrb[0].mxu0
      %v2115 = vadd.f32 %v1927, %v2114
      %v2116 = vpop.f32.mrb[0].mxu0
      %2117 = vmatprep.mubr.f32.mxu0 0.0
      %2118 = vmatmul.mubr.f32.gmra.mrb[0].mxu0 %v1959
      %v2119 = vpop.f32.mrb[0].mxu0
      %v2120 = vadd.f32 %v1927, %v2119
      %v2121 = vpop.f32.mrb[0].mxu0
      %2122 = vmatprep.mubr.f32.mxu0 0.0
      %2123 = vmatmul.mubr.f32.gmra.mrb[0].mxu0 %v1962
      %v2124 = vpop.f32.mrb[0].mxu0
      %v2125 = vadd.f32 %v1927, %v2124
      %v2126 = vpop.f32.mrb[0].mxu0
      %2127 = vmatprep.mubr.f32.mxu0 0.0
      %2128 = vmatmul.mubr.f32.gmra.mrb[0].mxu0 %v1965
      %v2129 = vpop.f32.mrb[0].mxu0
      %v2130 = vadd.f32 %v1927, %v2129
      %v2131 = vpop.f32.mrb[0].mxu0
      %2132 = vmatprep.mubr.f32.mxu0 0.0
      %2133 = vmatmul.mubr.f32.gmra.mrb[0].mxu0 %v1968
      %v2134 = vpop.f32.mrb[0].mxu0
      %v2135 = vadd.f32 %v1927, %v2134
      %v2136 = vpop.f32.mrb[0].mxu0
      %2137 = vmatprep.mubr.f32.mxu0 0.0
      %2138 = vmatmul.mubr.f32.gmra.mrb[0].mxu0 %v1971
      %v2139 = vpop.f32.mrb[0].mxu0
      %v2140 = vadd.f32 %v1927, %v2139
      %v2141 = vpop.f32.mrb[0].mxu0
      %2142 = vmatprep.mubr.f32.mxu0 0.0
      %2143 = vmatmul.mubr.f32.gmra.mrb[0].mxu0 %v1974
      %v2144 = vpop.f32.mrb[0].mxu0
      %v2145 = vadd.f32 %v1927, %v2144
      %v2146 = vpop.f32.mrb[0].mxu0
      %2147 = vmatprep.mubr.f32.mxu0 0.0
      %2148 = vmatmul.mubr.f32.gmra.mrb[0].mxu0 %v1977
      %v2149 = vpop.f32.mrb[0].mxu0
      %v2150 = vadd.f32 %v1927, %v2149
      %v2151 = vpop.f32.mrb[0].mxu0
      %2152 = vmatprep.mubr.f32.mxu0 0.0
      %2153 = vmatmul.mubr.f32.gmra.mrb[0].mxu0 %v1980
      %v2154 = vpop.f32.mrb[0].mxu0
      %v2155 = vadd.f32 %v1927, %v2154
      %v2156 = vpop.f32.mrb[0].mxu0
      %2157 = vmatprep.mubr.f32.mxu0 0.0
      %2158 = vmatmul.mubr.f32.gmra.mrb[0].mxu0 %v1983
      %v2159 = vpop.f32.mrb[0].mxu0
      %v2160 = vadd.f32 %v1927, %v2159
      %v2161 = vpop.f32.mrb[0].mxu0
      %2162 = vmatprep.mubr.f32.mxu0 0.0
      %2163 = vmatmul.mubr.f32.gmra.mrb[0].mxu0 %v1986
      %v2164 = vpop.f32.mrb[0].mxu0
      %v2165 = vadd.f32 %v1927, %v2164
      %v2166 = vpop.f32.mrb[0].mxu0
      %2167 = vmatprep.mubr.f32.mxu0 0.0
      %2168 = vmatmul.mubr.f32.gmra.mrb[0].mxu0 %v1989
      %v2169 = vpop.f32.mrb[0].mxu0
      %v2170 = vadd.f32 %v1927, %v2169
      %v2171 = vpop.f32.mrb[0].mxu0
      %2172 = vmatprep.mubr.f32.mxu0 0.0
      %2173 = vmatmul.mubr.f32.gmra.mrb[0].mxu0 %v1992
      %v2174 = vpop.f32.mrb[0].mxu0
      %v2175 = vadd.f32 %v1927, %v2174
      %v2176 = vpop.f32.mrb[0].mxu0
      %2177 = vmatprep.mubr.f32.mxu0 0.0
      %2178 = vmatmul.mubr.f32.gmra.mrb[0].mxu0 %v1995
      %v2179 = vpop.f32.mrb[0].mxu0
      %v2180 = vadd.f32 %v1927, %v2179
      %v2181 = vpop.f32.mrb[0].mxu0
      %2182 = vmatprep.mubr.f32.mxu0 0.0
      %2183 = vmatmul.mubr.f32.gmra.mrb[0].mxu0 %v1998
      %v2184 = vpop.f32.mrb[0].mxu0
      %v2185 = vadd.f32 %v1927, %v2184
      %v2186 = vpop.f32.mrb[0].mxu0
      %2187 = vmatprep.mubr.f32.mxu0 0.0
      %2188 = vmatmul.mubr.f32.gmra.mrb[0].mxu0 %v2001
      %v2189 = vpop.f32.mrb[0].mxu0
      %v2190 = vadd.f32 %v1927, %v2189
      %v2191 = vpop.f32.mrb[0].mxu0
      %2192 = vdwg.mxu0
      %v2193 = vlaneseq
      %v2194 = vshrl.u32 %v2193, 7
      %v2195 = vsub.s32 0, %v2194
      %v2196 = vrot.slane %v1839, %v2195
      %v2197 = vadd.f32 %v2070, %v2196
      %v2198 = vadd.f32 %v2075, %v2196
      %v2199 = vadd.f32 %v2080, %v2196
      %v2200 = vadd.f32 %v2085, %v2196
      %v2201 = vadd.f32 %v2090, %v2196
      %v2202 = vadd.f32 %v2095, %v2196
      %v2203 = vadd.f32 %v2100, %v2196
      %v2204 = vadd.f32 %v2105, %v2196
      %v2205 = vadd.f32 %v2110, %v2196
      %v2206 = vadd.f32 %v2115, %v2196
      %v2207 = vadd.f32 %v2120, %v2196
      %v2208 = vadd.f32 %v2125, %v2196
      %v2209 = vadd.f32 %v2130, %v2196
      %v2210 = vadd.f32 %v2135, %v2196
      %v2211 = vadd.f32 %v2140, %v2196
      %v2212 = vadd.f32 %v2145, %v2196
      %v2213 = vadd.f32 %v2150, %v2196
      %v2214 = vadd.f32 %v2155, %v2196
      %v2215 = vadd.f32 %v2160, %v2196
      %v2216 = vadd.f32 %v2165, %v2196
      %v2217 = vadd.f32 %v2170, %v2196
      %v2218 = vadd.f32 %v2175, %v2196
      %v2219 = vadd.f32 %v2180, %v2196
      %v2220 = vadd.f32 %v2185, %v2196
      %v2221 = vadd.f32 %v2190, %v2196
      %vm2222 = vcmp.ge.f32.partialorder %v2197, 0.0
      %vm2223 = vcmp.ge.f32.partialorder %v2198, 0.0
      %vm2224 = vcmp.ge.f32.partialorder %v2199, 0.0
      %vm2225 = vcmp.ge.f32.partialorder %v2200, 0.0
      %vm2226 = vcmp.ge.f32.partialorder %v2201, 0.0
      %vm2227 = vcmp.ge.f32.partialorder %v2202, 0.0
      %vm2228 = vcmp.ge.f32.partialorder %v2203, 0.0
      %vm2229 = vcmp.ge.f32.partialorder %v2204, 0.0
      %vm2230 = vcmp.ge.f32.partialorder %v2205, 0.0
      %vm2231 = vcmp.ge.f32.partialorder %v2206, 0.0
      %vm2232 = vcmp.ge.f32.partialorder %v2207, 0.0
      %vm2233 = vcmp.ge.f32.partialorder %v2208, 0.0
      %vm2234 = vcmp.ge.f32.partialorder %v2209, 0.0
      %vm2235 = vcmp.ge.f32.partialorder %v2210, 0.0
      %vm2236 = vcmp.ge.f32.partialorder %v2211, 0.0
      %vm2237 = vcmp.ge.f32.partialorder %v2212, 0.0
      %vm2238 = vcmp.ge.f32.partialorder %v2213, 0.0
      %vm2239 = vcmp.ge.f32.partialorder %v2214, 0.0
      %vm2240 = vcmp.ge.f32.partialorder %v2215, 0.0
      %vm2241 = vcmp.ge.f32.partialorder %v2216, 0.0
      %vm2242 = vcmp.ge.f32.partialorder %v2217, 0.0
      %vm2243 = vcmp.ge.f32.partialorder %v2218, 0.0
      %vm2244 = vcmp.ge.f32.partialorder %v2219, 0.0
      %vm2245 = vcmp.ge.f32.partialorder %v2220, 0.0
      %vm2246 = vcmp.ge.f32.partialorder %v2221, 0.0
      %v2247 = vlaneseq
      %v2248 = vshrl.u32 %v2247, 7
      %v2249 = vsub.s32 1, %v2248
      %v2250 = vrot.slane %v1839, %v2249
      %v2251 = vmul.f32 %v2250, %v2197
      %v2252 = vmul.f32 %v2250, %v2198
      %v2253 = vmul.f32 %v2250, %v2199
      %v2254 = vmul.f32 %v2250, %v2200
      %v2255 = vmul.f32 %v2250, %v2201
      %v2256 = vmul.f32 %v2250, %v2202
      %v2257 = vmul.f32 %v2250, %v2203
      %v2258 = vmul.f32 %v2250, %v2204
      %v2259 = vmul.f32 %v2250, %v2205
      %v2260 = vmul.f32 %v2250, %v2206
      %v2261 = vmul.f32 %v2250, %v2207
      %v2262 = vmul.f32 %v2250, %v2208
      %v2263 = vmul.f32 %v2250, %v2209
      %v2264 = vmul.f32 %v2250, %v2210
      %v2265 = vmul.f32 %v2250, %v2211
      %v2266 = vmul.f32 %v2250, %v2212
      %v2267 = vmul.f32 %v2250, %v2213
      %v2268 = vmul.f32 %v2250, %v2214
      %v2269 = vmul.f32 %v2250, %v2215
      %v2270 = vmul.f32 %v2250, %v2216
      %v2271 = vmul.f32 %v2250, %v2217
      %v2272 = vmul.f32 %v2250, %v2218
      %v2273 = vmul.f32 %v2250, %v2219
      %v2274 = vmul.f32 %v2250, %v2220
      %v2275 = vmul.f32 %v2250, %v2221
      %v2276 = vsel %vm2222, %v2197, %v2251
      %v2277 = vsel %vm2223, %v2198, %v2252
      %v2278 = vsel %vm2224, %v2199, %v2253
      %v2279 = vsel %vm2225, %v2200, %v2254
      %v2280 = vsel %vm2226, %v2201, %v2255
      %v2281 = vsel %vm2227, %v2202, %v2256
      %v2282 = vsel %vm2228, %v2203, %v2257
      %v2283 = vsel %vm2229, %v2204, %v2258
      %v2284 = vsel %vm2230, %v2205, %v2259
      %v2285 = vsel %vm2231, %v2206, %v2260
      %v2286 = vsel %vm2232, %v2207, %v2261
      %v2287 = vsel %vm2233, %v2208, %v2262
      %v2288 = vsel %vm2234, %v2209, %v2263
      %v2289 = vsel %vm2235, %v2210, %v2264
      %v2290 = vsel %vm2236, %v2211, %v2265
      %v2291 = vsel %vm2237, %v2212, %v2266
      %v2292 = vsel %vm2238, %v2213, %v2267
      %v2293 = vsel %vm2239, %v2214, %v2268
      %v2294 = vsel %vm2240, %v2215, %v2269
      %v2295 = vsel %vm2241, %v2216, %v2270
      %v2296 = vsel %vm2242, %v2217, %v2271
      %v2297 = vsel %vm2243, %v2218, %v2272
      %v2298 = vsel %vm2244, %v2219, %v2273
      %v2299 = vsel %vm2245, %v2220, %v2274
      %v2300 = vsel %vm2246, %v2221, %v2275
      %vm2301 = vcmask 392192
      %v2302 = vsel %vm2301, %v2276, 0.0
      %v2303 = vsel %vm2301, %v2277, 0.0
      %v2304 = vadd.f32 %v2302, %v2303
      %v2305 = vsel %vm2301, %v2278, 0.0
      %v2306 = vadd.f32 %v2304, %v2305
      %v2307 = vsel %vm2301, %v2279, 0.0
      %v2308 = vadd.f32 %v2306, %v2307
      %v2309 = vsel %vm2301, %v2280, 0.0
      %v2310 = vadd.f32 %v2308, %v2309
      %v2311 = vsel %vm2301, %v2281, 0.0
      %v2312 = vadd.f32 %v2310, %v2311
      %v2313 = vsel %vm2301, %v2282, 0.0
      %v2314 = vadd.f32 %v2312, %v2313
      %v2315 = vsel %vm2301, %v2283, 0.0
      %v2316 = vadd.f32 %v2314, %v2315
      %v2317 = vsel %vm2301, %v2284, 0.0
      %v2318 = vadd.f32 %v2316, %v2317
      %v2319 = vsel %vm2301, %v2285, 0.0
      %v2320 = vadd.f32 %v2318, %v2319
      %v2321 = vsel %vm2301, %v2286, 0.0
      %v2322 = vadd.f32 %v2320, %v2321
      %v2323 = vsel %vm2301, %v2287, 0.0
      %v2324 = vadd.f32 %v2322, %v2323
      %v2325 = vsel %vm2301, %v2288, 0.0
      %v2326 = vadd.f32 %v2324, %v2325
      %v2327 = vsel %vm2301, %v2289, 0.0
      %v2328 = vadd.f32 %v2326, %v2327
      %v2329 = vsel %vm2301, %v2290, 0.0
      %v2330 = vadd.f32 %v2328, %v2329
      %v2331 = vsel %vm2301, %v2291, 0.0
      %v2332 = vadd.f32 %v2330, %v2331
      %v2333 = vsel %vm2301, %v2292, 0.0
      %v2334 = vadd.f32 %v2332, %v2333
      %v2335 = vsel %vm2301, %v2293, 0.0
      %v2336 = vadd.f32 %v2334, %v2335
      %v2337 = vsel %vm2301, %v2294, 0.0
      %v2338 = vadd.f32 %v2336, %v2337
      %v2339 = vsel %vm2301, %v2295, 0.0
      %v2340 = vadd.f32 %v2338, %v2339
      %v2341 = vsel %vm2301, %v2296, 0.0
      %v2342 = vadd.f32 %v2340, %v2341
      %v2343 = vsel %vm2301, %v2297, 0.0
      %v2344 = vadd.f32 %v2342, %v2343
      %v2345 = vsel %vm2301, %v2298, 0.0
      %v2346 = vadd.f32 %v2344, %v2345
      %v2347 = vsel %vm2301, %v2299, 0.0
      %v2348 = vadd.f32 %v2346, %v2347
      %vm2349 = vcmask 391168
      %v2350 = vsel %vm2349, %v2300, 0.0
      %v2351 = vadd.f32 %v2348, %v2350
      %2352 = vadd.xlane.f32.xlu0 %v2351
      %v2353 = vpop.xlane.xlu0 %2352
      %v2354 = vrot.slane %v2353, 4
      %v2355 = vadd.f32 %v2353, %v2354
      %v2356 = vrot.slane %v2355, 2
      %v2357 = vadd.f32 %v2355, %v2356
      %v2358 = vrot.slane %v2357, 1
      %v2359 = vadd.f32 %v2357, %v2358
      %s2360 = vtos %v2359
      %v2361 = vrcp.pop 9552.0
      %s2362 = vtos %v2361
      %s2363 = smul.f32 %s2360, %s2362
      %v2364 = vmul.f32 %v2276, %v2276
      %v2365 = vmul.f32 %v2277, %v2277
      %v2366 = vmul.f32 %v2278, %v2278
      %v2367 = vmul.f32 %v2279, %v2279
      %v2368 = vmul.f32 %v2280, %v2280
      %v2369 = vmul.f32 %v2281, %v2281
      %v2370 = vmul.f32 %v2282, %v2282
      %v2371 = vmul.f32 %v2283, %v2283
      %v2372 = vmul.f32 %v2284, %v2284
      %v2373 = vmul.f32 %v2285, %v2285
      %v2374 = vmul.f32 %v2286, %v2286
      %v2375 = vmul.f32 %v2287, %v2287
      %v2376 = vmul.f32 %v2288, %v2288
      %v2377 = vmul.f32 %v2289, %v2289
      %v2378 = vmul.f32 %v2290, %v2290
      %v2379 = vmul.f32 %v2291, %v2291
      %v2380 = vmul.f32 %v2292, %v2292
      %v2381 = vmul.f32 %v2293, %v2293
      %v2382 = vmul.f32 %v2294, %v2294
      %v2383 = vmul.f32 %v2295, %v2295
      %v2384 = vmul.f32 %v2296, %v2296
      %v2385 = vmul.f32 %v2297, %v2297
      %v2386 = vmul.f32 %v2298, %v2298
      %v2387 = vmul.f32 %v2299, %v2299
      %v2388 = vmul.f32 %v2300, %v2300
      %v2389 = vsel %vm2301, %v2364, 0.0
      %v2390 = vsel %vm2301, %v2365, 0.0
      %v2391 = vadd.f32 %v2389, %v2390
      %v2392 = vsel %vm2301, %v2366, 0.0
      %v2393 = vadd.f32 %v2391, %v2392
      %v2394 = vsel %vm2301, %v2367, 0.0
      %v2395 = vadd.f32 %v2393, %v2394
      %v2396 = vsel %vm2301, %v2368, 0.0
      %v2397 = vadd.f32 %v2395, %v2396
      %v2398 = vsel %vm2301, %v2369, 0.0
      %v2399 = vadd.f32 %v2397, %v2398
      %v2400 = vsel %vm2301, %v2370, 0.0
      %v2401 = vadd.f32 %v2399, %v2400
      %v2402 = vsel %vm2301, %v2371, 0.0
      %v2403 = vadd.f32 %v2401, %v2402
      %v2404 = vsel %vm2301, %v2372, 0.0
      %v2405 = vadd.f32 %v2403, %v2404
      %v2406 = vsel %vm2301, %v2373, 0.0
      %v2407 = vadd.f32 %v2405, %v2406
      %v2408 = vsel %vm2301, %v2374, 0.0
      %v2409 = vadd.f32 %v2407, %v2408
      %v2410 = vsel %vm2301, %v2375, 0.0
      %v2411 = vadd.f32 %v2409, %v2410
      %v2412 = vsel %vm2301, %v2376, 0.0
      %v2413 = vadd.f32 %v2411, %v2412
      %v2414 = vsel %vm2301, %v2377, 0.0
      %v2415 = vadd.f32 %v2413, %v2414
      %v2416 = vsel %vm2301, %v2378, 0.0
      %v2417 = vadd.f32 %v2415, %v2416
      %v2418 = vsel %vm2301, %v2379, 0.0
      %v2419 = vadd.f32 %v2417, %v2418
      %v2420 = vsel %vm2301, %v2380, 0.0
      %v2421 = vadd.f32 %v2419, %v2420
      %v2422 = vsel %vm2301, %v2381, 0.0
      %v2423 = vadd.f32 %v2421, %v2422
      %v2424 = vsel %vm2301, %v2382, 0.0
      %v2425 = vadd.f32 %v2423, %v2424
      %v2426 = vsel %vm2301, %v2383, 0.0
      %v2427 = vadd.f32 %v2425, %v2426
      %v2428 = vsel %vm2301, %v2384, 0.0
      %v2429 = vadd.f32 %v2427, %v2428
      %v2430 = vsel %vm2301, %v2385, 0.0
      %v2431 = vadd.f32 %v2429, %v2430
      %v2432 = vsel %vm2301, %v2386, 0.0
      %v2433 = vadd.f32 %v2431, %v2432
      %v2434 = vsel %vm2301, %v2387, 0.0
      %v2435 = vadd.f32 %v2433, %v2434
      %v2436 = vsel %vm2349, %v2388, 0.0
      %v2437 = vadd.f32 %v2435, %v2436
      %2438 = vadd.xlane.f32.xlu0 %v2437
      %v2439 = vpop.xlane.xlu0 %2438
      %v2440 = vrot.slane %v2439, 4
      %v2441 = vadd.f32 %v2439, %v2440
      %v2442 = vrot.slane %v2441, 2
      %v2443 = vadd.f32 %v2441, %v2442
      %v2444 = vrot.slane %v2443, 1
      %v2445 = vadd.f32 %v2443, %v2444
      %s2446 = vtos %v2445
      %v2447 = vrcp.pop 9552.0
      %s2448 = vtos %v2447
      %s2449 = smul.f32 %s2446, %s2448
      %s2450 = smul.f32 %s2363, %s2363
      %s2451 = ssub.f32 %s2449, %s2450
      %s2452 = smax.f32 %s2451, 0.0
      %v2453 = vstv %s2363
      %v2454 = vsub.f32 %v2276, %v2453
      %v2455 = vsub.f32 %v2277, %v2453
      %v2456 = vsub.f32 %v2278, %v2453
      %v2457 = vsub.f32 %v2279, %v2453
      %v2458 = vsub.f32 %v2280, %v2453
      %v2459 = vsub.f32 %v2281, %v2453
      %v2460 = vsub.f32 %v2282, %v2453
      %v2461 = vsub.f32 %v2283, %v2453
      %v2462 = vsub.f32 %v2284, %v2453
      %v2463 = vsub.f32 %v2285, %v2453
      %v2464 = vsub.f32 %v2286, %v2453
      %v2465 = vsub.f32 %v2287, %v2453
      %v2466 = vsub.f32 %v2288, %v2453
      %v2467 = vsub.f32 %v2289, %v2453
      %v2468 = vsub.f32 %v2290, %v2453
      %v2469 = vsub.f32 %v2291, %v2453
      %v2470 = vsub.f32 %v2292, %v2453
      %v2471 = vsub.f32 %v2293, %v2453
      %v2472 = vsub.f32 %v2294, %v2453
      %v2473 = vsub.f32 %v2295, %v2453
      %v2474 = vsub.f32 %v2296, %v2453
      %v2475 = vsub.f32 %v2297, %v2453
      %v2476 = vsub.f32 %v2298, %v2453
      %v2477 = vsub.f32 %v2299, %v2453
      %v2478 = vsub.f32 %v2300, %v2453
      %s2479 = sadd.f32 %s2452, 1e-08
      %v2480 = vstv %s2479
      %v2481 = vrsqrt.pop %v2480
      %s2482 = vtos %v2481
      %v2483 = vstv %s2482
      %v2484 = vmul.f32 %v2454, %v2483
      %v2485 = vmul.f32 %v2455, %v2483
      %v2486 = vmul.f32 %v2456, %v2483
      %v2487 = vmul.f32 %v2457, %v2483
      %v2488 = vmul.f32 %v2458, %v2483
      %v2489 = vmul.f32 %v2459, %v2483
      %v2490 = vmul.f32 %v2460, %v2483
      %v2491 = vmul.f32 %v2461, %v2483
      %v2492 = vmul.f32 %v2462, %v2483
      %v2493 = vmul.f32 %v2463, %v2483
      %v2494 = vmul.f32 %v2464, %v2483
      %v2495 = vmul.f32 %v2465, %v2483
      %v2496 = vmul.f32 %v2466, %v2483
      %v2497 = vmul.f32 %v2467, %v2483
      %v2498 = vmul.f32 %v2468, %v2483
      %v2499 = vmul.f32 %v2469, %v2483
      %v2500 = vmul.f32 %v2470, %v2483
      %v2501 = vmul.f32 %v2471, %v2483
      %v2502 = vmul.f32 %v2472, %v2483
      %v2503 = vmul.f32 %v2473, %v2483
      %v2504 = vmul.f32 %v2474, %v2483
      %v2505 = vmul.f32 %v2475, %v2483
      %v2506 = vmul.f32 %v2476, %v2483
      %v2507 = vmul.f32 %v2477, %v2483
      %v2508 = vmul.f32 %v2478, %v2483
      %v2509 = vlaneseq
      %v2510 = vshrl.u32 %v2509, 7
      %v2511 = vsub.s32 2, %v2510
      %v2512 = vrot.slane %v1839, %v2511
      %v2513 = vmul.f32 %v2484, %v2512
      %v2514 = vmul.f32 %v2485, %v2512
      %v2515 = vmul.f32 %v2486, %v2512
      %v2516 = vmul.f32 %v2487, %v2512
      %v2517 = vmul.f32 %v2488, %v2512
      %v2518 = vmul.f32 %v2489, %v2512
      %v2519 = vmul.f32 %v2490, %v2512
      %v2520 = vmul.f32 %v2491, %v2512
      %v2521 = vmul.f32 %v2492, %v2512
      %v2522 = vmul.f32 %v2493, %v2512
      %v2523 = vmul.f32 %v2494, %v2512
      %v2524 = vmul.f32 %v2495, %v2512
      %v2525 = vmul.f32 %v2496, %v2512
      %v2526 = vmul.f32 %v2497, %v2512
      %v2527 = vmul.f32 %v2498, %v2512
      %v2528 = vmul.f32 %v2499, %v2512
      %v2529 = vmul.f32 %v2500, %v2512
      %v2530 = vmul.f32 %v2501, %v2512
      %v2531 = vmul.f32 %v2502, %v2512
      %v2532 = vmul.f32 %v2503, %v2512
      %v2533 = vmul.f32 %v2504, %v2512
      %v2534 = vmul.f32 %v2505, %v2512
      %v2535 = vmul.f32 %v2506, %v2512
      %v2536 = vmul.f32 %v2507, %v2512
      %v2537 = vmul.f32 %v2508, %v2512
      %v2538 = vlaneseq
      %v2539 = vshrl.u32 %v2538, 7
      %v2540 = vsub.s32 3, %v2539
      %v2541 = vrot.slane %v1839, %v2540
      %v2542 = vadd.f32 %v2513, %v2541
      %v2543 = vadd.f32 %v2514, %v2541
      %v2544 = vadd.f32 %v2515, %v2541
      %v2545 = vadd.f32 %v2516, %v2541
      %v2546 = vadd.f32 %v2517, %v2541
      %v2547 = vadd.f32 %v2518, %v2541
      %v2548 = vadd.f32 %v2519, %v2541
      %v2549 = vadd.f32 %v2520, %v2541
      %v2550 = vadd.f32 %v2521, %v2541
      %v2551 = vadd.f32 %v2522, %v2541
      %v2552 = vadd.f32 %v2523, %v2541
      %v2553 = vadd.f32 %v2524, %v2541
      %v2554 = vadd.f32 %v2525, %v2541
      %v2555 = vadd.f32 %v2526, %v2541
      %v2556 = vadd.f32 %v2527, %v2541
      %v2557 = vadd.f32 %v2528, %v2541
      %v2558 = vadd.f32 %v2529, %v2541
      %v2559 = vadd.f32 %v2530, %v2541
      %v2560 = vadd.f32 %v2531, %v2541
      %v2561 = vadd.f32 %v2532, %v2541
      %v2562 = vadd.f32 %v2533, %v2541
      %v2563 = vadd.f32 %v2534, %v2541
      %v2564 = vadd.f32 %v2535, %v2541
      %v2565 = vadd.f32 %v2536, %v2541
      %v2566 = vadd.f32 %v2537, %v2541
      %vm2592 = vcmask 1040384
      %v2593 = vrot.slane %v2542, 7
      %v2594 = vrot.slane %v2543, 7
      %v2595 = vsel %vm2592, %v2593, %v2594
      %v2596 = vrot.slane %v2544, 7
      %v2597 = vsel %vm2592, %v2594, %v2596
      %v2598 = vrot.slane %v2545, 7
      %v2599 = vsel %vm2592, %v2596, %v2598
      %v2600 = vrot.slane %v2546, 7
      %v2601 = vsel %vm2592, %v2598, %v2600
      %v2602 = vrot.slane %v2547, 7
      %v2603 = vsel %vm2592, %v2600, %v2602
      %v2604 = vrot.slane %v2548, 7
      %v2605 = vsel %vm2592, %v2602, %v2604
      %v2606 = vrot.slane %v2549, 7
      %v2607 = vsel %vm2592, %v2604, %v2606
      %v2608 = vrot.slane %v2550, 7
      %v2609 = vsel %vm2592, %v2606, %v2608
      %v2610 = vrot.slane %v2551, 7
      %v2611 = vsel %vm2592, %v2608, %v2610
      %v2612 = vrot.slane %v2552, 7
      %v2613 = vsel %vm2592, %v2610, %v2612
      %v2614 = vrot.slane %v2553, 7
      %v2615 = vsel %vm2592, %v2612, %v2614
      %v2616 = vrot.slane %v2554, 7
      %v2617 = vsel %vm2592, %v2614, %v2616
      %v2618 = vrot.slane %v2555, 7
      %v2619 = vsel %vm2592, %v2616, %v2618
      %v2620 = vrot.slane %v2556, 7
      %v2621 = vsel %vm2592, %v2618, %v2620
      %v2622 = vrot.slane %v2557, 7
      %v2623 = vsel %vm2592, %v2620, %v2622
      %v2624 = vrot.slane %v2558, 7
      %v2625 = vsel %vm2592, %v2622, %v2624
      %v2626 = vrot.slane %v2559, 7
      %v2627 = vsel %vm2592, %v2624, %v2626
      %v2628 = vrot.slane %v2560, 7
      %v2629 = vsel %vm2592, %v2626, %v2628
      %v2630 = vrot.slane %v2561, 7
      %v2631 = vsel %vm2592, %v2628, %v2630
      %v2632 = vrot.slane %v2562, 7
      %v2633 = vsel %vm2592, %v2630, %v2632
      %v2634 = vrot.slane %v2563, 7
      %v2635 = vsel %vm2592, %v2632, %v2634
      %v2636 = vrot.slane %v2564, 7
      %v2637 = vsel %vm2592, %v2634, %v2636
      %v2638 = vrot.slane %v2565, 7
      %v2639 = vsel %vm2592, %v2636, %v2638
      %v2640 = vrot.slane %v2566, 7
      %v2641 = vsel %vm2592, %v2638, %v2640
      %v2667 = vsel %vm2592, 0.0, %v2593
      %vm2668 = vcmask 1046528
      %v2669 = vrot.slane %v2542, 1
      %v2670 = vrot.slane %v2543, 1
      %v2671 = vsel %vm2668, %v2669, %v2670
      %v2672 = vrot.slane %v2544, 1
      %v2673 = vsel %vm2668, %v2670, %v2672
      %v2674 = vrot.slane %v2545, 1
      %v2675 = vsel %vm2668, %v2672, %v2674
      %v2676 = vrot.slane %v2546, 1
      %v2677 = vsel %vm2668, %v2674, %v2676
      %v2678 = vrot.slane %v2547, 1
      %v2679 = vsel %vm2668, %v2676, %v2678
      %v2680 = vrot.slane %v2548, 1
      %v2681 = vsel %vm2668, %v2678, %v2680
      %v2682 = vrot.slane %v2549, 1
      %v2683 = vsel %vm2668, %v2680, %v2682
      %v2684 = vrot.slane %v2550, 1
      %v2685 = vsel %vm2668, %v2682, %v2684
      %v2686 = vrot.slane %v2551, 1
      %v2687 = vsel %vm2668, %v2684, %v2686
      %v2688 = vrot.slane %v2552, 1
      %v2689 = vsel %vm2668, %v2686, %v2688
      %v2690 = vrot.slane %v2553, 1
      %v2691 = vsel %vm2668, %v2688, %v2690
      %v2692 = vrot.slane %v2554, 1
      %v2693 = vsel %vm2668, %v2690, %v2692
      %v2694 = vrot.slane %v2555, 1
      %v2695 = vsel %vm2668, %v2692, %v2694
      %v2696 = vrot.slane %v2556, 1
      %v2697 = vsel %vm2668, %v2694, %v2696
      %v2698 = vrot.slane %v2557, 1
      %v2699 = vsel %vm2668, %v2696, %v2698
      %v2700 = vrot.slane %v2558, 1
      %v2701 = vsel %vm2668, %v2698, %v2700
      %v2702 = vrot.slane %v2559, 1
      %v2703 = vsel %vm2668, %v2700, %v2702
      %v2704 = vrot.slane %v2560, 1
      %v2705 = vsel %vm2668, %v2702, %v2704
      %v2706 = vrot.slane %v2561, 1
      %v2707 = vsel %vm2668, %v2704, %v2706
      %v2708 = vrot.slane %v2562, 1
      %v2709 = vsel %vm2668, %v2706, %v2708
      %v2710 = vrot.slane %v2563, 1
      %v2711 = vsel %vm2668, %v2708, %v2710
      %v2712 = vrot.slane %v2564, 1
      %v2713 = vsel %vm2668, %v2710, %v2712
      %v2714 = vrot.slane %v2565, 1
      %v2715 = vsel %vm2668, %v2712, %v2714
      %v2716 = vrot.slane %v2566, 1
      %v2717 = vsel %vm2668, %v2714, %v2716
      %vm2743 = vcmask 1045504
      %v2744 = vsel %vm2743, %v2716, 0.0
      %v2745 = vlaneseq
      %v2746 = vshrl.u32 %v2745, 7
      %v2747 = vsub.s32 4, %v2746
      %v2748 = vrot.slane %v1839, %v2747
      %v2749 = vmul.f32 %v2667, %v2748
      %v2750 = vmul.f32 %v2595, %v2748
      %v2751 = vmul.f32 %v2597, %v2748
      %v2752 = vmul.f32 %v2599, %v2748
      %v2753 = vmul.f32 %v2601, %v2748
      %v2754 = vmul.f32 %v2603, %v2748
      %v2755 = vmul.f32 %v2605, %v2748
      %v2756 = vmul.f32 %v2607, %v2748
      %v2757 = vmul.f32 %v2609, %v2748
      %v2758 = vmul.f32 %v2611, %v2748
      %v2759 = vmul.f32 %v2613, %v2748
      %v2760 = vmul.f32 %v2615, %v2748
      %v2761 = vmul.f32 %v2617, %v2748
      %v2762 = vmul.f32 %v2619, %v2748
      %v2763 = vmul.f32 %v2621, %v2748
      %v2764 = vmul.f32 %v2623, %v2748
      %v2765 = vmul.f32 %v2625, %v2748
      %v2766 = vmul.f32 %v2627, %v2748
      %v2767 = vmul.f32 %v2629, %v2748
      %v2768 = vmul.f32 %v2631, %v2748
      %v2769 = vmul.f32 %v2633, %v2748
      %v2770 = vmul.f32 %v2635, %v2748
      %v2771 = vmul.f32 %v2637, %v2748
      %v2772 = vmul.f32 %v2639, %v2748
      %v2773 = vmul.f32 %v2641, %v2748
      %v2774 = vlaneseq
      %v2775 = vshrl.u32 %v2774, 7
      %v2776 = vsub.s32 5, %v2775
      %v2777 = vrot.slane %v1839, %v2776
      %v2778 = vmul.f32 %v2542, %v2777
      %v2779 = vmul.f32 %v2543, %v2777
      %v2780 = vmul.f32 %v2544, %v2777
      %v2781 = vmul.f32 %v2545, %v2777
      %v2782 = vmul.f32 %v2546, %v2777
      %v2783 = vmul.f32 %v2547, %v2777
      %v2784 = vmul.f32 %v2548, %v2777
      %v2785 = vmul.f32 %v2549, %v2777
      %v2786 = vmul.f32 %v2550, %v2777
      %v2787 = vmul.f32 %v2551, %v2777
      %v2788 = vmul.f32 %v2552, %v2777
      %v2789 = vmul.f32 %v2553, %v2777
      %v2790 = vmul.f32 %v2554, %v2777
      %v2791 = vmul.f32 %v2555, %v2777
      %v2792 = vmul.f32 %v2556, %v2777
      %v2793 = vmul.f32 %v2557, %v2777
      %v2794 = vmul.f32 %v2558, %v2777
      %v2795 = vmul.f32 %v2559, %v2777
      %v2796 = vmul.f32 %v2560, %v2777
      %v2797 = vmul.f32 %v2561, %v2777
      %v2798 = vmul.f32 %v2562, %v2777
      %v2799 = vmul.f32 %v2563, %v2777
      %v2800 = vmul.f32 %v2564, %v2777
      %v2801 = vmul.f32 %v2565, %v2777
      %v2802 = vmul.f32 %v2566, %v2777
      %v2803 = vadd.f32 %v2749, %v2778
      %v2804 = vadd.f32 %v2750, %v2779
      %v2805 = vadd.f32 %v2751, %v2780
      %v2806 = vadd.f32 %v2752, %v2781
      %v2807 = vadd.f32 %v2753, %v2782
      %v2808 = vadd.f32 %v2754, %v2783
      %v2809 = vadd.f32 %v2755, %v2784
      %v2810 = vadd.f32 %v2756, %v2785
      %v2811 = vadd.f32 %v2757, %v2786
      %v2812 = vadd.f32 %v2758, %v2787
      %v2813 = vadd.f32 %v2759, %v2788
      %v2814 = vadd.f32 %v2760, %v2789
      %v2815 = vadd.f32 %v2761, %v2790
      %v2816 = vadd.f32 %v2762, %v2791
      %v2817 = vadd.f32 %v2763, %v2792
      %v2818 = vadd.f32 %v2764, %v2793
      %v2819 = vadd.f32 %v2765, %v2794
      %v2820 = vadd.f32 %v2766, %v2795
      %v2821 = vadd.f32 %v2767, %v2796
      %v2822 = vadd.f32 %v2768, %v2797
      %v2823 = vadd.f32 %v2769, %v2798
      %v2824 = vadd.f32 %v2770, %v2799
      %v2825 = vadd.f32 %v2771, %v2800
      %v2826 = vadd.f32 %v2772, %v2801
      %v2827 = vadd.f32 %v2773, %v2802
      %v2828 = vlaneseq
      %v2829 = vshrl.u32 %v2828, 7
      %v2830 = vsub.s32 6, %v2829
      %v2831 = vrot.slane %v1839, %v2830
      %v2832 = vmul.f32 %v2671, %v2831
      %v2833 = vmul.f32 %v2673, %v2831
      %v2834 = vmul.f32 %v2675, %v2831
      %v2835 = vmul.f32 %v2677, %v2831
      %v2836 = vmul.f32 %v2679, %v2831
      %v2837 = vmul.f32 %v2681, %v2831
      %v2838 = vmul.f32 %v2683, %v2831
      %v2839 = vmul.f32 %v2685, %v2831
      %v2840 = vmul.f32 %v2687, %v2831
      %v2841 = vmul.f32 %v2689, %v2831
      %v2842 = vmul.f32 %v2691, %v2831
      %v2843 = vmul.f32 %v2693, %v2831
      %v2844 = vmul.f32 %v2695, %v2831
      %v2845 = vmul.f32 %v2697, %v2831
      %v2846 = vmul.f32 %v2699, %v2831
      %v2847 = vmul.f32 %v2701, %v2831
      %v2848 = vmul.f32 %v2703, %v2831
      %v2849 = vmul.f32 %v2705, %v2831
      %v2850 = vmul.f32 %v2707, %v2831
      %v2851 = vmul.f32 %v2709, %v2831
      %v2852 = vmul.f32 %v2711, %v2831
      %v2853 = vmul.f32 %v2713, %v2831
      %v2854 = vmul.f32 %v2715, %v2831
      %v2855 = vmul.f32 %v2717, %v2831
      %v2856 = vmul.f32 %v2744, %v2831
      %v2857 = vadd.f32 %v2803, %v2832
      %v2858 = vadd.f32 %v2804, %v2833
      %v2859 = vadd.f32 %v2805, %v2834
      %v2860 = vadd.f32 %v2806, %v2835
      %v2861 = vadd.f32 %v2807, %v2836
      %v2862 = vadd.f32 %v2808, %v2837
      %v2863 = vadd.f32 %v2809, %v2838
      %v2864 = vadd.f32 %v2810, %v2839
      %v2865 = vadd.f32 %v2811, %v2840
      %v2866 = vadd.f32 %v2812, %v2841
      %v2867 = vadd.f32 %v2813, %v2842
      %v2868 = vadd.f32 %v2814, %v2843
      %v2869 = vadd.f32 %v2815, %v2844
      %v2870 = vadd.f32 %v2816, %v2845
      %v2871 = vadd.f32 %v2817, %v2846
      %v2872 = vadd.f32 %v2818, %v2847
      %v2873 = vadd.f32 %v2819, %v2848
      %v2874 = vadd.f32 %v2820, %v2849
      %v2875 = vadd.f32 %v2821, %v2850
      %v2876 = vadd.f32 %v2822, %v2851
      %v2877 = vadd.f32 %v2823, %v2852
      %v2878 = vadd.f32 %v2824, %v2853
      %v2879 = vadd.f32 %v2825, %v2854
      %v2880 = vadd.f32 %v2826, %v2855
      %v2881 = vadd.f32 %v2827, %v2856
      %v2882 = vlaneseq
      %v2883 = vshrl.u32 %v2882, 7
      %v2884 = vsub.s32 7, %v2883
      %v2885 = vrot.slane %v1839, %v2884
      %v2886 = vadd.f32 %v2857, %v2885
      %v2887 = vadd.f32 %v2858, %v2885
      %v2888 = vadd.f32 %v2859, %v2885
      %v2889 = vadd.f32 %v2860, %v2885
      %v2890 = vadd.f32 %v2861, %v2885
      %v2891 = vadd.f32 %v2862, %v2885
      %v2892 = vadd.f32 %v2863, %v2885
      %v2893 = vadd.f32 %v2864, %v2885
      %v2894 = vadd.f32 %v2865, %v2885
      %v2895 = vadd.f32 %v2866, %v2885
      %v2896 = vadd.f32 %v2867, %v2885
      %v2897 = vadd.f32 %v2868, %v2885
      %v2898 = vadd.f32 %v2869, %v2885
      %v2899 = vadd.f32 %v2870, %v2885
      %v2900 = vadd.f32 %v2871, %v2885
      %v2901 = vadd.f32 %v2872, %v2885
      %v2902 = vadd.f32 %v2873, %v2885
      %v2903 = vadd.f32 %v2874, %v2885
      %v2904 = vadd.f32 %v2875, %v2885
      %v2905 = vadd.f32 %v2876, %v2885
      %v2906 = vadd.f32 %v2877, %v2885
      %v2907 = vadd.f32 %v2878, %v2885
      %v2908 = vadd.f32 %v2879, %v2885
      %v2909 = vadd.f32 %v2880, %v2885
      %v2910 = vadd.f32 %v2881, %v2885
      %vm2911 = vcmp.ge.f32.partialorder %v2886, 0.0
      %vm2912 = vcmp.ge.f32.partialorder %v2887, 0.0
      %vm2913 = vcmp.ge.f32.partialorder %v2888, 0.0
      %vm2914 = vcmp.ge.f32.partialorder %v2889, 0.0
      %vm2915 = vcmp.ge.f32.partialorder %v2890, 0.0
      %vm2916 = vcmp.ge.f32.partialorder %v2891, 0.0
      %vm2917 = vcmp.ge.f32.partialorder %v2892, 0.0
      %vm2918 = vcmp.ge.f32.partialorder %v2893, 0.0
      %vm2919 = vcmp.ge.f32.partialorder %v2894, 0.0
      %vm2920 = vcmp.ge.f32.partialorder %v2895, 0.0
      %vm2921 = vcmp.ge.f32.partialorder %v2896, 0.0
      %vm2922 = vcmp.ge.f32.partialorder %v2897, 0.0
      %vm2923 = vcmp.ge.f32.partialorder %v2898, 0.0
      %vm2924 = vcmp.ge.f32.partialorder %v2899, 0.0
      %vm2925 = vcmp.ge.f32.partialorder %v2900, 0.0
      %vm2926 = vcmp.ge.f32.partialorder %v2901, 0.0
      %vm2927 = vcmp.ge.f32.partialorder %v2902, 0.0
      %vm2928 = vcmp.ge.f32.partialorder %v2903, 0.0
      %vm2929 = vcmp.ge.f32.partialorder %v2904, 0.0
      %vm2930 = vcmp.ge.f32.partialorder %v2905, 0.0
      %vm2931 = vcmp.ge.f32.partialorder %v2906, 0.0
      %vm2932 = vcmp.ge.f32.partialorder %v2907, 0.0
      %vm2933 = vcmp.ge.f32.partialorder %v2908, 0.0
      %vm2934 = vcmp.ge.f32.partialorder %v2909, 0.0
      %vm2935 = vcmp.ge.f32.partialorder %v2910, 0.0
      %v2936 = vlaneseq
      %v2937 = vshrl.u32 %v2936, 7
      %v2938 = vsub.s32 0, %v2937
      %v2939 = vrot.slane %v1840, %v2938
      %v2940 = vmul.f32 %v2939, %v2886
      %v2941 = vmul.f32 %v2939, %v2887
      %v2942 = vmul.f32 %v2939, %v2888
      %v2943 = vmul.f32 %v2939, %v2889
      %v2944 = vmul.f32 %v2939, %v2890
      %v2945 = vmul.f32 %v2939, %v2891
      %v2946 = vmul.f32 %v2939, %v2892
      %v2947 = vmul.f32 %v2939, %v2893
      %v2948 = vmul.f32 %v2939, %v2894
      %v2949 = vmul.f32 %v2939, %v2895
      %v2950 = vmul.f32 %v2939, %v2896
      %v2951 = vmul.f32 %v2939, %v2897
      %v2952 = vmul.f32 %v2939, %v2898
      %v2953 = vmul.f32 %v2939, %v2899
      %v2954 = vmul.f32 %v2939, %v2900
      %v2955 = vmul.f32 %v2939, %v2901
      %v2956 = vmul.f32 %v2939, %v2902
      %v2957 = vmul.f32 %v2939, %v2903
      %v2958 = vmul.f32 %v2939, %v2904
      %v2959 = vmul.f32 %v2939, %v2905
      %v2960 = vmul.f32 %v2939, %v2906
      %v2961 = vmul.f32 %v2939, %v2907
      %v2962 = vmul.f32 %v2939, %v2908
      %v2963 = vmul.f32 %v2939, %v2909
      %v2964 = vmul.f32 %v2939, %v2910
      %v2965 = vsel %vm2911, %v2886, %v2940
      %v2966 = vsel %vm2912, %v2887, %v2941
      %v2967 = vsel %vm2913, %v2888, %v2942
      %v2968 = vsel %vm2914, %v2889, %v2943
      %v2969 = vsel %vm2915, %v2890, %v2944
      %v2970 = vsel %vm2916, %v2891, %v2945
      %v2971 = vsel %vm2917, %v2892, %v2946
      %v2972 = vsel %vm2918, %v2893, %v2947
      %v2973 = vsel %vm2919, %v2894, %v2948
      %v2974 = vsel %vm2920, %v2895, %v2949
      %v2975 = vsel %vm2921, %v2896, %v2950
      %v2976 = vsel %vm2922, %v2897, %v2951
      %v2977 = vsel %vm2923, %v2898, %v2952
      %v2978 = vsel %vm2924, %v2899, %v2953
      %v2979 = vsel %vm2925, %v2900, %v2954
      %v2980 = vsel %vm2926, %v2901, %v2955
      %v2981 = vsel %vm2927, %v2902, %v2956
      %v2982 = vsel %vm2928, %v2903, %v2957
      %v2983 = vsel %vm2929, %v2904, %v2958
      %v2984 = vsel %vm2930, %v2905, %v2959
      %v2985 = vsel %vm2931, %v2906, %v2960
      %v2986 = vsel %vm2932, %v2907, %v2961
      %v2987 = vsel %vm2933, %v2908, %v2962
      %v2988 = vsel %vm2934, %v2909, %v2963
      %v2989 = vsel %vm2935, %v2910, %v2964
      %v2990 = vsel %vm2301, %v2965, 0.0
      %v2991 = vsel %vm2301, %v2966, 0.0
      %v2992 = vadd.f32 %v2990, %v2991
      %v2993 = vsel %vm2301, %v2967, 0.0
      %v2994 = vadd.f32 %v2992, %v2993
      %v2995 = vsel %vm2301, %v2968, 0.0
      %v2996 = vadd.f32 %v2994, %v2995
      %v2997 = vsel %vm2301, %v2969, 0.0
      %v2998 = vadd.f32 %v2996, %v2997
      %v2999 = vsel %vm2301, %v2970, 0.0
      %v3000 = vadd.f32 %v2998, %v2999
      %v3001 = vsel %vm2301, %v2971, 0.0
      %v3002 = vadd.f32 %v3000, %v3001
      %v3003 = vsel %vm2301, %v2972, 0.0
      %v3004 = vadd.f32 %v3002, %v3003
      %v3005 = vsel %vm2301, %v2973, 0.0
      %v3006 = vadd.f32 %v3004, %v3005
      %v3007 = vsel %vm2301, %v2974, 0.0
      %v3008 = vadd.f32 %v3006, %v3007
      %v3009 = vsel %vm2301, %v2975, 0.0
      %v3010 = vadd.f32 %v3008, %v3009
      %v3011 = vsel %vm2301, %v2976, 0.0
      %v3012 = vadd.f32 %v3010, %v3011
      %v3013 = vsel %vm2301, %v2977, 0.0
      %v3014 = vadd.f32 %v3012, %v3013
      %v3015 = vsel %vm2301, %v2978, 0.0
      %v3016 = vadd.f32 %v3014, %v3015
      %v3017 = vsel %vm2301, %v2979, 0.0
      %v3018 = vadd.f32 %v3016, %v3017
      %v3019 = vsel %vm2301, %v2980, 0.0
      %v3020 = vadd.f32 %v3018, %v3019
      %v3021 = vsel %vm2301, %v2981, 0.0
      %v3022 = vadd.f32 %v3020, %v3021
      %v3023 = vsel %vm2301, %v2982, 0.0
      %v3024 = vadd.f32 %v3022, %v3023
      %v3025 = vsel %vm2301, %v2983, 0.0
      %v3026 = vadd.f32 %v3024, %v3025
      %v3027 = vsel %vm2301, %v2984, 0.0
      %v3028 = vadd.f32 %v3026, %v3027
      %v3029 = vsel %vm2301, %v2985, 0.0
      %v3030 = vadd.f32 %v3028, %v3029
      %v3031 = vsel %vm2301, %v2986, 0.0
      %v3032 = vadd.f32 %v3030, %v3031
      %v3033 = vsel %vm2301, %v2987, 0.0
      %v3034 = vadd.f32 %v3032, %v3033
      %v3035 = vsel %vm2301, %v2988, 0.0
      %v3036 = vadd.f32 %v3034, %v3035
      %v3037 = vsel %vm2349, %v2989, 0.0
      %v3038 = vadd.f32 %v3036, %v3037
      %3039 = vadd.xlane.f32.xlu0 %v3038
      %v3040 = vpop.xlane.xlu0 %3039
      %v3041 = vrot.slane %v3040, 4
      %v3042 = vadd.f32 %v3040, %v3041
      %v3043 = vrot.slane %v3042, 2
      %v3044 = vadd.f32 %v3042, %v3043
      %v3045 = vrot.slane %v3044, 1
      %v3046 = vadd.f32 %v3044, %v3045
      %s3047 = vtos %v3046
      %v3048 = vrcp.pop 9552.0
      %s3049 = vtos %v3048
      %s3050 = smul.f32 %s3047, %s3049
      %v3051 = vmul.f32 %v2965, %v2965
      %v3052 = vmul.f32 %v2966, %v2966
      %v3053 = vmul.f32 %v2967, %v2967
      %v3054 = vmul.f32 %v2968, %v2968
      %v3055 = vmul.f32 %v2969, %v2969
      %v3056 = vmul.f32 %v2970, %v2970
      %v3057 = vmul.f32 %v2971, %v2971
      %v3058 = vmul.f32 %v2972, %v2972
      %v3059 = vmul.f32 %v2973, %v2973
      %v3060 = vmul.f32 %v2974, %v2974
      %v3061 = vmul.f32 %v2975, %v2975
      %v3062 = vmul.f32 %v2976, %v2976
      %v3063 = vmul.f32 %v2977, %v2977
      %v3064 = vmul.f32 %v2978, %v2978
      %v3065 = vmul.f32 %v2979, %v2979
      %v3066 = vmul.f32 %v2980, %v2980
      %v3067 = vmul.f32 %v2981, %v2981
      %v3068 = vmul.f32 %v2982, %v2982
      %v3069 = vmul.f32 %v2983, %v2983
      %v3070 = vmul.f32 %v2984, %v2984
      %v3071 = vmul.f32 %v2985, %v2985
      %v3072 = vmul.f32 %v2986, %v2986
      %v3073 = vmul.f32 %v2987, %v2987
      %v3074 = vmul.f32 %v2988, %v2988
      %v3075 = vmul.f32 %v2989, %v2989
      %v3076 = vsel %vm2301, %v3051, 0.0
      %v3077 = vsel %vm2301, %v3052, 0.0
      %v3078 = vadd.f32 %v3076, %v3077
      %v3079 = vsel %vm2301, %v3053, 0.0
      %v3080 = vadd.f32 %v3078, %v3079
      %v3081 = vsel %vm2301, %v3054, 0.0
      %v3082 = vadd.f32 %v3080, %v3081
      %v3083 = vsel %vm2301, %v3055, 0.0
      %v3084 = vadd.f32 %v3082, %v3083
      %v3085 = vsel %vm2301, %v3056, 0.0
      %v3086 = vadd.f32 %v3084, %v3085
      %v3087 = vsel %vm2301, %v3057, 0.0
      %v3088 = vadd.f32 %v3086, %v3087
      %v3089 = vsel %vm2301, %v3058, 0.0
      %v3090 = vadd.f32 %v3088, %v3089
      %v3091 = vsel %vm2301, %v3059, 0.0
      %v3092 = vadd.f32 %v3090, %v3091
      %v3093 = vsel %vm2301, %v3060, 0.0
      %v3094 = vadd.f32 %v3092, %v3093
      %v3095 = vsel %vm2301, %v3061, 0.0
      %v3096 = vadd.f32 %v3094, %v3095
      %v3097 = vsel %vm2301, %v3062, 0.0
      %v3098 = vadd.f32 %v3096, %v3097
      %v3099 = vsel %vm2301, %v3063, 0.0
      %v3100 = vadd.f32 %v3098, %v3099
      %v3101 = vsel %vm2301, %v3064, 0.0
      %v3102 = vadd.f32 %v3100, %v3101
      %v3103 = vsel %vm2301, %v3065, 0.0
      %v3104 = vadd.f32 %v3102, %v3103
      %v3105 = vsel %vm2301, %v3066, 0.0
      %v3106 = vadd.f32 %v3104, %v3105
      %v3107 = vsel %vm2301, %v3067, 0.0
      %v3108 = vadd.f32 %v3106, %v3107
      %v3109 = vsel %vm2301, %v3068, 0.0
      %v3110 = vadd.f32 %v3108, %v3109
      %v3111 = vsel %vm2301, %v3069, 0.0
      %v3112 = vadd.f32 %v3110, %v3111
      %v3113 = vsel %vm2301, %v3070, 0.0
      %v3114 = vadd.f32 %v3112, %v3113
      %v3115 = vsel %vm2301, %v3071, 0.0
      %v3116 = vadd.f32 %v3114, %v3115
      %v3117 = vsel %vm2301, %v3072, 0.0
      %v3118 = vadd.f32 %v3116, %v3117
      %v3119 = vsel %vm2301, %v3073, 0.0
      %v3120 = vadd.f32 %v3118, %v3119
      %v3121 = vsel %vm2301, %v3074, 0.0
      %v3122 = vadd.f32 %v3120, %v3121
      %v3123 = vsel %vm2349, %v3075, 0.0
      %v3124 = vadd.f32 %v3122, %v3123
      %3125 = vadd.xlane.f32.xlu0 %v3124
      %v3126 = vpop.xlane.xlu0 %3125
      %v3127 = vrot.slane %v3126, 4
      %v3128 = vadd.f32 %v3126, %v3127
      %v3129 = vrot.slane %v3128, 2
      %v3130 = vadd.f32 %v3128, %v3129
      %v3131 = vrot.slane %v3130, 1
      %v3132 = vadd.f32 %v3130, %v3131
      %s3133 = vtos %v3132
      %v3134 = vrcp.pop 9552.0
      %s3135 = vtos %v3134
      %s3136 = smul.f32 %s3133, %s3135
      %s3137 = smul.f32 %s3050, %s3050
      %s3138 = ssub.f32 %s3136, %s3137
      %s3139 = smax.f32 %s3138, 0.0
      %v3140 = vstv %s3050
      %v3141 = vsub.f32 %v2965, %v3140
      %v3142 = vsub.f32 %v2966, %v3140
      %v3143 = vsub.f32 %v2967, %v3140
      %v3144 = vsub.f32 %v2968, %v3140
      %v3145 = vsub.f32 %v2969, %v3140
      %v3146 = vsub.f32 %v2970, %v3140
      %v3147 = vsub.f32 %v2971, %v3140
      %v3148 = vsub.f32 %v2972, %v3140
      %v3149 = vsub.f32 %v2973, %v3140
      %v3150 = vsub.f32 %v2974, %v3140
      %v3151 = vsub.f32 %v2975, %v3140
      %v3152 = vsub.f32 %v2976, %v3140
      %v3153 = vsub.f32 %v2977, %v3140
      %v3154 = vsub.f32 %v2978, %v3140
      %v3155 = vsub.f32 %v2979, %v3140
      %v3156 = vsub.f32 %v2980, %v3140
      %v3157 = vsub.f32 %v2981, %v3140
      %v3158 = vsub.f32 %v2982, %v3140
      %v3159 = vsub.f32 %v2983, %v3140
      %v3160 = vsub.f32 %v2984, %v3140
      %v3161 = vsub.f32 %v2985, %v3140
      %v3162 = vsub.f32 %v2986, %v3140
      %v3163 = vsub.f32 %v2987, %v3140
      %v3164 = vsub.f32 %v2988, %v3140
      %v3165 = vsub.f32 %v2989, %v3140
      %s3166 = sadd.f32 %s3139, 1e-08
      %v3167 = vstv %s3166
      %v3168 = vrsqrt.pop %v3167
      %s3169 = vtos %v3168
      %v3170 = vstv %s3169
      %v3171 = vmul.f32 %v3141, %v3170
      %v3172 = vmul.f32 %v3142, %v3170
      %v3173 = vmul.f32 %v3143, %v3170
      %v3174 = vmul.f32 %v3144, %v3170
      %v3175 = vmul.f32 %v3145, %v3170
      %v3176 = vmul.f32 %v3146, %v3170
      %v3177 = vmul.f32 %v3147, %v3170
      %v3178 = vmul.f32 %v3148, %v3170
      %v3179 = vmul.f32 %v3149, %v3170
      %v3180 = vmul.f32 %v3150, %v3170
      %v3181 = vmul.f32 %v3151, %v3170
      %v3182 = vmul.f32 %v3152, %v3170
      %v3183 = vmul.f32 %v3153, %v3170
      %v3184 = vmul.f32 %v3154, %v3170
      %v3185 = vmul.f32 %v3155, %v3170
      %v3186 = vmul.f32 %v3156, %v3170
      %v3187 = vmul.f32 %v3157, %v3170
      %v3188 = vmul.f32 %v3158, %v3170
      %v3189 = vmul.f32 %v3159, %v3170
      %v3190 = vmul.f32 %v3160, %v3170
      %v3191 = vmul.f32 %v3161, %v3170
      %v3192 = vmul.f32 %v3162, %v3170
      %v3193 = vmul.f32 %v3163, %v3170
      %v3194 = vmul.f32 %v3164, %v3170
      %v3195 = vmul.f32 %v3165, %v3170
      %v3196 = vlaneseq
      %v3197 = vshrl.u32 %v3196, 7
      %v3198 = vsub.s32 1, %v3197
      %v3199 = vrot.slane %v1840, %v3198
      %v3200 = vmul.f32 %v3171, %v3199
      %v3201 = vmul.f32 %v3172, %v3199
      %v3202 = vmul.f32 %v3173, %v3199
      %v3203 = vmul.f32 %v3174, %v3199
      %v3204 = vmul.f32 %v3175, %v3199
      %v3205 = vmul.f32 %v3176, %v3199
      %v3206 = vmul.f32 %v3177, %v3199
      %v3207 = vmul.f32 %v3178, %v3199
      %v3208 = vmul.f32 %v3179, %v3199
      %v3209 = vmul.f32 %v3180, %v3199
      %v3210 = vmul.f32 %v3181, %v3199
      %v3211 = vmul.f32 %v3182, %v3199
      %v3212 = vmul.f32 %v3183, %v3199
      %v3213 = vmul.f32 %v3184, %v3199
      %v3214 = vmul.f32 %v3185, %v3199
      %v3215 = vmul.f32 %v3186, %v3199
      %v3216 = vmul.f32 %v3187, %v3199
      %v3217 = vmul.f32 %v3188, %v3199
      %v3218 = vmul.f32 %v3189, %v3199
      %v3219 = vmul.f32 %v3190, %v3199
      %v3220 = vmul.f32 %v3191, %v3199
      %v3221 = vmul.f32 %v3192, %v3199
      %v3222 = vmul.f32 %v3193, %v3199
      %v3223 = vmul.f32 %v3194, %v3199
      %v3224 = vmul.f32 %v3195, %v3199
      %v3225 = vlaneseq
      %v3226 = vshrl.u32 %v3225, 7
      %v3227 = vsub.s32 2, %v3226
      %v3228 = vrot.slane %v1840, %v3227
      %v3229 = vadd.f32 %v3200, %v3228
      %v3230 = vadd.f32 %v3201, %v3228
      %v3231 = vadd.f32 %v3202, %v3228
      %v3232 = vadd.f32 %v3203, %v3228
      %v3233 = vadd.f32 %v3204, %v3228
      %v3234 = vadd.f32 %v3205, %v3228
      %v3235 = vadd.f32 %v3206, %v3228
      %v3236 = vadd.f32 %v3207, %v3228
      %v3237 = vadd.f32 %v3208, %v3228
      %v3238 = vadd.f32 %v3209, %v3228
      %v3239 = vadd.f32 %v3210, %v3228
      %v3240 = vadd.f32 %v3211, %v3228
      %v3241 = vadd.f32 %v3212, %v3228
      %v3242 = vadd.f32 %v3213, %v3228
      %v3243 = vadd.f32 %v3214, %v3228
      %v3244 = vadd.f32 %v3215, %v3228
      %v3245 = vadd.f32 %v3216, %v3228
      %v3246 = vadd.f32 %v3217, %v3228
      %v3247 = vadd.f32 %v3218, %v3228
      %v3248 = vadd.f32 %v3219, %v3228
      %v3249 = vadd.f32 %v3220, %v3228
      %v3250 = vadd.f32 %v3221, %v3228
      %v3251 = vadd.f32 %v3222, %v3228
      %v3252 = vadd.f32 %v3223, %v3228
      %v3253 = vadd.f32 %v3224, %v3228
      %v3254 = vld [vmem:[%s9] sm:$0xff]
      %v3255 = vld [vmem:[%s9 + $0x8] sm:$0xff]
      %v3256 = vld [vmem:[%s9 + $0x10] sm:$0xff]
      %v3257 = vld [vmem:[%s9 + $0x18] sm:$0xff]
      %v3258 = vld [vmem:[%s9 + $0x20] sm:$0xff]
      %v3259 = vld [vmem:[%s9 + $0x28] sm:$0xff]
      %v3261 = vsel %vm2301, %v3229, 0
      %v3264 = vsel %vm2301, %v3230, 0
      %v3267 = vsel %vm2301, %v3231, 0
      %v3270 = vsel %vm2301, %v3232, 0
      %v3273 = vsel %vm2301, %v3233, 0
      %v3276 = vsel %vm2301, %v3234, 0
      %v3279 = vsel %vm2301, %v3235, 0
      %v3282 = vsel %vm2301, %v3236, 0
      %v3285 = vsel %vm2301, %v3237, 0
      %v3288 = vsel %vm2301, %v3238, 0
      %v3291 = vsel %vm2301, %v3239, 0
      %v3294 = vsel %vm2301, %v3240, 0
      %v3297 = vsel %vm2301, %v3241, 0
      %v3300 = vsel %vm2301, %v3242, 0
      %v3303 = vsel %vm2301, %v3243, 0
      %v3306 = vsel %vm2301, %v3244, 0
      %v3309 = vsel %vm2301, %v3245, 0
      %v3312 = vsel %vm2301, %v3246, 0
      %v3315 = vsel %vm2301, %v3247, 0
      %v3318 = vsel %vm2301, %v3248, 0
      %v3321 = vsel %vm2301, %v3249, 0
      %v3324 = vsel %vm2301, %v3250, 0
      %v3327 = vsel %vm2301, %v3251, 0
      %v3330 = vsel %vm2301, %v3252, 0
      %v3333 = vsel %vm2301, %v3253, 0
      %3335 = vmatprep.subr.mxu0 0.0
      %3336 = vmatpush1.msra.mxu0 %v3254
      %3337 = vmatprep.subr.mxu0 0.0
      %3338 = vmatpush1.msra.mxu0 %v3255
      %3339 = vmatprep.subr.mxu0 0.0
      %3340 = vmatpush1.msra.mxu0 %v3256
      %3341 = vmatprep.subr.mxu0 0.0
      %3342 = vmatpush1.msra.mxu0 %v3257
      %3343 = vmatprep.subr.mxu0 0.0
      %3344 = vmatpush1.msra.mxu0 %v3258
      %3345 = vmatprep.subr.mxu0 0.0
      %3346 = vmatpush1.msra.mxu0 %v3259
      %3347 = vmatprep.subr.mxu0 0.0
      %3348 = vmatpush1.msra.mxu0 0.0
      %3349 = vmatprep.subr.mxu0 0.0
      %3350 = vmatpush1.msra.mxu0 0.0
      %3351 = vmatprep.subr.mxu0 0.0
      %3352 = vmatpush1.msra.mxu0 0.0
      %3353 = vmatprep.subr.mxu0 0.0
      %3354 = vmatpush1.msra.mxu0 0.0
      %3355 = vmatprep.subr.mxu0 0.0
      %3356 = vmatpush1.msra.mxu0 0.0
      %3357 = vmatprep.subr.mxu0 0.0
      %3358 = vmatpush1.msra.mxu0 0.0
      %3359 = vmatprep.subr.mxu0 0.0
      %3360 = vmatpush1.msra.mxu0 0.0
      %3361 = vmatprep.subr.mxu0 0.0
      %3362 = vmatpush1.msra.mxu0 0.0
      %3363 = vmatprep.subr.mxu0 0.0
      %3364 = vmatpush1.msra.mxu0 0.0
      %3365 = vmatprep.subr.mxu0 0.0
      %3366 = vmatpush1.msra.mxu0 0.0
      %3367 = vmatprep.subr.mxu0 0.0
      %3368 = vmatpush1.msra.mxu0 0.0
      %3369 = vmatprep.subr.mxu0 0.0
      %3370 = vmatpush1.msra.mxu0 0.0
      %3371 = vmatprep.subr.mxu0 0.0
      %3372 = vmatpush1.msra.mxu0 0.0
      %3373 = vmatprep.subr.mxu0 0.0
      %3374 = vmatpush1.msra.mxu0 0.0
      %3375 = vmatprep.subr.mxu0 0.0
      %3376 = vmatpush1.msra.mxu0 0.0
      %3377 = vmatprep.subr.mxu0 0.0
      %3378 = vmatpush1.msra.mxu0 0.0
      %3379 = vmatprep.subr.mxu0 0.0
      %3380 = vmatpush1.msra.mxu0 0.0
      %3381 = vmatprep.subr.mxu0 0.0
      %3382 = vmatpush1.msra.mxu0 0.0
      %3383 = vmatprep.subr.mxu0 0.0
      %3384 = vmatpush1.msra.mxu0 0.0
      %3385 = vmatprep.subr.mxu0 0.0
      %3386 = vmatpush1.msra.mxu0 0.0
      %3387 = vmatprep.subr.mxu0 0.0
      %3388 = vmatpush1.msra.mxu0 0.0
      %3389 = vmatprep.subr.mxu0 0.0
      %3390 = vmatpush1.msra.mxu0 0.0
      %3391 = vmatprep.subr.mxu0 0.0
      %3392 = vmatpush1.msra.mxu0 0.0
      %3393 = vmatprep.subr.mxu0 0.0
      %3394 = vmatpush1.msra.mxu0 0.0
      %3395 = vmatprep.subr.mxu0 0.0
      %3396 = vmatpush1.msra.mxu0 0.0
      %3397 = vmatprep.subr.mxu0 0.0
      %3398 = vmatpush1.msra.mxu0 0.0
      %3399 = vmatprep.mubr.f32.mxu0 0.0
      %3400 = vmatmul.mubr.f32.gmra.mrb[0].mxu0 %v3261
      %v3401 = vpop.f32.mrb[0].mxu0
      %v3402 = vadd.f32 0.0, %v3401
      %v3403 = vpop.f32.mrb[0].mxu0
      %3404 = vmatprep.mubr.f32.mxu0 0.0
      %3405 = vmatmul.mubr.f32.gmra.mrb[0].mxu0 %v3264
      %v3406 = vpop.f32.mrb[0].mxu0
      %v3407 = vadd.f32 0.0, %v3406
      %v3408 = vpop.f32.mrb[0].mxu0
      %3409 = vmatprep.mubr.f32.mxu0 0.0
      %3410 = vmatmul.mubr.f32.gmra.mrb[0].mxu0 %v3267
      %v3411 = vpop.f32.mrb[0].mxu0
      %v3412 = vadd.f32 0.0, %v3411
      %v3413 = vpop.f32.mrb[0].mxu0
      %3414 = vmatprep.mubr.f32.mxu0 0.0
      %3415 = vmatmul.mubr.f32.gmra.mrb[0].mxu0 %v3270
      %v3416 = vpop.f32.mrb[0].mxu0
      %v3417 = vadd.f32 0.0, %v3416
      %v3418 = vpop.f32.mrb[0].mxu0
      %3419 = vmatprep.mubr.f32.mxu0 0.0
      %3420 = vmatmul.mubr.f32.gmra.mrb[0].mxu0 %v3273
      %v3421 = vpop.f32.mrb[0].mxu0
      %v3422 = vadd.f32 0.0, %v3421
      %v3423 = vpop.f32.mrb[0].mxu0
      %3424 = vmatprep.mubr.f32.mxu0 0.0
      %3425 = vmatmul.mubr.f32.gmra.mrb[0].mxu0 %v3276
      %v3426 = vpop.f32.mrb[0].mxu0
      %v3427 = vadd.f32 0.0, %v3426
      %v3428 = vpop.f32.mrb[0].mxu0
      %3429 = vmatprep.mubr.f32.mxu0 0.0
      %3430 = vmatmul.mubr.f32.gmra.mrb[0].mxu0 %v3279
      %v3431 = vpop.f32.mrb[0].mxu0
      %v3432 = vadd.f32 0.0, %v3431
      %v3433 = vpop.f32.mrb[0].mxu0
      %3434 = vmatprep.mubr.f32.mxu0 0.0
      %3435 = vmatmul.mubr.f32.gmra.mrb[0].mxu0 %v3282
      %v3436 = vpop.f32.mrb[0].mxu0
      %v3437 = vadd.f32 0.0, %v3436
      %v3438 = vpop.f32.mrb[0].mxu0
      %3439 = vmatprep.mubr.f32.mxu0 0.0
      %3440 = vmatmul.mubr.f32.gmra.mrb[0].mxu0 %v3285
      %v3441 = vpop.f32.mrb[0].mxu0
      %v3442 = vadd.f32 0.0, %v3441
      %v3443 = vpop.f32.mrb[0].mxu0
      %3444 = vmatprep.mubr.f32.mxu0 0.0
      %3445 = vmatmul.mubr.f32.gmra.mrb[0].mxu0 %v3288
      %v3446 = vpop.f32.mrb[0].mxu0
      %v3447 = vadd.f32 0.0, %v3446
      %v3448 = vpop.f32.mrb[0].mxu0
      %3449 = vmatprep.mubr.f32.mxu0 0.0
      %3450 = vmatmul.mubr.f32.gmra.mrb[0].mxu0 %v3291
      %v3451 = vpop.f32.mrb[0].mxu0
      %v3452 = vadd.f32 0.0, %v3451
      %v3453 = vpop.f32.mrb[0].mxu0
      %3454 = vmatprep.mubr.f32.mxu0 0.0
      %3455 = vmatmul.mubr.f32.gmra.mrb[0].mxu0 %v3294
      %v3456 = vpop.f32.mrb[0].mxu0
      %v3457 = vadd.f32 0.0, %v3456
      %v3458 = vpop.f32.mrb[0].mxu0
      %3459 = vmatprep.mubr.f32.mxu0 0.0
      %3460 = vmatmul.mubr.f32.gmra.mrb[0].mxu0 %v3297
      %v3461 = vpop.f32.mrb[0].mxu0
      %v3462 = vadd.f32 0.0, %v3461
      %v3463 = vpop.f32.mrb[0].mxu0
      %3464 = vmatprep.mubr.f32.mxu0 0.0
      %3465 = vmatmul.mubr.f32.gmra.mrb[0].mxu0 %v3300
      %v3466 = vpop.f32.mrb[0].mxu0
      %v3467 = vadd.f32 0.0, %v3466
      %v3468 = vpop.f32.mrb[0].mxu0
      %3469 = vmatprep.mubr.f32.mxu0 0.0
      %3470 = vmatmul.mubr.f32.gmra.mrb[0].mxu0 %v3303
      %v3471 = vpop.f32.mrb[0].mxu0
      %v3472 = vadd.f32 0.0, %v3471
      %v3473 = vpop.f32.mrb[0].mxu0
      %3474 = vmatprep.mubr.f32.mxu0 0.0
      %3475 = vmatmul.mubr.f32.gmra.mrb[0].mxu0 %v3306
      %v3476 = vpop.f32.mrb[0].mxu0
      %v3477 = vadd.f32 0.0, %v3476
      %v3478 = vpop.f32.mrb[0].mxu0
      %3479 = vmatprep.mubr.f32.mxu0 0.0
      %3480 = vmatmul.mubr.f32.gmra.mrb[0].mxu0 %v3309
      %v3481 = vpop.f32.mrb[0].mxu0
      %v3482 = vadd.f32 0.0, %v3481
      %v3483 = vpop.f32.mrb[0].mxu0
      %3484 = vmatprep.mubr.f32.mxu0 0.0
      %3485 = vmatmul.mubr.f32.gmra.mrb[0].mxu0 %v3312
      %v3486 = vpop.f32.mrb[0].mxu0
      %v3487 = vadd.f32 0.0, %v3486
      %v3488 = vpop.f32.mrb[0].mxu0
      %3489 = vmatprep.mubr.f32.mxu0 0.0
      %3490 = vmatmul.mubr.f32.gmra.mrb[0].mxu0 %v3315
      %v3491 = vpop.f32.mrb[0].mxu0
      %v3492 = vadd.f32 0.0, %v3491
      %v3493 = vpop.f32.mrb[0].mxu0
      %3494 = vmatprep.mubr.f32.mxu0 0.0
      %3495 = vmatmul.mubr.f32.gmra.mrb[0].mxu0 %v3318
      %v3496 = vpop.f32.mrb[0].mxu0
      %v3497 = vadd.f32 0.0, %v3496
      %v3498 = vpop.f32.mrb[0].mxu0
      %3499 = vmatprep.mubr.f32.mxu0 0.0
      %3500 = vmatmul.mubr.f32.gmra.mrb[0].mxu0 %v3321
      %v3501 = vpop.f32.mrb[0].mxu0
      %v3502 = vadd.f32 0.0, %v3501
      %v3503 = vpop.f32.mrb[0].mxu0
      %3504 = vmatprep.mubr.f32.mxu0 0.0
      %3505 = vmatmul.mubr.f32.gmra.mrb[0].mxu0 %v3324
      %v3506 = vpop.f32.mrb[0].mxu0
      %v3507 = vadd.f32 0.0, %v3506
      %v3508 = vpop.f32.mrb[0].mxu0
      %3509 = vmatprep.mubr.f32.mxu0 0.0
      %3510 = vmatmul.mubr.f32.gmra.mrb[0].mxu0 %v3327
      %v3511 = vpop.f32.mrb[0].mxu0
      %v3512 = vadd.f32 0.0, %v3511
      %v3513 = vpop.f32.mrb[0].mxu0
      %3514 = vmatprep.mubr.f32.mxu0 0.0
      %3515 = vmatmul.mubr.f32.gmra.mrb[0].mxu0 %v3330
      %v3516 = vpop.f32.mrb[0].mxu0
      %v3517 = vadd.f32 0.0, %v3516
      %v3518 = vpop.f32.mrb[0].mxu0
      %3519 = vmatprep.mubr.f32.mxu0 0.0
      %3520 = vmatmul.mubr.f32.gmra.mrb[0].mxu0 %v3333
      %v3521 = vpop.f32.mrb[0].mxu0
      %v3522 = vadd.f32 0.0, %v3521
      %v3523 = vpop.f32.mrb[0].mxu0
      %3524 = vdwg.mxu0
      %v3525 = vadd.f32 %v1715, %v3402
      %v3526 = vadd.f32 %v1720, %v3407
      %v3527 = vadd.f32 %v1725, %v3412
      %v3528 = vadd.f32 %v1730, %v3417
      %v3529 = vadd.f32 %v1735, %v3422
      %v3530 = vadd.f32 %v1740, %v3427
      %v3531 = vadd.f32 %v1745, %v3432
      %v3532 = vadd.f32 %v1750, %v3437
      %v3533 = vadd.f32 %v1755, %v3442
      %v3534 = vadd.f32 %v1760, %v3447
      %v3535 = vadd.f32 %v1765, %v3452
      %v3536 = vadd.f32 %v1770, %v3457
      %v3537 = vadd.f32 %v1775, %v3462
      %v3538 = vadd.f32 %v1780, %v3467
      %v3539 = vadd.f32 %v1785, %v3472
      %v3540 = vadd.f32 %v1790, %v3477
      %v3541 = vadd.f32 %v1795, %v3482
      %v3542 = vadd.f32 %v1800, %v3487
      %v3543 = vadd.f32 %v1805, %v3492
      %v3544 = vadd.f32 %v1810, %v3497
      %v3545 = vadd.f32 %v1815, %v3502
      %v3546 = vadd.f32 %v1820, %v3507
      %v3547 = vadd.f32 %v1825, %v3512
      %v3548 = vadd.f32 %v1830, %v3517
      %v3549 = vadd.f32 %v1835, %v3522
      %v3550 = vld [vmem:[%s4 + $0x5] sm:$0x1]
      %v3551 = vlaneseq
      %v3552 = vshrl.u32 %v3551, 7
      %v3553 = vsub.s32 0, %v3552
      %v3554 = vrot.slane %v3550, %v3553
      %v3555 = vadd.f32 %v3525, %v3554
      %v3556 = vadd.f32 %v3526, %v3554
      %v3557 = vadd.f32 %v3527, %v3554
      %v3558 = vadd.f32 %v3528, %v3554
      %v3559 = vadd.f32 %v3529, %v3554
      %v3560 = vadd.f32 %v3530, %v3554
      %v3561 = vadd.f32 %v3531, %v3554
      %v3562 = vadd.f32 %v3532, %v3554
      %v3563 = vadd.f32 %v3533, %v3554
      %v3564 = vadd.f32 %v3534, %v3554
      %v3565 = vadd.f32 %v3535, %v3554
      %v3566 = vadd.f32 %v3536, %v3554
      %v3567 = vadd.f32 %v3537, %v3554
      %v3568 = vadd.f32 %v3538, %v3554
      %v3569 = vadd.f32 %v3539, %v3554
      %v3570 = vadd.f32 %v3540, %v3554
      %v3571 = vadd.f32 %v3541, %v3554
      %v3572 = vadd.f32 %v3542, %v3554
      %v3573 = vadd.f32 %v3543, %v3554
      %v3574 = vadd.f32 %v3544, %v3554
      %v3575 = vadd.f32 %v3545, %v3554
      %v3576 = vadd.f32 %v3546, %v3554
      %v3577 = vadd.f32 %v3547, %v3554
      %v3578 = vadd.f32 %v3548, %v3554
      %v3579 = vadd.f32 %v3549, %v3554
      %s3580 = scalar_lea.vmem %s8, 16
      %v3581 = vld [vmem:[%s3580] sm:$0xff]
      %v3582 = vld [vmem:[%s3580 + $0x8] sm:$0x7]
      %s3583 = scalar_lea.vmem %s6, 32
      %v3584 = vld [vmem:[%s3583] sm:$0xff]
      %v3585 = vld [vmem:[%s3583 + $0x8] sm:$0xff]
      %v3586 = vld [vmem:[%s3583 + $0x10] sm:$0xff]
      %v3587 = vld [vmem:[%s3583 + $0x18] sm:$0xff]
      %v3588 = vlaneseq
      %v3589 = vshrl.u32 %v3588, 7
      %v3590 = vsub.s32 0, %v3589
      %v3591 = vrot.slane %v3581, %v3590
      %v3593 = vsel %vm1101, %v3555, 0
      %v3596 = vsel %vm1101, %v3556, 0
      %v3599 = vsel %vm1101, %v3557, 0
      %v3602 = vsel %vm1101, %v3558, 0
      %v3605 = vsel %vm1101, %v3559, 0
      %v3608 = vsel %vm1101, %v3560, 0
      %v3611 = vsel %vm1101, %v3561, 0
      %v3614 = vsel %vm1101, %v3562, 0
      %v3617 = vsel %vm1101, %v3563, 0
      %v3620 = vsel %vm1101, %v3564, 0
      %v3623 = vsel %vm1101, %v3565, 0
      %v3626 = vsel %vm1101, %v3566, 0
      %v3629 = vsel %vm1101, %v3567, 0
      %v3632 = vsel %vm1101, %v3568, 0
      %v3635 = vsel %vm1101, %v3569, 0
      %v3638 = vsel %vm1101, %v3570, 0
      %v3641 = vsel %vm1101, %v3571, 0
      %v3644 = vsel %vm1101, %v3572, 0
      %v3647 = vsel %vm1101, %v3573, 0
      %v3650 = vsel %vm1101, %v3574, 0
      %v3653 = vsel %vm1101, %v3575, 0
      %v3656 = vsel %vm1101, %v3576, 0
      %v3659 = vsel %vm1101, %v3577, 0
      %v3662 = vsel %vm1101, %v3578, 0
      %v3665 = vsel %vm1101, %v3579, 0
      %3667 = vmatprep.subr.mxu0 0.0
      %3668 = vmatpush1.msra.mxu0 %v3584
      %3669 = vmatprep.subr.mxu0 0.0
      %3670 = vmatpush1.msra.mxu0 %v3585
      %3671 = vmatprep.subr.mxu0 0.0
      %3672 = vmatpush1.msra.mxu0 %v3586
      %3673 = vmatprep.subr.mxu0 0.0
      %3674 = vmatpush1.msra.mxu0 %v3587
      %3675 = vmatprep.subr.mxu0 0.0
      %3676 = vmatpush1.msra.mxu0 0.0
      %3677 = vmatprep.subr.mxu0 0.0
      %3678 = vmatpush1.msra.mxu0 0.0
      %3679 = vmatprep.subr.mxu0 0.0
      %3680 = vmatpush1.msra.mxu0 0.0
      %3681 = vmatprep.subr.mxu0 0.0
      %3682 = vmatpush1.msra.mxu0 0.0
      %3683 = vmatprep.subr.mxu0 0.0
      %3684 = vmatpush1.msra.mxu0 0.0
      %3685 = vmatprep.subr.mxu0 0.0
      %3686 = vmatpush1.msra.mxu0 0.0
      %3687 = vmatprep.subr.mxu0 0.0
      %3688 = vmatpush1.msra.mxu0 0.0
      %3689 = vmatprep.subr.mxu0 0.0
      %3690 = vmatpush1.msra.mxu0 0.0
      %3691 = vmatprep.subr.mxu0 0.0
      %3692 = vmatpush1.msra.mxu0 0.0
      %3693 = vmatprep.subr.mxu0 0.0
      %3694 = vmatpush1.msra.mxu0 0.0
      %3695 = vmatprep.subr.mxu0 0.0
      %3696 = vmatpush1.msra.mxu0 0.0
      %3697 = vmatprep.subr.mxu0 0.0
      %3698 = vmatpush1.msra.mxu0 0.0
      %3699 = vmatprep.subr.mxu0 0.0
      %3700 = vmatpush1.msra.mxu0 0.0
      %3701 = vmatprep.subr.mxu0 0.0
      %3702 = vmatpush1.msra.mxu0 0.0
      %3703 = vmatprep.subr.mxu0 0.0
      %3704 = vmatpush1.msra.mxu0 0.0
      %3705 = vmatprep.subr.mxu0 0.0
      %3706 = vmatpush1.msra.mxu0 0.0
      %3707 = vmatprep.subr.mxu0 0.0
      %3708 = vmatpush1.msra.mxu0 0.0
      %3709 = vmatprep.subr.mxu0 0.0
      %3710 = vmatpush1.msra.mxu0 0.0
      %3711 = vmatprep.subr.mxu0 0.0
      %3712 = vmatpush1.msra.mxu0 0.0
      %3713 = vmatprep.subr.mxu0 0.0
      %3714 = vmatpush1.msra.mxu0 0.0
      %3715 = vmatprep.subr.mxu0 0.0
      %3716 = vmatpush1.msra.mxu0 0.0
      %3717 = vmatprep.subr.mxu0 0.0
      %3718 = vmatpush1.msra.mxu0 0.0
      %3719 = vmatprep.subr.mxu0 0.0
      %3720 = vmatpush1.msra.mxu0 0.0
      %3721 = vmatprep.subr.mxu0 0.0
      %3722 = vmatpush1.msra.mxu0 0.0
      %3723 = vmatprep.subr.mxu0 0.0
      %3724 = vmatpush1.msra.mxu0 0.0
      %3725 = vmatprep.subr.mxu0 0.0
      %3726 = vmatpush1.msra.mxu0 0.0
      %3727 = vmatprep.subr.mxu0 0.0
      %3728 = vmatpush1.msra.mxu0 0.0
      %3729 = vmatprep.subr.mxu0 0.0
      %3730 = vmatpush1.msra.mxu0 0.0
      %3731 = vmatprep.mubr.f32.mxu0 0.0
      %3732 = vmatmul.mubr.f32.gmra.mrb[0].mxu0 %v3593
      %v3733 = vpop.f32.mrb[0].mxu0
      %v3734 = vadd.f32 %v3591, %v3733
      %v3735 = vpop.f32.mrb[0].mxu0
      %3736 = vmatprep.mubr.f32.mxu0 0.0
      %3737 = vmatmul.mubr.f32.gmra.mrb[0].mxu0 %v3596
      %v3738 = vpop.f32.mrb[0].mxu0
      %v3739 = vadd.f32 %v3591, %v3738
      %v3740 = vpop.f32.mrb[0].mxu0
      %3741 = vmatprep.mubr.f32.mxu0 0.0
      %3742 = vmatmul.mubr.f32.gmra.mrb[0].mxu0 %v3599
      %v3743 = vpop.f32.mrb[0].mxu0
      %v3744 = vadd.f32 %v3591, %v3743
      %v3745 = vpop.f32.mrb[0].mxu0
      %3746 = vmatprep.mubr.f32.mxu0 0.0
      %3747 = vmatmul.mubr.f32.gmra.mrb[0].mxu0 %v3602
      %v3748 = vpop.f32.mrb[0].mxu0
      %v3749 = vadd.f32 %v3591, %v3748
      %v3750 = vpop.f32.mrb[0].mxu0
      %3751 = vmatprep.mubr.f32.mxu0 0.0
      %3752 = vmatmul.mubr.f32.gmra.mrb[0].mxu0 %v3605
      %v3753 = vpop.f32.mrb[0].mxu0
      %v3754 = vadd.f32 %v3591, %v3753
      %v3755 = vpop.f32.mrb[0].mxu0
      %3756 = vmatprep.mubr.f32.mxu0 0.0
      %3757 = vmatmul.mubr.f32.gmra.mrb[0].mxu0 %v3608
      %v3758 = vpop.f32.mrb[0].mxu0
      %v3759 = vadd.f32 %v3591, %v3758
      %v3760 = vpop.f32.mrb[0].mxu0
      %3761 = vmatprep.mubr.f32.mxu0 0.0
      %3762 = vmatmul.mubr.f32.gmra.mrb[0].mxu0 %v3611
      %v3763 = vpop.f32.mrb[0].mxu0
      %v3764 = vadd.f32 %v3591, %v3763
      %v3765 = vpop.f32.mrb[0].mxu0
      %3766 = vmatprep.mubr.f32.mxu0 0.0
      %3767 = vmatmul.mubr.f32.gmra.mrb[0].mxu0 %v3614
      %v3768 = vpop.f32.mrb[0].mxu0
      %v3769 = vadd.f32 %v3591, %v3768
      %v3770 = vpop.f32.mrb[0].mxu0
      %3771 = vmatprep.mubr.f32.mxu0 0.0
      %3772 = vmatmul.mubr.f32.gmra.mrb[0].mxu0 %v3617
      %v3773 = vpop.f32.mrb[0].mxu0
      %v3774 = vadd.f32 %v3591, %v3773
      %v3775 = vpop.f32.mrb[0].mxu0
      %3776 = vmatprep.mubr.f32.mxu0 0.0
      %3777 = vmatmul.mubr.f32.gmra.mrb[0].mxu0 %v3620
      %v3778 = vpop.f32.mrb[0].mxu0
      %v3779 = vadd.f32 %v3591, %v3778
      %v3780 = vpop.f32.mrb[0].mxu0
      %3781 = vmatprep.mubr.f32.mxu0 0.0
      %3782 = vmatmul.mubr.f32.gmra.mrb[0].mxu0 %v3623
      %v3783 = vpop.f32.mrb[0].mxu0
      %v3784 = vadd.f32 %v3591, %v3783
      %v3785 = vpop.f32.mrb[0].mxu0
      %3786 = vmatprep.mubr.f32.mxu0 0.0
      %3787 = vmatmul.mubr.f32.gmra.mrb[0].mxu0 %v3626
      %v3788 = vpop.f32.mrb[0].mxu0
      %v3789 = vadd.f32 %v3591, %v3788
      %v3790 = vpop.f32.mrb[0].mxu0
      %3791 = vmatprep.mubr.f32.mxu0 0.0
      %3792 = vmatmul.mubr.f32.gmra.mrb[0].mxu0 %v3629
      %v3793 = vpop.f32.mrb[0].mxu0
      %v3794 = vadd.f32 %v3591, %v3793
      %v3795 = vpop.f32.mrb[0].mxu0
      %3796 = vmatprep.mubr.f32.mxu0 0.0
      %3797 = vmatmul.mubr.f32.gmra.mrb[0].mxu0 %v3632
      %v3798 = vpop.f32.mrb[0].mxu0
      %v3799 = vadd.f32 %v3591, %v3798
      %v3800 = vpop.f32.mrb[0].mxu0
      %3801 = vmatprep.mubr.f32.mxu0 0.0
      %3802 = vmatmul.mubr.f32.gmra.mrb[0].mxu0 %v3635
      %v3803 = vpop.f32.mrb[0].mxu0
      %v3804 = vadd.f32 %v3591, %v3803
      %v3805 = vpop.f32.mrb[0].mxu0
      %3806 = vmatprep.mubr.f32.mxu0 0.0
      %3807 = vmatmul.mubr.f32.gmra.mrb[0].mxu0 %v3638
      %v3808 = vpop.f32.mrb[0].mxu0
      %v3809 = vadd.f32 %v3591, %v3808
      %v3810 = vpop.f32.mrb[0].mxu0
      %3811 = vmatprep.mubr.f32.mxu0 0.0
      %3812 = vmatmul.mubr.f32.gmra.mrb[0].mxu0 %v3641
      %v3813 = vpop.f32.mrb[0].mxu0
      %v3814 = vadd.f32 %v3591, %v3813
      %v3815 = vpop.f32.mrb[0].mxu0
      %3816 = vmatprep.mubr.f32.mxu0 0.0
      %3817 = vmatmul.mubr.f32.gmra.mrb[0].mxu0 %v3644
      %v3818 = vpop.f32.mrb[0].mxu0
      %v3819 = vadd.f32 %v3591, %v3818
      %v3820 = vpop.f32.mrb[0].mxu0
      %3821 = vmatprep.mubr.f32.mxu0 0.0
      %3822 = vmatmul.mubr.f32.gmra.mrb[0].mxu0 %v3647
      %v3823 = vpop.f32.mrb[0].mxu0
      %v3824 = vadd.f32 %v3591, %v3823
      %v3825 = vpop.f32.mrb[0].mxu0
      %3826 = vmatprep.mubr.f32.mxu0 0.0
      %3827 = vmatmul.mubr.f32.gmra.mrb[0].mxu0 %v3650
      %v3828 = vpop.f32.mrb[0].mxu0
      %v3829 = vadd.f32 %v3591, %v3828
      %v3830 = vpop.f32.mrb[0].mxu0
      %3831 = vmatprep.mubr.f32.mxu0 0.0
      %3832 = vmatmul.mubr.f32.gmra.mrb[0].mxu0 %v3653
      %v3833 = vpop.f32.mrb[0].mxu0
      %v3834 = vadd.f32 %v3591, %v3833
      %v3835 = vpop.f32.mrb[0].mxu0
      %3836 = vmatprep.mubr.f32.mxu0 0.0
      %3837 = vmatmul.mubr.f32.gmra.mrb[0].mxu0 %v3656
      %v3838 = vpop.f32.mrb[0].mxu0
      %v3839 = vadd.f32 %v3591, %v3838
      %v3840 = vpop.f32.mrb[0].mxu0
      %3841 = vmatprep.mubr.f32.mxu0 0.0
      %3842 = vmatmul.mubr.f32.gmra.mrb[0].mxu0 %v3659
      %v3843 = vpop.f32.mrb[0].mxu0
      %v3844 = vadd.f32 %v3591, %v3843
      %v3845 = vpop.f32.mrb[0].mxu0
      %3846 = vmatprep.mubr.f32.mxu0 0.0
      %3847 = vmatmul.mubr.f32.gmra.mrb[0].mxu0 %v3662
      %v3848 = vpop.f32.mrb[0].mxu0
      %v3849 = vadd.f32 %v3591, %v3848
      %v3850 = vpop.f32.mrb[0].mxu0
      %3851 = vmatprep.mubr.f32.mxu0 0.0
      %3852 = vmatmul.mubr.f32.gmra.mrb[0].mxu0 %v3665
      %v3853 = vpop.f32.mrb[0].mxu0
      %v3854 = vadd.f32 %v3591, %v3853
      %v3855 = vpop.f32.mrb[0].mxu0
      %3856 = vdwg.mxu0
      %vm3857 = vcmp.ge.f32.partialorder %v3734, 0.0
      %vm3858 = vcmp.ge.f32.partialorder %v3739, 0.0
      %vm3859 = vcmp.ge.f32.partialorder %v3744, 0.0
      %vm3860 = vcmp.ge.f32.partialorder %v3749, 0.0
      %vm3861 = vcmp.ge.f32.partialorder %v3754, 0.0
      %vm3862 = vcmp.ge.f32.partialorder %v3759, 0.0
      %vm3863 = vcmp.ge.f32.partialorder %v3764, 0.0
      %vm3864 = vcmp.ge.f32.partialorder %v3769, 0.0
      %vm3865 = vcmp.ge.f32.partialorder %v3774, 0.0
      %vm3866 = vcmp.ge.f32.partialorder %v3779, 0.0
      %vm3867 = vcmp.ge.f32.partialorder %v3784, 0.0
      %vm3868 = vcmp.ge.f32.partialorder %v3789, 0.0
      %vm3869 = vcmp.ge.f32.partialorder %v3794, 0.0
      %vm3870 = vcmp.ge.f32.partialorder %v3799, 0.0
      %vm3871 = vcmp.ge.f32.partialorder %v3804, 0.0
      %vm3872 = vcmp.ge.f32.partialorder %v3809, 0.0
      %vm3873 = vcmp.ge.f32.partialorder %v3814, 0.0
      %vm3874 = vcmp.ge.f32.partialorder %v3819, 0.0
      %vm3875 = vcmp.ge.f32.partialorder %v3824, 0.0
      %vm3876 = vcmp.ge.f32.partialorder %v3829, 0.0
      %vm3877 = vcmp.ge.f32.partialorder %v3834, 0.0
      %vm3878 = vcmp.ge.f32.partialorder %v3839, 0.0
      %vm3879 = vcmp.ge.f32.partialorder %v3844, 0.0
      %vm3880 = vcmp.ge.f32.partialorder %v3849, 0.0
      %vm3881 = vcmp.ge.f32.partialorder %v3854, 0.0
      %v3882 = vlaneseq
      %v3883 = vshrl.u32 %v3882, 7
      %v3884 = vsub.s32 1, %v3883
      %v3885 = vrot.slane %v3581, %v3884
      %v3886 = vmul.f32 %v3885, %v3734
      %v3887 = vmul.f32 %v3885, %v3739
      %v3888 = vmul.f32 %v3885, %v3744
      %v3889 = vmul.f32 %v3885, %v3749
      %v3890 = vmul.f32 %v3885, %v3754
      %v3891 = vmul.f32 %v3885, %v3759
      %v3892 = vmul.f32 %v3885, %v3764
      %v3893 = vmul.f32 %v3885, %v3769
      %v3894 = vmul.f32 %v3885, %v3774
      %v3895 = vmul.f32 %v3885, %v3779
      %v3896 = vmul.f32 %v3885, %v3784
      %v3897 = vmul.f32 %v3885, %v3789
      %v3898 = vmul.f32 %v3885, %v3794
      %v3899 = vmul.f32 %v3885, %v3799
      %v3900 = vmul.f32 %v3885, %v3804
      %v3901 = vmul.f32 %v3885, %v3809
      %v3902 = vmul.f32 %v3885, %v3814
      %v3903 = vmul.f32 %v3885, %v3819
      %v3904 = vmul.f32 %v3885, %v3824
      %v3905 = vmul.f32 %v3885, %v3829
      %v3906 = vmul.f32 %v3885, %v3834
      %v3907 = vmul.f32 %v3885, %v3839
      %v3908 = vmul.f32 %v3885, %v3844
      %v3909 = vmul.f32 %v3885, %v3849
      %v3910 = vmul.f32 %v3885, %v3854
      %v3911 = vsel %vm3857, %v3734, %v3886
      %v3912 = vsel %vm3858, %v3739, %v3887
      %v3913 = vsel %vm3859, %v3744, %v3888
      %v3914 = vsel %vm3860, %v3749, %v3889
      %v3915 = vsel %vm3861, %v3754, %v3890
      %v3916 = vsel %vm3862, %v3759, %v3891
      %v3917 = vsel %vm3863, %v3764, %v3892
      %v3918 = vsel %vm3864, %v3769, %v3893
      %v3919 = vsel %vm3865, %v3774, %v3894
      %v3920 = vsel %vm3866, %v3779, %v3895
      %v3921 = vsel %vm3867, %v3784, %v3896
      %v3922 = vsel %vm3868, %v3789, %v3897
      %v3923 = vsel %vm3869, %v3794, %v3898
      %v3924 = vsel %vm3870, %v3799, %v3899
      %v3925 = vsel %vm3871, %v3804, %v3900
      %v3926 = vsel %vm3872, %v3809, %v3901
      %v3927 = vsel %vm3873, %v3814, %v3902
      %v3928 = vsel %vm3874, %v3819, %v3903
      %v3929 = vsel %vm3875, %v3824, %v3904
      %v3930 = vsel %vm3876, %v3829, %v3905
      %v3931 = vsel %vm3877, %v3834, %v3906
      %v3932 = vsel %vm3878, %v3839, %v3907
      %v3933 = vsel %vm3879, %v3844, %v3908
      %v3934 = vsel %vm3880, %v3849, %v3909
      %v3935 = vsel %vm3881, %v3854, %v3910
      %v3936 = vsel %vm2301, %v3911, 0.0
      %v3937 = vsel %vm2301, %v3912, 0.0
      %v3938 = vadd.f32 %v3936, %v3937
      %v3939 = vsel %vm2301, %v3913, 0.0
      %v3940 = vadd.f32 %v3938, %v3939
      %v3941 = vsel %vm2301, %v3914, 0.0
      %v3942 = vadd.f32 %v3940, %v3941
      %v3943 = vsel %vm2301, %v3915, 0.0
      %v3944 = vadd.f32 %v3942, %v3943
      %v3945 = vsel %vm2301, %v3916, 0.0
      %v3946 = vadd.f32 %v3944, %v3945
      %v3947 = vsel %vm2301, %v3917, 0.0
      %v3948 = vadd.f32 %v3946, %v3947
      %v3949 = vsel %vm2301, %v3918, 0.0
      %v3950 = vadd.f32 %v3948, %v3949
      %v3951 = vsel %vm2301, %v3919, 0.0
      %v3952 = vadd.f32 %v3950, %v3951
      %v3953 = vsel %vm2301, %v3920, 0.0
      %v3954 = vadd.f32 %v3952, %v3953
      %v3955 = vsel %vm2301, %v3921, 0.0
      %v3956 = vadd.f32 %v3954, %v3955
      %v3957 = vsel %vm2301, %v3922, 0.0
      %v3958 = vadd.f32 %v3956, %v3957
      %v3959 = vsel %vm2301, %v3923, 0.0
      %v3960 = vadd.f32 %v3958, %v3959
      %v3961 = vsel %vm2301, %v3924, 0.0
      %v3962 = vadd.f32 %v3960, %v3961
      %v3963 = vsel %vm2301, %v3925, 0.0
      %v3964 = vadd.f32 %v3962, %v3963
      %v3965 = vsel %vm2301, %v3926, 0.0
      %v3966 = vadd.f32 %v3964, %v3965
      %v3967 = vsel %vm2301, %v3927, 0.0
      %v3968 = vadd.f32 %v3966, %v3967
      %v3969 = vsel %vm2301, %v3928, 0.0
      %v3970 = vadd.f32 %v3968, %v3969
      %v3971 = vsel %vm2301, %v3929, 0.0
      %v3972 = vadd.f32 %v3970, %v3971
      %v3973 = vsel %vm2301, %v3930, 0.0
      %v3974 = vadd.f32 %v3972, %v3973
      %v3975 = vsel %vm2301, %v3931, 0.0
      %v3976 = vadd.f32 %v3974, %v3975
      %v3977 = vsel %vm2301, %v3932, 0.0
      %v3978 = vadd.f32 %v3976, %v3977
      %v3979 = vsel %vm2301, %v3933, 0.0
      %v3980 = vadd.f32 %v3978, %v3979
      %v3981 = vsel %vm2301, %v3934, 0.0
      %v3982 = vadd.f32 %v3980, %v3981
      %v3983 = vsel %vm2349, %v3935, 0.0
      %v3984 = vadd.f32 %v3982, %v3983
      %3985 = vadd.xlane.f32.xlu0 %v3984
      %v3986 = vpop.xlane.xlu0 %3985
      %v3987 = vrot.slane %v3986, 4
      %v3988 = vadd.f32 %v3986, %v3987
      %v3989 = vrot.slane %v3988, 2
      %v3990 = vadd.f32 %v3988, %v3989
      %v3991 = vrot.slane %v3990, 1
      %v3992 = vadd.f32 %v3990, %v3991
      %s3993 = vtos %v3992
      %v3994 = vrcp.pop 9552.0
      %s3995 = vtos %v3994
      %s3996 = smul.f32 %s3993, %s3995
      %v3997 = vmul.f32 %v3911, %v3911
      %v3998 = vmul.f32 %v3912, %v3912
      %v3999 = vmul.f32 %v3913, %v3913
      %v4000 = vmul.f32 %v3914, %v3914
      %v4001 = vmul.f32 %v3915, %v3915
      %v4002 = vmul.f32 %v3916, %v3916
      %v4003 = vmul.f32 %v3917, %v3917
      %v4004 = vmul.f32 %v3918, %v3918
      %v4005 = vmul.f32 %v3919, %v3919
      %v4006 = vmul.f32 %v3920, %v3920
      %v4007 = vmul.f32 %v3921, %v3921
      %v4008 = vmul.f32 %v3922, %v3922
      %v4009 = vmul.f32 %v3923, %v3923
      %v4010 = vmul.f32 %v3924, %v3924
      %v4011 = vmul.f32 %v3925, %v3925
      %v4012 = vmul.f32 %v3926, %v3926
      %v4013 = vmul.f32 %v3927, %v3927
      %v4014 = vmul.f32 %v3928, %v3928
      %v4015 = vmul.f32 %v3929, %v3929
      %v4016 = vmul.f32 %v3930, %v3930
      %v4017 = vmul.f32 %v3931, %v3931
      %v4018 = vmul.f32 %v3932, %v3932
      %v4019 = vmul.f32 %v3933, %v3933
      %v4020 = vmul.f32 %v3934, %v3934
      %v4021 = vmul.f32 %v3935, %v3935
      %v4022 = vsel %vm2301, %v3997, 0.0
      %v4023 = vsel %vm2301, %v3998, 0.0
      %v4024 = vadd.f32 %v4022, %v4023
      %v4025 = vsel %vm2301, %v3999, 0.0
      %v4026 = vadd.f32 %v4024, %v4025
      %v4027 = vsel %vm2301, %v4000, 0.0
      %v4028 = vadd.f32 %v4026, %v4027
      %v4029 = vsel %vm2301, %v4001, 0.0
      %v4030 = vadd.f32 %v4028, %v4029
      %v4031 = vsel %vm2301, %v4002, 0.0
      %v4032 = vadd.f32 %v4030, %v4031
      %v4033 = vsel %vm2301, %v4003, 0.0
      %v4034 = vadd.f32 %v4032, %v4033
      %v4035 = vsel %vm2301, %v4004, 0.0
      %v4036 = vadd.f32 %v4034, %v4035
      %v4037 = vsel %vm2301, %v4005, 0.0
      %v4038 = vadd.f32 %v4036, %v4037
      %v4039 = vsel %vm2301, %v4006, 0.0
      %v4040 = vadd.f32 %v4038, %v4039
      %v4041 = vsel %vm2301, %v4007, 0.0
      %v4042 = vadd.f32 %v4040, %v4041
      %v4043 = vsel %vm2301, %v4008, 0.0
      %v4044 = vadd.f32 %v4042, %v4043
      %v4045 = vsel %vm2301, %v4009, 0.0
      %v4046 = vadd.f32 %v4044, %v4045
      %v4047 = vsel %vm2301, %v4010, 0.0
      %v4048 = vadd.f32 %v4046, %v4047
      %v4049 = vsel %vm2301, %v4011, 0.0
      %v4050 = vadd.f32 %v4048, %v4049
      %v4051 = vsel %vm2301, %v4012, 0.0
      %v4052 = vadd.f32 %v4050, %v4051
      %v4053 = vsel %vm2301, %v4013, 0.0
      %v4054 = vadd.f32 %v4052, %v4053
      %v4055 = vsel %vm2301, %v4014, 0.0
      %v4056 = vadd.f32 %v4054, %v4055
      %v4057 = vsel %vm2301, %v4015, 0.0
      %v4058 = vadd.f32 %v4056, %v4057
      %v4059 = vsel %vm2301, %v4016, 0.0
      %v4060 = vadd.f32 %v4058, %v4059
      %v4061 = vsel %vm2301, %v4017, 0.0
      %v4062 = vadd.f32 %v4060, %v4061
      %v4063 = vsel %vm2301, %v4018, 0.0
      %v4064 = vadd.f32 %v4062, %v4063
      %v4065 = vsel %vm2301, %v4019, 0.0
      %v4066 = vadd.f32 %v4064, %v4065
      %v4067 = vsel %vm2301, %v4020, 0.0
      %v4068 = vadd.f32 %v4066, %v4067
      %v4069 = vsel %vm2349, %v4021, 0.0
      %v4070 = vadd.f32 %v4068, %v4069
      %4071 = vadd.xlane.f32.xlu0 %v4070
      %v4072 = vpop.xlane.xlu0 %4071
      %v4073 = vrot.slane %v4072, 4
      %v4074 = vadd.f32 %v4072, %v4073
      %v4075 = vrot.slane %v4074, 2
      %v4076 = vadd.f32 %v4074, %v4075
      %v4077 = vrot.slane %v4076, 1
      %v4078 = vadd.f32 %v4076, %v4077
      %s4079 = vtos %v4078
      %v4080 = vrcp.pop 9552.0
      %s4081 = vtos %v4080
      %s4082 = smul.f32 %s4079, %s4081
      %s4083 = smul.f32 %s3996, %s3996
      %s4084 = ssub.f32 %s4082, %s4083
      %s4085 = smax.f32 %s4084, 0.0
      %v4086 = vstv %s3996
      %v4087 = vsub.f32 %v3911, %v4086
      %v4088 = vsub.f32 %v3912, %v4086
      %v4089 = vsub.f32 %v3913, %v4086
      %v4090 = vsub.f32 %v3914, %v4086
      %v4091 = vsub.f32 %v3915, %v4086
      %v4092 = vsub.f32 %v3916, %v4086
      %v4093 = vsub.f32 %v3917, %v4086
      %v4094 = vsub.f32 %v3918, %v4086
      %v4095 = vsub.f32 %v3919, %v4086
      %v4096 = vsub.f32 %v3920, %v4086
      %v4097 = vsub.f32 %v3921, %v4086
      %v4098 = vsub.f32 %v3922, %v4086
      %v4099 = vsub.f32 %v3923, %v4086
      %v4100 = vsub.f32 %v3924, %v4086
      %v4101 = vsub.f32 %v3925, %v4086
      %v4102 = vsub.f32 %v3926, %v4086
      %v4103 = vsub.f32 %v3927, %v4086
      %v4104 = vsub.f32 %v3928, %v4086
      %v4105 = vsub.f32 %v3929, %v4086
      %v4106 = vsub.f32 %v3930, %v4086
      %v4107 = vsub.f32 %v3931, %v4086
      %v4108 = vsub.f32 %v3932, %v4086
      %v4109 = vsub.f32 %v3933, %v4086
      %v4110 = vsub.f32 %v3934, %v4086
      %v4111 = vsub.f32 %v3935, %v4086
      %s4112 = sadd.f32 %s4085, 1e-08
      %v4113 = vstv %s4112
      %v4114 = vrsqrt.pop %v4113
      %s4115 = vtos %v4114
      %v4116 = vstv %s4115
      %v4117 = vmul.f32 %v4087, %v4116
      %v4118 = vmul.f32 %v4088, %v4116
      %v4119 = vmul.f32 %v4089, %v4116
      %v4120 = vmul.f32 %v4090, %v4116
      %v4121 = vmul.f32 %v4091, %v4116
      %v4122 = vmul.f32 %v4092, %v4116
      %v4123 = vmul.f32 %v4093, %v4116
      %v4124 = vmul.f32 %v4094, %v4116
      %v4125 = vmul.f32 %v4095, %v4116
      %v4126 = vmul.f32 %v4096, %v4116
      %v4127 = vmul.f32 %v4097, %v4116
      %v4128 = vmul.f32 %v4098, %v4116
      %v4129 = vmul.f32 %v4099, %v4116
      %v4130 = vmul.f32 %v4100, %v4116
      %v4131 = vmul.f32 %v4101, %v4116
      %v4132 = vmul.f32 %v4102, %v4116
      %v4133 = vmul.f32 %v4103, %v4116
      %v4134 = vmul.f32 %v4104, %v4116
      %v4135 = vmul.f32 %v4105, %v4116
      %v4136 = vmul.f32 %v4106, %v4116
      %v4137 = vmul.f32 %v4107, %v4116
      %v4138 = vmul.f32 %v4108, %v4116
      %v4139 = vmul.f32 %v4109, %v4116
      %v4140 = vmul.f32 %v4110, %v4116
      %v4141 = vmul.f32 %v4111, %v4116
      %v4142 = vlaneseq
      %v4143 = vshrl.u32 %v4142, 7
      %v4144 = vsub.s32 2, %v4143
      %v4145 = vrot.slane %v3581, %v4144
      %v4146 = vmul.f32 %v4117, %v4145
      %v4147 = vmul.f32 %v4118, %v4145
      %v4148 = vmul.f32 %v4119, %v4145
      %v4149 = vmul.f32 %v4120, %v4145
      %v4150 = vmul.f32 %v4121, %v4145
      %v4151 = vmul.f32 %v4122, %v4145
      %v4152 = vmul.f32 %v4123, %v4145
      %v4153 = vmul.f32 %v4124, %v4145
      %v4154 = vmul.f32 %v4125, %v4145
      %v4155 = vmul.f32 %v4126, %v4145
      %v4156 = vmul.f32 %v4127, %v4145
      %v4157 = vmul.f32 %v4128, %v4145
      %v4158 = vmul.f32 %v4129, %v4145
      %v4159 = vmul.f32 %v4130, %v4145
      %v4160 = vmul.f32 %v4131, %v4145
      %v4161 = vmul.f32 %v4132, %v4145
      %v4162 = vmul.f32 %v4133, %v4145
      %v4163 = vmul.f32 %v4134, %v4145
      %v4164 = vmul.f32 %v4135, %v4145
      %v4165 = vmul.f32 %v4136, %v4145
      %v4166 = vmul.f32 %v4137, %v4145
      %v4167 = vmul.f32 %v4138, %v4145
      %v4168 = vmul.f32 %v4139, %v4145
      %v4169 = vmul.f32 %v4140, %v4145
      %v4170 = vmul.f32 %v4141, %v4145
      %v4171 = vlaneseq
      %v4172 = vshrl.u32 %v4171, 7
      %v4173 = vsub.s32 3, %v4172
      %v4174 = vrot.slane %v3581, %v4173
      %v4175 = vadd.f32 %v4146, %v4174
      %v4176 = vadd.f32 %v4147, %v4174
      %v4177 = vadd.f32 %v4148, %v4174
      %v4178 = vadd.f32 %v4149, %v4174
      %v4179 = vadd.f32 %v4150, %v4174
      %v4180 = vadd.f32 %v4151, %v4174
      %v4181 = vadd.f32 %v4152, %v4174
      %v4182 = vadd.f32 %v4153, %v4174
      %v4183 = vadd.f32 %v4154, %v4174
      %v4184 = vadd.f32 %v4155, %v4174
      %v4185 = vadd.f32 %v4156, %v4174
      %v4186 = vadd.f32 %v4157, %v4174
      %v4187 = vadd.f32 %v4158, %v4174
      %v4188 = vadd.f32 %v4159, %v4174
      %v4189 = vadd.f32 %v4160, %v4174
      %v4190 = vadd.f32 %v4161, %v4174
      %v4191 = vadd.f32 %v4162, %v4174
      %v4192 = vadd.f32 %v4163, %v4174
      %v4193 = vadd.f32 %v4164, %v4174
      %v4194 = vadd.f32 %v4165, %v4174
      %v4195 = vadd.f32 %v4166, %v4174
      %v4196 = vadd.f32 %v4167, %v4174
      %v4197 = vadd.f32 %v4168, %v4174
      %v4198 = vadd.f32 %v4169, %v4174
      %v4199 = vadd.f32 %v4170, %v4174
      %vm4225 = vcmask 1041408
      %v4226 = vrot.slane %v4175, 6
      %v4227 = vrot.slane %v4176, 6
      %v4228 = vsel %vm4225, %v4226, %v4227
      %v4229 = vrot.slane %v4177, 6
      %v4230 = vsel %vm4225, %v4227, %v4229
      %v4231 = vrot.slane %v4178, 6
      %v4232 = vsel %vm4225, %v4229, %v4231
      %v4233 = vrot.slane %v4179, 6
      %v4234 = vsel %vm4225, %v4231, %v4233
      %v4235 = vrot.slane %v4180, 6
      %v4236 = vsel %vm4225, %v4233, %v4235
      %v4237 = vrot.slane %v4181, 6
      %v4238 = vsel %vm4225, %v4235, %v4237
      %v4239 = vrot.slane %v4182, 6
      %v4240 = vsel %vm4225, %v4237, %v4239
      %v4241 = vrot.slane %v4183, 6
      %v4242 = vsel %vm4225, %v4239, %v4241
      %v4243 = vrot.slane %v4184, 6
      %v4244 = vsel %vm4225, %v4241, %v4243
      %v4245 = vrot.slane %v4185, 6
      %v4246 = vsel %vm4225, %v4243, %v4245
      %v4247 = vrot.slane %v4186, 6
      %v4248 = vsel %vm4225, %v4245, %v4247
      %v4249 = vrot.slane %v4187, 6
      %v4250 = vsel %vm4225, %v4247, %v4249
      %v4251 = vrot.slane %v4188, 6
      %v4252 = vsel %vm4225, %v4249, %v4251
      %v4253 = vrot.slane %v4189, 6
      %v4254 = vsel %vm4225, %v4251, %v4253
      %v4255 = vrot.slane %v4190, 6
      %v4256 = vsel %vm4225, %v4253, %v4255
      %v4257 = vrot.slane %v4191, 6
      %v4258 = vsel %vm4225, %v4255, %v4257
      %v4259 = vrot.slane %v4192, 6
      %v4260 = vsel %vm4225, %v4257, %v4259
      %v4261 = vrot.slane %v4193, 6
      %v4262 = vsel %vm4225, %v4259, %v4261
      %v4263 = vrot.slane %v4194, 6
      %v4264 = vsel %vm4225, %v4261, %v4263
      %v4265 = vrot.slane %v4195, 6
      %v4266 = vsel %vm4225, %v4263, %v4265
      %v4267 = vrot.slane %v4196, 6
      %v4268 = vsel %vm4225, %v4265, %v4267
      %v4269 = vrot.slane %v4197, 6
      %v4270 = vsel %vm4225, %v4267, %v4269
      %v4271 = vrot.slane %v4198, 6
      %v4272 = vsel %vm4225, %v4269, %v4271
      %v4273 = vrot.slane %v4199, 6
      %v4274 = vsel %vm4225, %v4271, %v4273
      %v4300 = vsel %vm4225, 0.0, %v4226
      %v4301 = vrot.slane %v4175, 2
      %v4302 = vrot.slane %v4176, 2
      %v4303 = vsel %vm2743, %v4301, %v4302
      %v4304 = vrot.slane %v4177, 2
      %v4305 = vsel %vm2743, %v4302, %v4304
      %v4306 = vrot.slane %v4178, 2
      %v4307 = vsel %vm2743, %v4304, %v4306
      %v4308 = vrot.slane %v4179, 2
      %v4309 = vsel %vm2743, %v4306, %v4308
      %v4310 = vrot.slane %v4180, 2
      %v4311 = vsel %vm2743, %v4308, %v4310
      %v4312 = vrot.slane %v4181, 2
      %v4313 = vsel %vm2743, %v4310, %v4312
      %v4314 = vrot.slane %v4182, 2
      %v4315 = vsel %vm2743, %v4312, %v4314
      %v4316 = vrot.slane %v4183, 2
      %v4317 = vsel %vm2743, %v4314, %v4316
      %v4318 = vrot.slane %v4184, 2
      %v4319 = vsel %vm2743, %v4316, %v4318
      %v4320 = vrot.slane %v4185, 2
      %v4321 = vsel %vm2743, %v4318, %v4320
      %v4322 = vrot.slane %v4186, 2
      %v4323 = vsel %vm2743, %v4320, %v4322
      %v4324 = vrot.slane %v4187, 2
      %v4325 = vsel %vm2743, %v4322, %v4324
      %v4326 = vrot.slane %v4188, 2
      %v4327 = vsel %vm2743, %v4324, %v4326
      %v4328 = vrot.slane %v4189, 2
      %v4329 = vsel %vm2743, %v4326, %v4328
      %v4330 = vrot.slane %v4190, 2
      %v4331 = vsel %vm2743, %v4328, %v4330
      %v4332 = vrot.slane %v4191, 2
      %v4333 = vsel %vm2743, %v4330, %v4332
      %v4334 = vrot.slane %v4192, 2
      %v4335 = vsel %vm2743, %v4332, %v4334
      %v4336 = vrot.slane %v4193, 2
      %v4337 = vsel %vm2743, %v4334, %v4336
      %v4338 = vrot.slane %v4194, 2
      %v4339 = vsel %vm2743, %v4336, %v4338
      %v4340 = vrot.slane %v4195, 2
      %v4341 = vsel %vm2743, %v4338, %v4340
      %v4342 = vrot.slane %v4196, 2
      %v4343 = vsel %vm2743, %v4340, %v4342
      %v4344 = vrot.slane %v4197, 2
      %v4345 = vsel %vm2743, %v4342, %v4344
      %v4346 = vrot.slane %v4198, 2
      %v4347 = vsel %vm2743, %v4344, %v4346
      %v4348 = vrot.slane %v4199, 2
      %v4349 = vsel %vm2743, %v4346, %v4348
      %vm4375 = vcmask 1044480
      %v4376 = vsel %vm4375, %v4348, 0.0
      %v4377 = vlaneseq
      %v4378 = vshrl.u32 %v4377, 7
      %v4379 = vsub.s32 4, %v4378
      %v4380 = vrot.slane %v3581, %v4379
      %v4381 = vmul.f32 %v4300, %v4380
      %v4382 = vmul.f32 %v4228, %v4380
      %v4383 = vmul.f32 %v4230, %v4380
      %v4384 = vmul.f32 %v4232, %v4380
      %v4385 = vmul.f32 %v4234, %v4380
      %v4386 = vmul.f32 %v4236, %v4380
      %v4387 = vmul.f32 %v4238, %v4380
      %v4388 = vmul.f32 %v4240, %v4380
      %v4389 = vmul.f32 %v4242, %v4380
      %v4390 = vmul.f32 %v4244, %v4380
      %v4391 = vmul.f32 %v4246, %v4380
      %v4392 = vmul.f32 %v4248, %v4380
      %v4393 = vmul.f32 %v4250, %v4380
      %v4394 = vmul.f32 %v4252, %v4380
      %v4395 = vmul.f32 %v4254, %v4380
      %v4396 = vmul.f32 %v4256, %v4380
      %v4397 = vmul.f32 %v4258, %v4380
      %v4398 = vmul.f32 %v4260, %v4380
      %v4399 = vmul.f32 %v4262, %v4380
      %v4400 = vmul.f32 %v4264, %v4380
      %v4401 = vmul.f32 %v4266, %v4380
      %v4402 = vmul.f32 %v4268, %v4380
      %v4403 = vmul.f32 %v4270, %v4380
      %v4404 = vmul.f32 %v4272, %v4380
      %v4405 = vmul.f32 %v4274, %v4380
      %v4406 = vlaneseq
      %v4407 = vshrl.u32 %v4406, 7
      %v4408 = vsub.s32 5, %v4407
      %v4409 = vrot.slane %v3581, %v4408
      %v4410 = vmul.f32 %v4175, %v4409
      %v4411 = vmul.f32 %v4176, %v4409
      %v4412 = vmul.f32 %v4177, %v4409
      %v4413 = vmul.f32 %v4178, %v4409
      %v4414 = vmul.f32 %v4179, %v4409
      %v4415 = vmul.f32 %v4180, %v4409
      %v4416 = vmul.f32 %v4181, %v4409
      %v4417 = vmul.f32 %v4182, %v4409
      %v4418 = vmul.f32 %v4183, %v4409
      %v4419 = vmul.f32 %v4184, %v4409
      %v4420 = vmul.f32 %v4185, %v4409
      %v4421 = vmul.f32 %v4186, %v4409
      %v4422 = vmul.f32 %v4187, %v4409
      %v4423 = vmul.f32 %v4188, %v4409
      %v4424 = vmul.f32 %v4189, %v4409
      %v4425 = vmul.f32 %v4190, %v4409
      %v4426 = vmul.f32 %v4191, %v4409
      %v4427 = vmul.f32 %v4192, %v4409
      %v4428 = vmul.f32 %v4193, %v4409
      %v4429 = vmul.f32 %v4194, %v4409
      %v4430 = vmul.f32 %v4195, %v4409
      %v4431 = vmul.f32 %v4196, %v4409
      %v4432 = vmul.f32 %v4197, %v4409
      %v4433 = vmul.f32 %v4198, %v4409
      %v4434 = vmul.f32 %v4199, %v4409
      %v4435 = vadd.f32 %v4381, %v4410
      %v4436 = vadd.f32 %v4382, %v4411
      %v4437 = vadd.f32 %v4383, %v4412
      %v4438 = vadd.f32 %v4384, %v4413
      %v4439 = vadd.f32 %v4385, %v4414
      %v4440 = vadd.f32 %v4386, %v4415
      %v4441 = vadd.f32 %v4387, %v4416
      %v4442 = vadd.f32 %v4388, %v4417
      %v4443 = vadd.f32 %v4389, %v4418
      %v4444 = vadd.f32 %v4390, %v4419
      %v4445 = vadd.f32 %v4391, %v4420
      %v4446 = vadd.f32 %v4392, %v4421
      %v4447 = vadd.f32 %v4393, %v4422
      %v4448 = vadd.f32 %v4394, %v4423
      %v4449 = vadd.f32 %v4395, %v4424
      %v4450 = vadd.f32 %v4396, %v4425
      %v4451 = vadd.f32 %v4397, %v4426
      %v4452 = vadd.f32 %v4398, %v4427
      %v4453 = vadd.f32 %v4399, %v4428
      %v4454 = vadd.f32 %v4400, %v4429
      %v4455 = vadd.f32 %v4401, %v4430
      %v4456 = vadd.f32 %v4402, %v4431
      %v4457 = vadd.f32 %v4403, %v4432
      %v4458 = vadd.f32 %v4404, %v4433
      %v4459 = vadd.f32 %v4405, %v4434
      %v4460 = vlaneseq
      %v4461 = vshrl.u32 %v4460, 7
      %v4462 = vsub.s32 6, %v4461
      %v4463 = vrot.slane %v3581, %v4462
      %v4464 = vmul.f32 %v4303, %v4463
      %v4465 = vmul.f32 %v4305, %v4463
      %v4466 = vmul.f32 %v4307, %v4463
      %v4467 = vmul.f32 %v4309, %v4463
      %v4468 = vmul.f32 %v4311, %v4463
      %v4469 = vmul.f32 %v4313, %v4463
      %v4470 = vmul.f32 %v4315, %v4463
      %v4471 = vmul.f32 %v4317, %v4463
      %v4472 = vmul.f32 %v4319, %v4463
      %v4473 = vmul.f32 %v4321, %v4463
      %v4474 = vmul.f32 %v4323, %v4463
      %v4475 = vmul.f32 %v4325, %v4463
      %v4476 = vmul.f32 %v4327, %v4463
      %v4477 = vmul.f32 %v4329, %v4463
      %v4478 = vmul.f32 %v4331, %v4463
      %v4479 = vmul.f32 %v4333, %v4463
      %v4480 = vmul.f32 %v4335, %v4463
      %v4481 = vmul.f32 %v4337, %v4463
      %v4482 = vmul.f32 %v4339, %v4463
      %v4483 = vmul.f32 %v4341, %v4463
      %v4484 = vmul.f32 %v4343, %v4463
      %v4485 = vmul.f32 %v4345, %v4463
      %v4486 = vmul.f32 %v4347, %v4463
      %v4487 = vmul.f32 %v4349, %v4463
      %v4488 = vmul.f32 %v4376, %v4463
      %v4489 = vadd.f32 %v4435, %v4464
      %v4490 = vadd.f32 %v4436, %v4465
      %v4491 = vadd.f32 %v4437, %v4466
      %v4492 = vadd.f32 %v4438, %v4467
      %v4493 = vadd.f32 %v4439, %v4468
      %v4494 = vadd.f32 %v4440, %v4469
      %v4495 = vadd.f32 %v4441, %v4470
      %v4496 = vadd.f32 %v4442, %v4471
      %v4497 = vadd.f32 %v4443, %v4472
      %v4498 = vadd.f32 %v4444, %v4473
      %v4499 = vadd.f32 %v4445, %v4474
      %v4500 = vadd.f32 %v4446, %v4475
      %v4501 = vadd.f32 %v4447, %v4476
      %v4502 = vadd.f32 %v4448, %v4477
      %v4503 = vadd.f32 %v4449, %v4478
      %v4504 = vadd.f32 %v4450, %v4479
      %v4505 = vadd.f32 %v4451, %v4480
      %v4506 = vadd.f32 %v4452, %v4481
      %v4507 = vadd.f32 %v4453, %v4482
      %v4508 = vadd.f32 %v4454, %v4483
      %v4509 = vadd.f32 %v4455, %v4484
      %v4510 = vadd.f32 %v4456, %v4485
      %v4511 = vadd.f32 %v4457, %v4486
      %v4512 = vadd.f32 %v4458, %v4487
      %v4513 = vadd.f32 %v4459, %v4488
      %v4514 = vlaneseq
      %v4515 = vshrl.u32 %v4514, 7
      %v4516 = vsub.s32 7, %v4515
      %v4517 = vrot.slane %v3581, %v4516
      %v4518 = vadd.f32 %v4489, %v4517
      %v4519 = vadd.f32 %v4490, %v4517
      %v4520 = vadd.f32 %v4491, %v4517
      %v4521 = vadd.f32 %v4492, %v4517
      %v4522 = vadd.f32 %v4493, %v4517
      %v4523 = vadd.f32 %v4494, %v4517
      %v4524 = vadd.f32 %v4495, %v4517
      %v4525 = vadd.f32 %v4496, %v4517
      %v4526 = vadd.f32 %v4497, %v4517
      %v4527 = vadd.f32 %v4498, %v4517
      %v4528 = vadd.f32 %v4499, %v4517
      %v4529 = vadd.f32 %v4500, %v4517
      %v4530 = vadd.f32 %v4501, %v4517
      %v4531 = vadd.f32 %v4502, %v4517
      %v4532 = vadd.f32 %v4503, %v4517
      %v4533 = vadd.f32 %v4504, %v4517
      %v4534 = vadd.f32 %v4505, %v4517
      %v4535 = vadd.f32 %v4506, %v4517
      %v4536 = vadd.f32 %v4507, %v4517
      %v4537 = vadd.f32 %v4508, %v4517
      %v4538 = vadd.f32 %v4509, %v4517
      %v4539 = vadd.f32 %v4510, %v4517
      %v4540 = vadd.f32 %v4511, %v4517
      %v4541 = vadd.f32 %v4512, %v4517
      %v4542 = vadd.f32 %v4513, %v4517
      %vm4543 = vcmp.ge.f32.partialorder %v4518, 0.0
      %vm4544 = vcmp.ge.f32.partialorder %v4519, 0.0
      %vm4545 = vcmp.ge.f32.partialorder %v4520, 0.0
      %vm4546 = vcmp.ge.f32.partialorder %v4521, 0.0
      %vm4547 = vcmp.ge.f32.partialorder %v4522, 0.0
      %vm4548 = vcmp.ge.f32.partialorder %v4523, 0.0
      %vm4549 = vcmp.ge.f32.partialorder %v4524, 0.0
      %vm4550 = vcmp.ge.f32.partialorder %v4525, 0.0
      %vm4551 = vcmp.ge.f32.partialorder %v4526, 0.0
      %vm4552 = vcmp.ge.f32.partialorder %v4527, 0.0
      %vm4553 = vcmp.ge.f32.partialorder %v4528, 0.0
      %vm4554 = vcmp.ge.f32.partialorder %v4529, 0.0
      %vm4555 = vcmp.ge.f32.partialorder %v4530, 0.0
      %vm4556 = vcmp.ge.f32.partialorder %v4531, 0.0
      %vm4557 = vcmp.ge.f32.partialorder %v4532, 0.0
      %vm4558 = vcmp.ge.f32.partialorder %v4533, 0.0
      %vm4559 = vcmp.ge.f32.partialorder %v4534, 0.0
      %vm4560 = vcmp.ge.f32.partialorder %v4535, 0.0
      %vm4561 = vcmp.ge.f32.partialorder %v4536, 0.0
      %vm4562 = vcmp.ge.f32.partialorder %v4537, 0.0
      %vm4563 = vcmp.ge.f32.partialorder %v4538, 0.0
      %vm4564 = vcmp.ge.f32.partialorder %v4539, 0.0
      %vm4565 = vcmp.ge.f32.partialorder %v4540, 0.0
      %vm4566 = vcmp.ge.f32.partialorder %v4541, 0.0
      %vm4567 = vcmp.ge.f32.partialorder %v4542, 0.0
      %v4568 = vlaneseq
      %v4569 = vshrl.u32 %v4568, 7
      %v4570 = vsub.s32 0, %v4569
      %v4571 = vrot.slane %v3582, %v4570
      %v4572 = vmul.f32 %v4571, %v4518
      %v4573 = vmul.f32 %v4571, %v4519
      %v4574 = vmul.f32 %v4571, %v4520
      %v4575 = vmul.f32 %v4571, %v4521
      %v4576 = vmul.f32 %v4571, %v4522
      %v4577 = vmul.f32 %v4571, %v4523
      %v4578 = vmul.f32 %v4571, %v4524
      %v4579 = vmul.f32 %v4571, %v4525
      %v4580 = vmul.f32 %v4571, %v4526
      %v4581 = vmul.f32 %v4571, %v4527
      %v4582 = vmul.f32 %v4571, %v4528
      %v4583 = vmul.f32 %v4571, %v4529
      %v4584 = vmul.f32 %v4571, %v4530
      %v4585 = vmul.f32 %v4571, %v4531
      %v4586 = vmul.f32 %v4571, %v4532
      %v4587 = vmul.f32 %v4571, %v4533
      %v4588 = vmul.f32 %v4571, %v4534
      %v4589 = vmul.f32 %v4571, %v4535
      %v4590 = vmul.f32 %v4571, %v4536
      %v4591 = vmul.f32 %v4571, %v4537
      %v4592 = vmul.f32 %v4571, %v4538
      %v4593 = vmul.f32 %v4571, %v4539
      %v4594 = vmul.f32 %v4571, %v4540
      %v4595 = vmul.f32 %v4571, %v4541
      %v4596 = vmul.f32 %v4571, %v4542
      %v4597 = vsel %vm4543, %v4518, %v4572
      %v4598 = vsel %vm4544, %v4519, %v4573
      %v4599 = vsel %vm4545, %v4520, %v4574
      %v4600 = vsel %vm4546, %v4521, %v4575
      %v4601 = vsel %vm4547, %v4522, %v4576
      %v4602 = vsel %vm4548, %v4523, %v4577
      %v4603 = vsel %vm4549, %v4524, %v4578
      %v4604 = vsel %vm4550, %v4525, %v4579
      %v4605 = vsel %vm4551, %v4526, %v4580
      %v4606 = vsel %vm4552, %v4527, %v4581
      %v4607 = vsel %vm4553, %v4528, %v4582
      %v4608 = vsel %vm4554, %v4529, %v4583
      %v4609 = vsel %vm4555, %v4530, %v4584
      %v4610 = vsel %vm4556, %v4531, %v4585
      %v4611 = vsel %vm4557, %v4532, %v4586
      %v4612 = vsel %vm4558, %v4533, %v4587
      %v4613 = vsel %vm4559, %v4534, %v4588
      %v4614 = vsel %vm4560, %v4535, %v4589
      %v4615 = vsel %vm4561, %v4536, %v4590
      %v4616 = vsel %vm4562, %v4537, %v4591
      %v4617 = vsel %vm4563, %v4538, %v4592
      %v4618 = vsel %vm4564, %v4539, %v4593
      %v4619 = vsel %vm4565, %v4540, %v4594
      %v4620 = vsel %vm4566, %v4541, %v4595
      %v4621 = vsel %vm4567, %v4542, %v4596
      %v4622 = vsel %vm2301, %v4597, 0.0
      %v4623 = vsel %vm2301, %v4598, 0.0
      %v4624 = vadd.f32 %v4622, %v4623
      %v4625 = vsel %vm2301, %v4599, 0.0
      %v4626 = vadd.f32 %v4624, %v4625
      %v4627 = vsel %vm2301, %v4600, 0.0
      %v4628 = vadd.f32 %v4626, %v4627
      %v4629 = vsel %vm2301, %v4601, 0.0
      %v4630 = vadd.f32 %v4628, %v4629
      %v4631 = vsel %vm2301, %v4602, 0.0
      %v4632 = vadd.f32 %v4630, %v4631
      %v4633 = vsel %vm2301, %v4603, 0.0
      %v4634 = vadd.f32 %v4632, %v4633
      %v4635 = vsel %vm2301, %v4604, 0.0
      %v4636 = vadd.f32 %v4634, %v4635
      %v4637 = vsel %vm2301, %v4605, 0.0
      %v4638 = vadd.f32 %v4636, %v4637
      %v4639 = vsel %vm2301, %v4606, 0.0
      %v4640 = vadd.f32 %v4638, %v4639
      %v4641 = vsel %vm2301, %v4607, 0.0
      %v4642 = vadd.f32 %v4640, %v4641
      %v4643 = vsel %vm2301, %v4608, 0.0
      %v4644 = vadd.f32 %v4642, %v4643
      %v4645 = vsel %vm2301, %v4609, 0.0
      %v4646 = vadd.f32 %v4644, %v4645
      %v4647 = vsel %vm2301, %v4610, 0.0
      %v4648 = vadd.f32 %v4646, %v4647
      %v4649 = vsel %vm2301, %v4611, 0.0
      %v4650 = vadd.f32 %v4648, %v4649
      %v4651 = vsel %vm2301, %v4612, 0.0
      %v4652 = vadd.f32 %v4650, %v4651
      %v4653 = vsel %vm2301, %v4613, 0.0
      %v4654 = vadd.f32 %v4652, %v4653
      %v4655 = vsel %vm2301, %v4614, 0.0
      %v4656 = vadd.f32 %v4654, %v4655
      %v4657 = vsel %vm2301, %v4615, 0.0
      %v4658 = vadd.f32 %v4656, %v4657
      %v4659 = vsel %vm2301, %v4616, 0.0
      %v4660 = vadd.f32 %v4658, %v4659
      %v4661 = vsel %vm2301, %v4617, 0.0
      %v4662 = vadd.f32 %v4660, %v4661
      %v4663 = vsel %vm2301, %v4618, 0.0
      %v4664 = vadd.f32 %v4662, %v4663
      %v4665 = vsel %vm2301, %v4619, 0.0
      %v4666 = vadd.f32 %v4664, %v4665
      %v4667 = vsel %vm2301, %v4620, 0.0
      %v4668 = vadd.f32 %v4666, %v4667
      %v4669 = vsel %vm2349, %v4621, 0.0
      %v4670 = vadd.f32 %v4668, %v4669
      %4671 = vadd.xlane.f32.xlu0 %v4670
      %v4672 = vpop.xlane.xlu0 %4671
      %v4673 = vrot.slane %v4672, 4
      %v4674 = vadd.f32 %v4672, %v4673
      %v4675 = vrot.slane %v4674, 2
      %v4676 = vadd.f32 %v4674, %v4675
      %v4677 = vrot.slane %v4676, 1
      %v4678 = vadd.f32 %v4676, %v4677
      %s4679 = vtos %v4678
      %v4680 = vrcp.pop 9552.0
      %s4681 = vtos %v4680
      %s4682 = smul.f32 %s4679, %s4681
      %v4683 = vmul.f32 %v4597, %v4597
      %v4684 = vmul.f32 %v4598, %v4598
      %v4685 = vmul.f32 %v4599, %v4599
      %v4686 = vmul.f32 %v4600, %v4600
      %v4687 = vmul.f32 %v4601, %v4601
      %v4688 = vmul.f32 %v4602, %v4602
      %v4689 = vmul.f32 %v4603, %v4603
      %v4690 = vmul.f32 %v4604, %v4604
      %v4691 = vmul.f32 %v4605, %v4605
      %v4692 = vmul.f32 %v4606, %v4606
      %v4693 = vmul.f32 %v4607, %v4607
      %v4694 = vmul.f32 %v4608, %v4608
      %v4695 = vmul.f32 %v4609, %v4609
      %v4696 = vmul.f32 %v4610, %v4610
      %v4697 = vmul.f32 %v4611, %v4611
      %v4698 = vmul.f32 %v4612, %v4612
      %v4699 = vmul.f32 %v4613, %v4613
      %v4700 = vmul.f32 %v4614, %v4614
      %v4701 = vmul.f32 %v4615, %v4615
      %v4702 = vmul.f32 %v4616, %v4616
      %v4703 = vmul.f32 %v4617, %v4617
      %v4704 = vmul.f32 %v4618, %v4618
      %v4705 = vmul.f32 %v4619, %v4619
      %v4706 = vmul.f32 %v4620, %v4620
      %v4707 = vmul.f32 %v4621, %v4621
      %v4708 = vsel %vm2301, %v4683, 0.0
      %v4709 = vsel %vm2301, %v4684, 0.0
      %v4710 = vadd.f32 %v4708, %v4709
      %v4711 = vsel %vm2301, %v4685, 0.0
      %v4712 = vadd.f32 %v4710, %v4711
      %v4713 = vsel %vm2301, %v4686, 0.0
      %v4714 = vadd.f32 %v4712, %v4713
      %v4715 = vsel %vm2301, %v4687, 0.0
      %v4716 = vadd.f32 %v4714, %v4715
      %v4717 = vsel %vm2301, %v4688, 0.0
      %v4718 = vadd.f32 %v4716, %v4717
      %v4719 = vsel %vm2301, %v4689, 0.0
      %v4720 = vadd.f32 %v4718, %v4719
      %v4721 = vsel %vm2301, %v4690, 0.0
      %v4722 = vadd.f32 %v4720, %v4721
      %v4723 = vsel %vm2301, %v4691, 0.0
      %v4724 = vadd.f32 %v4722, %v4723
      %v4725 = vsel %vm2301, %v4692, 0.0
      %v4726 = vadd.f32 %v4724, %v4725
      %v4727 = vsel %vm2301, %v4693, 0.0
      %v4728 = vadd.f32 %v4726, %v4727
      %v4729 = vsel %vm2301, %v4694, 0.0
      %v4730 = vadd.f32 %v4728, %v4729
      %v4731 = vsel %vm2301, %v4695, 0.0
      %v4732 = vadd.f32 %v4730, %v4731
      %v4733 = vsel %vm2301, %v4696, 0.0
      %v4734 = vadd.f32 %v4732, %v4733
      %v4735 = vsel %vm2301, %v4697, 0.0
      %v4736 = vadd.f32 %v4734, %v4735
      %v4737 = vsel %vm2301, %v4698, 0.0
      %v4738 = vadd.f32 %v4736, %v4737
      %v4739 = vsel %vm2301, %v4699, 0.0
      %v4740 = vadd.f32 %v4738, %v4739
      %v4741 = vsel %vm2301, %v4700, 0.0
      %v4742 = vadd.f32 %v4740, %v4741
      %v4743 = vsel %vm2301, %v4701, 0.0
      %v4744 = vadd.f32 %v4742, %v4743
      %v4745 = vsel %vm2301, %v4702, 0.0
      %v4746 = vadd.f32 %v4744, %v4745
      %v4747 = vsel %vm2301, %v4703, 0.0
      %v4748 = vadd.f32 %v4746, %v4747
      %v4749 = vsel %vm2301, %v4704, 0.0
      %v4750 = vadd.f32 %v4748, %v4749
      %v4751 = vsel %vm2301, %v4705, 0.0
      %v4752 = vadd.f32 %v4750, %v4751
      %v4753 = vsel %vm2301, %v4706, 0.0
      %v4754 = vadd.f32 %v4752, %v4753
      %v4755 = vsel %vm2349, %v4707, 0.0
      %v4756 = vadd.f32 %v4754, %v4755
      %4757 = vadd.xlane.f32.xlu0 %v4756
      %v4758 = vpop.xlane.xlu0 %4757
      %v4759 = vrot.slane %v4758, 4
      %v4760 = vadd.f32 %v4758, %v4759
      %v4761 = vrot.slane %v4760, 2
      %v4762 = vadd.f32 %v4760, %v4761
      %v4763 = vrot.slane %v4762, 1
      %v4764 = vadd.f32 %v4762, %v4763
      %s4765 = vtos %v4764
      %v4766 = vrcp.pop 9552.0
      %s4767 = vtos %v4766
      %s4768 = smul.f32 %s4765, %s4767
      %s4769 = smul.f32 %s4682, %s4682
      %s4770 = ssub.f32 %s4768, %s4769
      %s4771 = smax.f32 %s4770, 0.0
      %v4772 = vstv %s4682
      %v4773 = vsub.f32 %v4597, %v4772
      %v4774 = vsub.f32 %v4598, %v4772
      %v4775 = vsub.f32 %v4599, %v4772
      %v4776 = vsub.f32 %v4600, %v4772
      %v4777 = vsub.f32 %v4601, %v4772
      %v4778 = vsub.f32 %v4602, %v4772
      %v4779 = vsub.f32 %v4603, %v4772
      %v4780 = vsub.f32 %v4604, %v4772
      %v4781 = vsub.f32 %v4605, %v4772
      %v4782 = vsub.f32 %v4606, %v4772
      %v4783 = vsub.f32 %v4607, %v4772
      %v4784 = vsub.f32 %v4608, %v4772
      %v4785 = vsub.f32 %v4609, %v4772
      %v4786 = vsub.f32 %v4610, %v4772
      %v4787 = vsub.f32 %v4611, %v4772
      %v4788 = vsub.f32 %v4612, %v4772
      %v4789 = vsub.f32 %v4613, %v4772
      %v4790 = vsub.f32 %v4614, %v4772
      %v4791 = vsub.f32 %v4615, %v4772
      %v4792 = vsub.f32 %v4616, %v4772
      %v4793 = vsub.f32 %v4617, %v4772
      %v4794 = vsub.f32 %v4618, %v4772
      %v4795 = vsub.f32 %v4619, %v4772
      %v4796 = vsub.f32 %v4620, %v4772
      %v4797 = vsub.f32 %v4621, %v4772
      %s4798 = sadd.f32 %s4771, 1e-08
      %v4799 = vstv %s4798
      %v4800 = vrsqrt.pop %v4799
      %s4801 = vtos %v4800
      %v4802 = vstv %s4801
      %v4803 = vmul.f32 %v4773, %v4802
      %v4804 = vmul.f32 %v4774, %v4802
      %v4805 = vmul.f32 %v4775, %v4802
      %v4806 = vmul.f32 %v4776, %v4802
      %v4807 = vmul.f32 %v4777, %v4802
      %v4808 = vmul.f32 %v4778, %v4802
      %v4809 = vmul.f32 %v4779, %v4802
      %v4810 = vmul.f32 %v4780, %v4802
      %v4811 = vmul.f32 %v4781, %v4802
      %v4812 = vmul.f32 %v4782, %v4802
      %v4813 = vmul.f32 %v4783, %v4802
      %v4814 = vmul.f32 %v4784, %v4802
      %v4815 = vmul.f32 %v4785, %v4802
      %v4816 = vmul.f32 %v4786, %v4802
      %v4817 = vmul.f32 %v4787, %v4802
      %v4818 = vmul.f32 %v4788, %v4802
      %v4819 = vmul.f32 %v4789, %v4802
      %v4820 = vmul.f32 %v4790, %v4802
      %v4821 = vmul.f32 %v4791, %v4802
      %v4822 = vmul.f32 %v4792, %v4802
      %v4823 = vmul.f32 %v4793, %v4802
      %v4824 = vmul.f32 %v4794, %v4802
      %v4825 = vmul.f32 %v4795, %v4802
      %v4826 = vmul.f32 %v4796, %v4802
      %v4827 = vmul.f32 %v4797, %v4802
      %v4828 = vlaneseq
      %v4829 = vshrl.u32 %v4828, 7
      %v4830 = vsub.s32 1, %v4829
      %v4831 = vrot.slane %v3582, %v4830
      %v4832 = vmul.f32 %v4803, %v4831
      %v4833 = vmul.f32 %v4804, %v4831
      %v4834 = vmul.f32 %v4805, %v4831
      %v4835 = vmul.f32 %v4806, %v4831
      %v4836 = vmul.f32 %v4807, %v4831
      %v4837 = vmul.f32 %v4808, %v4831
      %v4838 = vmul.f32 %v4809, %v4831
      %v4839 = vmul.f32 %v4810, %v4831
      %v4840 = vmul.f32 %v4811, %v4831
      %v4841 = vmul.f32 %v4812, %v4831
      %v4842 = vmul.f32 %v4813, %v4831
      %v4843 = vmul.f32 %v4814, %v4831
      %v4844 = vmul.f32 %v4815, %v4831
      %v4845 = vmul.f32 %v4816, %v4831
      %v4846 = vmul.f32 %v4817, %v4831
      %v4847 = vmul.f32 %v4818, %v4831
      %v4848 = vmul.f32 %v4819, %v4831
      %v4849 = vmul.f32 %v4820, %v4831
      %v4850 = vmul.f32 %v4821, %v4831
      %v4851 = vmul.f32 %v4822, %v4831
      %v4852 = vmul.f32 %v4823, %v4831
      %v4853 = vmul.f32 %v4824, %v4831
      %v4854 = vmul.f32 %v4825, %v4831
      %v4855 = vmul.f32 %v4826, %v4831
      %v4856 = vmul.f32 %v4827, %v4831
      %v4857 = vlaneseq
      %v4858 = vshrl.u32 %v4857, 7
      %v4859 = vsub.s32 2, %v4858
      %v4860 = vrot.slane %v3582, %v4859
      %v4861 = vadd.f32 %v4832, %v4860
      %v4862 = vadd.f32 %v4833, %v4860
      %v4863 = vadd.f32 %v4834, %v4860
      %v4864 = vadd.f32 %v4835, %v4860
      %v4865 = vadd.f32 %v4836, %v4860
      %v4866 = vadd.f32 %v4837, %v4860
      %v4867 = vadd.f32 %v4838, %v4860
      %v4868 = vadd.f32 %v4839, %v4860
      %v4869 = vadd.f32 %v4840, %v4860
      %v4870 = vadd.f32 %v4841, %v4860
      %v4871 = vadd.f32 %v4842, %v4860
      %v4872 = vadd.f32 %v4843, %v4860
      %v4873 = vadd.f32 %v4844, %v4860
      %v4874 = vadd.f32 %v4845, %v4860
      %v4875 = vadd.f32 %v4846, %v4860
      %v4876 = vadd.f32 %v4847, %v4860
      %v4877 = vadd.f32 %v4848, %v4860
      %v4878 = vadd.f32 %v4849, %v4860
      %v4879 = vadd.f32 %v4850, %v4860
      %v4880 = vadd.f32 %v4851, %v4860
      %v4881 = vadd.f32 %v4852, %v4860
      %v4882 = vadd.f32 %v4853, %v4860
      %v4883 = vadd.f32 %v4854, %v4860
      %v4884 = vadd.f32 %v4855, %v4860
      %v4885 = vadd.f32 %v4856, %v4860
      %s4886 = scalar_lea.vmem %s9, 48
      %v4887 = vld [vmem:[%s4886] sm:$0xff]
      %v4888 = vld [vmem:[%s4886 + $0x8] sm:$0xff]
      %v4889 = vld [vmem:[%s4886 + $0x10] sm:$0xff]
      %v4890 = vld [vmem:[%s4886 + $0x18] sm:$0xff]
      %v4891 = vld [vmem:[%s4886 + $0x20] sm:$0xff]
      %v4892 = vld [vmem:[%s4886 + $0x28] sm:$0xff]
      %v4894 = vsel %vm2301, %v4861, 0
      %v4897 = vsel %vm2301, %v4862, 0
      %v4900 = vsel %vm2301, %v4863, 0
      %v4903 = vsel %vm2301, %v4864, 0
      %v4906 = vsel %vm2301, %v4865, 0
      %v4909 = vsel %vm2301, %v4866, 0
      %v4912 = vsel %vm2301, %v4867, 0
      %v4915 = vsel %vm2301, %v4868, 0
      %v4918 = vsel %vm2301, %v4869, 0
      %v4921 = vsel %vm2301, %v4870, 0
      %v4924 = vsel %vm2301, %v4871, 0
      %v4927 = vsel %vm2301, %v4872, 0
      %v4930 = vsel %vm2301, %v4873, 0
      %v4933 = vsel %vm2301, %v4874, 0
      %v4936 = vsel %vm2301, %v4875, 0
      %v4939 = vsel %vm2301, %v4876, 0
      %v4942 = vsel %vm2301, %v4877, 0
      %v4945 = vsel %vm2301, %v4878, 0
      %v4948 = vsel %vm2301, %v4879, 0
      %v4951 = vsel %vm2301, %v4880, 0
      %v4954 = vsel %vm2301, %v4881, 0
      %v4957 = vsel %vm2301, %v4882, 0
      %v4960 = vsel %vm2301, %v4883, 0
      %v4963 = vsel %vm2301, %v4884, 0
      %v4966 = vsel %vm2301, %v4885, 0
      %4968 = vmatprep.subr.mxu0 0.0
      %4969 = vmatpush1.msra.mxu0 %v4887
      %4970 = vmatprep.subr.mxu0 0.0
      %4971 = vmatpush1.msra.mxu0 %v4888
      %4972 = vmatprep.subr.mxu0 0.0
      %4973 = vmatpush1.msra.mxu0 %v4889
      %4974 = vmatprep.subr.mxu0 0.0
      %4975 = vmatpush1.msra.mxu0 %v4890
      %4976 = vmatprep.subr.mxu0 0.0
      %4977 = vmatpush1.msra.mxu0 %v4891
      %4978 = vmatprep.subr.mxu0 0.0
      %4979 = vmatpush1.msra.mxu0 %v4892
      %4980 = vmatprep.subr.mxu0 0.0
      %4981 = vmatpush1.msra.mxu0 0.0
      %4982 = vmatprep.subr.mxu0 0.0
      %4983 = vmatpush1.msra.mxu0 0.0
      %4984 = vmatprep.subr.mxu0 0.0
      %4985 = vmatpush1.msra.mxu0 0.0
      %4986 = vmatprep.subr.mxu0 0.0
      %4987 = vmatpush1.msra.mxu0 0.0
      %4988 = vmatprep.subr.mxu0 0.0
      %4989 = vmatpush1.msra.mxu0 0.0
      %4990 = vmatprep.subr.mxu0 0.0
      %4991 = vmatpush1.msra.mxu0 0.0
      %4992 = vmatprep.subr.mxu0 0.0
      %4993 = vmatpush1.msra.mxu0 0.0
      %4994 = vmatprep.subr.mxu0 0.0
      %4995 = vmatpush1.msra.mxu0 0.0
      %4996 = vmatprep.subr.mxu0 0.0
      %4997 = vmatpush1.msra.mxu0 0.0
      %4998 = vmatprep.subr.mxu0 0.0
      %4999 = vmatpush1.msra.mxu0 0.0
      %5000 = vmatprep.subr.mxu0 0.0
      %5001 = vmatpush1.msra.mxu0 0.0
      %5002 = vmatprep.subr.mxu0 0.0
      %5003 = vmatpush1.msra.mxu0 0.0
      %5004 = vmatprep.subr.mxu0 0.0
      %5005 = vmatpush1.msra.mxu0 0.0
      %5006 = vmatprep.subr.mxu0 0.0
      %5007 = vmatpush1.msra.mxu0 0.0
      %5008 = vmatprep.subr.mxu0 0.0
      %5009 = vmatpush1.msra.mxu0 0.0
      %5010 = vmatprep.subr.mxu0 0.0
      %5011 = vmatpush1.msra.mxu0 0.0
      %5012 = vmatprep.subr.mxu0 0.0
      %5013 = vmatpush1.msra.mxu0 0.0
      %5014 = vmatprep.subr.mxu0 0.0
      %5015 = vmatpush1.msra.mxu0 0.0
      %5016 = vmatprep.subr.mxu0 0.0
      %5017 = vmatpush1.msra.mxu0 0.0
      %5018 = vmatprep.subr.mxu0 0.0
      %5019 = vmatpush1.msra.mxu0 0.0
      %5020 = vmatprep.subr.mxu0 0.0
      %5021 = vmatpush1.msra.mxu0 0.0
      %5022 = vmatprep.subr.mxu0 0.0
      %5023 = vmatpush1.msra.mxu0 0.0
      %5024 = vmatprep.subr.mxu0 0.0
      %5025 = vmatpush1.msra.mxu0 0.0
      %5026 = vmatprep.subr.mxu0 0.0
      %5027 = vmatpush1.msra.mxu0 0.0
      %5028 = vmatprep.subr.mxu0 0.0
      %5029 = vmatpush1.msra.mxu0 0.0
      %5030 = vmatprep.subr.mxu0 0.0
      %5031 = vmatpush1.msra.mxu0 0.0
      %5032 = vmatprep.mubr.f32.mxu0 0.0
      %5033 = vmatmul.mubr.f32.gmra.mrb[0].mxu0 %v4894
      %v5034 = vpop.f32.mrb[0].mxu0
      %v5035 = vadd.f32 0.0, %v5034
      %v5036 = vpop.f32.mrb[0].mxu0
      %5037 = vmatprep.mubr.f32.mxu0 0.0
      %5038 = vmatmul.mubr.f32.gmra.mrb[0].mxu0 %v4897
      %v5039 = vpop.f32.mrb[0].mxu0
      %v5040 = vadd.f32 0.0, %v5039
      %v5041 = vpop.f32.mrb[0].mxu0
      %5042 = vmatprep.mubr.f32.mxu0 0.0
      %5043 = vmatmul.mubr.f32.gmra.mrb[0].mxu0 %v4900
      %v5044 = vpop.f32.mrb[0].mxu0
      %v5045 = vadd.f32 0.0, %v5044
      %v5046 = vpop.f32.mrb[0].mxu0
      %5047 = vmatprep.mubr.f32.mxu0 0.0
      %5048 = vmatmul.mubr.f32.gmra.mrb[0].mxu0 %v4903
      %v5049 = vpop.f32.mrb[0].mxu0
      %v5050 = vadd.f32 0.0, %v5049
      %v5051 = vpop.f32.mrb[0].mxu0
      %5052 = vmatprep.mubr.f32.mxu0 0.0
      %5053 = vmatmul.mubr.f32.gmra.mrb[0].mxu0 %v4906
      %v5054 = vpop.f32.mrb[0].mxu0
      %v5055 = vadd.f32 0.0, %v5054
      %v5056 = vpop.f32.mrb[0].mxu0
      %5057 = vmatprep.mubr.f32.mxu0 0.0
      %5058 = vmatmul.mubr.f32.gmra.mrb[0].mxu0 %v4909
      %v5059 = vpop.f32.mrb[0].mxu0
      %v5060 = vadd.f32 0.0, %v5059
      %v5061 = vpop.f32.mrb[0].mxu0
      %5062 = vmatprep.mubr.f32.mxu0 0.0
      %5063 = vmatmul.mubr.f32.gmra.mrb[0].mxu0 %v4912
      %v5064 = vpop.f32.mrb[0].mxu0
      %v5065 = vadd.f32 0.0, %v5064
      %v5066 = vpop.f32.mrb[0].mxu0
      %5067 = vmatprep.mubr.f32.mxu0 0.0
      %5068 = vmatmul.mubr.f32.gmra.mrb[0].mxu0 %v4915
      %v5069 = vpop.f32.mrb[0].mxu0
      %v5070 = vadd.f32 0.0, %v5069
      %v5071 = vpop.f32.mrb[0].mxu0
      %5072 = vmatprep.mubr.f32.mxu0 0.0
      %5073 = vmatmul.mubr.f32.gmra.mrb[0].mxu0 %v4918
      %v5074 = vpop.f32.mrb[0].mxu0
      %v5075 = vadd.f32 0.0, %v5074
      %v5076 = vpop.f32.mrb[0].mxu0
      %5077 = vmatprep.mubr.f32.mxu0 0.0
      %5078 = vmatmul.mubr.f32.gmra.mrb[0].mxu0 %v4921
      %v5079 = vpop.f32.mrb[0].mxu0
      %v5080 = vadd.f32 0.0, %v5079
      %v5081 = vpop.f32.mrb[0].mxu0
      %5082 = vmatprep.mubr.f32.mxu0 0.0
      %5083 = vmatmul.mubr.f32.gmra.mrb[0].mxu0 %v4924
      %v5084 = vpop.f32.mrb[0].mxu0
      %v5085 = vadd.f32 0.0, %v5084
      %v5086 = vpop.f32.mrb[0].mxu0
      %5087 = vmatprep.mubr.f32.mxu0 0.0
      %5088 = vmatmul.mubr.f32.gmra.mrb[0].mxu0 %v4927
      %v5089 = vpop.f32.mrb[0].mxu0
      %v5090 = vadd.f32 0.0, %v5089
      %v5091 = vpop.f32.mrb[0].mxu0
      %5092 = vmatprep.mubr.f32.mxu0 0.0
      %5093 = vmatmul.mubr.f32.gmra.mrb[0].mxu0 %v4930
      %v5094 = vpop.f32.mrb[0].mxu0
      %v5095 = vadd.f32 0.0, %v5094
      %v5096 = vpop.f32.mrb[0].mxu0
      %5097 = vmatprep.mubr.f32.mxu0 0.0
      %5098 = vmatmul.mubr.f32.gmra.mrb[0].mxu0 %v4933
      %v5099 = vpop.f32.mrb[0].mxu0
      %v5100 = vadd.f32 0.0, %v5099
      %v5101 = vpop.f32.mrb[0].mxu0
      %5102 = vmatprep.mubr.f32.mxu0 0.0
      %5103 = vmatmul.mubr.f32.gmra.mrb[0].mxu0 %v4936
      %v5104 = vpop.f32.mrb[0].mxu0
      %v5105 = vadd.f32 0.0, %v5104
      %v5106 = vpop.f32.mrb[0].mxu0
      %5107 = vmatprep.mubr.f32.mxu0 0.0
      %5108 = vmatmul.mubr.f32.gmra.mrb[0].mxu0 %v4939
      %v5109 = vpop.f32.mrb[0].mxu0
      %v5110 = vadd.f32 0.0, %v5109
      %v5111 = vpop.f32.mrb[0].mxu0
      %5112 = vmatprep.mubr.f32.mxu0 0.0
      %5113 = vmatmul.mubr.f32.gmra.mrb[0].mxu0 %v4942
      %v5114 = vpop.f32.mrb[0].mxu0
      %v5115 = vadd.f32 0.0, %v5114
      %v5116 = vpop.f32.mrb[0].mxu0
      %5117 = vmatprep.mubr.f32.mxu0 0.0
      %5118 = vmatmul.mubr.f32.gmra.mrb[0].mxu0 %v4945
      %v5119 = vpop.f32.mrb[0].mxu0
      %v5120 = vadd.f32 0.0, %v5119
      %v5121 = vpop.f32.mrb[0].mxu0
      %5122 = vmatprep.mubr.f32.mxu0 0.0
      %5123 = vmatmul.mubr.f32.gmra.mrb[0].mxu0 %v4948
      %v5124 = vpop.f32.mrb[0].mxu0
      %v5125 = vadd.f32 0.0, %v5124
      %v5126 = vpop.f32.mrb[0].mxu0
      %5127 = vmatprep.mubr.f32.mxu0 0.0
      %5128 = vmatmul.mubr.f32.gmra.mrb[0].mxu0 %v4951
      %v5129 = vpop.f32.mrb[0].mxu0
      %v5130 = vadd.f32 0.0, %v5129
      %v5131 = vpop.f32.mrb[0].mxu0
      %5132 = vmatprep.mubr.f32.mxu0 0.0
      %5133 = vmatmul.mubr.f32.gmra.mrb[0].mxu0 %v4954
      %v5134 = vpop.f32.mrb[0].mxu0
      %v5135 = vadd.f32 0.0, %v5134
      %v5136 = vpop.f32.mrb[0].mxu0
      %5137 = vmatprep.mubr.f32.mxu0 0.0
      %5138 = vmatmul.mubr.f32.gmra.mrb[0].mxu0 %v4957
      %v5139 = vpop.f32.mrb[0].mxu0
      %v5140 = vadd.f32 0.0, %v5139
      %v5141 = vpop.f32.mrb[0].mxu0
      %5142 = vmatprep.mubr.f32.mxu0 0.0
      %5143 = vmatmul.mubr.f32.gmra.mrb[0].mxu0 %v4960
      %v5144 = vpop.f32.mrb[0].mxu0
      %v5145 = vadd.f32 0.0, %v5144
      %v5146 = vpop.f32.mrb[0].mxu0
      %5147 = vmatprep.mubr.f32.mxu0 0.0
      %5148 = vmatmul.mubr.f32.gmra.mrb[0].mxu0 %v4963
      %v5149 = vpop.f32.mrb[0].mxu0
      %v5150 = vadd.f32 0.0, %v5149
      %v5151 = vpop.f32.mrb[0].mxu0
      %5152 = vmatprep.mubr.f32.mxu0 0.0
      %5153 = vmatmul.mubr.f32.gmra.mrb[0].mxu0 %v4966
      %v5154 = vpop.f32.mrb[0].mxu0
      %v5155 = vadd.f32 0.0, %v5154
      %v5156 = vpop.f32.mrb[0].mxu0
      %5157 = vdwg.mxu0
      %v5158 = vadd.f32 %v3555, %v5035
      %v5159 = vadd.f32 %v3556, %v5040
      %v5160 = vadd.f32 %v3557, %v5045
      %v5161 = vadd.f32 %v3558, %v5050
      %v5162 = vadd.f32 %v3559, %v5055
      %v5163 = vadd.f32 %v3560, %v5060
      %v5164 = vadd.f32 %v3561, %v5065
      %v5165 = vadd.f32 %v3562, %v5070
      %v5166 = vadd.f32 %v3563, %v5075
      %v5167 = vadd.f32 %v3564, %v5080
      %v5168 = vadd.f32 %v3565, %v5085
      %v5169 = vadd.f32 %v3566, %v5090
      %v5170 = vadd.f32 %v3567, %v5095
      %v5171 = vadd.f32 %v3568, %v5100
      %v5172 = vadd.f32 %v3569, %v5105
      %v5173 = vadd.f32 %v3570, %v5110
      %v5174 = vadd.f32 %v3571, %v5115
      %v5175 = vadd.f32 %v3572, %v5120
      %v5176 = vadd.f32 %v3573, %v5125
      %v5177 = vadd.f32 %v3574, %v5130
      %v5178 = vadd.f32 %v3575, %v5135
      %v5179 = vadd.f32 %v3576, %v5140
      %v5180 = vadd.f32 %v3577, %v5145
      %v5181 = vadd.f32 %v3578, %v5150
      %v5182 = vadd.f32 %v3579, %v5155
      %v5183 = vld [vmem:[%s4 + $0x6] sm:$0x1]
      %v5184 = vlaneseq
      %v5185 = vshrl.u32 %v5184, 7
      %v5186 = vsub.s32 0, %v5185
      %v5187 = vrot.slane %v5183, %v5186
      %v5188 = vadd.f32 %v5158, %v5187
      %v5189 = vadd.f32 %v5159, %v5187
      %v5190 = vadd.f32 %v5160, %v5187
      %v5191 = vadd.f32 %v5161, %v5187
      %v5192 = vadd.f32 %v5162, %v5187
      %v5193 = vadd.f32 %v5163, %v5187
      %v5194 = vadd.f32 %v5164, %v5187
      %v5195 = vadd.f32 %v5165, %v5187
      %v5196 = vadd.f32 %v5166, %v5187
      %v5197 = vadd.f32 %v5167, %v5187
      %v5198 = vadd.f32 %v5168, %v5187
      %v5199 = vadd.f32 %v5169, %v5187
      %v5200 = vadd.f32 %v5170, %v5187
      %v5201 = vadd.f32 %v5171, %v5187
      %v5202 = vadd.f32 %v5172, %v5187
      %v5203 = vadd.f32 %v5173, %v5187
      %v5204 = vadd.f32 %v5174, %v5187
      %v5205 = vadd.f32 %v5175, %v5187
      %v5206 = vadd.f32 %v5176, %v5187
      %v5207 = vadd.f32 %v5177, %v5187
      %v5208 = vadd.f32 %v5178, %v5187
      %v5209 = vadd.f32 %v5179, %v5187
      %v5210 = vadd.f32 %v5180, %v5187
      %v5211 = vadd.f32 %v5181, %v5187
      %v5212 = vadd.f32 %v5182, %v5187
      %v5213 = vld [vmem:[%s10] sm:$0xff]
      %v5214 = vld [vmem:[%s10 + $0x8] sm:$0xff]
      %v5215 = vld [vmem:[%s10 + $0x10] sm:$0xff]
      %v5216 = vld [vmem:[%s10 + $0x18] sm:$0xff]
      %v5217 = vld [vmem:[%s4 + $0x4] sm:$0x1]
      %v5218 = vlaneseq
      %v5219 = vshrl.u32 %v5218, 7
      %v5220 = vsub.s32 0, %v5219
      %v5221 = vrot.slane %v5217, %v5220
      %v5223 = vsel %vm1101, %v5188, 0
      %v5226 = vsel %vm1101, %v5189, 0
      %v5229 = vsel %vm1101, %v5190, 0
      %v5232 = vsel %vm1101, %v5191, 0
      %v5235 = vsel %vm1101, %v5192, 0
      %v5238 = vsel %vm1101, %v5193, 0
      %v5241 = vsel %vm1101, %v5194, 0
      %v5244 = vsel %vm1101, %v5195, 0
      %v5247 = vsel %vm1101, %v5196, 0
      %v5250 = vsel %vm1101, %v5197, 0
      %v5253 = vsel %vm1101, %v5198, 0
      %v5256 = vsel %vm1101, %v5199, 0
      %v5259 = vsel %vm1101, %v5200, 0
      %v5262 = vsel %vm1101, %v5201, 0
      %v5265 = vsel %vm1101, %v5202, 0
      %v5268 = vsel %vm1101, %v5203, 0
      %v5271 = vsel %vm1101, %v5204, 0
      %v5274 = vsel %vm1101, %v5205, 0
      %v5277 = vsel %vm1101, %v5206, 0
      %v5280 = vsel %vm1101, %v5207, 0
      %v5283 = vsel %vm1101, %v5208, 0
      %v5286 = vsel %vm1101, %v5209, 0
      %v5289 = vsel %vm1101, %v5210, 0
      %v5292 = vsel %vm1101, %v5211, 0
      %v5295 = vsel %vm1101, %v5212, 0
      %5297 = vmatprep.subr.mxu0 0.0
      %5298 = vmatpush1.msra.mxu0 %v5213
      %5299 = vmatprep.subr.mxu0 0.0
      %5300 = vmatpush1.msra.mxu0 %v5214
      %5301 = vmatprep.subr.mxu0 0.0
      %5302 = vmatpush1.msra.mxu0 %v5215
      %5303 = vmatprep.subr.mxu0 0.0
      %5304 = vmatpush1.msra.mxu0 %v5216
      %5305 = vmatprep.subr.mxu0 0.0
      %5306 = vmatpush1.msra.mxu0 0.0
      %5307 = vmatprep.subr.mxu0 0.0
      %5308 = vmatpush1.msra.mxu0 0.0
      %5309 = vmatprep.subr.mxu0 0.0
      %5310 = vmatpush1.msra.mxu0 0.0
      %5311 = vmatprep.subr.mxu0 0.0
      %5312 = vmatpush1.msra.mxu0 0.0
      %5313 = vmatprep.subr.mxu0 0.0
      %5314 = vmatpush1.msra.mxu0 0.0
      %5315 = vmatprep.subr.mxu0 0.0
      %5316 = vmatpush1.msra.mxu0 0.0
      %5317 = vmatprep.subr.mxu0 0.0
      %5318 = vmatpush1.msra.mxu0 0.0
      %5319 = vmatprep.subr.mxu0 0.0
      %5320 = vmatpush1.msra.mxu0 0.0
      %5321 = vmatprep.subr.mxu0 0.0
      %5322 = vmatpush1.msra.mxu0 0.0
      %5323 = vmatprep.subr.mxu0 0.0
      %5324 = vmatpush1.msra.mxu0 0.0
      %5325 = vmatprep.subr.mxu0 0.0
      %5326 = vmatpush1.msra.mxu0 0.0
      %5327 = vmatprep.subr.mxu0 0.0
      %5328 = vmatpush1.msra.mxu0 0.0
      %5329 = vmatprep.subr.mxu0 0.0
      %5330 = vmatpush1.msra.mxu0 0.0
      %5331 = vmatprep.subr.mxu0 0.0
      %5332 = vmatpush1.msra.mxu0 0.0
      %5333 = vmatprep.subr.mxu0 0.0
      %5334 = vmatpush1.msra.mxu0 0.0
      %5335 = vmatprep.subr.mxu0 0.0
      %5336 = vmatpush1.msra.mxu0 0.0
      %5337 = vmatprep.subr.mxu0 0.0
      %5338 = vmatpush1.msra.mxu0 0.0
      %5339 = vmatprep.subr.mxu0 0.0
      %5340 = vmatpush1.msra.mxu0 0.0
      %5341 = vmatprep.subr.mxu0 0.0
      %5342 = vmatpush1.msra.mxu0 0.0
      %5343 = vmatprep.subr.mxu0 0.0
      %5344 = vmatpush1.msra.mxu0 0.0
      %5345 = vmatprep.subr.mxu0 0.0
      %5346 = vmatpush1.msra.mxu0 0.0
      %5347 = vmatprep.subr.mxu0 0.0
      %5348 = vmatpush1.msra.mxu0 0.0
      %5349 = vmatprep.subr.mxu0 0.0
      %5350 = vmatpush1.msra.mxu0 0.0
      %5351 = vmatprep.subr.mxu0 0.0
      %5352 = vmatpush1.msra.mxu0 0.0
      %5353 = vmatprep.subr.mxu0 0.0
      %5354 = vmatpush1.msra.mxu0 0.0
      %5355 = vmatprep.subr.mxu0 0.0
      %5356 = vmatpush1.msra.mxu0 0.0
      %5357 = vmatprep.subr.mxu0 0.0
      %5358 = vmatpush1.msra.mxu0 0.0
      %5359 = vmatprep.subr.mxu0 0.0
      %5360 = vmatpush1.msra.mxu0 0.0
      %5361 = vmatprep.mubr.f32.mxu0 0.0
      %5362 = vmatmul.mubr.f32.gmra.mrb[0].mxu0 %v5223
      %v5363 = vpop.f32.mrb[0].mxu0
      %v5364 = vadd.f32 %v5221, %v5363
      %v5365 = vpop.f32.mrb[0].mxu0
      %5366 = vmatprep.mubr.f32.mxu0 0.0
      %5367 = vmatmul.mubr.f32.gmra.mrb[0].mxu0 %v5226
      %v5368 = vpop.f32.mrb[0].mxu0
      %v5369 = vadd.f32 %v5221, %v5368
      %v5370 = vpop.f32.mrb[0].mxu0
      %5371 = vmatprep.mubr.f32.mxu0 0.0
      %5372 = vmatmul.mubr.f32.gmra.mrb[0].mxu0 %v5229
      %v5373 = vpop.f32.mrb[0].mxu0
      %v5374 = vadd.f32 %v5221, %v5373
      %v5375 = vpop.f32.mrb[0].mxu0
      %5376 = vmatprep.mubr.f32.mxu0 0.0
      %5377 = vmatmul.mubr.f32.gmra.mrb[0].mxu0 %v5232
      %v5378 = vpop.f32.mrb[0].mxu0
      %v5379 = vadd.f32 %v5221, %v5378
      %v5380 = vpop.f32.mrb[0].mxu0
      %5381 = vmatprep.mubr.f32.mxu0 0.0
      %5382 = vmatmul.mubr.f32.gmra.mrb[0].mxu0 %v5235
      %v5383 = vpop.f32.mrb[0].mxu0
      %v5384 = vadd.f32 %v5221, %v5383
      %v5385 = vpop.f32.mrb[0].mxu0
      %5386 = vmatprep.mubr.f32.mxu0 0.0
      %5387 = vmatmul.mubr.f32.gmra.mrb[0].mxu0 %v5238
      %v5388 = vpop.f32.mrb[0].mxu0
      %v5389 = vadd.f32 %v5221, %v5388
      %v5390 = vpop.f32.mrb[0].mxu0
      %5391 = vmatprep.mubr.f32.mxu0 0.0
      %5392 = vmatmul.mubr.f32.gmra.mrb[0].mxu0 %v5241
      %v5393 = vpop.f32.mrb[0].mxu0
      %v5394 = vadd.f32 %v5221, %v5393
      %v5395 = vpop.f32.mrb[0].mxu0
      %5396 = vmatprep.mubr.f32.mxu0 0.0
      %5397 = vmatmul.mubr.f32.gmra.mrb[0].mxu0 %v5244
      %v5398 = vpop.f32.mrb[0].mxu0
      %v5399 = vadd.f32 %v5221, %v5398
      %v5400 = vpop.f32.mrb[0].mxu0
      %5401 = vmatprep.mubr.f32.mxu0 0.0
      %5402 = vmatmul.mubr.f32.gmra.mrb[0].mxu0 %v5247
      %v5403 = vpop.f32.mrb[0].mxu0
      %v5404 = vadd.f32 %v5221, %v5403
      %v5405 = vpop.f32.mrb[0].mxu0
      %5406 = vmatprep.mubr.f32.mxu0 0.0
      %5407 = vmatmul.mubr.f32.gmra.mrb[0].mxu0 %v5250
      %v5408 = vpop.f32.mrb[0].mxu0
      %v5409 = vadd.f32 %v5221, %v5408
      %v5410 = vpop.f32.mrb[0].mxu0
      %5411 = vmatprep.mubr.f32.mxu0 0.0
      %5412 = vmatmul.mubr.f32.gmra.mrb[0].mxu0 %v5253
      %v5413 = vpop.f32.mrb[0].mxu0
      %v5414 = vadd.f32 %v5221, %v5413
      %v5415 = vpop.f32.mrb[0].mxu0
      %5416 = vmatprep.mubr.f32.mxu0 0.0
      %5417 = vmatmul.mubr.f32.gmra.mrb[0].mxu0 %v5256
      %v5418 = vpop.f32.mrb[0].mxu0
      %v5419 = vadd.f32 %v5221, %v5418
      %v5420 = vpop.f32.mrb[0].mxu0
      %5421 = vmatprep.mubr.f32.mxu0 0.0
      %5422 = vmatmul.mubr.f32.gmra.mrb[0].mxu0 %v5259
      %v5423 = vpop.f32.mrb[0].mxu0
      %v5424 = vadd.f32 %v5221, %v5423
      %v5425 = vpop.f32.mrb[0].mxu0
      %5426 = vmatprep.mubr.f32.mxu0 0.0
      %5427 = vmatmul.mubr.f32.gmra.mrb[0].mxu0 %v5262
      %v5428 = vpop.f32.mrb[0].mxu0
      %v5429 = vadd.f32 %v5221, %v5428
      %v5430 = vpop.f32.mrb[0].mxu0
      %5431 = vmatprep.mubr.f32.mxu0 0.0
      %5432 = vmatmul.mubr.f32.gmra.mrb[0].mxu0 %v5265
      %v5433 = vpop.f32.mrb[0].mxu0
      %v5434 = vadd.f32 %v5221, %v5433
      %v5435 = vpop.f32.mrb[0].mxu0
      %5436 = vmatprep.mubr.f32.mxu0 0.0
      %5437 = vmatmul.mubr.f32.gmra.mrb[0].mxu0 %v5268
      %v5438 = vpop.f32.mrb[0].mxu0
      %v5439 = vadd.f32 %v5221, %v5438
      %v5440 = vpop.f32.mrb[0].mxu0
      %5441 = vmatprep.mubr.f32.mxu0 0.0
      %5442 = vmatmul.mubr.f32.gmra.mrb[0].mxu0 %v5271
      %v5443 = vpop.f32.mrb[0].mxu0
      %v5444 = vadd.f32 %v5221, %v5443
      %v5445 = vpop.f32.mrb[0].mxu0
      %5446 = vmatprep.mubr.f32.mxu0 0.0
      %5447 = vmatmul.mubr.f32.gmra.mrb[0].mxu0 %v5274
      %v5448 = vpop.f32.mrb[0].mxu0
      %v5449 = vadd.f32 %v5221, %v5448
      %v5450 = vpop.f32.mrb[0].mxu0
      %5451 = vmatprep.mubr.f32.mxu0 0.0
      %5452 = vmatmul.mubr.f32.gmra.mrb[0].mxu0 %v5277
      %v5453 = vpop.f32.mrb[0].mxu0
      %v5454 = vadd.f32 %v5221, %v5453
      %v5455 = vpop.f32.mrb[0].mxu0
      %5456 = vmatprep.mubr.f32.mxu0 0.0
      %5457 = vmatmul.mubr.f32.gmra.mrb[0].mxu0 %v5280
      %v5458 = vpop.f32.mrb[0].mxu0
      %v5459 = vadd.f32 %v5221, %v5458
      %v5460 = vpop.f32.mrb[0].mxu0
      %5461 = vmatprep.mubr.f32.mxu0 0.0
      %5462 = vmatmul.mubr.f32.gmra.mrb[0].mxu0 %v5283
      %v5463 = vpop.f32.mrb[0].mxu0
      %v5464 = vadd.f32 %v5221, %v5463
      %v5465 = vpop.f32.mrb[0].mxu0
      %5466 = vmatprep.mubr.f32.mxu0 0.0
      %5467 = vmatmul.mubr.f32.gmra.mrb[0].mxu0 %v5286
      %v5468 = vpop.f32.mrb[0].mxu0
      %v5469 = vadd.f32 %v5221, %v5468
      %v5470 = vpop.f32.mrb[0].mxu0
      %5471 = vmatprep.mubr.f32.mxu0 0.0
      %5472 = vmatmul.mubr.f32.gmra.mrb[0].mxu0 %v5289
      %v5473 = vpop.f32.mrb[0].mxu0
      %v5474 = vadd.f32 %v5221, %v5473
      %v5475 = vpop.f32.mrb[0].mxu0
      %5476 = vmatprep.mubr.f32.mxu0 0.0
      %5477 = vmatmul.mubr.f32.gmra.mrb[0].mxu0 %v5292
      %v5478 = vpop.f32.mrb[0].mxu0
      %v5479 = vadd.f32 %v5221, %v5478
      %v5480 = vpop.f32.mrb[0].mxu0
      %5481 = vmatprep.mubr.f32.mxu0 0.0
      %5482 = vmatmul.mubr.f32.gmra.mrb[0].mxu0 %v5295
      %v5483 = vpop.f32.mrb[0].mxu0
      %v5484 = vadd.f32 %v5221, %v5483
      %v5485 = vpop.f32.mrb[0].mxu0
      %5486 = vdwg.mxu0
      %v5487 = vmax.f32 %v5364, 0.0
      %v5488 = vmax.f32 %v5369, 0.0
      %v5489 = vmax.f32 %v5374, 0.0
      %v5490 = vmax.f32 %v5379, 0.0
      %v5491 = vmax.f32 %v5384, 0.0
      %v5492 = vmax.f32 %v5389, 0.0
      %v5493 = vmax.f32 %v5394, 0.0
      %v5494 = vmax.f32 %v5399, 0.0
      %v5495 = vmax.f32 %v5404, 0.0
      %v5496 = vmax.f32 %v5409, 0.0
      %v5497 = vmax.f32 %v5414, 0.0
      %v5498 = vmax.f32 %v5419, 0.0
      %v5499 = vmax.f32 %v5424, 0.0
      %v5500 = vmax.f32 %v5429, 0.0
      %v5501 = vmax.f32 %v5434, 0.0
      %v5502 = vmax.f32 %v5439, 0.0
      %v5503 = vmax.f32 %v5444, 0.0
      %v5504 = vmax.f32 %v5449, 0.0
      %v5505 = vmax.f32 %v5454, 0.0
      %v5506 = vmax.f32 %v5459, 0.0
      %v5507 = vmax.f32 %v5464, 0.0
      %v5508 = vmax.f32 %v5469, 0.0
      %v5509 = vmax.f32 %v5474, 0.0
      %v5510 = vmax.f32 %v5479, 0.0
      %v5511 = vmax.f32 %v5484, 0.0
      %v5512 = vmul.f32 %v1076, %v5487
      %v5513 = vmul.f32 %v1077, %v5488
      %v5514 = vmul.f32 %v1078, %v5489
      %v5515 = vmul.f32 %v1079, %v5490
      %v5516 = vmul.f32 %v1080, %v5491
      %v5517 = vmul.f32 %v1081, %v5492
      %v5518 = vmul.f32 %v1082, %v5493
      %v5519 = vmul.f32 %v1083, %v5494
      %v5520 = vmul.f32 %v1084, %v5495
      %v5521 = vmul.f32 %v1085, %v5496
      %v5522 = vmul.f32 %v1086, %v5497
      %v5523 = vmul.f32 %v1087, %v5498
      %v5524 = vmul.f32 %v1088, %v5499
      %v5525 = vmul.f32 %v1089, %v5500
      %v5526 = vmul.f32 %v1090, %v5501
      %v5527 = vmul.f32 %v1091, %v5502
      %v5528 = vmul.f32 %v1092, %v5503
      %v5529 = vmul.f32 %v1093, %v5504
      %v5530 = vmul.f32 %v1094, %v5505
      %v5531 = vmul.f32 %v1095, %v5506
      %v5532 = vmul.f32 %v1096, %v5507
      %v5533 = vmul.f32 %v1097, %v5508
      %v5534 = vmul.f32 %v1098, %v5509
      %v5535 = vmul.f32 %v1099, %v5510
      %v5536 = vmul.f32 %v1100, %v5511
      %v5537 = vld [vmem:[%s11] sm:$0xff]
      %v5538 = vld [vmem:[%s11 + $0x8] sm:$0xff]
      %v5539 = vld [vmem:[%s11 + $0x10] sm:$0xff]
      %v5540 = vld [vmem:[%s11 + $0x18] sm:$0xff]
      %v5542 = vsel %vm1101, %v5512, 0
      %v5545 = vsel %vm1101, %v5513, 0
      %v5548 = vsel %vm1101, %v5514, 0
      %v5551 = vsel %vm1101, %v5515, 0
      %v5554 = vsel %vm1101, %v5516, 0
      %v5557 = vsel %vm1101, %v5517, 0
      %v5560 = vsel %vm1101, %v5518, 0
      %v5563 = vsel %vm1101, %v5519, 0
      %v5566 = vsel %vm1101, %v5520, 0
      %v5569 = vsel %vm1101, %v5521, 0
      %v5572 = vsel %vm1101, %v5522, 0
      %v5575 = vsel %vm1101, %v5523, 0
      %v5578 = vsel %vm1101, %v5524, 0
      %v5581 = vsel %vm1101, %v5525, 0
      %v5584 = vsel %vm1101, %v5526, 0
      %v5587 = vsel %vm1101, %v5527, 0
      %v5590 = vsel %vm1101, %v5528, 0
      %v5593 = vsel %vm1101, %v5529, 0
      %v5596 = vsel %vm1101, %v5530, 0
      %v5599 = vsel %vm1101, %v5531, 0
      %v5602 = vsel %vm1101, %v5532, 0
      %v5605 = vsel %vm1101, %v5533, 0
      %v5608 = vsel %vm1101, %v5534, 0
      %v5611 = vsel %vm1101, %v5535, 0
      %v5614 = vsel %vm1101, %v5536, 0
      %5616 = vmatprep.subr.mxu0 0.0
      %5617 = vmatpush1.msra.mxu0 %v5537
      %5618 = vmatprep.subr.mxu0 0.0
      %5619 = vmatpush1.msra.mxu0 %v5538
      %5620 = vmatprep.subr.mxu0 0.0
      %5621 = vmatpush1.msra.mxu0 %v5539
      %5622 = vmatprep.subr.mxu0 0.0
      %5623 = vmatpush1.msra.mxu0 %v5540
      %5624 = vmatprep.subr.mxu0 0.0
      %5625 = vmatpush1.msra.mxu0 0.0
      %5626 = vmatprep.subr.mxu0 0.0
      %5627 = vmatpush1.msra.mxu0 0.0
      %5628 = vmatprep.subr.mxu0 0.0
      %5629 = vmatpush1.msra.mxu0 0.0
      %5630 = vmatprep.subr.mxu0 0.0
      %5631 = vmatpush1.msra.mxu0 0.0
      %5632 = vmatprep.subr.mxu0 0.0
      %5633 = vmatpush1.msra.mxu0 0.0
      %5634 = vmatprep.subr.mxu0 0.0
      %5635 = vmatpush1.msra.mxu0 0.0
      %5636 = vmatprep.subr.mxu0 0.0
      %5637 = vmatpush1.msra.mxu0 0.0
      %5638 = vmatprep.subr.mxu0 0.0
      %5639 = vmatpush1.msra.mxu0 0.0
      %5640 = vmatprep.subr.mxu0 0.0
      %5641 = vmatpush1.msra.mxu0 0.0
      %5642 = vmatprep.subr.mxu0 0.0
      %5643 = vmatpush1.msra.mxu0 0.0
      %5644 = vmatprep.subr.mxu0 0.0
      %5645 = vmatpush1.msra.mxu0 0.0
      %5646 = vmatprep.subr.mxu0 0.0
      %5647 = vmatpush1.msra.mxu0 0.0
      %5648 = vmatprep.subr.mxu0 0.0
      %5649 = vmatpush1.msra.mxu0 0.0
      %5650 = vmatprep.subr.mxu0 0.0
      %5651 = vmatpush1.msra.mxu0 0.0
      %5652 = vmatprep.subr.mxu0 0.0
      %5653 = vmatpush1.msra.mxu0 0.0
      %5654 = vmatprep.subr.mxu0 0.0
      %5655 = vmatpush1.msra.mxu0 0.0
      %5656 = vmatprep.subr.mxu0 0.0
      %5657 = vmatpush1.msra.mxu0 0.0
      %5658 = vmatprep.subr.mxu0 0.0
      %5659 = vmatpush1.msra.mxu0 0.0
      %5660 = vmatprep.subr.mxu0 0.0
      %5661 = vmatpush1.msra.mxu0 0.0
      %5662 = vmatprep.subr.mxu0 0.0
      %5663 = vmatpush1.msra.mxu0 0.0
      %5664 = vmatprep.subr.mxu0 0.0
      %5665 = vmatpush1.msra.mxu0 0.0
      %5666 = vmatprep.subr.mxu0 0.0
      %5667 = vmatpush1.msra.mxu0 0.0
      %5668 = vmatprep.subr.mxu0 0.0
      %5669 = vmatpush1.msra.mxu0 0.0
      %5670 = vmatprep.subr.mxu0 0.0
      %5671 = vmatpush1.msra.mxu0 0.0
      %5672 = vmatprep.subr.mxu0 0.0
      %5673 = vmatpush1.msra.mxu0 0.0
      %5674 = vmatprep.subr.mxu0 0.0
      %5675 = vmatpush1.msra.mxu0 0.0
      %5676 = vmatprep.subr.mxu0 0.0
      %5677 = vmatpush1.msra.mxu0 0.0
      %5678 = vmatprep.subr.mxu0 0.0
      %5679 = vmatpush1.msra.mxu0 0.0
      %5680 = vmatprep.mubr.f32.mxu0 0.0
      %5681 = vmatmul.mubr.f32.gmra.mrb[0].mxu0 %v5542
      %v5682 = vpop.f32.mrb[0].mxu0
      %v5683 = vadd.f32 0.0, %v5682
      %v5684 = vpop.f32.mrb[0].mxu0
      %5685 = vmatprep.mubr.f32.mxu0 0.0
      %5686 = vmatmul.mubr.f32.gmra.mrb[0].mxu0 %v5545
      %v5687 = vpop.f32.mrb[0].mxu0
      %v5688 = vadd.f32 0.0, %v5687
      %v5689 = vpop.f32.mrb[0].mxu0
      %5690 = vmatprep.mubr.f32.mxu0 0.0
      %5691 = vmatmul.mubr.f32.gmra.mrb[0].mxu0 %v5548
      %v5692 = vpop.f32.mrb[0].mxu0
      %v5693 = vadd.f32 0.0, %v5692
      %v5694 = vpop.f32.mrb[0].mxu0
      %5695 = vmatprep.mubr.f32.mxu0 0.0
      %5696 = vmatmul.mubr.f32.gmra.mrb[0].mxu0 %v5551
      %v5697 = vpop.f32.mrb[0].mxu0
      %v5698 = vadd.f32 0.0, %v5697
      %v5699 = vpop.f32.mrb[0].mxu0
      %5700 = vmatprep.mubr.f32.mxu0 0.0
      %5701 = vmatmul.mubr.f32.gmra.mrb[0].mxu0 %v5554
      %v5702 = vpop.f32.mrb[0].mxu0
      %v5703 = vadd.f32 0.0, %v5702
      %v5704 = vpop.f32.mrb[0].mxu0
      %5705 = vmatprep.mubr.f32.mxu0 0.0
      %5706 = vmatmul.mubr.f32.gmra.mrb[0].mxu0 %v5557
      %v5707 = vpop.f32.mrb[0].mxu0
      %v5708 = vadd.f32 0.0, %v5707
      %v5709 = vpop.f32.mrb[0].mxu0
      %5710 = vmatprep.mubr.f32.mxu0 0.0
      %5711 = vmatmul.mubr.f32.gmra.mrb[0].mxu0 %v5560
      %v5712 = vpop.f32.mrb[0].mxu0
      %v5713 = vadd.f32 0.0, %v5712
      %v5714 = vpop.f32.mrb[0].mxu0
      %5715 = vmatprep.mubr.f32.mxu0 0.0
      %5716 = vmatmul.mubr.f32.gmra.mrb[0].mxu0 %v5563
      %v5717 = vpop.f32.mrb[0].mxu0
      %v5718 = vadd.f32 0.0, %v5717
      %v5719 = vpop.f32.mrb[0].mxu0
      %5720 = vmatprep.mubr.f32.mxu0 0.0
      %5721 = vmatmul.mubr.f32.gmra.mrb[0].mxu0 %v5566
      %v5722 = vpop.f32.mrb[0].mxu0
      %v5723 = vadd.f32 0.0, %v5722
      %v5724 = vpop.f32.mrb[0].mxu0
      %5725 = vmatprep.mubr.f32.mxu0 0.0
      %5726 = vmatmul.mubr.f32.gmra.mrb[0].mxu0 %v5569
      %v5727 = vpop.f32.mrb[0].mxu0
      %v5728 = vadd.f32 0.0, %v5727
      %v5729 = vpop.f32.mrb[0].mxu0
      %5730 = vmatprep.mubr.f32.mxu0 0.0
      %5731 = vmatmul.mubr.f32.gmra.mrb[0].mxu0 %v5572
      %v5732 = vpop.f32.mrb[0].mxu0
      %v5733 = vadd.f32 0.0, %v5732
      %v5734 = vpop.f32.mrb[0].mxu0
      %5735 = vmatprep.mubr.f32.mxu0 0.0
      %5736 = vmatmul.mubr.f32.gmra.mrb[0].mxu0 %v5575
      %v5737 = vpop.f32.mrb[0].mxu0
      %v5738 = vadd.f32 0.0, %v5737
      %v5739 = vpop.f32.mrb[0].mxu0
      %5740 = vmatprep.mubr.f32.mxu0 0.0
      %5741 = vmatmul.mubr.f32.gmra.mrb[0].mxu0 %v5578
      %v5742 = vpop.f32.mrb[0].mxu0
      %v5743 = vadd.f32 0.0, %v5742
      %v5744 = vpop.f32.mrb[0].mxu0
      %5745 = vmatprep.mubr.f32.mxu0 0.0
      %5746 = vmatmul.mubr.f32.gmra.mrb[0].mxu0 %v5581
      %v5747 = vpop.f32.mrb[0].mxu0
      %v5748 = vadd.f32 0.0, %v5747
      %v5749 = vpop.f32.mrb[0].mxu0
      %5750 = vmatprep.mubr.f32.mxu0 0.0
      %5751 = vmatmul.mubr.f32.gmra.mrb[0].mxu0 %v5584
      %v5752 = vpop.f32.mrb[0].mxu0
      %v5753 = vadd.f32 0.0, %v5752
      %v5754 = vpop.f32.mrb[0].mxu0
      %5755 = vmatprep.mubr.f32.mxu0 0.0
      %5756 = vmatmul.mubr.f32.gmra.mrb[0].mxu0 %v5587
      %v5757 = vpop.f32.mrb[0].mxu0
      %v5758 = vadd.f32 0.0, %v5757
      %v5759 = vpop.f32.mrb[0].mxu0
      %5760 = vmatprep.mubr.f32.mxu0 0.0
      %5761 = vmatmul.mubr.f32.gmra.mrb[0].mxu0 %v5590
      %v5762 = vpop.f32.mrb[0].mxu0
      %v5763 = vadd.f32 0.0, %v5762
      %v5764 = vpop.f32.mrb[0].mxu0
      %5765 = vmatprep.mubr.f32.mxu0 0.0
      %5766 = vmatmul.mubr.f32.gmra.mrb[0].mxu0 %v5593
      %v5767 = vpop.f32.mrb[0].mxu0
      %v5768 = vadd.f32 0.0, %v5767
      %v5769 = vpop.f32.mrb[0].mxu0
      %5770 = vmatprep.mubr.f32.mxu0 0.0
      %5771 = vmatmul.mubr.f32.gmra.mrb[0].mxu0 %v5596
      %v5772 = vpop.f32.mrb[0].mxu0
      %v5773 = vadd.f32 0.0, %v5772
      %v5774 = vpop.f32.mrb[0].mxu0
      %5775 = vmatprep.mubr.f32.mxu0 0.0
      %5776 = vmatmul.mubr.f32.gmra.mrb[0].mxu0 %v5599
      %v5777 = vpop.f32.mrb[0].mxu0
      %v5778 = vadd.f32 0.0, %v5777
      %v5779 = vpop.f32.mrb[0].mxu0
      %5780 = vmatprep.mubr.f32.mxu0 0.0
      %5781 = vmatmul.mubr.f32.gmra.mrb[0].mxu0 %v5602
      %v5782 = vpop.f32.mrb[0].mxu0
      %v5783 = vadd.f32 0.0, %v5782
      %v5784 = vpop.f32.mrb[0].mxu0
      %5785 = vmatprep.mubr.f32.mxu0 0.0
      %5786 = vmatmul.mubr.f32.gmra.mrb[0].mxu0 %v5605
      %v5787 = vpop.f32.mrb[0].mxu0
      %v5788 = vadd.f32 0.0, %v5787
      %v5789 = vpop.f32.mrb[0].mxu0
      %5790 = vmatprep.mubr.f32.mxu0 0.0
      %5791 = vmatmul.mubr.f32.gmra.mrb[0].mxu0 %v5608
      %v5792 = vpop.f32.mrb[0].mxu0
      %v5793 = vadd.f32 0.0, %v5792
      %v5794 = vpop.f32.mrb[0].mxu0
      %5795 = vmatprep.mubr.f32.mxu0 0.0
      %5796 = vmatmul.mubr.f32.gmra.mrb[0].mxu0 %v5611
      %v5797 = vpop.f32.mrb[0].mxu0
      %v5798 = vadd.f32 0.0, %v5797
      %v5799 = vpop.f32.mrb[0].mxu0
      %5800 = vmatprep.mubr.f32.mxu0 0.0
      %5801 = vmatmul.mubr.f32.gmra.mrb[0].mxu0 %v5614
      %v5802 = vpop.f32.mrb[0].mxu0
      %v5803 = vadd.f32 0.0, %v5802
      %v5804 = vpop.f32.mrb[0].mxu0
      %5805 = vdwg.mxu0
      %v5806 = vsel %vm2668, %v5803, 0.0
      %v5832 = vrot.slane %v5683, 7
      %v5833 = vrot.slane %v5688, 7
      %v5834 = vsel %vm2592, %v5832, %v5833
      %v5835 = vrot.slane %v5693, 7
      %v5836 = vsel %vm2592, %v5833, %v5835
      %v5837 = vrot.slane %v5698, 7
      %v5838 = vsel %vm2592, %v5835, %v5837
      %v5839 = vrot.slane %v5703, 7
      %v5840 = vsel %vm2592, %v5837, %v5839
      %v5841 = vrot.slane %v5708, 7
      %v5842 = vsel %vm2592, %v5839, %v5841
      %v5843 = vrot.slane %v5713, 7
      %v5844 = vsel %vm2592, %v5841, %v5843
      %v5845 = vrot.slane %v5718, 7
      %v5846 = vsel %vm2592, %v5843, %v5845
      %v5847 = vrot.slane %v5723, 7
      %v5848 = vsel %vm2592, %v5845, %v5847
      %v5849 = vrot.slane %v5728, 7
      %v5850 = vsel %vm2592, %v5847, %v5849
      %v5851 = vrot.slane %v5733, 7
      %v5852 = vsel %vm2592, %v5849, %v5851
      %v5853 = vrot.slane %v5738, 7
      %v5854 = vsel %vm2592, %v5851, %v5853
      %v5855 = vrot.slane %v5743, 7
      %v5856 = vsel %vm2592, %v5853, %v5855
      %v5857 = vrot.slane %v5748, 7
      %v5858 = vsel %vm2592, %v5855, %v5857
      %v5859 = vrot.slane %v5753, 7
      %v5860 = vsel %vm2592, %v5857, %v5859
      %v5861 = vrot.slane %v5758, 7
      %v5862 = vsel %vm2592, %v5859, %v5861
      %v5863 = vrot.slane %v5763, 7
      %v5864 = vsel %vm2592, %v5861, %v5863
      %v5865 = vrot.slane %v5768, 7
      %v5866 = vsel %vm2592, %v5863, %v5865
      %v5867 = vrot.slane %v5773, 7
      %v5868 = vsel %vm2592, %v5865, %v5867
      %v5869 = vrot.slane %v5778, 7
      %v5870 = vsel %vm2592, %v5867, %v5869
      %v5871 = vrot.slane %v5783, 7
      %v5872 = vsel %vm2592, %v5869, %v5871
      %v5873 = vrot.slane %v5788, 7
      %v5874 = vsel %vm2592, %v5871, %v5873
      %v5875 = vrot.slane %v5793, 7
      %v5876 = vsel %vm2592, %v5873, %v5875
      %v5877 = vrot.slane %v5798, 7
      %v5878 = vsel %vm2592, %v5875, %v5877
      %v5879 = vrot.slane %v5803, 7
      %v5880 = vsel %vm2592, %v5877, %v5879
      %5881 = vrot.lane.b32.xlu0 %v5832, 124
      %v5882 = vpop.permute.xlu0 %5881
      %5883 = vrot.lane.b32.xlu0 %v5834, 124
      %v5884 = vpop.permute.xlu0 %5883
      %5885 = vrot.lane.b32.xlu0 %v5836, 124
      %v5886 = vpop.permute.xlu0 %5885
      %5887 = vrot.lane.b32.xlu0 %v5838, 124
      %v5888 = vpop.permute.xlu0 %5887
      %5889 = vrot.lane.b32.xlu0 %v5840, 124
      %v5890 = vpop.permute.xlu0 %5889
      %5891 = vrot.lane.b32.xlu0 %v5842, 124
      %v5892 = vpop.permute.xlu0 %5891
      %5893 = vrot.lane.b32.xlu0 %v5844, 124
      %v5894 = vpop.permute.xlu0 %5893
      %5895 = vrot.lane.b32.xlu0 %v5846, 124
      %v5896 = vpop.permute.xlu0 %5895
      %5897 = vrot.lane.b32.xlu0 %v5848, 124
      %v5898 = vpop.permute.xlu0 %5897
      %5899 = vrot.lane.b32.xlu0 %v5850, 124
      %v5900 = vpop.permute.xlu0 %5899
      %5901 = vrot.lane.b32.xlu0 %v5852, 124
      %v5902 = vpop.permute.xlu0 %5901
      %5903 = vrot.lane.b32.xlu0 %v5854, 124
      %v5904 = vpop.permute.xlu0 %5903
      %5905 = vrot.lane.b32.xlu0 %v5856, 124
      %v5906 = vpop.permute.xlu0 %5905
      %5907 = vrot.lane.b32.xlu0 %v5858, 124
      %v5908 = vpop.permute.xlu0 %5907
      %5909 = vrot.lane.b32.xlu0 %v5860, 124
      %v5910 = vpop.permute.xlu0 %5909
      %5911 = vrot.lane.b32.xlu0 %v5862, 124
      %v5912 = vpop.permute.xlu0 %5911
      %5913 = vrot.lane.b32.xlu0 %v5864, 124
      %v5914 = vpop.permute.xlu0 %5913
      %5915 = vrot.lane.b32.xlu0 %v5866, 124
      %v5916 = vpop.permute.xlu0 %5915
      %5917 = vrot.lane.b32.xlu0 %v5868, 124
      %v5918 = vpop.permute.xlu0 %5917
      %5919 = vrot.lane.b32.xlu0 %v5870, 124
      %v5920 = vpop.permute.xlu0 %5919
      %5921 = vrot.lane.b32.xlu0 %v5872, 124
      %v5922 = vpop.permute.xlu0 %5921
      %5923 = vrot.lane.b32.xlu0 %v5874, 124
      %v5924 = vpop.permute.xlu0 %5923
      %5925 = vrot.lane.b32.xlu0 %v5876, 124
      %v5926 = vpop.permute.xlu0 %5925
      %5927 = vrot.lane.b32.xlu0 %v5878, 124
      %v5928 = vpop.permute.xlu0 %5927
      %5929 = vrot.lane.b32.xlu0 %v5880, 124
      %v5930 = vpop.permute.xlu0 %5929
      %v5956 = vsel %vm2592, 0.0, %v5882
      %v5957 = vadd.f32 %v5683, %v5956
      %v5958 = vadd.f32 %v5688, %v5884
      %v5959 = vadd.f32 %v5693, %v5886
      %v5960 = vadd.f32 %v5698, %v5888
      %v5961 = vadd.f32 %v5703, %v5890
      %v5962 = vadd.f32 %v5708, %v5892
      %v5963 = vadd.f32 %v5713, %v5894
      %v5964 = vadd.f32 %v5718, %v5896
      %v5965 = vadd.f32 %v5723, %v5898
      %v5966 = vadd.f32 %v5728, %v5900
      %v5967 = vadd.f32 %v5733, %v5902
      %v5968 = vadd.f32 %v5738, %v5904
      %v5969 = vadd.f32 %v5743, %v5906
      %v5970 = vadd.f32 %v5748, %v5908
      %v5971 = vadd.f32 %v5753, %v5910
      %v5972 = vadd.f32 %v5758, %v5912
      %v5973 = vadd.f32 %v5763, %v5914
      %v5974 = vadd.f32 %v5768, %v5916
      %v5975 = vadd.f32 %v5773, %v5918
      %v5976 = vadd.f32 %v5778, %v5920
      %v5977 = vadd.f32 %v5783, %v5922
      %v5978 = vadd.f32 %v5788, %v5924
      %v5979 = vadd.f32 %v5793, %v5926
      %v5980 = vadd.f32 %v5798, %v5928
      %v5981 = vadd.f32 %v5806, %v5930
      %s5982 = sld [smem:[#allocation2]]
      %v5983 = vstv %s5982
      %v5984 = vadd.f32 %v5957, %v5983
      %v5985 = vadd.f32 %v5958, %v5983
      %v5986 = vadd.f32 %v5959, %v5983
      %v5987 = vadd.f32 %v5960, %v5983
      %v5988 = vadd.f32 %v5961, %v5983
      %v5989 = vadd.f32 %v5962, %v5983
      %v5990 = vadd.f32 %v5963, %v5983
      %v5991 = vadd.f32 %v5964, %v5983
      %v5992 = vadd.f32 %v5965, %v5983
      %v5993 = vadd.f32 %v5966, %v5983
      %v5994 = vadd.f32 %v5967, %v5983
      %v5995 = vadd.f32 %v5968, %v5983
      %v5996 = vadd.f32 %v5969, %v5983
      %v5997 = vadd.f32 %v5970, %v5983
      %v5998 = vadd.f32 %v5971, %v5983
      %v5999 = vadd.f32 %v5972, %v5983
      %v6000 = vadd.f32 %v5973, %v5983
      %v6001 = vadd.f32 %v5974, %v5983
      %v6002 = vadd.f32 %v5975, %v5983
      %v6003 = vadd.f32 %v5976, %v5983
      %v6004 = vadd.f32 %v5977, %v5983
      %v6005 = vadd.f32 %v5978, %v5983
      %v6006 = vadd.f32 %v5979, %v5983
      %v6007 = vadd.f32 %v5980, %v5983
      %v6008 = vadd.f32 %v5981, %v5983
      %6009 = vst.msk [vmem:[%s455] sm:$0xff] %vm508, %v5984
      %6010 = vst.msk [vmem:[%s455 + $0x8] sm:$0xff] %vm508, %v5985
      %6011 = vst.msk [vmem:[%s455 + $0x10] sm:$0xff] %vm508, %v5986
      %6012 = vst.msk [vmem:[%s455 + $0x18] sm:$0xff] %vm508, %v5987
      %6013 = vst.msk [vmem:[%s455 + $0x20] sm:$0xff] %vm508, %v5988
      %6014 = vst.msk [vmem:[%s455 + $0x28] sm:$0xff] %vm508, %v5989
      %6015 = vst.msk [vmem:[%s455 + $0x30] sm:$0xff] %vm508, %v5990
      %6016 = vst.msk [vmem:[%s455 + $0x38] sm:$0xff] %vm508, %v5991
      %6017 = vst.msk [vmem:[%s455 + $0x40] sm:$0xff] %vm508, %v5992
      %6018 = vst.msk [vmem:[%s455 + $0x48] sm:$0xff] %vm508, %v5993
      %6019 = vst.msk [vmem:[%s455 + $0x50] sm:$0xff] %vm508, %v5994
      %6020 = vst.msk [vmem:[%s455 + $0x58] sm:$0xff] %vm508, %v5995
      %6021 = vst.msk [vmem:[%s455 + $0x60] sm:$0xff] %vm508, %v5996
      %6022 = vst.msk [vmem:[%s455 + $0x68] sm:$0xff] %vm508, %v5997
      %6023 = vst.msk [vmem:[%s455 + $0x70] sm:$0xff] %vm508, %v5998
      %6024 = vst.msk [vmem:[%s455 + $0x78] sm:$0xff] %vm508, %v5999
      %6025 = vst.msk [vmem:[%s455 + $0x80] sm:$0xff] %vm508, %v6000
      %6026 = vst.msk [vmem:[%s455 + $0x88] sm:$0xff] %vm508, %v6001
      %6027 = vst.msk [vmem:[%s455 + $0x90] sm:$0xff] %vm508, %v6002
      %6028 = vst.msk [vmem:[%s455 + $0x98] sm:$0xff] %vm508, %v6003
      %6029 = vst.msk [vmem:[%s455 + $0xa0] sm:$0xff] %vm508, %v6004
      %6030 = vst.msk [vmem:[%s455 + $0xa8] sm:$0xff] %vm508, %v6005
      %6031 = vst.msk [vmem:[%s455 + $0xb0] sm:$0xff] %vm508, %v6006
      %6032 = vst.msk [vmem:[%s455 + $0xb8] sm:$0xff] %vm508, %v6007
      %6033 = vst.msk [vmem:[%s455 + $0xc0] sm:$0xff] %vm508, %v6008
      %p6034 = scmp.lt.s32.totalorder %s25, 1
      %s6035 = scalar_select %p6034, %s25, 1
      %s6036 = smul.addr %s6035, 25
      %s6037 = smul.addr %s6036, 8
      %s6038 = scalar_lea.vmem %s13, %s6037
      // Predicated region
      $region73: #{spex_plus_short_forward.3} parent=71 // pred_check
        %p6039 = pneg %p326
      $region74: #{spex_plus_short_forward.3} parent=71 // pred_check_branch
        %6041 = sbr.rel (%p6039) target = $region76
      $region75: #{spex_plus_short_forward.3} parent=71 // pred_region
        _
      $region76: #{spex_plus_short_forward.3} parent=71 // pred_fallthru
        _
    $region72: #{spex_plus_short_forward.3} parent=5 // pred_fallthru
      _
    %p6042 = scmp.le.s32.totalorder 2, %s20
    // Predicated region
    $region77: #{spex_plus_short_forward.3} parent=5 // pred_check
      %p6043 = pneg %p6042
    $region78: #{spex_plus_short_forward.3} parent=5 // pred_check_branch
      %6045 = sbr.rel (%p6043) target = $region80
    $region79: #{spex_plus_short_forward.3} parent=5 // pred_region
      %s6046 = ssub.s32 %s20, 2
      // Predicated region
      $region81: #{spex_plus_short_forward.3} parent=79 // pred_check
        %p6047 = pneg %p332
      $region82: #{spex_plus_short_forward.3} parent=79 // pred_check_branch
        %6049 = sbr.rel (%p6047) target = $region84
      $region83: #{spex_plus_short_forward.3} parent=79 // pred_region
        %p6050 = scmp.lt.s32.totalorder %s26, 1
        %s6051 = scalar_select %p6050, %s26, 1
        %s6052 = smul.addr %s6051, 25
        %s6053 = smul.addr %s6052, 8
        %s6054 = scalar_lea.vmem %s13, %s6053
      $region84: #{spex_plus_short_forward.3} parent=79 // pred_fallthru
        _
    $region80: #{spex_plus_short_forward.3} parent=5 // pred_fallthru
      _
  $region6: #{spex_plus_short_forward.3} parent=0 // loop_footer
    %s24 = sadd.s32 1, %s20
  $region7: #{spex_plus_short_forward.3} parent=0 // loop_footer_branch
    %19 = sbr.rel target = $region3
  $region8: #{spex_plus_short_forward.3} parent=0 // loop_exit
    _

</llo_original>
